<compile_context>
chip_gen: v7x
topology: tpu7x:2x2x1
jax: 0.10.0
libtpu: 0.0.40
codegen_flags: <defaults>
</compile_context>

<pallas_src>
import functools

import jax
import jax.numpy as jnp
from jax.experimental import pallas as pl
from jax.experimental.pallas import tpu as pltpu

EPS = 1e-5
KSIZE = 4
_LANE = 128
_SUB = 16                       # bf16 sublane granularity
_VMEM_BUDGET = 8 * 1024 * 1024  # working-set budget used for row-tile sizing


def _round_up(x, m):
    return ((x + m - 1) // m) * m


def _round_down(x, m):
    return (x // m) * m


# ----------------------------------------------------------------------------
# Kernel A: per-parity matmul (bf16 x bf16 -> f32) with fused per-tile partial
# BatchNorm statistics (sum / sum-of-squares).  No reduction grid axis, so both
# grid dims are "parallel".
# ----------------------------------------------------------------------------
def _mm_stats_kernel(p_ref, w_ref, y_ref, sum_ref, ssq_ref):
    acc = jnp.dot(p_ref[...], w_ref[...], preferred_element_type=jnp.float32)
    y_ref[...] = acc.astype(y_ref.dtype)
    s = jnp.sum(acc, axis=0, keepdims=True)
    ss = jnp.sum(acc * acc, axis=0, keepdims=True)
    # broadcast the (1, Cp) row to the full (8, Cp) stats block (f32 tile).
    sum_ref[...] = jnp.broadcast_to(s, sum_ref.shape)
    ssq_ref[...] = jnp.broadcast_to(ss, ssq_ref.shape)


def _matmul_stats(patches, wsub, TM):
    R, Mp, Kp = patches.shape
    Cp = wsub.shape[2]
    Mt = Mp // TM
    flops = 2 * R * Mp * Kp * Cp
    bytes_accessed = (patches.size * 2 + wsub.size * 2
                      + R * Mp * Cp * 2 + 2 * R * Mt * 8 * Cp * 4)
    return pl.pallas_call(
        _mm_stats_kernel,
        out_shape=(jax.ShapeDtypeStruct((R, Mp, Cp), jnp.bfloat16),
                   jax.ShapeDtypeStruct((R, Mt * 8, Cp), jnp.float32),
                   jax.ShapeDtypeStruct((R, Mt * 8, Cp), jnp.float32)),
        grid=(R, Mt),
        in_specs=[pl.BlockSpec((None, TM, Kp), lambda r, mi: (r, mi, 0)),
                  pl.BlockSpec((None, Kp, Cp), lambda r, mi: (r, 0, 0))],
        out_specs=(pl.BlockSpec((None, TM, Cp), lambda r, mi: (r, mi, 0)),
                   pl.BlockSpec((None, 8, Cp), lambda r, mi: (r, mi, 0)),
                   pl.BlockSpec((None, 8, Cp), lambda r, mi: (r, mi, 0))),
        compiler_params=pltpu.CompilerParams(
            dimension_semantics=("parallel", "parallel")),
        cost_estimate=pl.CostEstimate(flops=flops, transcendentals=0,
                                      bytes_accessed=bytes_accessed),
    )(patches, wsub)


# ----------------------------------------------------------------------------
# Kernel A': final layer -- matmul + tanh fused (no BatchNorm), f32 output.
# ----------------------------------------------------------------------------
def _mm_tanh_kernel(p_ref, w_ref, o_ref):
    acc = jnp.dot(p_ref[...], w_ref[...], preferred_element_type=jnp.float32)
    o_ref[...] = jnp.tanh(acc)


def _matmul_tanh(patches, wsub, TM):
    R, Mp, Kp = patches.shape
    Cp = wsub.shape[2]
    Mt = Mp // TM
    return pl.pallas_call(
        _mm_tanh_kernel,
        out_shape=jax.ShapeDtypeStruct((R, Mp, Cp), jnp.float32),
        grid=(R, Mt),
        in_specs=[pl.BlockSpec((None, TM, Kp), lambda r, mi: (r, mi, 0)),
                  pl.BlockSpec((None, Kp, Cp), lambda r, mi: (r, 0, 0))],
        out_specs=pl.BlockSpec((None, TM, Cp), lambda r, mi: (r, mi, 0)),
        compiler_params=pltpu.CompilerParams(
            dimension_semantics=("parallel", "parallel")),
        cost_estimate=pl.CostEstimate(
            flops=2 * R * Mp * Kp * Cp,
            transcendentals=R * Mp * Cp,
            bytes_accessed=patches.size * 2 + wsub.size * 2 + R * Mp * Cp * 4),
    )(patches, wsub)


# ----------------------------------------------------------------------------
# Kernel B: fused BatchNorm affine + activation (f32 math, bf16 in/out).
# ----------------------------------------------------------------------------
def _bn_act_kernel(y_ref, sc_ref, sh_ref, o_ref, *, act, slope):
    y = y_ref[...].astype(jnp.float32) * sc_ref[...] + sh_ref[...]
    if act == "relu":
        y = jnp.maximum(y, 0.0)
    elif act == "leakyrelu":
        y = jnp.where(y > 0, y, slope * y)
    elif act == "tanh":
        y = jnp.tanh(y)
    o_ref[...] = y.astype(o_ref.dtype)


def _bn_act(y, scale_row, shift_row, act, slope, TM):
    R, Mp, Cp = y.shape
    Mt = Mp // TM
    kern = functools.partial(_bn_act_kernel, act=act, slope=slope)
    return pl.pallas_call(
        kern,
        out_shape=jax.ShapeDtypeStruct((R, Mp, Cp), jnp.bfloat16),
        grid=(R, Mt),
        in_specs=[pl.BlockSpec((None, TM, Cp), lambda r, mi: (r, mi, 0)),
                  pl.BlockSpec((1, Cp), lambda r, mi: (0, 0)),
                  pl.BlockSpec((1, Cp), lambda r, mi: (0, 0))],
        out_specs=pl.BlockSpec((None, TM, Cp), lambda r, mi: (r, mi, 0)),
        compiler_params=pltpu.CompilerParams(
            dimension_semantics=("parallel", "parallel")),
        cost_estimate=pl.CostEstimate(
            flops=4 * R * Mp * Cp, transcendentals=0,
            bytes_accessed=R * Mp * Cp * 4 + 2 * Cp * 4),
    )(y, scale_row, shift_row)


# ----------------------------------------------------------------------------
# One DEConvBNormRelu2d layer: ConvTranspose2d (bias=False) via sub-pixel
# decomposition -> (BatchNorm2d, training stats) -> ReLU / LeakyReLU, or
# (final layer) -> tanh.  NHWC in, NHWC out.
# ----------------------------------------------------------------------------
def _deconv_layer(x, wsub, gamma, beta, cfg):
    N, H, W, Cin = x.shape
    s, p = cfg["stride"], cfg["padding"]
    act, slope, use_bn = cfg["act"], cfg["slope"], cfg["use_bn"]
    k = KSIZE
    t = k // s
    R = s * s
    assert wsub.shape[0] == R

    Hout = (H - 1) * s - 2 * p + k
    Wout = (W - 1) * s - 2 * p + k
    assert Hout % s == 0 and Wout % s == 0
    Hp, Wp = Hout // s, Wout // s

    # per-parity correlation geometry
    j_hi = [(k - 1 - r - p) // s for r in range(s)]
    j_lo = [-((r + p) // s) for r in range(s)]
    off = [max(j_hi) - j_hi[r] for r in range(s)]
    padL = max(j_hi)
    padRh = max(max(0, (Hp - 1) - j_lo[r] - (H - 1)) for r in range(s))
    padRw = max(max(0, (Wp - 1) - j_lo[r] - (W - 1)) for r in range(s))

    xp = jnp.pad(x, ((0, 0), (padL, padRh), (padL, padRw), (0, 0)))

    # sub-pixel im2col: one [M, (k/s)^2 * Cin] patch matrix per output parity.
    M = N * Hp * Wp
    K = t * t * Cin
    pieces = []
    for rh in range(s):
        for rw in range(s):
            taps = [xp[:, off[rh] + eh: off[rh] + eh + Hp,
                       off[rw] + ew: off[rw] + ew + Wp, :]
                    for eh in range(t) for ew in range(t)]
            pieces.append(jnp.concatenate(taps, axis=-1).reshape(M, K))
    patches = jnp.stack(pieces, axis=0)                      # [R, M, K] bf16

    Kp = _round_up(K, _LANE)
    Cout = gamma.shape[0]
    Cp = wsub.shape[2]
    assert Kp == wsub.shape[1]

    # row-tile size: biggest tile that fits the VMEM budget (double-buffered).
    row_bytes = 2 * (Kp + Cp)
    cap = max(_SUB, min(2048, _round_down(_VMEM_BUDGET // (2 * row_bytes), _SUB)))
    if M <= cap:
        TM = _round_up(M, _SUB)
        Mp = TM
    else:
        TM = cap
        Mp = _round_up(M, TM)

    patches = jnp.pad(patches,
                      ((0, 0), (0, Mp - M), (0, Kp - K))).astype(jnp.bfloat16)

    if use_bn:
        y, sums, ssqs = _matmul_stats(patches, wsub, TM)
        cnt = float(R * M)
        # each grid step wrote its partial sum broadcast to 8 rows -> divide by 8
        ch_sum = jnp.sum(sums[:, :, :Cout], axis=(0, 1)) / 8.0
        ch_ssq = jnp.sum(ssqs[:, :, :Cout], axis=(0, 1)) / 8.0
        mean = ch_sum / cnt
        var = jnp.maximum(ch_ssq / cnt - mean * mean, 0.0)   # biased (training BN)
        scale = gamma * jax.lax.rsqrt(var + EPS)
        shift = beta - mean * scale
        scale_row = jnp.pad(scale, (0, Cp - Cout)).reshape(1, Cp)
        shift_row = jnp.pad(shift, (0, Cp - Cout)).reshape(1, Cp)
        out = _bn_act(y, scale_row, shift_row, act, slope, TM)
    else:
        out = _matmul_tanh(patches, wsub, TM)                # final layer fused

    # pixel shuffle: interleave the s*s parity planes -> [N, Hout, Wout, Cout]
    out = out[:, :M, :Cout].reshape(s, s, N, Hp, Wp, Cout)
    out = out.transpose(2, 3, 0, 4, 1, 5).reshape(N, Hout, Wout, Cout)
    return out


_LAYER_CFGS = [
    dict(stride=1, padding=0, act="relu", slope=0.0, use_bn=True),
    dict(stride=2, padding=1, act="leakyrelu", slope=0.2, use_bn=True),
    dict(stride=2, padding=1, act="leakyrelu", slope=0.2, use_bn=True),
    dict(stride=2, padding=1, act="leakyrelu", slope=0.2, use_bn=True),
    dict(stride=2, padding=1, act="tanh", slope=0.0, use_bn=False),
]


def init_params(key, in_channels, out_channels, nker):
    chans = [(in_channels, 16 * nker), (16 * nker, 8 * nker),
             (8 * nker, 4 * nker), (4 * nker, 2 * nker),
             (2 * nker, out_channels)]
    params = []
    for ci, co in chans:
        key, sub = jax.random.split(key)
        W = 0.02 * jax.random.normal(sub, (ci, co, KSIZE, KSIZE), jnp.float32)
        gamma = jnp.ones((co,), jnp.float32)   # PyTorch BatchNorm2d defaults
        beta = jnp.zeros((co,), jnp.float32)
        params.append((W, gamma, beta))
    return params


def _make_wsub(W, stride, padding):
    """Repack ConvTranspose2d weight [Cin, Cout, k, k] into the per-parity
    stride-1 correlation matrices [s*s, Kp, Cp] (bf16, padded)."""
    cin, cout, k, _ = W.shape
    s, p = stride, padding
    t = k // s
    j_hi = [(k - 1 - r - p) // s for r in range(s)]
    mats = []
    for rh in range(s):
        for rw in range(s):
            blocks = []
            for eh in range(t):
                kh = s * (j_hi[rh] - eh) + rh + p
                for ew in range(t):
                    kw = s * (j_hi[rw] - ew) + rw + p
                    blocks.append(W[:, :, kh, kw])            # [cin, cout]
            mats.append(jnp.concatenate(blocks, axis=0))      # [t*t*cin, cout]
    wsub = jnp.stack(mats, axis=0)                            # [R, K, cout]
    K = t * t * cin
    Kp = _round_up(K, _LANE)
    Cp = _round_up(cout, _LANE)
    wsub = jnp.pad(wsub, ((0, 0), (0, Kp - K), (0, Cp - cout)))
    return wsub.astype(jnp.bfloat16)


def prepare_params(params):
    """Weight repacking done once, outside the jitted forward."""
    prepared = []
    for (W, gamma, beta), cfg in zip(params, _LAYER_CFGS):
        prepared.append((_make_wsub(W, cfg["stride"], cfg["padding"]),
                         gamma, beta))
    return prepared


@jax.jit
def dcgan_generator(x, prepared_params):
    # x: [N, Cin, H, W] f32 (NCHW, PyTorch layout); returns NCHW f32.
    h = jnp.transpose(x, (0, 2, 3, 1)).astype(jnp.bfloat16)   # NHWC once
    for (wsub, g, b), cfg in zip(prepared_params, _LAYER_CFGS):
        h = _deconv_layer(h, wsub, g, b, cfg)
    return jnp.transpose(h, (0, 3, 1, 2))                     # NCHW once


# ----------------------------------------------------------------------------
# pure-JAX reference (sanity check of the Pallas implementation)
# ----------------------------------------------------------------------------
def _ref_forward(x, params):
    for (W, g, b), cfg in zip(params, _LAYER_CFGS):
        k = W.shape[2]
        p = cfg["padding"]
        Wc = jnp.transpose(W[:, :, ::-1, ::-1], (1, 0, 2, 3))
        y = jax.lax.conv_general_dilated(
            x, Wc, window_strides=(1, 1),
            padding=[(k - 1 - p, k - 1 - p)] * 2,
            lhs_dilation=(cfg["stride"], cfg["stride"]),
            dimension_numbers=("NCHW", "OIHW", "NCHW"))
        if cfg["use_bn"]:
            mean = y.mean(axis=(0, 2, 3), keepdims=True)
            var = y.var(axis=(0, 2, 3), keepdims=True)
            y = (y - mean) * jax.lax.rsqrt(var + EPS)
            y = y * g.reshape(1, -1, 1, 1) + b.reshape(1, -1, 1, 1)
        if cfg["act"] == "relu":
            y = jnp.maximum(y, 0.0)
        elif cfg["act"] == "leakyrelu":
            y = jnp.where(y > 0, y, cfg["slope"] * y)
        elif cfg["act"] == "tanh":
            y = jnp.tanh(y)
        x = y
    return x


if __name__ == "__main__":
    # small config: latent dim 4, RGB output, nker=8, batch 2, latent is 1x1
    in_channels, out_channels, nker, N = 4, 3, 8, 2
    key = jax.random.PRNGKey(0)
    k_x, k_p = jax.random.split(key)
    x = jax.random.normal(k_x, (N, in_channels, 1, 1), jnp.float32)
    params = init_params(k_p, in_channels, out_channels, nker)
    prepared = prepare_params(params)

    out = dcgan_generator(x, prepared)
    out = jax.block_until_ready(out)

    assert out.shape == (N, out_channels, 64, 64), out.shape
    assert bool(jnp.all(jnp.isfinite(out)))
    ref = _ref_forward(x, params)
    err = float(jnp.max(jnp.abs(out - ref)))
    assert err < 5e-2, err

    print("KERNEL_OK")
</pallas_src>

<mosaic_0001>
module attributes {stable_mosaic.version = 11 : i64} {
  func.func @_mm_stats_kernel(%arg0: i32, %arg1: i32, %arg2: memref<1x32x128xbf16, #tpu.memory_space<vmem>>, %arg3: memref<1x128x128xbf16, #tpu.memory_space<vmem>>, %arg4: memref<1x32x128xbf16, #tpu.memory_space<vmem>>, %arg5: memref<1x8x128xf32, #tpu.memory_space<vmem>>, %arg6: memref<1x8x128xf32, #tpu.memory_space<vmem>>) attributes {dimension_semantics = [#tpu.dimension_semantics<parallel>, #tpu.dimension_semantics<parallel>], iteration_bounds = array<i64: 1, 1>, scalar_prefetch = 0 : i64, scratch_operands = 0 : i64, tpu.core_type = #tpu.core_type<tc>, window_params = [{transform_indices = @transform_0, window_bounds = array<i64: 1, 32, 128>}, {transform_indices = @transform_1, window_bounds = array<i64: 1, 128, 128>}, {transform_indices = @transform_2, window_bounds = array<i64: 1, 32, 128>}, {transform_indices = @transform_3, window_bounds = array<i64: 1, 8, 128>}, {transform_indices = @transform_4, window_bounds = array<i64: 1, 8, 128>}]} {
    %c0 = arith.constant 0 : index
    %c0_0 = arith.constant 0 : index
    %c0_1 = arith.constant 0 : index
    %0 = vector.load %arg2[%c0, %c0_0, %c0_1] : memref<1x32x128xbf16, #tpu.memory_space<vmem>>, vector<1x32x128xbf16>
    %1 = vector.shape_cast %0 : vector<1x32x128xbf16> to vector<32x128xbf16>
    %c0_2 = arith.constant 0 : index
    %c0_3 = arith.constant 0 : index
    %c0_4 = arith.constant 0 : index
    %2 = vector.load %arg3[%c0_2, %c0_3, %c0_4] : memref<1x128x128xbf16, #tpu.memory_space<vmem>>, vector<1x128x128xbf16>
    %3 = vector.shape_cast %2 : vector<1x128x128xbf16> to vector<128x128xbf16>
    %cst = arith.constant dense<0.000000e+00> : vector<32x128xf32>
    %4 = tpu.matmul %1, %3, %cst {dimension_numbers = #tpu.dot_dimension_numbers<[1], [0], [0], [1], [0, 0, 1, 1], [], []>} : vector<32x128xbf16>, vector<128x128xbf16>, vector<32x128xf32> -> vector<32x128xf32>
    %5 = arith.truncf %4 : vector<32x128xf32> to vector<32x128xbf16>
    %c0_5 = arith.constant 0 : index
    %c0_6 = arith.constant 0 : index
    %c0_7 = arith.constant 0 : index
    %6 = vector.load %arg4[%c0_5, %c0_6, %c0_7] : memref<1x32x128xbf16, #tpu.memory_space<vmem>>, vector<1x32x128xbf16>
    %7 = vector.shape_cast %6 : vector<1x32x128xbf16> to vector<32x128xbf16>
    %8 = vector.shape_cast %5 : vector<32x128xbf16> to vector<1x32x128xbf16>
    tpu.vector_store %arg4[%c0_5, %c0_6, %c0_7], %8 {strides = array<i32>} : memref<1x32x128xbf16, #tpu.memory_space<vmem>>, vector<1x32x128xbf16>,
    %cst_8 = arith.constant dense<0.000000e+00> : vector<128xf32>
    %9 = vector.multi_reduction <add>, %4, %cst_8 [0] : vector<32x128xf32> to vector<128xf32>
    %10 = vector.shape_cast %9 : vector<128xf32> to vector<1x128xf32>
    %11 = arith.mulf %4, %4 : vector<32x128xf32>
    %cst_9 = arith.constant dense<0.000000e+00> : vector<128xf32>
    %12 = vector.multi_reduction <add>, %11, %cst_9 [0] : vector<32x128xf32> to vector<128xf32>
    %13 = vector.shape_cast %12 : vector<128xf32> to vector<1x128xf32>
    %14 = vector.shape_cast %10 : vector<1x128xf32> to vector<1x128xf32>
    %15 = vector.broadcast %14 : vector<1x128xf32> to vector<8x128xf32>
    %c0_10 = arith.constant 0 : index
    %c0_11 = arith.constant 0 : index
    %c0_12 = arith.constant 0 : index
    %16 = vector.load %arg5[%c0_10, %c0_11, %c0_12] : memref<1x8x128xf32, #tpu.memory_space<vmem>>, vector<1x8x128xf32>
    %17 = vector.shape_cast %16 : vector<1x8x128xf32> to vector<8x128xf32>
    %18 = vector.shape_cast %15 : vector<8x128xf32> to vector<1x8x128xf32>
    tpu.vector_store %arg5[%c0_10, %c0_11, %c0_12], %18 {strides = array<i32>} : memref<1x8x128xf32, #tpu.memory_space<vmem>>, vector<1x8x128xf32>,
    %19 = vector.shape_cast %13 : vector<1x128xf32> to vector<1x128xf32>
    %20 = vector.broadcast %19 : vector<1x128xf32> to vector<8x128xf32>
    %c0_13 = arith.constant 0 : index
    %c0_14 = arith.constant 0 : index
    %c0_15 = arith.constant 0 : index
    %21 = vector.load %arg6[%c0_13, %c0_14, %c0_15] : memref<1x8x128xf32, #tpu.memory_space<vmem>>, vector<1x8x128xf32>
    %22 = vector.shape_cast %21 : vector<1x8x128xf32> to vector<8x128xf32>
    %23 = vector.shape_cast %20 : vector<8x128xf32> to vector<1x8x128xf32>
    tpu.vector_store %arg6[%c0_13, %c0_14, %c0_15], %23 {strides = array<i32>} : memref<1x8x128xf32, #tpu.memory_space<vmem>>, vector<1x8x128xf32>,
    return
  }
  func.func @transform_0(%arg0: i32, %arg1: i32) -> (i32, i32, i32) {
    %c0_i32 = arith.constant 0 : i32
    %c0_i32_0 = arith.constant 0 : i32
    return %arg0, %arg1, %c0_i32 : i32, i32, i32
  }
  func.func @transform_1(%arg0: i32, %arg1: i32) -> (i32, i32, i32) {
    %c0_i32 = arith.constant 0 : i32
    %c0_i32_0 = arith.constant 0 : i32
    %c0_i32_1 = arith.constant 0 : i32
    return %arg0, %c0_i32, %c0_i32_0 : i32, i32, i32
  }
  func.func @transform_2(%arg0: i32, %arg1: i32) -> (i32, i32, i32) {
    %c0_i32 = arith.constant 0 : i32
    %c0_i32_0 = arith.constant 0 : i32
    return %arg0, %arg1, %c0_i32 : i32, i32, i32
  }
  func.func @transform_3(%arg0: i32, %arg1: i32) -> (i32, i32, i32) {
    %c0_i32 = arith.constant 0 : i32
    %c0_i32_0 = arith.constant 0 : i32
    return %arg0, %arg1, %c0_i32 : i32, i32, i32
  }
  func.func @transform_4(%arg0: i32, %arg1: i32) -> (i32, i32, i32) {
    %c0_i32 = arith.constant 0 : i32
    %c0_i32_0 = arith.constant 0 : i32
    return %arg0, %arg1, %c0_i32 : i32, i32, i32
  }
}

module attributes {stable_mosaic.version = 11 : i64} {
  func.func @_bn_act_kernel(%arg0: i32, %arg1: i32, %arg2: memref<1x32x128xbf16, #tpu.memory_space<vmem>>, %arg3: memref<1x128xf32, #tpu.memory_space<vmem>>, %arg4: memref<1x128xf32, #tpu.memory_space<vmem>>, %arg5: memref<1x32x128xbf16, #tpu.memory_space<vmem>>) attributes {dimension_semantics = [#tpu.dimension_semantics<parallel>, #tpu.dimension_semantics<parallel>], iteration_bounds = array<i64: 1, 1>, scalar_prefetch = 0 : i64, scratch_operands = 0 : i64, tpu.core_type = #tpu.core_type<tc>, window_params = [{transform_indices = @transform_0, window_bounds = array<i64: 1, 32, 128>}, {pipeline_mode = #tpu.pipeline_mode<synchronous>, transform_indices = @transform_1, window_bounds = array<i64: 1, 128>}, {pipeline_mode = #tpu.pipeline_mode<synchronous>, transform_indices = @transform_2, window_bounds = array<i64: 1, 128>}, {transform_indices = @transform_3, window_bounds = array<i64: 1, 32, 128>}]} {
    %c0 = arith.constant 0 : index
    %c0_0 = arith.constant 0 : index
    %c0_1 = arith.constant 0 : index
    %0 = vector.load %arg2[%c0, %c0_0, %c0_1] : memref<1x32x128xbf16, #tpu.memory_space<vmem>>, vector<1x32x128xbf16>
    %1 = vector.shape_cast %0 : vector<1x32x128xbf16> to vector<32x128xbf16>
    %2 = arith.extf %1 : vector<32x128xbf16> to vector<32x128xf32>
    %c0_2 = arith.constant 0 : index
    %c0_3 = arith.constant 0 : index
    %3 = vector.load %arg3[%c0_2, %c0_3] : memref<1x128xf32, #tpu.memory_space<vmem>>, vector<1x128xf32>
    %4 = vector.broadcast %3 : vector<1x128xf32> to vector<32x128xf32>
    %5 = arith.mulf %2, %4 : vector<32x128xf32>
    %c0_4 = arith.constant 0 : index
    %c0_5 = arith.constant 0 : index
    %6 = vector.load %arg4[%c0_4, %c0_5] : memref<1x128xf32, #tpu.memory_space<vmem>>, vector<1x128xf32>
    %7 = vector.broadcast %6 : vector<1x128xf32> to vector<32x128xf32>
    %8 = arith.addf %5, %7 : vector<32x128xf32>
    %cst = arith.constant 0.000000e+00 : f32
    %9 = vector.broadcast %cst : f32 to vector<32x128xf32>
    %10 = arith.maximumf %8, %9 : vector<32x128xf32>
    %11 = arith.truncf %10 : vector<32x128xf32> to vector<32x128xbf16>
    %c0_6 = arith.constant 0 : index
    %c0_7 = arith.constant 0 : index
    %c0_8 = arith.constant 0 : index
    %12 = vector.load %arg5[%c0_6, %c0_7, %c0_8] : memref<1x32x128xbf16, #tpu.memory_space<vmem>>, vector<1x32x128xbf16>
    %13 = vector.shape_cast %12 : vector<1x32x128xbf16> to vector<32x128xbf16>
    %14 = vector.shape_cast %11 : vector<32x128xbf16> to vector<1x32x128xbf16>
    tpu.vector_store %arg5[%c0_6, %c0_7, %c0_8], %14 {strides = array<i32>} : memref<1x32x128xbf16, #tpu.memory_space<vmem>>, vector<1x32x128xbf16>,
    return
  }
  func.func @transform_0(%arg0: i32, %arg1: i32) -> (i32, i32, i32) {
    %c0_i32 = arith.constant 0 : i32
    %c0_i32_0 = arith.constant 0 : i32
    return %arg0, %arg1, %c0_i32 : i32, i32, i32
  }
  func.func @transform_1(%arg0: i32, %arg1: i32) -> (i32, i32) {
    %c0_i32 = arith.constant 0 : i32
    %c0_i32_0 = arith.constant 0 : i32
    %c0_i32_1 = arith.constant 0 : i32
    return %c0_i32, %c0_i32_0 : i32, i32
  }
  func.func @transform_2(%arg0: i32, %arg1: i32) -> (i32, i32) {
    %c0_i32 = arith.constant 0 : i32
    %c0_i32_0 = arith.constant 0 : i32
    %c0_i32_1 = arith.constant 0 : i32
    return %c0_i32, %c0_i32_0 : i32, i32
  }
  func.func @transform_3(%arg0: i32, %arg1: i32) -> (i32, i32, i32) {
    %c0_i32 = arith.constant 0 : i32
    %c0_i32_0 = arith.constant 0 : i32
    return %arg0, %arg1, %c0_i32 : i32, i32, i32
  }
}

module attributes {stable_mosaic.version = 11 : i64} {
  func.func @_mm_stats_kernel(%arg0: i32, %arg1: i32, %arg2: memref<1x32x512xbf16, #tpu.memory_space<vmem>>, %arg3: memref<1x512x128xbf16, #tpu.memory_space<vmem>>, %arg4: memref<1x32x128xbf16, #tpu.memory_space<vmem>>, %arg5: memref<1x8x128xf32, #tpu.memory_space<vmem>>, %arg6: memref<1x8x128xf32, #tpu.memory_space<vmem>>) attributes {dimension_semantics = [#tpu.dimension_semantics<parallel>, #tpu.dimension_semantics<parallel>], iteration_bounds = array<i64: 4, 1>, scalar_prefetch = 0 : i64, scratch_operands = 0 : i64, tpu.core_type = #tpu.core_type<tc>, window_params = [{transform_indices = @transform_0, window_bounds = array<i64: 1, 32, 512>}, {transform_indices = @transform_1, window_bounds = array<i64: 1, 512, 128>}, {transform_indices = @transform_2, window_bounds = array<i64: 1, 32, 128>}, {transform_indices = @transform_3, window_bounds = array<i64: 1, 8, 128>}, {transform_indices = @transform_4, window_bounds = array<i64: 1, 8, 128>}]} {
    %c0 = arith.constant 0 : index
    %c0_0 = arith.constant 0 : index
    %c0_1 = arith.constant 0 : index
    %0 = vector.load %arg2[%c0, %c0_0, %c0_1] : memref<1x32x512xbf16, #tpu.memory_space<vmem>>, vector<1x32x512xbf16>
    %1 = vector.shape_cast %0 : vector<1x32x512xbf16> to vector<32x512xbf16>
    %c0_2 = arith.constant 0 : index
    %c0_3 = arith.constant 0 : index
    %c0_4 = arith.constant 0 : index
    %2 = vector.load %arg3[%c0_2, %c0_3, %c0_4] : memref<1x512x128xbf16, #tpu.memory_space<vmem>>, vector<1x512x128xbf16>
    %3 = vector.shape_cast %2 : vector<1x512x128xbf16> to vector<512x128xbf16>
    %cst = arith.constant dense<0.000000e+00> : vector<32x128xf32>
    %4 = tpu.matmul %1, %3, %cst {dimension_numbers = #tpu.dot_dimension_numbers<[1], [0], [0], [1], [0, 0, 1, 1], [], []>} : vector<32x512xbf16>, vector<512x128xbf16>, vector<32x128xf32> -> vector<32x128xf32>
    %5 = arith.truncf %4 : vector<32x128xf32> to vector<32x128xbf16>
    %c0_5 = arith.constant 0 : index
    %c0_6 = arith.constant 0 : index
    %c0_7 = arith.constant 0 : index
    %6 = vector.load %arg4[%c0_5, %c0_6, %c0_7] : memref<1x32x128xbf16, #tpu.memory_space<vmem>>, vector<1x32x128xbf16>
    %7 = vector.shape_cast %6 : vector<1x32x128xbf16> to vector<32x128xbf16>
    %8 = vector.shape_cast %5 : vector<32x128xbf16> to vector<1x32x128xbf16>
    tpu.vector_store %arg4[%c0_5, %c0_6, %c0_7], %8 {strides = array<i32>} : memref<1x32x128xbf16, #tpu.memory_space<vmem>>, vector<1x32x128xbf16>,
    %cst_8 = arith.constant dense<0.000000e+00> : vector<128xf32>
    %9 = vector.multi_reduction <add>, %4, %cst_8 [0] : vector<32x128xf32> to vector<128xf32>
    %10 = vector.shape_cast %9 : vector<128xf32> to vector<1x128xf32>
    %11 = arith.mulf %4, %4 : vector<32x128xf32>
    %cst_9 = arith.constant dense<0.000000e+00> : vector<128xf32>
    %12 = vector.multi_reduction <add>, %11, %cst_9 [0] : vector<32x128xf32> to vector<128xf32>
    %13 = vector.shape_cast %12 : vector<128xf32> to vector<1x128xf32>
    %14 = vector.shape_cast %10 : vector<1x128xf32> to vector<1x128xf32>
    %15 = vector.broadcast %14 : vector<1x128xf32> to vector<8x128xf32>
    %c0_10 = arith.constant 0 : index
    %c0_11 = arith.constant 0 : index
    %c0_12 = arith.constant 0 : index
    %16 = vector.load %arg5[%c0_10, %c0_11, %c0_12] : memref<1x8x128xf32, #tpu.memory_space<vmem>>, vector<1x8x128xf32>
    %17 = vector.shape_cast %16 : vector<1x8x128xf32> to vector<8x128xf32>
    %18 = vector.shape_cast %15 : vector<8x128xf32> to vector<1x8x128xf32>
    tpu.vector_store %arg5[%c0_10, %c0_11, %c0_12], %18 {strides = array<i32>} : memref<1x8x128xf32, #tpu.memory_space<vmem>>, vector<1x8x128xf32>,
    %19 = vector.shape_cast %13 : vector<1x128xf32> to vector<1x128xf32>
    %20 = vector.broadcast %19 : vector<1x128xf32> to vector<8x128xf32>
    %c0_13 = arith.constant 0 : index
    %c0_14 = arith.constant 0 : index
    %c0_15 = arith.constant 0 : index
    %21 = vector.load %arg6[%c0_13, %c0_14, %c0_15] : memref<1x8x128xf32, #tpu.memory_space<vmem>>, vector<1x8x128xf32>
    %22 = vector.shape_cast %21 : vector<1x8x128xf32> to vector<8x128xf32>
    %23 = vector.shape_cast %20 : vector<8x128xf32> to vector<1x8x128xf32>
    tpu.vector_store %arg6[%c0_13, %c0_14, %c0_15], %23 {strides = array<i32>} : memref<1x8x128xf32, #tpu.memory_space<vmem>>, vector<1x8x128xf32>,
    return
  }
  func.func @transform_0(%arg0: i32, %arg1: i32) -> (i32, i32, i32) {
    %c0_i32 = arith.constant 0 : i32
    %c0_i32_0 = arith.constant 0 : i32
    return %arg0, %arg1, %c0_i32 : i32, i32, i32
  }
  func.func @transform_1(%arg0: i32, %arg1: i32) -> (i32, i32, i32) {
    %c0_i32 = arith.constant 0 : i32
    %c0_i32_0 = arith.constant 0 : i32
    %c0_i32_1 = arith.constant 0 : i32
    return %arg0, %c0_i32, %c0_i32_0 : i32, i32, i32
  }
  func.func @transform_2(%arg0: i32, %arg1: i32) -> (i32, i32, i32) {
    %c0_i32 = arith.constant 0 : i32
    %c0_i32_0 = arith.constant 0 : i32
    return %arg0, %arg1, %c0_i32 : i32, i32, i32
  }
  func.func @transform_3(%arg0: i32, %arg1: i32) -> (i32, i32, i32) {
    %c0_i32 = arith.constant 0 : i32
    %c0_i32_0 = arith.constant 0 : i32
    return %arg0, %arg1, %c0_i32 : i32, i32, i32
  }
  func.func @transform_4(%arg0: i32, %arg1: i32) -> (i32, i32, i32) {
    %c0_i32 = arith.constant 0 : i32
    %c0_i32_0 = arith.constant 0 : i32
    return %arg0, %arg1, %c0_i32 : i32, i32, i32
  }
}

module attributes {stable_mosaic.version = 11 : i64} {
  func.func @_bn_act_kernel(%arg0: i32, %arg1: i32, %arg2: memref<1x32x128xbf16, #tpu.memory_space<vmem>>, %arg3: memref<1x128xf32, #tpu.memory_space<vmem>>, %arg4: memref<1x128xf32, #tpu.memory_space<vmem>>, %arg5: memref<1x32x128xbf16, #tpu.memory_space<vmem>>) attributes {dimension_semantics = [#tpu.dimension_semantics<parallel>, #tpu.dimension_semantics<parallel>], iteration_bounds = array<i64: 4, 1>, scalar_prefetch = 0 : i64, scratch_operands = 0 : i64, tpu.core_type = #tpu.core_type<tc>, window_params = [{transform_indices = @transform_0, window_bounds = array<i64: 1, 32, 128>}, {pipeline_mode = #tpu.pipeline_mode<synchronous>, transform_indices = @transform_1, window_bounds = array<i64: 1, 128>}, {pipeline_mode = #tpu.pipeline_mode<synchronous>, transform_indices = @transform_2, window_bounds = array<i64: 1, 128>}, {transform_indices = @transform_3, window_bounds = array<i64: 1, 32, 128>}]} {
    %c0 = arith.constant 0 : index
    %c0_0 = arith.constant 0 : index
    %c0_1 = arith.constant 0 : index
    %0 = vector.load %arg2[%c0, %c0_0, %c0_1] : memref<1x32x128xbf16, #tpu.memory_space<vmem>>, vector<1x32x128xbf16>
    %1 = vector.shape_cast %0 : vector<1x32x128xbf16> to vector<32x128xbf16>
    %2 = arith.extf %1 : vector<32x128xbf16> to vector<32x128xf32>
    %c0_2 = arith.constant 0 : index
    %c0_3 = arith.constant 0 : index
    %3 = vector.load %arg3[%c0_2, %c0_3] : memref<1x128xf32, #tpu.memory_space<vmem>>, vector<1x128xf32>
    %4 = vector.broadcast %3 : vector<1x128xf32> to vector<32x128xf32>
    %5 = arith.mulf %2, %4 : vector<32x128xf32>
    %c0_4 = arith.constant 0 : index
    %c0_5 = arith.constant 0 : index
    %6 = vector.load %arg4[%c0_4, %c0_5] : memref<1x128xf32, #tpu.memory_space<vmem>>, vector<1x128xf32>
    %7 = vector.broadcast %6 : vector<1x128xf32> to vector<32x128xf32>
    %8 = arith.addf %5, %7 : vector<32x128xf32>
    %cst = arith.constant 0.000000e+00 : f32
    %9 = vector.broadcast %cst : f32 to vector<32x128xf32>
    %10 = arith.cmpf ogt, %8, %9 : vector<32x128xf32>
    %cst_6 = arith.constant 2.000000e-01 : f32
    %11 = vector.broadcast %cst_6 : f32 to vector<32x128xf32>
    %12 = arith.mulf %11, %8 : vector<32x128xf32>
    %13 = arith.select %10, %8, %12 : vector<32x128xi1>, vector<32x128xf32>
    %14 = arith.truncf %13 : vector<32x128xf32> to vector<32x128xbf16>
    %c0_7 = arith.constant 0 : index
    %c0_8 = arith.constant 0 : index
    %c0_9 = arith.constant 0 : index
    %15 = vector.load %arg5[%c0_7, %c0_8, %c0_9] : memref<1x32x128xbf16, #tpu.memory_space<vmem>>, vector<1x32x128xbf16>
    %16 = vector.shape_cast %15 : vector<1x32x128xbf16> to vector<32x128xbf16>
    %17 = vector.shape_cast %14 : vector<32x128xbf16> to vector<1x32x128xbf16>
    tpu.vector_store %arg5[%c0_7, %c0_8, %c0_9], %17 {strides = array<i32>} : memref<1x32x128xbf16, #tpu.memory_space<vmem>>, vector<1x32x128xbf16>,
    return
  }
  func.func @transform_0(%arg0: i32, %arg1: i32) -> (i32, i32, i32) {
    %c0_i32 = arith.constant 0 : i32
    %c0_i32_0 = arith.constant 0 : i32
    return %arg0, %arg1, %c0_i32 : i32, i32, i32
  }
  func.func @transform_1(%arg0: i32, %arg1: i32) -> (i32, i32) {
    %c0_i32 = arith.constant 0 : i32
    %c0_i32_0 = arith.constant 0 : i32
    %c0_i32_1 = arith.constant 0 : i32
    return %c0_i32, %c0_i32_0 : i32, i32
  }
  func.func @transform_2(%arg0: i32, %arg1: i32) -> (i32, i32) {
    %c0_i32 = arith.constant 0 : i32
    %c0_i32_0 = arith.constant 0 : i32
    %c0_i32_1 = arith.constant 0 : i32
    return %c0_i32, %c0_i32_0 : i32, i32
  }
  func.func @transform_3(%arg0: i32, %arg1: i32) -> (i32, i32, i32) {
    %c0_i32 = arith.constant 0 : i32
    %c0_i32_0 = arith.constant 0 : i32
    return %arg0, %arg1, %c0_i32 : i32, i32, i32
  }
}

module attributes {stable_mosaic.version = 11 : i64} {
  func.func @_mm_stats_kernel(%arg0: i32, %arg1: i32, %arg2: memref<1x128x256xbf16, #tpu.memory_space<vmem>>, %arg3: memref<1x256x128xbf16, #tpu.memory_space<vmem>>, %arg4: memref<1x128x128xbf16, #tpu.memory_space<vmem>>, %arg5: memref<1x8x128xf32, #tpu.memory_space<vmem>>, %arg6: memref<1x8x128xf32, #tpu.memory_space<vmem>>) attributes {dimension_semantics = [#tpu.dimension_semantics<parallel>, #tpu.dimension_semantics<parallel>], iteration_bounds = array<i64: 4, 1>, scalar_prefetch = 0 : i64, scratch_operands = 0 : i64, tpu.core_type = #tpu.core_type<tc>, window_params = [{transform_indices = @transform_0, window_bounds = array<i64: 1, 128, 256>}, {transform_indices = @transform_1, window_bounds = array<i64: 1, 256, 128>}, {transform_indices = @transform_2, window_bounds = array<i64: 1, 128, 128>}, {transform_indices = @transform_3, window_bounds = array<i64: 1, 8, 128>}, {transform_indices = @transform_4, window_bounds = array<i64: 1, 8, 128>}]} {
    %c0 = arith.constant 0 : index
    %c0_0 = arith.constant 0 : index
    %c0_1 = arith.constant 0 : index
    %0 = vector.load %arg2[%c0, %c0_0, %c0_1] : memref<1x128x256xbf16, #tpu.memory_space<vmem>>, vector<1x128x256xbf16>
    %1 = vector.shape_cast %0 : vector<1x128x256xbf16> to vector<128x256xbf16>
    %c0_2 = arith.constant 0 : index
    %c0_3 = arith.constant 0 : index
    %c0_4 = arith.constant 0 : index
    %2 = vector.load %arg3[%c0_2, %c0_3, %c0_4] : memref<1x256x128xbf16, #tpu.memory_space<vmem>>, vector<1x256x128xbf16>
    %3 = vector.shape_cast %2 : vector<1x256x128xbf16> to vector<256x128xbf16>
    %cst = arith.constant dense<0.000000e+00> : vector<128x128xf32>
    %4 = tpu.matmul %1, %3, %cst {dimension_numbers = #tpu.dot_dimension_numbers<[1], [0], [0], [1], [0, 0, 1, 1], [], []>} : vector<128x256xbf16>, vector<256x128xbf16>, vector<128x128xf32> -> vector<128x128xf32>
    %5 = arith.truncf %4 : vector<128x128xf32> to vector<128x128xbf16>
    %c0_5 = arith.constant 0 : index
    %c0_6 = arith.constant 0 : index
    %c0_7 = arith.constant 0 : index
    %6 = vector.load %arg4[%c0_5, %c0_6, %c0_7] : memref<1x128x128xbf16, #tpu.memory_space<vmem>>, vector<1x128x128xbf16>
    %7 = vector.shape_cast %6 : vector<1x128x128xbf16> to vector<128x128xbf16>
    %8 = vector.shape_cast %5 : vector<128x128xbf16> to vector<1x128x128xbf16>
    tpu.vector_store %arg4[%c0_5, %c0_6, %c0_7], %8 {strides = array<i32>} : memref<1x128x128xbf16, #tpu.memory_space<vmem>>, vector<1x128x128xbf16>,
    %cst_8 = arith.constant dense<0.000000e+00> : vector<128xf32>
    %9 = vector.multi_reduction <add>, %4, %cst_8 [0] : vector<128x128xf32> to vector<128xf32>
    %10 = vector.shape_cast %9 : vector<128xf32> to vector<1x128xf32>
    %11 = arith.mulf %4, %4 : vector<128x128xf32>
    %cst_9 = arith.constant dense<0.000000e+00> : vector<128xf32>
    %12 = vector.multi_reduction <add>, %11, %cst_9 [0] : vector<128x128xf32> to vector<128xf32>
    %13 = vector.shape_cast %12 : vector<128xf32> to vector<1x128xf32>
    %14 = vector.shape_cast %10 : vector<1x128xf32> to vector<1x128xf32>
    %15 = vector.broadcast %14 : vector<1x128xf32> to vector<8x128xf32>
    %c0_10 = arith.constant 0 : index
    %c0_11 = arith.constant 0 : index
    %c0_12 = arith.constant 0 : index
    %16 = vector.load %arg5[%c0_10, %c0_11, %c0_12] : memref<1x8x128xf32, #tpu.memory_space<vmem>>, vector<1x8x128xf32>
    %17 = vector.shape_cast %16 : vector<1x8x128xf32> to vector<8x128xf32>
    %18 = vector.shape_cast %15 : vector<8x128xf32> to vector<1x8x128xf32>
    tpu.vector_store %arg5[%c0_10, %c0_11, %c0_12], %18 {strides = array<i32>} : memref<1x8x128xf32, #tpu.memory_space<vmem>>, vector<1x8x128xf32>,
    %19 = vector.shape_cast %13 : vector<1x128xf32> to vector<1x128xf32>
    %20 = vector.broadcast %19 : vector<1x128xf32> to vector<8x128xf32>
    %c0_13 = arith.constant 0 : index
    %c0_14 = arith.constant 0 : index
    %c0_15 = arith.constant 0 : index
    %21 = vector.load %arg6[%c0_13, %c0_14, %c0_15] : memref<1x8x128xf32, #tpu.memory_space<vmem>>, vector<1x8x128xf32>
    %22 = vector.shape_cast %21 : vector<1x8x128xf32> to vector<8x128xf32>
    %23 = vector.shape_cast %20 : vector<8x128xf32> to vector<1x8x128xf32>
    tpu.vector_store %arg6[%c0_13, %c0_14, %c0_15], %23 {strides = array<i32>} : memref<1x8x128xf32, #tpu.memory_space<vmem>>, vector<1x8x128xf32>,
    return
  }
  func.func @transform_0(%arg0: i32, %arg1: i32) -> (i32, i32, i32) {
    %c0_i32 = arith.constant 0 : i32
    %c0_i32_0 = arith.constant 0 : i32
    return %arg0, %arg1, %c0_i32 : i32, i32, i32
  }
  func.func @transform_1(%arg0: i32, %arg1: i32) -> (i32, i32, i32) {
    %c0_i32 = arith.constant 0 : i32
    %c0_i32_0 = arith.constant 0 : i32
    %c0_i32_1 = arith.constant 0 : i32
    return %arg0, %c0_i32, %c0_i32_0 : i32, i32, i32
  }
  func.func @transform_2(%arg0: i32, %arg1: i32) -> (i32, i32, i32) {
    %c0_i32 = arith.constant 0 : i32
    %c0_i32_0 = arith.constant 0 : i32
    return %arg0, %arg1, %c0_i32 : i32, i32, i32
  }
  func.func @transform_3(%arg0: i32, %arg1: i32) -> (i32, i32, i32) {
    %c0_i32 = arith.constant 0 : i32
    %c0_i32_0 = arith.constant 0 : i32
    return %arg0, %arg1, %c0_i32 : i32, i32, i32
  }
  func.func @transform_4(%arg0: i32, %arg1: i32) -> (i32, i32, i32) {
    %c0_i32 = arith.constant 0 : i32
    %c0_i32_0 = arith.constant 0 : i32
    return %arg0, %arg1, %c0_i32 : i32, i32, i32
  }
}

module attributes {stable_mosaic.version = 11 : i64} {
  func.func @_bn_act_kernel(%arg0: i32, %arg1: i32, %arg2: memref<1x128x128xbf16, #tpu.memory_space<vmem>>, %arg3: memref<1x128xf32, #tpu.memory_space<vmem>>, %arg4: memref<1x128xf32, #tpu.memory_space<vmem>>, %arg5: memref<1x128x128xbf16, #tpu.memory_space<vmem>>) attributes {dimension_semantics = [#tpu.dimension_semantics<parallel>, #tpu.dimension_semantics<parallel>], iteration_bounds = array<i64: 4, 1>, scalar_prefetch = 0 : i64, scratch_operands = 0 : i64, tpu.core_type = #tpu.core_type<tc>, window_params = [{transform_indices = @transform_0, window_bounds = array<i64: 1, 128, 128>}, {pipeline_mode = #tpu.pipeline_mode<synchronous>, transform_indices = @transform_1, window_bounds = array<i64: 1, 128>}, {pipeline_mode = #tpu.pipeline_mode<synchronous>, transform_indices = @transform_2, window_bounds = array<i64: 1, 128>}, {transform_indices = @transform_3, window_bounds = array<i64: 1, 128, 128>}]} {
    %c0 = arith.constant 0 : index
    %c0_0 = arith.constant 0 : index
    %c0_1 = arith.constant 0 : index
    %0 = vector.load %arg2[%c0, %c0_0, %c0_1] : memref<1x128x128xbf16, #tpu.memory_space<vmem>>, vector<1x128x128xbf16>
    %1 = vector.shape_cast %0 : vector<1x128x128xbf16> to vector<128x128xbf16>
    %2 = arith.extf %1 : vector<128x128xbf16> to vector<128x128xf32>
    %c0_2 = arith.constant 0 : index
    %c0_3 = arith.constant 0 : index
    %3 = vector.load %arg3[%c0_2, %c0_3] : memref<1x128xf32, #tpu.memory_space<vmem>>, vector<1x128xf32>
    %4 = vector.broadcast %3 : vector<1x128xf32> to vector<128x128xf32>
    %5 = arith.mulf %2, %4 : vector<128x128xf32>
    %c0_4 = arith.constant 0 : index
    %c0_5 = arith.constant 0 : index
    %6 = vector.load %arg4[%c0_4, %c0_5] : memref<1x128xf32, #tpu.memory_space<vmem>>, vector<1x128xf32>
    %7 = vector.broadcast %6 : vector<1x128xf32> to vector<128x128xf32>
    %8 = arith.addf %5, %7 : vector<128x128xf32>
    %cst = arith.constant 0.000000e+00 : f32
    %9 = vector.broadcast %cst : f32 to vector<128x128xf32>
    %10 = arith.cmpf ogt, %8, %9 : vector<128x128xf32>
    %cst_6 = arith.constant 2.000000e-01 : f32
    %11 = vector.broadcast %cst_6 : f32 to vector<128x128xf32>
    %12 = arith.mulf %11, %8 : vector<128x128xf32>
    %13 = arith.select %10, %8, %12 : vector<128x128xi1>, vector<128x128xf32>
    %14 = arith.truncf %13 : vector<128x128xf32> to vector<128x128xbf16>
    %c0_7 = arith.constant 0 : index
    %c0_8 = arith.constant 0 : index
    %c0_9 = arith.constant 0 : index
    %15 = vector.load %arg5[%c0_7, %c0_8, %c0_9] : memref<1x128x128xbf16, #tpu.memory_space<vmem>>, vector<1x128x128xbf16>
    %16 = vector.shape_cast %15 : vector<1x128x128xbf16> to vector<128x128xbf16>
    %17 = vector.shape_cast %14 : vector<128x128xbf16> to vector<1x128x128xbf16>
    tpu.vector_store %arg5[%c0_7, %c0_8, %c0_9], %17 {strides = array<i32>} : memref<1x128x128xbf16, #tpu.memory_space<vmem>>, vector<1x128x128xbf16>,
    return
  }
  func.func @transform_0(%arg0: i32, %arg1: i32) -> (i32, i32, i32) {
    %c0_i32 = arith.constant 0 : i32
    %c0_i32_0 = arith.constant 0 : i32
    return %arg0, %arg1, %c0_i32 : i32, i32, i32
  }
  func.func @transform_1(%arg0: i32, %arg1: i32) -> (i32, i32) {
    %c0_i32 = arith.constant 0 : i32
    %c0_i32_0 = arith.constant 0 : i32
    %c0_i32_1 = arith.constant 0 : i32
    return %c0_i32, %c0_i32_0 : i32, i32
  }
  func.func @transform_2(%arg0: i32, %arg1: i32) -> (i32, i32) {
    %c0_i32 = arith.constant 0 : i32
    %c0_i32_0 = arith.constant 0 : i32
    %c0_i32_1 = arith.constant 0 : i32
    return %c0_i32, %c0_i32_0 : i32, i32
  }
  func.func @transform_3(%arg0: i32, %arg1: i32) -> (i32, i32, i32) {
    %c0_i32 = arith.constant 0 : i32
    %c0_i32_0 = arith.constant 0 : i32
    return %arg0, %arg1, %c0_i32 : i32, i32, i32
  }
}

module attributes {stable_mosaic.version = 11 : i64} {
  func.func @_mm_stats_kernel(%arg0: i32, %arg1: i32, %arg2: memref<1x512x128xbf16, #tpu.memory_space<vmem>>, %arg3: memref<1x128x128xbf16, #tpu.memory_space<vmem>>, %arg4: memref<1x512x128xbf16, #tpu.memory_space<vmem>>, %arg5: memref<1x8x128xf32, #tpu.memory_space<vmem>>, %arg6: memref<1x8x128xf32, #tpu.memory_space<vmem>>) attributes {dimension_semantics = [#tpu.dimension_semantics<parallel>, #tpu.dimension_semantics<parallel>], iteration_bounds = array<i64: 4, 1>, scalar_prefetch = 0 : i64, scratch_operands = 0 : i64, tpu.core_type = #tpu.core_type<tc>, window_params = [{transform_indices = @transform_0, window_bounds = array<i64: 1, 512, 128>}, {transform_indices = @transform_1, window_bounds = array<i64: 1, 128, 128>}, {transform_indices = @transform_2, window_bounds = array<i64: 1, 512, 128>}, {transform_indices = @transform_3, window_bounds = array<i64: 1, 8, 128>}, {transform_indices = @transform_4, window_bounds = array<i64: 1, 8, 128>}]} {
    %c0 = arith.constant 0 : index
    %c0_0 = arith.constant 0 : index
    %c0_1 = arith.constant 0 : index
    %0 = vector.load %arg2[%c0, %c0_0, %c0_1] : memref<1x512x128xbf16, #tpu.memory_space<vmem>>, vector<1x512x128xbf16>
    %1 = vector.shape_cast %0 : vector<1x512x128xbf16> to vector<512x128xbf16>
    %c0_2 = arith.constant 0 : index
    %c0_3 = arith.constant 0 : index
    %c0_4 = arith.constant 0 : index
    %2 = vector.load %arg3[%c0_2, %c0_3, %c0_4] : memref<1x128x128xbf16, #tpu.memory_space<vmem>>, vector<1x128x128xbf16>
    %3 = vector.shape_cast %2 : vector<1x128x128xbf16> to vector<128x128xbf16>
    %cst = arith.constant dense<0.000000e+00> : vector<512x128xf32>
    %4 = tpu.matmul %1, %3, %cst {dimension_numbers = #tpu.dot_dimension_numbers<[1], [0], [0], [1], [0, 0, 1, 1], [], []>} : vector<512x128xbf16>, vector<128x128xbf16>, vector<512x128xf32> -> vector<512x128xf32>
    %5 = arith.truncf %4 : vector<512x128xf32> to vector<512x128xbf16>
    %c0_5 = arith.constant 0 : index
    %c0_6 = arith.constant 0 : index
    %c0_7 = arith.constant 0 : index
    %6 = vector.load %arg4[%c0_5, %c0_6, %c0_7] : memref<1x512x128xbf16, #tpu.memory_space<vmem>>, vector<1x512x128xbf16>
    %7 = vector.shape_cast %6 : vector<1x512x128xbf16> to vector<512x128xbf16>
    %8 = vector.shape_cast %5 : vector<512x128xbf16> to vector<1x512x128xbf16>
    tpu.vector_store %arg4[%c0_5, %c0_6, %c0_7], %8 {strides = array<i32>} : memref<1x512x128xbf16, #tpu.memory_space<vmem>>, vector<1x512x128xbf16>,
    %cst_8 = arith.constant dense<0.000000e+00> : vector<128xf32>
    %9 = vector.multi_reduction <add>, %4, %cst_8 [0] : vector<512x128xf32> to vector<128xf32>
    %10 = vector.shape_cast %9 : vector<128xf32> to vector<1x128xf32>
    %11 = arith.mulf %4, %4 : vector<512x128xf32>
    %cst_9 = arith.constant dense<0.000000e+00> : vector<128xf32>
    %12 = vector.multi_reduction <add>, %11, %cst_9 [0] : vector<512x128xf32> to vector<128xf32>
    %13 = vector.shape_cast %12 : vector<128xf32> to vector<1x128xf32>
    %14 = vector.shape_cast %10 : vector<1x128xf32> to vector<1x128xf32>
    %15 = vector.broadcast %14 : vector<1x128xf32> to vector<8x128xf32>
    %c0_10 = arith.constant 0 : index
    %c0_11 = arith.constant 0 : index
    %c0_12 = arith.constant 0 : index
    %16 = vector.load %arg5[%c0_10, %c0_11, %c0_12] : memref<1x8x128xf32, #tpu.memory_space<vmem>>, vector<1x8x128xf32>
    %17 = vector.shape_cast %16 : vector<1x8x128xf32> to vector<8x128xf32>
    %18 = vector.shape_cast %15 : vector<8x128xf32> to vector<1x8x128xf32>
    tpu.vector_store %arg5[%c0_10, %c0_11, %c0_12], %18 {strides = array<i32>} : memref<1x8x128xf32, #tpu.memory_space<vmem>>, vector<1x8x128xf32>,
    %19 = vector.shape_cast %13 : vector<1x128xf32> to vector<1x128xf32>
    %20 = vector.broadcast %19 : vector<1x128xf32> to vector<8x128xf32>
    %c0_13 = arith.constant 0 : index
    %c0_14 = arith.constant 0 : index
    %c0_15 = arith.constant 0 : index
    %21 = vector.load %arg6[%c0_13, %c0_14, %c0_15] : memref<1x8x128xf32, #tpu.memory_space<vmem>>, vector<1x8x128xf32>
    %22 = vector.shape_cast %21 : vector<1x8x128xf32> to vector<8x128xf32>
    %23 = vector.shape_cast %20 : vector<8x128xf32> to vector<1x8x128xf32>
    tpu.vector_store %arg6[%c0_13, %c0_14, %c0_15], %23 {strides = array<i32>} : memref<1x8x128xf32, #tpu.memory_space<vmem>>, vector<1x8x128xf32>,
    return
  }
  func.func @transform_0(%arg0: i32, %arg1: i32) -> (i32, i32, i32) {
    %c0_i32 = arith.constant 0 : i32
    %c0_i32_0 = arith.constant 0 : i32
    return %arg0, %arg1, %c0_i32 : i32, i32, i32
  }
  func.func @transform_1(%arg0: i32, %arg1: i32) -> (i32, i32, i32) {
    %c0_i32 = arith.constant 0 : i32
    %c0_i32_0 = arith.constant 0 : i32
    %c0_i32_1 = arith.constant 0 : i32
    return %arg0, %c0_i32, %c0_i32_0 : i32, i32, i32
  }
  func.func @transform_2(%arg0: i32, %arg1: i32) -> (i32, i32, i32) {
    %c0_i32 = arith.constant 0 : i32
    %c0_i32_0 = arith.constant 0 : i32
    return %arg0, %arg1, %c0_i32 : i32, i32, i32
  }
  func.func @transform_3(%arg0: i32, %arg1: i32) -> (i32, i32, i32) {
    %c0_i32 = arith.constant 0 : i32
    %c0_i32_0 = arith.constant 0 : i32
    return %arg0, %arg1, %c0_i32 : i32, i32, i32
  }
  func.func @transform_4(%arg0: i32, %arg1: i32) -> (i32, i32, i32) {
    %c0_i32 = arith.constant 0 : i32
    %c0_i32_0 = arith.constant 0 : i32
    return %arg0, %arg1, %c0_i32 : i32, i32, i32
  }
}

module attributes {stable_mosaic.version = 11 : i64} {
  func.func @_bn_act_kernel(%arg0: i32, %arg1: i32, %arg2: memref<1x512x128xbf16, #tpu.memory_space<vmem>>, %arg3: memref<1x128xf32, #tpu.memory_space<vmem>>, %arg4: memref<1x128xf32, #tpu.memory_space<vmem>>, %arg5: memref<1x512x128xbf16, #tpu.memory_space<vmem>>) attributes {dimension_semantics = [#tpu.dimension_semantics<parallel>, #tpu.dimension_semantics<parallel>], iteration_bounds = array<i64: 4, 1>, scalar_prefetch = 0 : i64, scratch_operands = 0 : i64, tpu.core_type = #tpu.core_type<tc>, window_params = [{transform_indices = @transform_0, window_bounds = array<i64: 1, 512, 128>}, {pipeline_mode = #tpu.pipeline_mode<synchronous>, transform_indices = @transform_1, window_bounds = array<i64: 1, 128>}, {pipeline_mode = #tpu.pipeline_mode<synchronous>, transform_indices = @transform_2, window_bounds = array<i64: 1, 128>}, {transform_indices = @transform_3, window_bounds = array<i64: 1, 512, 128>}]} {
    %c0 = arith.constant 0 : index
    %c0_0 = arith.constant 0 : index
    %c0_1 = arith.constant 0 : index
    %0 = vector.load %arg2[%c0, %c0_0, %c0_1] : memref<1x512x128xbf16, #tpu.memory_space<vmem>>, vector<1x512x128xbf16>
    %1 = vector.shape_cast %0 : vector<1x512x128xbf16> to vector<512x128xbf16>
    %2 = arith.extf %1 : vector<512x128xbf16> to vector<512x128xf32>
    %c0_2 = arith.constant 0 : index
    %c0_3 = arith.constant 0 : index
    %3 = vector.load %arg3[%c0_2, %c0_3] : memref<1x128xf32, #tpu.memory_space<vmem>>, vector<1x128xf32>
    %4 = vector.broadcast %3 : vector<1x128xf32> to vector<512x128xf32>
    %5 = arith.mulf %2, %4 : vector<512x128xf32>
    %c0_4 = arith.constant 0 : index
    %c0_5 = arith.constant 0 : index
    %6 = vector.load %arg4[%c0_4, %c0_5] : memref<1x128xf32, #tpu.memory_space<vmem>>, vector<1x128xf32>
    %7 = vector.broadcast %6 : vector<1x128xf32> to vector<512x128xf32>
    %8 = arith.addf %5, %7 : vector<512x128xf32>
    %cst = arith.constant 0.000000e+00 : f32
    %9 = vector.broadcast %cst : f32 to vector<512x128xf32>
    %10 = arith.cmpf ogt, %8, %9 : vector<512x128xf32>
    %cst_6 = arith.constant 2.000000e-01 : f32
    %11 = vector.broadcast %cst_6 : f32 to vector<512x128xf32>
    %12 = arith.mulf %11, %8 : vector<512x128xf32>
    %13 = arith.select %10, %8, %12 : vector<512x128xi1>, vector<512x128xf32>
    %14 = arith.truncf %13 : vector<512x128xf32> to vector<512x128xbf16>
    %c0_7 = arith.constant 0 : index
    %c0_8 = arith.constant 0 : index
    %c0_9 = arith.constant 0 : index
    %15 = vector.load %arg5[%c0_7, %c0_8, %c0_9] : memref<1x512x128xbf16, #tpu.memory_space<vmem>>, vector<1x512x128xbf16>
    %16 = vector.shape_cast %15 : vector<1x512x128xbf16> to vector<512x128xbf16>
    %17 = vector.shape_cast %14 : vector<512x128xbf16> to vector<1x512x128xbf16>
    tpu.vector_store %arg5[%c0_7, %c0_8, %c0_9], %17 {strides = array<i32>} : memref<1x512x128xbf16, #tpu.memory_space<vmem>>, vector<1x512x128xbf16>,
    return
  }
  func.func @transform_0(%arg0: i32, %arg1: i32) -> (i32, i32, i32) {
    %c0_i32 = arith.constant 0 : i32
    %c0_i32_0 = arith.constant 0 : i32
    return %arg0, %arg1, %c0_i32 : i32, i32, i32
  }
  func.func @transform_1(%arg0: i32, %arg1: i32) -> (i32, i32) {
    %c0_i32 = arith.constant 0 : i32
    %c0_i32_0 = arith.constant 0 : i32
    %c0_i32_1 = arith.constant 0 : i32
    return %c0_i32, %c0_i32_0 : i32, i32
  }
  func.func @transform_2(%arg0: i32, %arg1: i32) -> (i32, i32) {
    %c0_i32 = arith.constant 0 : i32
    %c0_i32_0 = arith.constant 0 : i32
    %c0_i32_1 = arith.constant 0 : i32
    return %c0_i32, %c0_i32_0 : i32, i32
  }
  func.func @transform_3(%arg0: i32, %arg1: i32) -> (i32, i32, i32) {
    %c0_i32 = arith.constant 0 : i32
    %c0_i32_0 = arith.constant 0 : i32
    return %arg0, %arg1, %c0_i32 : i32, i32, i32
  }
}

module attributes {stable_mosaic.version = 11 : i64} {
  func.func @_mm_tanh_kernel(%arg0: i32, %arg1: i32, %arg2: memref<1x2048x128xbf16, #tpu.memory_space<vmem>>, %arg3: memref<1x128x128xbf16, #tpu.memory_space<vmem>>, %arg4: memref<1x2048x128xf32, #tpu.memory_space<vmem>>) attributes {dimension_semantics = [#tpu.dimension_semantics<parallel>, #tpu.dimension_semantics<parallel>], iteration_bounds = array<i64: 4, 1>, scalar_prefetch = 0 : i64, scratch_operands = 0 : i64, tpu.core_type = #tpu.core_type<tc>, window_params = [{transform_indices = @transform_0, window_bounds = array<i64: 1, 2048, 128>}, {transform_indices = @transform_1, window_bounds = array<i64: 1, 128, 128>}, {transform_indices = @transform_2, window_bounds = array<i64: 1, 2048, 128>}]} {
    %c0 = arith.constant 0 : index
    %c0_0 = arith.constant 0 : index
    %c0_1 = arith.constant 0 : index
    %0 = vector.load %arg2[%c0, %c0_0, %c0_1] : memref<1x2048x128xbf16, #tpu.memory_space<vmem>>, vector<1x2048x128xbf16>
    %1 = vector.shape_cast %0 : vector<1x2048x128xbf16> to vector<2048x128xbf16>
    %c0_2 = arith.constant 0 : index
    %c0_3 = arith.constant 0 : index
    %c0_4 = arith.constant 0 : index
    %2 = vector.load %arg3[%c0_2, %c0_3, %c0_4] : memref<1x128x128xbf16, #tpu.memory_space<vmem>>, vector<1x128x128xbf16>
    %3 = vector.shape_cast %2 : vector<1x128x128xbf16> to vector<128x128xbf16>
    %cst = arith.constant dense<0.000000e+00> : vector<2048x128xf32>
    %4 = tpu.matmul %1, %3, %cst {dimension_numbers = #tpu.dot_dimension_numbers<[1], [0], [0], [1], [0, 0, 1, 1], [], []>} : vector<2048x128xbf16>, vector<128x128xbf16>, vector<2048x128xf32> -> vector<2048x128xf32>
    %5 = math.tanh %4 : vector<2048x128xf32>
    %c0_5 = arith.constant 0 : index
    %c0_6 = arith.constant 0 : index
    %c0_7 = arith.constant 0 : index
    %6 = vector.load %arg4[%c0_5, %c0_6, %c0_7] : memref<1x2048x128xf32, #tpu.memory_space<vmem>>, vector<1x2048x128xf32>
    %7 = vector.shape_cast %6 : vector<1x2048x128xf32> to vector<2048x128xf32>
    %8 = vector.shape_cast %5 : vector<2048x128xf32> to vector<1x2048x128xf32>
    tpu.vector_store %arg4[%c0_5, %c0_6, %c0_7], %8 {strides = array<i32>} : memref<1x2048x128xf32, #tpu.memory_space<vmem>>, vector<1x2048x128xf32>,
    return
  }
  func.func @transform_0(%arg0: i32, %arg1: i32) -> (i32, i32, i32) {
    %c0_i32 = arith.constant 0 : i32
    %c0_i32_0 = arith.constant 0 : i32
    return %arg0, %arg1, %c0_i32 : i32, i32, i32
  }
  func.func @transform_1(%arg0: i32, %arg1: i32) -> (i32, i32, i32) {
    %c0_i32 = arith.constant 0 : i32
    %c0_i32_0 = arith.constant 0 : i32
    %c0_i32_1 = arith.constant 0 : i32
    return %arg0, %c0_i32, %c0_i32_0 : i32, i32, i32
  }
  func.func @transform_2(%arg0: i32, %arg1: i32) -> (i32, i32, i32) {
    %c0_i32 = arith.constant 0 : i32
    %c0_i32_0 = arith.constant 0 : i32
    return %arg0, %arg1, %c0_i32 : i32, i32, i32
  }
}

</mosaic_0001>

<llo_original>
// kernel: dcgan_generator.10
$region0: #{dcgan_generator.10}
  #allocation0 [shape = 'u32[]', space=smem, size = 0x4, offset = 0x4, fixed_abs, tag = 'smem constant byte address 0x4 - core index']
  #allocation1 [shape = 'u32[144,128]{1,0:T(1,128)}', space=vmem, size = 0x12000, scoped, tag = 'internal scratch']
  %s0 = inlined_call_operand.vmem [shape: bf16[1,32,128], index: 0, kind: input, shape index: {}]
  %s1 = inlined_call_operand.vmem [shape: f32[1,128], index: 1, kind: input, shape index: {}]
  %s2 = inlined_call_operand.vmem [shape: f32[1,128], index: 2, kind: input, shape index: {}]
  %s3 = inlined_call_operand.vmem [shape: bf16[1,32,128], index: 3, kind: output, shape index: {}]
  %s4 = sld [smem:[#allocation0]]
  $region22: #{dcgan_generator.10} parent=0
    _
  %s6 = ssub.s32 1, %s4
  %s7 = scalar_select 0, %s6, %s4
  // Predicated region
  $region2: #{dcgan_generator.10} parent=0 // pred_check
    _
  $region3: #{dcgan_generator.10} parent=0 // pred_check_branch
    %9 = sbr.rel (0) target = $region5
  $region4: #{dcgan_generator.10} parent=0 // pred_region
    _
  $region5: #{dcgan_generator.10} parent=0 // pred_fallthru
    _
  // Predicated region
  $region6: #{dcgan_generator.10} parent=0 // pred_check
    _
  $region7: #{dcgan_generator.10} parent=0 // pred_check_branch
    %11 = sbr.rel (0) target = $region9
  $region8: #{dcgan_generator.10} parent=0 // pred_region
    _
  $region9: #{dcgan_generator.10} parent=0 // pred_fallthru
    _
  // Predicated region
  $region10: #{dcgan_generator.10} parent=0 // pred_check
    _
  $region11: #{dcgan_generator.10} parent=0 // pred_check_branch
    %13 = sbr.rel (0) target = $region13
  $region12: #{dcgan_generator.10} parent=0 // pred_region
    _
  $region13: #{dcgan_generator.10} parent=0 // pred_fallthru
    _
  %v14 = vld [vmem:[%s0] sm:$0xf]
  %v15 = vld [vmem:[%s0 + $0x4] sm:$0xf]
  %v16 = vld [vmem:[%s0 + $0x8] sm:$0xf]
  %v17 = vld [vmem:[%s0 + $0xc] sm:$0xf]
  %v18 = vunpack.c.l.bf16 %v14
  %v19 = vunpack.c.l.bf16 %v15
  %v20 = vunpack.c.l.bf16 %v16
  %v21 = vunpack.c.l.bf16 %v17
  %v22 = vld [vmem:[%s1] sm:$0x1]
  %v24 = vlaneseq
  %v25 = vshrl.u32 %v24, 7
  %v26 = vsub.s32 0, %v25
  %v27 = vrot.slane %v22, %v26
  %v29 = vmul.f32 %v18, %v27
  %v30 = vmul.f32 %v19, %v27
  %v31 = vmul.f32 %v20, %v27
  %v32 = vmul.f32 %v21, %v27
  %v33 = vld [vmem:[%s2] sm:$0x1]
  %v35 = vlaneseq
  %v36 = vshrl.u32 %v35, 7
  %v37 = vsub.s32 0, %v36
  %v38 = vrot.slane %v33, %v37
  %v40 = vadd.f32 %v29, %v38
  %v41 = vadd.f32 %v30, %v38
  %v42 = vadd.f32 %v31, %v38
  %v43 = vadd.f32 %v32, %v38
  %v44 = vmax.f32 %v40, 0.0
  %v45 = vmax.f32 %v41, 0.0
  %v46 = vmax.f32 %v42, 0.0
  %v47 = vmax.f32 %v43, 0.0
  %v48 = vpack.c.bf16 %v45, %v44
  %v49 = vpack.c.bf16 %v47, %v46
  %v52 = vunpack.c.l.b16 %v48
  %v53 = vunpack.c.h.b16 %v48
  %v54 = vunpack.c.l.b16 %v49
  %v55 = vunpack.c.h.b16 %v49
  %v56 = vpack.c.b16 %v52, %v52
  %v57 = vpack.c.b16 %v53, %v53
  %v58 = vpack.c.b16 %v54, %v54
  %v59 = vpack.c.b16 %v55, %v55
  %64 = vst [vmem:[%s3] sm:$0xf] %v56
  %65 = vst [vmem:[%s3 + $0x4] sm:$0xf] %v57
  %66 = vst [vmem:[%s3 + $0x8] sm:$0xf] %v58
  %67 = vst [vmem:[%s3 + $0xc] sm:$0xf] %v59
  // Predicated region
  $region14: #{dcgan_generator.10} parent=0 // pred_check
    _
  $region15: #{dcgan_generator.10} parent=0 // pred_check_branch
    %69 = sbr.rel (0) target = $region17
  $region16: #{dcgan_generator.10} parent=0 // pred_region
    _
  $region17: #{dcgan_generator.10} parent=0 // pred_fallthru
    _
  // Predicated region
  $region18: #{dcgan_generator.10} parent=0 // pred_check
    _
  $region19: #{dcgan_generator.10} parent=0 // pred_check_branch
    %71 = sbr.rel (0) target = $region21
  $region20: #{dcgan_generator.10} parent=0 // pred_region
    _
  $region21: #{dcgan_generator.10} parent=0 // pred_fallthru
    _

// kernel: dcgan_generator.9
$region0: #{dcgan_generator.9}
  #allocation0 [shape = 'u32[]', space=smem, size = 0x4, offset = 0x4, fixed_abs, tag = 'smem constant byte address 0x4 - core index']
  #allocation1 [shape = 'u32[144,128]{1,0:T(1,128)}', space=vmem, size = 0x12000, scoped, tag = 'internal scratch']
  %s0 = inlined_call_operand.vmem [shape: bf16[1,32,128], index: 0, kind: input, shape index: {}]
  %s1 = inlined_call_operand.hbm [shape: bf16[1,128,128], index: 1, kind: input, shape index: {}]
  %s2 = inlined_call_operand.vmem [shape: bf16[1,32,128], index: 2, kind: output, shape index: {0}]
  %s3 = inlined_call_operand.vmem [shape: f32[1,8,128], index: 3, kind: output, shape index: {1}]
  %s4 = inlined_call_operand.vmem [shape: f32[1,8,128], index: 4, kind: output, shape index: {2}]
  %5 = xla_tuple %s2, %s3, %s4
  %s6 = sld [smem:[#allocation0]]
  $region38: #{dcgan_generator.9} parent=0
    _
  %s8 = ssub.s32 1, %s6
  %s9 = scalar_select 0, %s8, %s6
  $region1: #{dcgan_generator.9} parent=0
    #allocation2 [shape = 'u8[32768]{0}', space=vmem, size = 0x8000, scoped, tag = 'input window, operand 1, single buffered']
    #allocation3 [shape = 's32[1]{0}', space=sflag, size = 0x4, scoped, tag = 'scoped memory for dcgan_generator.9']
    %10 = vsyncpa [#allocation3], 0
    // Predicated region
    $region2: #{dcgan_generator.9} parent=1 // pred_check
      _
    $region3: #{dcgan_generator.9} parent=1 // pred_check_branch
      %12 = sbr.rel (0) target = $region5
    $region4: #{dcgan_generator.9} parent=1 // pred_region
      _
    $region5: #{dcgan_generator.9} parent=1 // pred_fallthru
      _
    // Predicated region
    $region6: #{dcgan_generator.9} parent=1 // pred_check
      _
    $region7: #{dcgan_generator.9} parent=1 // pred_check_branch
      %14 = sbr.rel (0) target = $region9
    $region8: #{dcgan_generator.9} parent=1 // pred_region
      %s16 = ssub.s32 1024, 1024
      %17 = vsyncadd [#allocation3], %s16
      %s18 = sshll.u32 [#allocation2], 4
      %s19 = int_to_ptr.vmem [resolvable:$true] %s18
      %24 = dma.hbm_to_vmem [thread:$0]  %s1, 1024, %s19, [#allocation3], 64, 64, 4
    $region9: #{dcgan_generator.9} parent=1 // pred_fallthru
      _
    // Predicated region
    $region10: #{dcgan_generator.9} parent=1 // pred_check
      _
    $region11: #{dcgan_generator.9} parent=1 // pred_check_branch
      %26 = sbr.rel (0) target = $region13
    $region12: #{dcgan_generator.9} parent=1 // pred_region
      %27 = dma.done [#allocation3], 1024
    $region13: #{dcgan_generator.9} parent=1 // pred_fallthru
      _
    %v29 = vld [vmem:[%s0] sm:$0xf]
    %v30 = vld [vmem:[%s0 + $0x4] sm:$0xf]
    %v31 = vld [vmem:[%s0 + $0x8] sm:$0xf]
    %v32 = vld [vmem:[%s0 + $0xc] sm:$0xf]
    %v33 = vld [vmem:[#allocation2] sm:$0xf]
    %v34 = vld [vmem:[#allocation2 + $0x4] sm:$0xf]
    %v35 = vld [vmem:[#allocation2 + $0x8] sm:$0xf]
    %v36 = vld [vmem:[#allocation2 + $0xc] sm:$0xf]
    %v37 = vld [vmem:[#allocation2 + $0x10] sm:$0xf]
    %v38 = vld [vmem:[#allocation2 + $0x14] sm:$0xf]
    %v39 = vld [vmem:[#allocation2 + $0x18] sm:$0xf]
    %v40 = vld [vmem:[#allocation2 + $0x1c] sm:$0xf]
    %v41 = vld [vmem:[#allocation2 + $0x20] sm:$0xf]
    %v42 = vld [vmem:[#allocation2 + $0x24] sm:$0xf]
    %v43 = vld [vmem:[#allocation2 + $0x28] sm:$0xf]
    %v44 = vld [vmem:[#allocation2 + $0x2c] sm:$0xf]
    %v45 = vld [vmem:[#allocation2 + $0x30] sm:$0xf]
    %v46 = vld [vmem:[#allocation2 + $0x34] sm:$0xf]
    %v47 = vld [vmem:[#allocation2 + $0x38] sm:$0xf]
    %v48 = vld [vmem:[#allocation2 + $0x3c] sm:$0xf]
    %v53 = vunpack.c.l.b16 %v29
    %v54 = vunpack.c.l.b16 %v30
    %v55 = vunpack.c.l.b16 %v31
    %v56 = vunpack.c.l.b16 %v32
    %v57 = vpack.c.b16 %v54, %v53
    %v58 = vpack.c.b16 %v56, %v55
    %v77 = vunpack.c.l.b16 %v33
    %v78 = vunpack.c.l.b16 %v34
    %v79 = vunpack.c.l.b16 %v35
    %v80 = vunpack.c.l.b16 %v36
    %v81 = vunpack.c.l.b16 %v37
    %v82 = vunpack.c.l.b16 %v38
    %v83 = vunpack.c.l.b16 %v39
    %v84 = vunpack.c.l.b16 %v40
    %v85 = vunpack.c.l.b16 %v41
    %v86 = vunpack.c.l.b16 %v42
    %v87 = vunpack.c.l.b16 %v43
    %v88 = vunpack.c.l.b16 %v44
    %v89 = vunpack.c.l.b16 %v45
    %v90 = vunpack.c.l.b16 %v46
    %v91 = vunpack.c.l.b16 %v47
    %v92 = vunpack.c.l.b16 %v48
    %v93 = vpack.c.b16 %v78, %v77
    %v94 = vpack.c.b16 %v80, %v79
    %v95 = vpack.c.b16 %v82, %v81
    %v96 = vpack.c.b16 %v84, %v83
    %v97 = vpack.c.b16 %v86, %v85
    %v98 = vpack.c.b16 %v88, %v87
    %v99 = vpack.c.b16 %v90, %v89
    %v100 = vpack.c.b16 %v92, %v91
    %109 = vmatprep.subr.bf16.mxu0 0
    %110 = vmatpush1.bf16.msra.mxu0 %v93
    %111 = vmatprep.subr.bf16.mxu0 0
    %112 = vmatpush1.bf16.msra.mxu0 %v94
    %113 = vmatprep.subr.bf16.mxu0 0
    %114 = vmatpush1.bf16.msra.mxu0 %v95
    %115 = vmatprep.subr.bf16.mxu0 0
    %116 = vmatpush1.bf16.msra.mxu0 %v96
    %117 = vmatprep.subr.bf16.mxu0 0
    %118 = vmatpush1.bf16.msra.mxu0 %v97
    %119 = vmatprep.subr.bf16.mxu0 0
    %120 = vmatpush1.bf16.msra.mxu0 %v98
    %121 = vmatprep.subr.bf16.mxu0 0
    %122 = vmatpush1.bf16.msra.mxu0 %v99
    %123 = vmatprep.subr.bf16.mxu0 0
    %124 = vmatpush1.bf16.msra.mxu0 %v100
    %125 = vmatprep.subr.bf16.mxu0 0
    %126 = vmatpush1.bf16.msra.mxu0 0
    %127 = vmatprep.subr.bf16.mxu0 0
    %128 = vmatpush1.bf16.msra.mxu0 0
    %129 = vmatprep.subr.bf16.mxu0 0
    %130 = vmatpush1.bf16.msra.mxu0 0
    %131 = vmatprep.subr.bf16.mxu0 0
    %132 = vmatpush1.bf16.msra.mxu0 0
    %133 = vmatprep.subr.bf16.mxu0 0
    %134 = vmatpush1.bf16.msra.mxu0 0
    %135 = vmatprep.subr.bf16.mxu0 0
    %136 = vmatpush1.bf16.msra.mxu0 0
    %137 = vmatprep.subr.bf16.mxu0 0
    %138 = vmatpush1.bf16.msra.mxu0 0
    %139 = vmatprep.subr.bf16.mxu0 0
    %140 = vmatpush1.bf16.msra.mxu0 0
    %141 = vmatprep.mubr.bf16.mxu0 0
    %142 = vmatmul.mubr.bf16.gmra.mrb[0].mxu0 %v57
    %v143 = vpop.f32.mrb[0].mxu0
    %v144 = vadd.f32 0.0, %v143
    %v145 = vpop.f32.mrb[0].mxu0
    %v146 = vpop.f32.mrb[0].mxu0
    %v147 = vadd.f32 0.0, %v146
    %v148 = vpop.f32.mrb[0].mxu0
    %149 = vmatprep.mubr.bf16.mxu0 0
    %150 = vmatmul.mubr.bf16.gmra.mrb[0].mxu0 %v58
    %v151 = vpop.f32.mrb[0].mxu0
    %v152 = vadd.f32 0.0, %v151
    %v153 = vpop.f32.mrb[0].mxu0
    %v154 = vpop.f32.mrb[0].mxu0
    %v155 = vadd.f32 0.0, %v154
    %v156 = vpop.f32.mrb[0].mxu0
    %157 = vdwg.mxu0
    %v158 = vpack.c.bf16 %v147, %v144
    %v159 = vpack.c.bf16 %v155, %v152
    %v162 = vunpack.c.l.b16 %v158
    %v163 = vunpack.c.h.b16 %v158
    %v164 = vunpack.c.l.b16 %v159
    %v165 = vunpack.c.h.b16 %v159
    %v166 = vpack.c.b16 %v162, %v162
    %v167 = vpack.c.b16 %v163, %v163
    %v168 = vpack.c.b16 %v164, %v164
    %v169 = vpack.c.b16 %v165, %v165
    %174 = vst [vmem:[%s2] sm:$0xf] %v166
    %175 = vst [vmem:[%s2 + $0x4] sm:$0xf] %v167
    %176 = vst [vmem:[%s2 + $0x8] sm:$0xf] %v168
    %177 = vst [vmem:[%s2 + $0xc] sm:$0xf] %v169
    %v178 = vadd.f32 %v144, %v147
    %v179 = vadd.f32 %v178, %v152
    %v180 = vadd.f32 %v179, %v155
    %v181 = vrot.slane %v180, 4
    %v182 = vadd.f32 %v180, %v181
    %v183 = vrot.slane %v182, 2
    %v184 = vadd.f32 %v182, %v183
    %v185 = vrot.slane %v184, 1
    %v186 = vadd.f32 %v184, %v185
    %v187 = vmul.f32 %v144, %v144
    %v188 = vmul.f32 %v147, %v147
    %v189 = vmul.f32 %v152, %v152
    %v190 = vmul.f32 %v155, %v155
    %v191 = vadd.f32 %v187, %v188
    %v192 = vadd.f32 %v191, %v189
    %v193 = vadd.f32 %v192, %v190
    %v194 = vrot.slane %v193, 4
    %v195 = vadd.f32 %v193, %v194
    %v196 = vrot.slane %v195, 2
    %v197 = vadd.f32 %v195, %v196
    %v198 = vrot.slane %v197, 1
    %v199 = vadd.f32 %v197, %v198
    %200 = vst [vmem:[%s3] sm:$0xff] %v186
    %201 = vst [vmem:[%s4] sm:$0xff] %v199
    // Predicated region
    $region14: #{dcgan_generator.9} parent=1 // pred_check
      _
    $region15: #{dcgan_generator.9} parent=1 // pred_check_branch
      %203 = sbr.rel (0) target = $region17
    $region16: #{dcgan_generator.9} parent=1 // pred_region
      _
    $region17: #{dcgan_generator.9} parent=1 // pred_fallthru
      _
    // Predicated region
    $region18: #{dcgan_generator.9} parent=1 // pred_check
      _
    $region19: #{dcgan_generator.9} parent=1 // pred_check_branch
      %205 = sbr.rel (0) target = $region21
    $region20: #{dcgan_generator.9} parent=1 // pred_region
      _
    $region21: #{dcgan_generator.9} parent=1 // pred_fallthru
      _
    // Predicated region
    $region22: #{dcgan_generator.9} parent=1 // pred_check
      _
    $region23: #{dcgan_generator.9} parent=1 // pred_check_branch
      %207 = sbr.rel (0) target = $region25
    $region24: #{dcgan_generator.9} parent=1 // pred_region
      _
    $region25: #{dcgan_generator.9} parent=1 // pred_fallthru
      _
    // Predicated region
    $region26: #{dcgan_generator.9} parent=1 // pred_check
      _
    $region27: #{dcgan_generator.9} parent=1 // pred_check_branch
      %209 = sbr.rel (0) target = $region29
    $region28: #{dcgan_generator.9} parent=1 // pred_region
      _
    $region29: #{dcgan_generator.9} parent=1 // pred_fallthru
      _
    // Predicated region
    $region30: #{dcgan_generator.9} parent=1 // pred_check
      _
    $region31: #{dcgan_generator.9} parent=1 // pred_check_branch
      %211 = sbr.rel (0) target = $region33
    $region32: #{dcgan_generator.9} parent=1 // pred_region
      _
    $region33: #{dcgan_generator.9} parent=1 // pred_fallthru
      _
    // Predicated region
    $region34: #{dcgan_generator.9} parent=1 // pred_check
      _
    $region35: #{dcgan_generator.9} parent=1 // pred_check_branch
      %213 = sbr.rel (0) target = $region37
    $region36: #{dcgan_generator.9} parent=1 // pred_region
      _
    $region37: #{dcgan_generator.9} parent=1 // pred_fallthru
      _
    %214 = vsyncpa [#allocation3], 1

// kernel: dcgan_generator.11
$region0: #{dcgan_generator.11}
  #allocation0 [shape = 'u32[]', space=smem, size = 0x4, offset = 0x4, fixed_abs, tag = 'smem constant byte address 0x4 - core index']
  #allocation1 [shape = 'u32[144,128]{1,0:T(1,128)}', space=vmem, size = 0x12000, scoped, tag = 'internal scratch']
  %s0 = inlined_call_operand.vmem [shape: bf16[4,32,512], index: 0, kind: input, shape index: {}]
  %s1 = inlined_call_operand.hbm [shape: bf16[4,512,128], index: 1, kind: input, shape index: {}]
  %s2 = inlined_call_operand.vmem [shape: bf16[4,32,128], index: 2, kind: output, shape index: {0}]
  %s3 = inlined_call_operand.vmem [shape: f32[4,8,128], index: 3, kind: output, shape index: {1}]
  %s4 = inlined_call_operand.vmem [shape: f32[4,8,128], index: 4, kind: output, shape index: {2}]
  %5 = xla_tuple %s2, %s3, %s4
  %s6 = sld [smem:[#allocation0]]
  $region61: #{dcgan_generator.11} parent=0
    _
  %s8 = ssub.s32 1, %s6
  %s9 = scalar_select 0, %s8, %s6
  $region1: #{dcgan_generator.11} parent=0
    #allocation2 [shape = 'u8[262144]{0}', space=vmem, size = 0x40000, scoped, tag = 'input window, operand 1']
    #allocation3 [shape = 's32[2]{0}', space=sflag, size = 0x8, scoped, tag = 'scoped memory for dcgan_generator.11']
    %10 = vsyncpa [#allocation3], 0
    %s11 = scalar_lea.sflag [#allocation3], 1
    %12 = vsyncpa %s11, 0
    loop: start=0, step=1, limit=6
    $region2: #{dcgan_generator.11} parent=1 // loop_pre_header
      _
    $region3: #{dcgan_generator.11} parent=1 // loop_header
      %s14 = sphi 0, %s18
      %p15 = scmp.ge.s32.totalorder %s14, 6
      %s21 = sphi 0, %s33
      %s22 = sphi 0, %s29
      %s23 = sphi 0, %s21
      %s24 = sphi 0, %s22
      %s25 = sphi 0, %s23
      %s26 = sphi 0, %s24
      %s38 = sphi 0, %s40
      %s41 = sphi 0, %s38
      %s42 = sphi 0, %s41
      %s58 = sphi 0, %s42
      %s64 = sphi 0, %s66
      %s67 = sphi 0, %s64
      %s68 = sphi 0, %s67
      %s84 = sphi 0, %s68
      %s92 = sphi 0, %s94
      %s95 = sphi 0, %s92
      %s96 = sphi 0, %s95
      %s112 = sphi 0, %s96
      %s120 = sphi 0, %s122
      %s123 = sphi 0, %s120
      %s124 = sphi 0, %s123
      %s140 = sphi 0, %s124
      %s148 = sphi 0, %s150
      %s151 = sphi 0, %s148
      %s152 = sphi 0, %s151
      %s168 = sphi 0, %s152
    $region4: #{dcgan_generator.11} parent=1 // loop_header_branch
      %17 = sbr.rel (%p15) target = $region8
    $region5: #{dcgan_generator.11} parent=1 // loop_body
      %s19 = ssub.s32 %s14, 1
      %s20 = ssub.s32 %s14, 2
      %s27 = sadd.s32 1, %s22
      %p28 = scmp.ge.s32.totalorder %s27, 1
      %s29 = scalar_select %p28, 0, %s27
      %s30 = sadd.s32 1, %s21
      %s31 = scalar_select %p28, %s30, %s21
      %p32 = scmp.ge.s32.totalorder %s31, 4
      %s33 = scalar_select %p32, 0, %s31
      %s34 = ssub.s32 %s21, %s33
      %s35 = ssub.s32 %s22, %s29
      %s36 = sor.u32 %s34, %s35
      %p37 = scmp.eq.s32.totalorder %s36, 0
      %s39 = sadd.s32 %s38, 1
      %s40 = scalar_select %p37, %s38, %s39
      %p43 = pneg %p37
      %p44 = scmp.eq.s32.totalorder %s14, 3
      %p45 = por %p43, %p44
      %p46 = scmp.ne.s32.totalorder %s38, %s41
      %p47 = scmp.eq.s32.totalorder %s14, 0
      %p48 = por %p46, %p47
      %p49 = scmp.ne.s32.totalorder %s38, %s41
      %p50 = scmp.eq.s32.totalorder %s19, 3
      %p51 = por %p49, %p50
      %p52 = scmp.ne.s32.totalorder %s41, %s42
      %p53 = scmp.eq.s32.totalorder %s19, 0
      %p54 = por %p52, %p53
      %p55 = scmp.ne.s32.totalorder %s41, %s42
      %p56 = scmp.eq.s32.totalorder %s20, 3
      %p57 = por %p55, %p56
      %p59 = scmp.ne.s32.totalorder %s42, %s58
      %p60 = scmp.eq.s32.totalorder %s20, 0
      %p61 = por %p59, %p60
      %s62 = ssub.s32 %s21, %s33
      %p63 = scmp.eq.s32.totalorder %s62, 0
      %s65 = sadd.s32 %s64, 1
      %s66 = scalar_select %p63, %s64, %s65
      %p69 = pneg %p63
      %p70 = scmp.eq.s32.totalorder %s14, 3
      %p71 = por %p69, %p70
      %p72 = scmp.ne.s32.totalorder %s64, %s67
      %p73 = scmp.eq.s32.totalorder %s14, 0
      %p74 = por %p72, %p73
      %p75 = scmp.ne.s32.totalorder %s64, %s67
      %p76 = scmp.eq.s32.totalorder %s19, 3
      %p77 = por %p75, %p76
      %p78 = scmp.ne.s32.totalorder %s67, %s68
      %p79 = scmp.eq.s32.totalorder %s19, 0
      %p80 = por %p78, %p79
      %p81 = scmp.ne.s32.totalorder %s67, %s68
      %p82 = scmp.eq.s32.totalorder %s20, 3
      %p83 = por %p81, %p82
      %p85 = scmp.ne.s32.totalorder %s68, %s84
      %p86 = scmp.eq.s32.totalorder %s20, 0
      %p87 = por %p85, %p86
      %s88 = ssub.s32 %s21, %s33
      %s89 = ssub.s32 %s22, %s29
      %s90 = sor.u32 %s88, %s89
      %p91 = scmp.eq.s32.totalorder %s90, 0
      %s93 = sadd.s32 %s92, 1
      %s94 = scalar_select %p91, %s92, %s93
      %p97 = pneg %p91
      %p98 = scmp.eq.s32.totalorder %s14, 3
      %p99 = por %p97, %p98
      %p100 = scmp.ne.s32.totalorder %s92, %s95
      %p101 = scmp.eq.s32.totalorder %s14, 0
      %p102 = por %p100, %p101
      %p103 = scmp.ne.s32.totalorder %s92, %s95
      %p104 = scmp.eq.s32.totalorder %s19, 3
      %p105 = por %p103, %p104
      %p106 = scmp.ne.s32.totalorder %s95, %s96
      %p107 = scmp.eq.s32.totalorder %s19, 0
      %p108 = por %p106, %p107
      %p109 = scmp.ne.s32.totalorder %s95, %s96
      %p110 = scmp.eq.s32.totalorder %s20, 3
      %p111 = por %p109, %p110
      %p113 = scmp.ne.s32.totalorder %s96, %s112
      %p114 = scmp.eq.s32.totalorder %s20, 0
      %p115 = por %p113, %p114
      %s116 = ssub.s32 %s21, %s33
      %s117 = ssub.s32 %s22, %s29
      %s118 = sor.u32 %s116, %s117
      %p119 = scmp.eq.s32.totalorder %s118, 0
      %s121 = sadd.s32 %s120, 1
      %s122 = scalar_select %p119, %s120, %s121
      %p125 = pneg %p119
      %p126 = scmp.eq.s32.totalorder %s14, 3
      %p127 = por %p125, %p126
      %p128 = scmp.ne.s32.totalorder %s120, %s123
      %p129 = scmp.eq.s32.totalorder %s14, 0
      %p130 = por %p128, %p129
      %p131 = scmp.ne.s32.totalorder %s120, %s123
      %p132 = scmp.eq.s32.totalorder %s19, 3
      %p133 = por %p131, %p132
      %p134 = scmp.ne.s32.totalorder %s123, %s124
      %p135 = scmp.eq.s32.totalorder %s19, 0
      %p136 = por %p134, %p135
      %p137 = scmp.ne.s32.totalorder %s123, %s124
      %p138 = scmp.eq.s32.totalorder %s20, 3
      %p139 = por %p137, %p138
      %p141 = scmp.ne.s32.totalorder %s124, %s140
      %p142 = scmp.eq.s32.totalorder %s20, 0
      %p143 = por %p141, %p142
      %s144 = ssub.s32 %s21, %s33
      %s145 = ssub.s32 %s22, %s29
      %s146 = sor.u32 %s144, %s145
      %p147 = scmp.eq.s32.totalorder %s146, 0
      %s149 = sadd.s32 %s148, 1
      %s150 = scalar_select %p147, %s148, %s149
      %p153 = pneg %p147
      %p154 = scmp.eq.s32.totalorder %s14, 3
      %p155 = por %p153, %p154
      %p156 = scmp.ne.s32.totalorder %s148, %s151
      %p157 = scmp.eq.s32.totalorder %s14, 0
      %p158 = por %p156, %p157
      %p159 = scmp.ne.s32.totalorder %s148, %s151
      %p160 = scmp.eq.s32.totalorder %s19, 3
      %p161 = por %p159, %p160
      %p162 = scmp.ne.s32.totalorder %s151, %s152
      %p163 = scmp.eq.s32.totalorder %s19, 0
      %p164 = por %p162, %p163
      %p165 = scmp.ne.s32.totalorder %s151, %s152
      %p166 = scmp.eq.s32.totalorder %s20, 3
      %p167 = por %p165, %p166
      %p169 = scmp.ne.s32.totalorder %s152, %s168
      %p170 = scmp.eq.s32.totalorder %s20, 0
      %p171 = por %p169, %p170
      %p172 = scmp.le.s32.totalorder 1, %s14
      %p173 = scmp.lt.s32.totalorder %s14, 5
      %p174 = pnand %p172, %p173
      %p175 = pneg %p174
      // Predicated region
      $region9: #{dcgan_generator.11} parent=5 // pred_check
        _
      $region10: #{dcgan_generator.11} parent=5 // pred_check_branch
        %177 = sbr.rel (%p174) target = $region12
      $region11: #{dcgan_generator.11} parent=5 // pred_region
        %s178 = ssub.s32 %s14, 1
      $region12: #{dcgan_generator.11} parent=5 // pred_fallthru
        _
      %p179 = scmp.lt.s32.totalorder %s14, 4
      // Predicated region
      $region13: #{dcgan_generator.11} parent=5 // pred_check
        %p180 = pneg %p179
      $region14: #{dcgan_generator.11} parent=5 // pred_check_branch
        %182 = sbr.rel (%p180) target = $region16
      $region15: #{dcgan_generator.11} parent=5 // pred_region
        // Predicated region
        $region17: #{dcgan_generator.11} parent=15 // pred_check
          %p183 = pneg %p48
        $region18: #{dcgan_generator.11} parent=15 // pred_check_branch
          %185 = sbr.rel (%p183) target = $region20
        $region19: #{dcgan_generator.11} parent=15 // pred_region
          %s186 = smul.u32 4, %s22
          %p187 = scmp.lt.s32.totalorder %s21, 3
          %s188 = scalar_select %p187, %s21, 3
          %p189 = scmp.lt.s32.totalorder %s186, 3
          %s190 = scalar_select %p189, %s186, 3
          %s191 = smul.addr %s190, 4
          %s192 = smul.addr %s188, 16
          %s193 = sadd.s32 %s191, %s192
          %s194 = smul.addr %s193, 4
          %s195 = scalar_lea.vmem %s0, %s194
          %s196 = smul.u32 4, %s22
        $region20: #{dcgan_generator.11} parent=15 // pred_fallthru
          _
        // Predicated region
        $region21: #{dcgan_generator.11} parent=15 // pred_check
          %p197 = pneg %p74
        $region22: #{dcgan_generator.11} parent=15 // pred_check_branch
          %199 = sbr.rel (%p197) target = $region24
        $region23: #{dcgan_generator.11} parent=15 // pred_region
          %s200 = sand.u32 %s64, 1
          %s201 = scalar_lea.sflag [#allocation3], %s200
          %s202 = sand.u32 %s64, 1
          %s203 = smul.addr %s202, 256
          %s204 = scalar_lea.vmem [#allocation2], %s203
          %s206 = ssub.s32 4096, 4096
          %207 = vsyncadd %s201, %s206
          %s208 = smul.addr %s21, 64
          %s209 = smul.addr %s208, 64
          %s210 = scalar_lea.hbm %s1, %s209
          %s211 = sshll.u32 %s204, 4
          %s212 = int_to_ptr.vmem [resolvable:$true] %s211
          %217 = dma.hbm_to_vmem [thread:$0]  %s210, 4096, %s212, %s201, 64, 64, 4
        $region24: #{dcgan_generator.11} parent=15 // pred_fallthru
          _
      $region16: #{dcgan_generator.11} parent=5 // pred_fallthru
        _
      %p218 = scmp.le.s32.totalorder 1, %s14
      %p219 = scmp.lt.s32.totalorder %s14, 5
      %p220 = pnand %p218, %p219
      %p221 = pneg %p220
      // Predicated region
      $region25: #{dcgan_generator.11} parent=5 // pred_check
        _
      $region26: #{dcgan_generator.11} parent=5 // pred_check_branch
        %223 = sbr.rel (%p220) target = $region28
      $region27: #{dcgan_generator.11} parent=5 // pred_region
        %s224 = ssub.s32 %s14, 1
        %s225 = sand.u32 %s67, 1
        %s226 = scalar_lea.sflag [#allocation3], %s225
        %s227 = sand.u32 %s67, 1
        %s228 = smul.addr %s227, 256
        %s229 = scalar_lea.vmem [#allocation2], %s228
        // Predicated region
        $region29: #{dcgan_generator.11} parent=27 // pred_check
          %p230 = pneg %p80
        $region30: #{dcgan_generator.11} parent=27 // pred_check_branch
          %232 = sbr.rel (%p230) target = $region32
        $region31: #{dcgan_generator.11} parent=27 // pred_region
          %233 = dma.done %s226, 4096
        $region32: #{dcgan_generator.11} parent=27 // pred_fallthru
          _
        %s234 = smul.u32 4, %s24
        %p235 = scmp.lt.s32.totalorder %s23, 3
        %s236 = scalar_select %p235, %s23, 3
        %p237 = scmp.lt.s32.totalorder %s234, 3
        %s238 = scalar_select %p237, %s234, 3
        %s239 = smul.addr %s238, 4
        %s240 = smul.addr %s236, 16
        %s241 = sadd.s32 %s239, %s240
        %s242 = smul.addr %s241, 4
        %s243 = scalar_lea.vmem %s0, %s242
        %p244 = pneg %p54
        %p245 = pneg %p51
        %s246 = sand.u32 %s67, 1
        %s247 = scalar_lea.sflag [#allocation3], %s246
        %s248 = sand.u32 %s67, 1
        %s249 = smul.addr %s248, 256
        %s250 = scalar_lea.vmem [#allocation2], %s249
        %p251 = pneg %p80
        %p252 = pneg %p77
        %p253 = pneg %p108
        %p254 = pneg %p105
        %s255 = smul.u32 4, %s24
        %p256 = scmp.lt.s32.totalorder %s23, 3
        %s257 = scalar_select %p256, %s23, 3
        %p258 = scmp.lt.s32.totalorder %s255, 3
        %s259 = scalar_select %p258, %s255, 3
        %s260 = smul.addr %s257, 4
        %s261 = sadd.s32 %s259, %s260
        %s262 = smul.addr %s261, 4
        %s263 = scalar_lea.vmem %s2, %s262
        %p264 = pneg %p136
        %p265 = pneg %p133
        %p266 = scmp.lt.s32.totalorder %s23, 3
        %s267 = scalar_select %p266, %s23, 3
        %p268 = scmp.lt.s32.totalorder %s24, 0
        %s269 = scalar_select %p268, %s24, 0
        %s270 = sadd.s32 %s269, %s267
        %s271 = smul.addr %s270, 8
        %s272 = scalar_lea.vmem %s3, %s271
        %p273 = pneg %p164
        %p274 = pneg %p161
        %p275 = scmp.lt.s32.totalorder %s23, 3
        %s276 = scalar_select %p275, %s23, 3
        %p277 = scmp.lt.s32.totalorder %s24, 0
        %s278 = scalar_select %p277, %s24, 0
        %s279 = sadd.s32 %s278, %s276
        %s280 = smul.addr %s279, 8
        %s281 = scalar_lea.vmem %s4, %s280
        %s282 = smul.u32 4, %s24
        %p283 = scmp.lt.s32.totalorder %s23, 3
        %s284 = scalar_select %p283, %s23, 3
        %p285 = scmp.lt.s32.totalorder %s282, 3
        %s286 = scalar_select %p285, %s282, 3
        %s287 = smul.addr %s286, 4
        %s288 = smul.addr %s284, 16
        %s289 = sadd.s32 %s287, %s288
        %s290 = smul.addr %s289, 4
        %s291 = scalar_lea.vmem %s0, %s290
        %s292 = smul.u32 4, %s24
        %s293 = smul.u32 4, %s24
        %p294 = scmp.lt.s32.totalorder %s23, 3
        %s295 = scalar_select %p294, %s23, 3
        %p296 = scmp.lt.s32.totalorder %s293, 3
        %s297 = scalar_select %p296, %s293, 3
        %s298 = smul.addr %s295, 4
        %s299 = sadd.s32 %s297, %s298
        %s300 = smul.addr %s299, 4
        %s301 = scalar_lea.vmem %s2, %s300
        %s302 = smul.u32 4, %s24
        %p303 = scmp.lt.s32.totalorder %s23, 3
        %s304 = scalar_select %p303, %s23, 3
        %p305 = scmp.lt.s32.totalorder %s24, 0
        %s306 = scalar_select %p305, %s24, 0
        %s307 = sadd.s32 %s306, %s304
        %s308 = smul.addr %s307, 8
        %s309 = scalar_lea.vmem %s3, %s308
        %p310 = scmp.lt.s32.totalorder %s23, 3
        %s311 = scalar_select %p310, %s23, 3
        %p312 = scmp.lt.s32.totalorder %s24, 0
        %s313 = scalar_select %p312, %s24, 0
        %s314 = sadd.s32 %s313, %s311
        %s315 = smul.addr %s314, 8
        %s316 = scalar_lea.vmem %s4, %s315
        %v318 = vld [vmem:[%s291] sm:$0xff]
        %v319 = vld [vmem:[%s291 + $0x8] sm:$0xff]
        %v320 = vld [vmem:[%s291 + $0x10] sm:$0xff]
        %v321 = vld [vmem:[%s291 + $0x18] sm:$0xff]
        %v322 = vld [vmem:[%s291 + $0x20] sm:$0xff]
        %v323 = vld [vmem:[%s291 + $0x28] sm:$0xff]
        %v324 = vld [vmem:[%s291 + $0x30] sm:$0xff]
        %v325 = vld [vmem:[%s291 + $0x38] sm:$0xff]
        %v326 = vld [vmem:[%s229] sm:$0xf]
        %v327 = vld [vmem:[%s229 + $0x4] sm:$0xf]
        %v328 = vld [vmem:[%s229 + $0x8] sm:$0xf]
        %v329 = vld [vmem:[%s229 + $0xc] sm:$0xf]
        %v330 = vld [vmem:[%s229 + $0x10] sm:$0xf]
        %v331 = vld [vmem:[%s229 + $0x14] sm:$0xf]
        %v332 = vld [vmem:[%s229 + $0x18] sm:$0xf]
        %v333 = vld [vmem:[%s229 + $0x1c] sm:$0xf]
        %v334 = vld [vmem:[%s229 + $0x20] sm:$0xf]
        %v335 = vld [vmem:[%s229 + $0x24] sm:$0xf]
        %v336 = vld [vmem:[%s229 + $0x28] sm:$0xf]
        %v337 = vld [vmem:[%s229 + $0x2c] sm:$0xf]
        %v338 = vld [vmem:[%s229 + $0x30] sm:$0xf]
        %v339 = vld [vmem:[%s229 + $0x34] sm:$0xf]
        %v340 = vld [vmem:[%s229 + $0x38] sm:$0xf]
        %v341 = vld [vmem:[%s229 + $0x3c] sm:$0xf]
        %v342 = vld [vmem:[%s229 + $0x40] sm:$0xf]
        %v343 = vld [vmem:[%s229 + $0x44] sm:$0xf]
        %v344 = vld [vmem:[%s229 + $0x48] sm:$0xf]
        %v345 = vld [vmem:[%s229 + $0x4c] sm:$0xf]
        %v346 = vld [vmem:[%s229 + $0x50] sm:$0xf]
        %v347 = vld [vmem:[%s229 + $0x54] sm:$0xf]
        %v348 = vld [vmem:[%s229 + $0x58] sm:$0xf]
        %v349 = vld [vmem:[%s229 + $0x5c] sm:$0xf]
        %v350 = vld [vmem:[%s229 + $0x60] sm:$0xf]
        %v351 = vld [vmem:[%s229 + $0x64] sm:$0xf]
        %v352 = vld [vmem:[%s229 + $0x68] sm:$0xf]
        %v353 = vld [vmem:[%s229 + $0x6c] sm:$0xf]
        %v354 = vld [vmem:[%s229 + $0x70] sm:$0xf]
        %v355 = vld [vmem:[%s229 + $0x74] sm:$0xf]
        %v356 = vld [vmem:[%s229 + $0x78] sm:$0xf]
        %v357 = vld [vmem:[%s229 + $0x7c] sm:$0xf]
        %v358 = vld [vmem:[%s229 + $0x80] sm:$0xf]
        %v359 = vld [vmem:[%s229 + $0x84] sm:$0xf]
        %v360 = vld [vmem:[%s229 + $0x88] sm:$0xf]
        %v361 = vld [vmem:[%s229 + $0x8c] sm:$0xf]
        %v362 = vld [vmem:[%s229 + $0x90] sm:$0xf]
        %v363 = vld [vmem:[%s229 + $0x94] sm:$0xf]
        %v364 = vld [vmem:[%s229 + $0x98] sm:$0xf]
        %v365 = vld [vmem:[%s229 + $0x9c] sm:$0xf]
        %v366 = vld [vmem:[%s229 + $0xa0] sm:$0xf]
        %v367 = vld [vmem:[%s229 + $0xa4] sm:$0xf]
        %v368 = vld [vmem:[%s229 + $0xa8] sm:$0xf]
        %v369 = vld [vmem:[%s229 + $0xac] sm:$0xf]
        %v370 = vld [vmem:[%s229 + $0xb0] sm:$0xf]
        %v371 = vld [vmem:[%s229 + $0xb4] sm:$0xf]
        %v372 = vld [vmem:[%s229 + $0xb8] sm:$0xf]
        %v373 = vld [vmem:[%s229 + $0xbc] sm:$0xf]
        %v374 = vld [vmem:[%s229 + $0xc0] sm:$0xf]
        %v375 = vld [vmem:[%s229 + $0xc4] sm:$0xf]
        %v376 = vld [vmem:[%s229 + $0xc8] sm:$0xf]
        %v377 = vld [vmem:[%s229 + $0xcc] sm:$0xf]
        %v378 = vld [vmem:[%s229 + $0xd0] sm:$0xf]
        %v379 = vld [vmem:[%s229 + $0xd4] sm:$0xf]
        %v380 = vld [vmem:[%s229 + $0xd8] sm:$0xf]
        %v381 = vld [vmem:[%s229 + $0xdc] sm:$0xf]
        %v382 = vld [vmem:[%s229 + $0xe0] sm:$0xf]
        %v383 = vld [vmem:[%s229 + $0xe4] sm:$0xf]
        %v384 = vld [vmem:[%s229 + $0xe8] sm:$0xf]
        %v385 = vld [vmem:[%s229 + $0xec] sm:$0xf]
        %v386 = vld [vmem:[%s229 + $0xf0] sm:$0xf]
        %v387 = vld [vmem:[%s229 + $0xf4] sm:$0xf]
        %v388 = vld [vmem:[%s229 + $0xf8] sm:$0xf]
        %v389 = vld [vmem:[%s229 + $0xfc] sm:$0xf]
        %v398 = vunpack.c.l.b16 %v318
        %v399 = vunpack.c.h.b16 %v318
        %v400 = vunpack.c.l.b16 %v319
        %v401 = vunpack.c.h.b16 %v319
        %v402 = vunpack.c.l.b16 %v320
        %v403 = vunpack.c.h.b16 %v320
        %v404 = vunpack.c.l.b16 %v321
        %v405 = vunpack.c.h.b16 %v321
        %v406 = vunpack.c.l.b16 %v322
        %v407 = vunpack.c.h.b16 %v322
        %v408 = vunpack.c.l.b16 %v323
        %v409 = vunpack.c.h.b16 %v323
        %v410 = vunpack.c.l.b16 %v324
        %v411 = vunpack.c.h.b16 %v324
        %v412 = vunpack.c.l.b16 %v325
        %v413 = vunpack.c.h.b16 %v325
        %v414 = vpack.c.b16 %v402, %v398
        %v415 = vpack.c.b16 %v403, %v399
        %v416 = vpack.c.b16 %v404, %v400
        %v417 = vpack.c.b16 %v405, %v401
        %v418 = vpack.c.b16 %v410, %v406
        %v419 = vpack.c.b16 %v411, %v407
        %v420 = vpack.c.b16 %v412, %v408
        %v421 = vpack.c.b16 %v413, %v409
        %v494 = vunpack.c.l.b16 %v326
        %v495 = vunpack.c.l.b16 %v327
        %v496 = vunpack.c.l.b16 %v328
        %v497 = vunpack.c.l.b16 %v329
        %v498 = vunpack.c.l.b16 %v330
        %v499 = vunpack.c.l.b16 %v331
        %v500 = vunpack.c.l.b16 %v332
        %v501 = vunpack.c.l.b16 %v333
        %v502 = vunpack.c.l.b16 %v334
        %v503 = vunpack.c.l.b16 %v335
        %v504 = vunpack.c.l.b16 %v336
        %v505 = vunpack.c.l.b16 %v337
        %v506 = vunpack.c.l.b16 %v338
        %v507 = vunpack.c.l.b16 %v339
        %v508 = vunpack.c.l.b16 %v340
        %v509 = vunpack.c.l.b16 %v341
        %v510 = vunpack.c.l.b16 %v342
        %v511 = vunpack.c.l.b16 %v343
        %v512 = vunpack.c.l.b16 %v344
        %v513 = vunpack.c.l.b16 %v345
        %v514 = vunpack.c.l.b16 %v346
        %v515 = vunpack.c.l.b16 %v347
        %v516 = vunpack.c.l.b16 %v348
        %v517 = vunpack.c.l.b16 %v349
        %v518 = vunpack.c.l.b16 %v350
        %v519 = vunpack.c.l.b16 %v351
        %v520 = vunpack.c.l.b16 %v352
        %v521 = vunpack.c.l.b16 %v353
        %v522 = vunpack.c.l.b16 %v354
        %v523 = vunpack.c.l.b16 %v355
        %v524 = vunpack.c.l.b16 %v356
        %v525 = vunpack.c.l.b16 %v357
        %v526 = vunpack.c.l.b16 %v358
        %v527 = vunpack.c.l.b16 %v359
        %v528 = vunpack.c.l.b16 %v360
        %v529 = vunpack.c.l.b16 %v361
        %v530 = vunpack.c.l.b16 %v362
        %v531 = vunpack.c.l.b16 %v363
        %v532 = vunpack.c.l.b16 %v364
        %v533 = vunpack.c.l.b16 %v365
        %v534 = vunpack.c.l.b16 %v366
        %v535 = vunpack.c.l.b16 %v367
        %v536 = vunpack.c.l.b16 %v368
        %v537 = vunpack.c.l.b16 %v369
        %v538 = vunpack.c.l.b16 %v370
        %v539 = vunpack.c.l.b16 %v371
        %v540 = vunpack.c.l.b16 %v372
        %v541 = vunpack.c.l.b16 %v373
        %v542 = vunpack.c.l.b16 %v374
        %v543 = vunpack.c.l.b16 %v375
        %v544 = vunpack.c.l.b16 %v376
        %v545 = vunpack.c.l.b16 %v377
        %v546 = vunpack.c.l.b16 %v378
        %v547 = vunpack.c.l.b16 %v379
        %v548 = vunpack.c.l.b16 %v380
        %v549 = vunpack.c.l.b16 %v381
        %v550 = vunpack.c.l.b16 %v382
        %v551 = vunpack.c.l.b16 %v383
        %v552 = vunpack.c.l.b16 %v384
        %v553 = vunpack.c.l.b16 %v385
        %v554 = vunpack.c.l.b16 %v386
        %v555 = vunpack.c.l.b16 %v387
        %v556 = vunpack.c.l.b16 %v388
        %v557 = vunpack.c.l.b16 %v389
        %v558 = vpack.c.b16 %v495, %v494
        %v559 = vpack.c.b16 %v497, %v496
        %v560 = vpack.c.b16 %v499, %v498
        %v561 = vpack.c.b16 %v501, %v500
        %v562 = vpack.c.b16 %v503, %v502
        %v563 = vpack.c.b16 %v505, %v504
        %v564 = vpack.c.b16 %v507, %v506
        %v565 = vpack.c.b16 %v509, %v508
        %v566 = vpack.c.b16 %v511, %v510
        %v567 = vpack.c.b16 %v513, %v512
        %v568 = vpack.c.b16 %v515, %v514
        %v569 = vpack.c.b16 %v517, %v516
        %v570 = vpack.c.b16 %v519, %v518
        %v571 = vpack.c.b16 %v521, %v520
        %v572 = vpack.c.b16 %v523, %v522
        %v573 = vpack.c.b16 %v525, %v524
        %v574 = vpack.c.b16 %v527, %v526
        %v575 = vpack.c.b16 %v529, %v528
        %v576 = vpack.c.b16 %v531, %v530
        %v577 = vpack.c.b16 %v533, %v532
        %v578 = vpack.c.b16 %v535, %v534
        %v579 = vpack.c.b16 %v537, %v536
        %v580 = vpack.c.b16 %v539, %v538
        %v581 = vpack.c.b16 %v541, %v540
        %v582 = vpack.c.b16 %v543, %v542
        %v583 = vpack.c.b16 %v545, %v544
        %v584 = vpack.c.b16 %v547, %v546
        %v585 = vpack.c.b16 %v549, %v548
        %v586 = vpack.c.b16 %v551, %v550
        %v587 = vpack.c.b16 %v553, %v552
        %v588 = vpack.c.b16 %v555, %v554
        %v589 = vpack.c.b16 %v557, %v556
        %622 = vmatprep.subr.bf16.mxu0 0
        %623 = vmatpush1.bf16.msra.mxu0 %v558
        %624 = vmatprep.subr.bf16.mxu0 0
        %625 = vmatpush1.bf16.msra.mxu0 %v559
        %626 = vmatprep.subr.bf16.mxu0 0
        %627 = vmatpush1.bf16.msra.mxu0 %v560
        %628 = vmatprep.subr.bf16.mxu0 0
        %629 = vmatpush1.bf16.msra.mxu0 %v561
        %630 = vmatprep.subr.bf16.mxu0 0
        %631 = vmatpush1.bf16.msra.mxu0 %v562
        %632 = vmatprep.subr.bf16.mxu0 0
        %633 = vmatpush1.bf16.msra.mxu0 %v563
        %634 = vmatprep.subr.bf16.mxu0 0
        %635 = vmatpush1.bf16.msra.mxu0 %v564
        %636 = vmatprep.subr.bf16.mxu0 0
        %637 = vmatpush1.bf16.msra.mxu0 %v565
        %638 = vmatprep.subr.bf16.mxu0 0
        %639 = vmatpush1.bf16.msra.mxu0 %v566
        %640 = vmatprep.subr.bf16.mxu0 0
        %641 = vmatpush1.bf16.msra.mxu0 %v567
        %642 = vmatprep.subr.bf16.mxu0 0
        %643 = vmatpush1.bf16.msra.mxu0 %v568
        %644 = vmatprep.subr.bf16.mxu0 0
        %645 = vmatpush1.bf16.msra.mxu0 %v569
        %646 = vmatprep.subr.bf16.mxu0 0
        %647 = vmatpush1.bf16.msra.mxu0 %v570
        %648 = vmatprep.subr.bf16.mxu0 0
        %649 = vmatpush1.bf16.msra.mxu0 %v571
        %650 = vmatprep.subr.bf16.mxu0 0
        %651 = vmatpush1.bf16.msra.mxu0 %v572
        %652 = vmatprep.subr.bf16.mxu0 0
        %653 = vmatpush1.bf16.msra.mxu0 %v573
        %654 = vmatprep.mubr.bf16.mxu0 %v415
        %655 = vmatmul.mubr.bf16.gmra.mrb[0].mxu0 %v414
        %v656 = vpop.f32.mrb[0].mxu0
        %v657 = vadd.f32 0.0, %v656
        %v658 = vpop.f32.mrb[0].mxu0
        %v659 = vpop.f32.mrb[0].mxu0
        %v660 = vadd.f32 0.0, %v659
        %v661 = vpop.f32.mrb[0].mxu0
        %662 = vmatprep.mubr.bf16.mxu0 %v419
        %663 = vmatmul.mubr.bf16.gmra.mrb[0].mxu0 %v418
        %v664 = vpop.f32.mrb[0].mxu0
        %v665 = vadd.f32 0.0, %v664
        %v666 = vpop.f32.mrb[0].mxu0
        %v667 = vpop.f32.mrb[0].mxu0
        %v668 = vadd.f32 0.0, %v667
        %v669 = vpop.f32.mrb[0].mxu0
        %670 = vdwg.mxu0
        %671 = vmatprep.subr.bf16.mxu0 0
        %672 = vmatpush1.bf16.msra.mxu0 %v574
        %673 = vmatprep.subr.bf16.mxu0 0
        %674 = vmatpush1.bf16.msra.mxu0 %v575
        %675 = vmatprep.subr.bf16.mxu0 0
        %676 = vmatpush1.bf16.msra.mxu0 %v576
        %677 = vmatprep.subr.bf16.mxu0 0
        %678 = vmatpush1.bf16.msra.mxu0 %v577
        %679 = vmatprep.subr.bf16.mxu0 0
        %680 = vmatpush1.bf16.msra.mxu0 %v578
        %681 = vmatprep.subr.bf16.mxu0 0
        %682 = vmatpush1.bf16.msra.mxu0 %v579
        %683 = vmatprep.subr.bf16.mxu0 0
        %684 = vmatpush1.bf16.msra.mxu0 %v580
        %685 = vmatprep.subr.bf16.mxu0 0
        %686 = vmatpush1.bf16.msra.mxu0 %v581
        %687 = vmatprep.subr.bf16.mxu0 0
        %688 = vmatpush1.bf16.msra.mxu0 %v582
        %689 = vmatprep.subr.bf16.mxu0 0
        %690 = vmatpush1.bf16.msra.mxu0 %v583
        %691 = vmatprep.subr.bf16.mxu0 0
        %692 = vmatpush1.bf16.msra.mxu0 %v584
        %693 = vmatprep.subr.bf16.mxu0 0
        %694 = vmatpush1.bf16.msra.mxu0 %v585
        %695 = vmatprep.subr.bf16.mxu0 0
        %696 = vmatpush1.bf16.msra.mxu0 %v586
        %697 = vmatprep.subr.bf16.mxu0 0
        %698 = vmatpush1.bf16.msra.mxu0 %v587
        %699 = vmatprep.subr.bf16.mxu0 0
        %700 = vmatpush1.bf16.msra.mxu0 %v588
        %701 = vmatprep.subr.bf16.mxu0 0
        %702 = vmatpush1.bf16.msra.mxu0 %v589
        %703 = vmatprep.mubr.bf16.mxu0 %v417
        %704 = vmatmul.mubr.bf16.gmra.mrb[0].mxu0 %v416
        %v705 = vpop.f32.mrb[0].mxu0
        %v706 = vadd.f32 %v657, %v705
        %v707 = vpop.f32.mrb[0].mxu0
        %v708 = vpop.f32.mrb[0].mxu0
        %v709 = vadd.f32 %v660, %v708
        %v710 = vpop.f32.mrb[0].mxu0
        %711 = vmatprep.mubr.bf16.mxu0 %v421
        %712 = vmatmul.mubr.bf16.gmra.mrb[0].mxu0 %v420
        %v713 = vpop.f32.mrb[0].mxu0
        %v714 = vadd.f32 %v665, %v713
        %v715 = vpop.f32.mrb[0].mxu0
        %v716 = vpop.f32.mrb[0].mxu0
        %v717 = vadd.f32 %v668, %v716
        %v718 = vpop.f32.mrb[0].mxu0
        %719 = vdwg.mxu0
        %v720 = vpack.c.bf16 %v709, %v706
        %v721 = vpack.c.bf16 %v717, %v714
        %v724 = vunpack.c.l.b16 %v720
        %v725 = vunpack.c.h.b16 %v720
        %v726 = vunpack.c.l.b16 %v721
        %v727 = vunpack.c.h.b16 %v721
        %v728 = vpack.c.b16 %v724, %v724
        %v729 = vpack.c.b16 %v725, %v725
        %v730 = vpack.c.b16 %v726, %v726
        %v731 = vpack.c.b16 %v727, %v727
        %736 = vst [vmem:[%s301] sm:$0xf] %v728
        %737 = vst [vmem:[%s301 + $0x4] sm:$0xf] %v729
        %738 = vst [vmem:[%s301 + $0x8] sm:$0xf] %v730
        %739 = vst [vmem:[%s301 + $0xc] sm:$0xf] %v731
        %v740 = vadd.f32 %v706, %v709
        %v741 = vadd.f32 %v740, %v714
        %v742 = vadd.f32 %v741, %v717
        %v743 = vrot.slane %v742, 4
        %v744 = vadd.f32 %v742, %v743
        %v745 = vrot.slane %v744, 2
        %v746 = vadd.f32 %v744, %v745
        %v747 = vrot.slane %v746, 1
        %v748 = vadd.f32 %v746, %v747
        %v749 = vmul.f32 %v706, %v706
        %v750 = vmul.f32 %v709, %v709
        %v751 = vmul.f32 %v714, %v714
        %v752 = vmul.f32 %v717, %v717
        %v753 = vadd.f32 %v749, %v750
        %v754 = vadd.f32 %v753, %v751
        %v755 = vadd.f32 %v754, %v752
        %v756 = vrot.slane %v755, 4
        %v757 = vadd.f32 %v755, %v756
        %v758 = vrot.slane %v757, 2
        %v759 = vadd.f32 %v757, %v758
        %v760 = vrot.slane %v759, 1
        %v761 = vadd.f32 %v759, %v760
        %762 = vst [vmem:[%s309] sm:$0xff] %v748
        %763 = vst [vmem:[%s316] sm:$0xff] %v761
        %s764 = smul.u32 4, %s24
        %p765 = scmp.lt.s32.totalorder %s23, 3
        %s766 = scalar_select %p765, %s23, 3
        %p767 = scmp.lt.s32.totalorder %s764, 3
        %s768 = scalar_select %p767, %s764, 3
        %s769 = smul.addr %s766, 4
        %s770 = sadd.s32 %s768, %s769
        %s771 = smul.addr %s770, 4
        %s772 = scalar_lea.vmem %s2, %s771
        %p773 = scmp.lt.s32.totalorder %s23, 3
        %s774 = scalar_select %p773, %s23, 3
        %p775 = scmp.lt.s32.totalorder %s24, 0
        %s776 = scalar_select %p775, %s24, 0
        %s777 = sadd.s32 %s776, %s774
        %s778 = smul.addr %s777, 8
        %s779 = scalar_lea.vmem %s3, %s778
        %p780 = scmp.lt.s32.totalorder %s23, 3
        %s781 = scalar_select %p780, %s23, 3
        %p782 = scmp.lt.s32.totalorder %s24, 0
        %s783 = scalar_select %p782, %s24, 0
        %s784 = sadd.s32 %s783, %s781
        %s785 = smul.addr %s784, 8
        %s786 = scalar_lea.vmem %s4, %s785
        // Predicated region
        $region33: #{dcgan_generator.11} parent=27 // pred_check
          %p787 = pneg %p105
        $region34: #{dcgan_generator.11} parent=27 // pred_check_branch
          %789 = sbr.rel (%p787) target = $region36
        $region35: #{dcgan_generator.11} parent=27 // pred_region
          %s790 = smul.u32 4, %s24
        $region36: #{dcgan_generator.11} parent=27 // pred_fallthru
          _
        // Predicated region
        $region37: #{dcgan_generator.11} parent=27 // pred_check
          %p791 = pneg %p133
        $region38: #{dcgan_generator.11} parent=27 // pred_check_branch
          %793 = sbr.rel (%p791) target = $region40
        $region39: #{dcgan_generator.11} parent=27 // pred_region
          _
        $region40: #{dcgan_generator.11} parent=27 // pred_fallthru
          _
        // Predicated region
        $region41: #{dcgan_generator.11} parent=27 // pred_check
          %p794 = pneg %p161
        $region42: #{dcgan_generator.11} parent=27 // pred_check_branch
          %796 = sbr.rel (%p794) target = $region44
        $region43: #{dcgan_generator.11} parent=27 // pred_region
          _
        $region44: #{dcgan_generator.11} parent=27 // pred_fallthru
          _
      $region28: #{dcgan_generator.11} parent=5 // pred_fallthru
        _
      %p797 = scmp.le.s32.totalorder 2, %s14
      // Predicated region
      $region45: #{dcgan_generator.11} parent=5 // pred_check
        %p798 = pneg %p797
      $region46: #{dcgan_generator.11} parent=5 // pred_check_branch
        %800 = sbr.rel (%p798) target = $region48
      $region47: #{dcgan_generator.11} parent=5 // pred_region
        %s801 = ssub.s32 %s14, 2
        // Predicated region
        $region49: #{dcgan_generator.11} parent=47 // pred_check
          %p802 = pneg %p111
        $region50: #{dcgan_generator.11} parent=47 // pred_check_branch
          %804 = sbr.rel (%p802) target = $region52
        $region51: #{dcgan_generator.11} parent=47 // pred_region
          %s805 = smul.u32 4, %s26
          %p806 = scmp.lt.s32.totalorder %s25, 3
          %s807 = scalar_select %p806, %s25, 3
          %p808 = scmp.lt.s32.totalorder %s805, 3
          %s809 = scalar_select %p808, %s805, 3
          %s810 = smul.addr %s807, 4
          %s811 = sadd.s32 %s809, %s810
          %s812 = smul.addr %s811, 4
          %s813 = scalar_lea.vmem %s2, %s812
        $region52: #{dcgan_generator.11} parent=47 // pred_fallthru
          _
        // Predicated region
        $region53: #{dcgan_generator.11} parent=47 // pred_check
          %p814 = pneg %p139
        $region54: #{dcgan_generator.11} parent=47 // pred_check_branch
          %816 = sbr.rel (%p814) target = $region56
        $region55: #{dcgan_generator.11} parent=47 // pred_region
          %p817 = scmp.lt.s32.totalorder %s25, 3
          %s818 = scalar_select %p817, %s25, 3
          %p819 = scmp.lt.s32.totalorder %s26, 0
          %s820 = scalar_select %p819, %s26, 0
          %s821 = sadd.s32 %s820, %s818
          %s822 = smul.addr %s821, 8
          %s823 = scalar_lea.vmem %s3, %s822
        $region56: #{dcgan_generator.11} parent=47 // pred_fallthru
          _
        // Predicated region
        $region57: #{dcgan_generator.11} parent=47 // pred_check
          %p824 = pneg %p167
        $region58: #{dcgan_generator.11} parent=47 // pred_check_branch
          %826 = sbr.rel (%p824) target = $region60
        $region59: #{dcgan_generator.11} parent=47 // pred_region
          %p827 = scmp.lt.s32.totalorder %s25, 3
          %s828 = scalar_select %p827, %s25, 3
          %p829 = scmp.lt.s32.totalorder %s26, 0
          %s830 = scalar_select %p829, %s26, 0
          %s831 = sadd.s32 %s830, %s828
          %s832 = smul.addr %s831, 8
          %s833 = scalar_lea.vmem %s4, %s832
        $region60: #{dcgan_generator.11} parent=47 // pred_fallthru
          _
      $region48: #{dcgan_generator.11} parent=5 // pred_fallthru
        _
    $region6: #{dcgan_generator.11} parent=1 // loop_footer
      %s18 = sadd.s32 1, %s14
    $region7: #{dcgan_generator.11} parent=1 // loop_footer_branch
      %13 = sbr.rel target = $region3
    $region8: #{dcgan_generator.11} parent=1 // loop_exit
      _
    %834 = vsyncpa [#allocation3], 1
    %s835 = scalar_lea.sflag [#allocation3], 1
    %836 = vsyncpa %s835, 1

// kernel: dcgan_generator.12
$region0: #{dcgan_generator.12}
  #allocation0 [shape = 'u32[]', space=smem, size = 0x4, offset = 0x4, fixed_abs, tag = 'smem constant byte address 0x4 - core index']
  #allocation1 [shape = 'u32[144,128]{1,0:T(1,128)}', space=vmem, size = 0x12000, scoped, tag = 'internal scratch']
  %s0 = inlined_call_operand.vmem [shape: bf16[4,32,128], index: 0, kind: input, shape index: {}]
  %s1 = inlined_call_operand.vmem [shape: f32[1,128], index: 1, kind: input, shape index: {}]
  %s2 = inlined_call_operand.vmem [shape: f32[1,128], index: 2, kind: input, shape index: {}]
  %s3 = inlined_call_operand.vmem [shape: bf16[4,32,128], index: 3, kind: output, shape index: {}]
  %s4 = sld [smem:[#allocation0]]
  $region45: #{dcgan_generator.12} parent=0
    _
  %s6 = ssub.s32 1, %s4
  %s7 = scalar_select 0, %s6, %s4
  loop: start=0, step=1, limit=6
  $region2: #{dcgan_generator.12} parent=0 // loop_pre_header
    _
  $region3: #{dcgan_generator.12} parent=0 // loop_header
    %s9 = sphi 0, %s13
    %p10 = scmp.ge.s32.totalorder %s9, 6
    %s16 = sphi 0, %s28
    %s17 = sphi 0, %s24
    %s18 = sphi 0, %s16
    %s19 = sphi 0, %s17
    %s20 = sphi 0, %s18
    %s21 = sphi 0, %s19
    %s33 = sphi 0, %s35
    %s36 = sphi 0, %s33
    %s37 = sphi 0, %s36
    %s53 = sphi 0, %s37
    %s57 = sphi 0, %s57
    %s59 = sphi 0, %s57
    %s60 = sphi 0, %s59
    %s74 = sphi 0, %s60
    %s78 = sphi 0, %s78
    %s80 = sphi 0, %s78
    %s81 = sphi 0, %s80
    %s95 = sphi 0, %s81
    %s103 = sphi 0, %s105
    %s106 = sphi 0, %s103
    %s107 = sphi 0, %s106
    %s123 = sphi 0, %s107
  $region4: #{dcgan_generator.12} parent=0 // loop_header_branch
    %12 = sbr.rel (%p10) target = $region8
  $region5: #{dcgan_generator.12} parent=0 // loop_body
    %s14 = ssub.s32 %s9, 1
    %s15 = ssub.s32 %s9, 2
    %s22 = sadd.s32 1, %s17
    %p23 = scmp.ge.s32.totalorder %s22, 1
    %s24 = scalar_select %p23, 0, %s22
    %s25 = sadd.s32 1, %s16
    %s26 = scalar_select %p23, %s25, %s16
    %p27 = scmp.ge.s32.totalorder %s26, 4
    %s28 = scalar_select %p27, 0, %s26
    %s29 = ssub.s32 %s16, %s28
    %s30 = ssub.s32 %s17, %s24
    %s31 = sor.u32 %s29, %s30
    %p32 = scmp.eq.s32.totalorder %s31, 0
    %s34 = sadd.s32 %s33, 1
    %s35 = scalar_select %p32, %s33, %s34
    %p38 = pneg %p32
    %p39 = scmp.eq.s32.totalorder %s9, 3
    %p40 = por %p38, %p39
    %p41 = scmp.ne.s32.totalorder %s33, %s36
    %p42 = scmp.eq.s32.totalorder %s9, 0
    %p43 = por %p41, %p42
    %p44 = scmp.ne.s32.totalorder %s33, %s36
    %p45 = scmp.eq.s32.totalorder %s14, 3
    %p46 = por %p44, %p45
    %p47 = scmp.ne.s32.totalorder %s36, %s37
    %p48 = scmp.eq.s32.totalorder %s14, 0
    %p49 = por %p47, %p48
    %p50 = scmp.ne.s32.totalorder %s36, %s37
    %p51 = scmp.eq.s32.totalorder %s15, 3
    %p52 = por %p50, %p51
    %p54 = scmp.ne.s32.totalorder %s37, %s53
    %p55 = scmp.eq.s32.totalorder %s15, 0
    %p56 = por %p54, %p55
    %s58 = sadd.s32 %s57, 1
    %p61 = scmp.eq.s32.totalorder %s9, 3
    %p62 = scmp.ne.s32.totalorder %s57, %s59
    %p63 = scmp.eq.s32.totalorder %s9, 0
    %p64 = por %p62, %p63
    %p65 = scmp.ne.s32.totalorder %s57, %s59
    %p66 = scmp.eq.s32.totalorder %s14, 3
    %p67 = por %p65, %p66
    %p68 = scmp.ne.s32.totalorder %s59, %s60
    %p69 = scmp.eq.s32.totalorder %s14, 0
    %p70 = por %p68, %p69
    %p71 = scmp.ne.s32.totalorder %s59, %s60
    %p72 = scmp.eq.s32.totalorder %s15, 3
    %p73 = por %p71, %p72
    %p75 = scmp.ne.s32.totalorder %s60, %s74
    %p76 = scmp.eq.s32.totalorder %s15, 0
    %p77 = por %p75, %p76
    %s79 = sadd.s32 %s78, 1
    %p82 = scmp.eq.s32.totalorder %s9, 3
    %p83 = scmp.ne.s32.totalorder %s78, %s80
    %p84 = scmp.eq.s32.totalorder %s9, 0
    %p85 = por %p83, %p84
    %p86 = scmp.ne.s32.totalorder %s78, %s80
    %p87 = scmp.eq.s32.totalorder %s14, 3
    %p88 = por %p86, %p87
    %p89 = scmp.ne.s32.totalorder %s80, %s81
    %p90 = scmp.eq.s32.totalorder %s14, 0
    %p91 = por %p89, %p90
    %p92 = scmp.ne.s32.totalorder %s80, %s81
    %p93 = scmp.eq.s32.totalorder %s15, 3
    %p94 = por %p92, %p93
    %p96 = scmp.ne.s32.totalorder %s81, %s95
    %p97 = scmp.eq.s32.totalorder %s15, 0
    %p98 = por %p96, %p97
    %s99 = ssub.s32 %s16, %s28
    %s100 = ssub.s32 %s17, %s24
    %s101 = sor.u32 %s99, %s100
    %p102 = scmp.eq.s32.totalorder %s101, 0
    %s104 = sadd.s32 %s103, 1
    %s105 = scalar_select %p102, %s103, %s104
    %p108 = pneg %p102
    %p109 = scmp.eq.s32.totalorder %s9, 3
    %p110 = por %p108, %p109
    %p111 = scmp.ne.s32.totalorder %s103, %s106
    %p112 = scmp.eq.s32.totalorder %s9, 0
    %p113 = por %p111, %p112
    %p114 = scmp.ne.s32.totalorder %s103, %s106
    %p115 = scmp.eq.s32.totalorder %s14, 3
    %p116 = por %p114, %p115
    %p117 = scmp.ne.s32.totalorder %s106, %s107
    %p118 = scmp.eq.s32.totalorder %s14, 0
    %p119 = por %p117, %p118
    %p120 = scmp.ne.s32.totalorder %s106, %s107
    %p121 = scmp.eq.s32.totalorder %s15, 3
    %p122 = por %p120, %p121
    %p124 = scmp.ne.s32.totalorder %s107, %s123
    %p125 = scmp.eq.s32.totalorder %s15, 0
    %p126 = por %p124, %p125
    %p127 = scmp.le.s32.totalorder 1, %s9
    %p128 = scmp.lt.s32.totalorder %s9, 5
    %p129 = pnand %p127, %p128
    %p130 = pneg %p129
    // Predicated region
    $region9: #{dcgan_generator.12} parent=5 // pred_check
      _
    $region10: #{dcgan_generator.12} parent=5 // pred_check_branch
      %132 = sbr.rel (%p129) target = $region12
    $region11: #{dcgan_generator.12} parent=5 // pred_region
      %s133 = ssub.s32 %s9, 1
      // Predicated region
      $region13: #{dcgan_generator.12} parent=11 // pred_check
        %p134 = pneg %p70
      $region14: #{dcgan_generator.12} parent=11 // pred_check_branch
        %136 = sbr.rel (%p134) target = $region16
      $region15: #{dcgan_generator.12} parent=11 // pred_region
        _
      $region16: #{dcgan_generator.12} parent=11 // pred_fallthru
        _
      // Predicated region
      $region17: #{dcgan_generator.12} parent=11 // pred_check
        %p137 = pneg %p91
      $region18: #{dcgan_generator.12} parent=11 // pred_check_branch
        %139 = sbr.rel (%p137) target = $region20
      $region19: #{dcgan_generator.12} parent=11 // pred_region
        _
      $region20: #{dcgan_generator.12} parent=11 // pred_fallthru
        _
    $region12: #{dcgan_generator.12} parent=5 // pred_fallthru
      _
    %p140 = scmp.lt.s32.totalorder %s9, 4
    // Predicated region
    $region21: #{dcgan_generator.12} parent=5 // pred_check
      %p141 = pneg %p140
    $region22: #{dcgan_generator.12} parent=5 // pred_check_branch
      %143 = sbr.rel (%p141) target = $region24
    $region23: #{dcgan_generator.12} parent=5 // pred_region
      // Predicated region
      $region25: #{dcgan_generator.12} parent=23 // pred_check
        %p144 = pneg %p43
      $region26: #{dcgan_generator.12} parent=23 // pred_check_branch
        %146 = sbr.rel (%p144) target = $region28
      $region27: #{dcgan_generator.12} parent=23 // pred_region
        %s147 = smul.u32 4, %s17
        %p148 = scmp.lt.s32.totalorder %s16, 3
        %s149 = scalar_select %p148, %s16, 3
        %p150 = scmp.lt.s32.totalorder %s147, 3
        %s151 = scalar_select %p150, %s147, 3
        %s152 = smul.addr %s149, 4
        %s153 = sadd.s32 %s151, %s152
        %s154 = smul.addr %s153, 4
        %s155 = scalar_lea.vmem %s0, %s154
        %s156 = smul.u32 4, %s17
      $region28: #{dcgan_generator.12} parent=23 // pred_fallthru
        _
    $region24: #{dcgan_generator.12} parent=5 // pred_fallthru
      _
    %p157 = scmp.le.s32.totalorder 1, %s9
    %p158 = scmp.lt.s32.totalorder %s9, 5
    %p159 = pnand %p157, %p158
    %p160 = pneg %p159
    // Predicated region
    $region29: #{dcgan_generator.12} parent=5 // pred_check
      _
    $region30: #{dcgan_generator.12} parent=5 // pred_check_branch
      %162 = sbr.rel (%p159) target = $region32
    $region31: #{dcgan_generator.12} parent=5 // pred_region
      %s163 = ssub.s32 %s9, 1
      %s164 = smul.u32 4, %s19
      %p165 = scmp.lt.s32.totalorder %s18, 3
      %s166 = scalar_select %p165, %s18, 3
      %p167 = scmp.lt.s32.totalorder %s164, 3
      %s168 = scalar_select %p167, %s164, 3
      %s169 = smul.addr %s166, 4
      %s170 = sadd.s32 %s168, %s169
      %s171 = smul.addr %s170, 4
      %s172 = scalar_lea.vmem %s0, %s171
      %p173 = pneg %p49
      %p174 = pneg %p46
      %p175 = pneg %p70
      %p176 = pneg %p67
      %p177 = pneg %p91
      %p178 = pneg %p88
      %p179 = pneg %p119
      %p180 = pneg %p116
      %s181 = smul.u32 4, %s19
      %p182 = scmp.lt.s32.totalorder %s18, 3
      %s183 = scalar_select %p182, %s18, 3
      %p184 = scmp.lt.s32.totalorder %s181, 3
      %s185 = scalar_select %p184, %s181, 3
      %s186 = smul.addr %s183, 4
      %s187 = sadd.s32 %s185, %s186
      %s188 = smul.addr %s187, 4
      %s189 = scalar_lea.vmem %s3, %s188
      %s190 = smul.u32 4, %s19
      %p191 = scmp.lt.s32.totalorder %s18, 3
      %s192 = scalar_select %p191, %s18, 3
      %p193 = scmp.lt.s32.totalorder %s190, 3
      %s194 = scalar_select %p193, %s190, 3
      %s195 = smul.addr %s192, 4
      %s196 = sadd.s32 %s194, %s195
      %s197 = smul.addr %s196, 4
      %s198 = scalar_lea.vmem %s0, %s197
      %s199 = smul.u32 4, %s19
      %s200 = smul.u32 4, %s19
      %p201 = scmp.lt.s32.totalorder %s18, 3
      %s202 = scalar_select %p201, %s18, 3
      %p203 = scmp.lt.s32.totalorder %s200, 3
      %s204 = scalar_select %p203, %s200, 3
      %s205 = smul.addr %s202, 4
      %s206 = sadd.s32 %s204, %s205
      %s207 = smul.addr %s206, 4
      %s208 = scalar_lea.vmem %s3, %s207
      %s209 = smul.u32 4, %s19
      %v210 = vld [vmem:[%s198] sm:$0xf]
      %v211 = vld [vmem:[%s198 + $0x4] sm:$0xf]
      %v212 = vld [vmem:[%s198 + $0x8] sm:$0xf]
      %v213 = vld [vmem:[%s198 + $0xc] sm:$0xf]
      %v214 = vunpack.c.l.bf16 %v210
      %v215 = vunpack.c.l.bf16 %v211
      %v216 = vunpack.c.l.bf16 %v212
      %v217 = vunpack.c.l.bf16 %v213
      %v218 = vld [vmem:[%s1] sm:$0x1]
      %v220 = vlaneseq
      %v221 = vshrl.u32 %v220, 7
      %v222 = vsub.s32 0, %v221
      %v223 = vrot.slane %v218, %v222
      %v225 = vmul.f32 %v214, %v223
      %v226 = vmul.f32 %v215, %v223
      %v227 = vmul.f32 %v216, %v223
      %v228 = vmul.f32 %v217, %v223
      %v229 = vld [vmem:[%s2] sm:$0x1]
      %v231 = vlaneseq
      %v232 = vshrl.u32 %v231, 7
      %v233 = vsub.s32 0, %v232
      %v234 = vrot.slane %v229, %v233
      %v236 = vadd.f32 %v225, %v234
      %v237 = vadd.f32 %v226, %v234
      %v238 = vadd.f32 %v227, %v234
      %v239 = vadd.f32 %v228, %v234
      %vm240 = vcmp.gt.f32.partialorder %v236, 0.0
      %vm241 = vcmp.gt.f32.partialorder %v237, 0.0
      %vm242 = vcmp.gt.f32.partialorder %v238, 0.0
      %vm243 = vcmp.gt.f32.partialorder %v239, 0.0
      %v244 = vmul.f32 %v236, 0.2
      %v245 = vmul.f32 %v237, 0.2
      %v246 = vmul.f32 %v238, 0.2
      %v247 = vmul.f32 %v239, 0.2
      %v248 = vsel %vm240, %v236, %v244
      %v249 = vsel %vm241, %v237, %v245
      %v250 = vsel %vm242, %v238, %v246
      %v251 = vsel %vm243, %v239, %v247
      %v252 = vpack.c.bf16 %v249, %v248
      %v253 = vpack.c.bf16 %v251, %v250
      %v256 = vunpack.c.l.b16 %v252
      %v257 = vunpack.c.h.b16 %v252
      %v258 = vunpack.c.l.b16 %v253
      %v259 = vunpack.c.h.b16 %v253
      %v260 = vpack.c.b16 %v256, %v256
      %v261 = vpack.c.b16 %v257, %v257
      %v262 = vpack.c.b16 %v258, %v258
      %v263 = vpack.c.b16 %v259, %v259
      %268 = vst [vmem:[%s208] sm:$0xf] %v260
      %269 = vst [vmem:[%s208 + $0x4] sm:$0xf] %v261
      %270 = vst [vmem:[%s208 + $0x8] sm:$0xf] %v262
      %271 = vst [vmem:[%s208 + $0xc] sm:$0xf] %v263
      %s272 = smul.u32 4, %s19
      %p273 = scmp.lt.s32.totalorder %s18, 3
      %s274 = scalar_select %p273, %s18, 3
      %p275 = scmp.lt.s32.totalorder %s272, 3
      %s276 = scalar_select %p275, %s272, 3
      %s277 = smul.addr %s274, 4
      %s278 = sadd.s32 %s276, %s277
      %s279 = smul.addr %s278, 4
      %s280 = scalar_lea.vmem %s3, %s279
      // Predicated region
      $region33: #{dcgan_generator.12} parent=31 // pred_check
        %p281 = pneg %p116
      $region34: #{dcgan_generator.12} parent=31 // pred_check_branch
        %283 = sbr.rel (%p281) target = $region36
      $region35: #{dcgan_generator.12} parent=31 // pred_region
        %s284 = smul.u32 4, %s19
      $region36: #{dcgan_generator.12} parent=31 // pred_fallthru
        _
    $region32: #{dcgan_generator.12} parent=5 // pred_fallthru
      _
    %p285 = scmp.le.s32.totalorder 2, %s9
    // Predicated region
    $region37: #{dcgan_generator.12} parent=5 // pred_check
      %p286 = pneg %p285
    $region38: #{dcgan_generator.12} parent=5 // pred_check_branch
      %288 = sbr.rel (%p286) target = $region40
    $region39: #{dcgan_generator.12} parent=5 // pred_region
      %s289 = ssub.s32 %s9, 2
      // Predicated region
      $region41: #{dcgan_generator.12} parent=39 // pred_check
        %p290 = pneg %p122
      $region42: #{dcgan_generator.12} parent=39 // pred_check_branch
        %292 = sbr.rel (%p290) target = $region44
      $region43: #{dcgan_generator.12} parent=39 // pred_region
        %s293 = smul.u32 4, %s21
        %p294 = scmp.lt.s32.totalorder %s20, 3
        %s295 = scalar_select %p294, %s20, 3
        %p296 = scmp.lt.s32.totalorder %s293, 3
        %s297 = scalar_select %p296, %s293, 3
        %s298 = smul.addr %s295, 4
        %s299 = sadd.s32 %s297, %s298
        %s300 = smul.addr %s299, 4
        %s301 = scalar_lea.vmem %s3, %s300
      $region44: #{dcgan_generator.12} parent=39 // pred_fallthru
        _
    $region40: #{dcgan_generator.12} parent=5 // pred_fallthru
      _
  $region6: #{dcgan_generator.12} parent=0 // loop_footer
    %s13 = sadd.s32 1, %s9
  $region7: #{dcgan_generator.12} parent=0 // loop_footer_branch
    %8 = sbr.rel target = $region3
  $region8: #{dcgan_generator.12} parent=0 // loop_exit
    _

// kernel: dcgan_generator.14
$region0: #{dcgan_generator.14}
  #allocation0 [shape = 'u32[]', space=smem, size = 0x4, offset = 0x4, fixed_abs, tag = 'smem constant byte address 0x4 - core index']
  #allocation1 [shape = 'u32[144,128]{1,0:T(1,128)}', space=vmem, size = 0x12000, scoped, tag = 'internal scratch']
  %s0 = inlined_call_operand.vmem [shape: bf16[4,128,128], index: 0, kind: input, shape index: {}]
  %s1 = inlined_call_operand.vmem [shape: f32[1,128], index: 1, kind: input, shape index: {}]
  %s2 = inlined_call_operand.vmem [shape: f32[1,128], index: 2, kind: input, shape index: {}]
  %s3 = inlined_call_operand.vmem [shape: bf16[4,128,128], index: 3, kind: output, shape index: {}]
  %s4 = sld [smem:[#allocation0]]
  $region45: #{dcgan_generator.14} parent=0
    _
  %s6 = ssub.s32 1, %s4
  %s7 = scalar_select 0, %s6, %s4
  loop: start=0, step=1, limit=6
  $region2: #{dcgan_generator.14} parent=0 // loop_pre_header
    _
  $region3: #{dcgan_generator.14} parent=0 // loop_header
    %s9 = sphi 0, %s13
    %p10 = scmp.ge.s32.totalorder %s9, 6
    %s16 = sphi 0, %s28
    %s17 = sphi 0, %s24
    %s18 = sphi 0, %s16
    %s19 = sphi 0, %s17
    %s20 = sphi 0, %s18
    %s21 = sphi 0, %s19
    %s33 = sphi 0, %s35
    %s36 = sphi 0, %s33
    %s37 = sphi 0, %s36
    %s53 = sphi 0, %s37
    %s57 = sphi 0, %s57
    %s59 = sphi 0, %s57
    %s60 = sphi 0, %s59
    %s74 = sphi 0, %s60
    %s78 = sphi 0, %s78
    %s80 = sphi 0, %s78
    %s81 = sphi 0, %s80
    %s95 = sphi 0, %s81
    %s103 = sphi 0, %s105
    %s106 = sphi 0, %s103
    %s107 = sphi 0, %s106
    %s123 = sphi 0, %s107
  $region4: #{dcgan_generator.14} parent=0 // loop_header_branch
    %12 = sbr.rel (%p10) target = $region8
  $region5: #{dcgan_generator.14} parent=0 // loop_body
    %s14 = ssub.s32 %s9, 1
    %s15 = ssub.s32 %s9, 2
    %s22 = sadd.s32 1, %s17
    %p23 = scmp.ge.s32.totalorder %s22, 1
    %s24 = scalar_select %p23, 0, %s22
    %s25 = sadd.s32 1, %s16
    %s26 = scalar_select %p23, %s25, %s16
    %p27 = scmp.ge.s32.totalorder %s26, 4
    %s28 = scalar_select %p27, 0, %s26
    %s29 = ssub.s32 %s16, %s28
    %s30 = ssub.s32 %s17, %s24
    %s31 = sor.u32 %s29, %s30
    %p32 = scmp.eq.s32.totalorder %s31, 0
    %s34 = sadd.s32 %s33, 1
    %s35 = scalar_select %p32, %s33, %s34
    %p38 = pneg %p32
    %p39 = scmp.eq.s32.totalorder %s9, 3
    %p40 = por %p38, %p39
    %p41 = scmp.ne.s32.totalorder %s33, %s36
    %p42 = scmp.eq.s32.totalorder %s9, 0
    %p43 = por %p41, %p42
    %p44 = scmp.ne.s32.totalorder %s33, %s36
    %p45 = scmp.eq.s32.totalorder %s14, 3
    %p46 = por %p44, %p45
    %p47 = scmp.ne.s32.totalorder %s36, %s37
    %p48 = scmp.eq.s32.totalorder %s14, 0
    %p49 = por %p47, %p48
    %p50 = scmp.ne.s32.totalorder %s36, %s37
    %p51 = scmp.eq.s32.totalorder %s15, 3
    %p52 = por %p50, %p51
    %p54 = scmp.ne.s32.totalorder %s37, %s53
    %p55 = scmp.eq.s32.totalorder %s15, 0
    %p56 = por %p54, %p55
    %s58 = sadd.s32 %s57, 1
    %p61 = scmp.eq.s32.totalorder %s9, 3
    %p62 = scmp.ne.s32.totalorder %s57, %s59
    %p63 = scmp.eq.s32.totalorder %s9, 0
    %p64 = por %p62, %p63
    %p65 = scmp.ne.s32.totalorder %s57, %s59
    %p66 = scmp.eq.s32.totalorder %s14, 3
    %p67 = por %p65, %p66
    %p68 = scmp.ne.s32.totalorder %s59, %s60
    %p69 = scmp.eq.s32.totalorder %s14, 0
    %p70 = por %p68, %p69
    %p71 = scmp.ne.s32.totalorder %s59, %s60
    %p72 = scmp.eq.s32.totalorder %s15, 3
    %p73 = por %p71, %p72
    %p75 = scmp.ne.s32.totalorder %s60, %s74
    %p76 = scmp.eq.s32.totalorder %s15, 0
    %p77 = por %p75, %p76
    %s79 = sadd.s32 %s78, 1
    %p82 = scmp.eq.s32.totalorder %s9, 3
    %p83 = scmp.ne.s32.totalorder %s78, %s80
    %p84 = scmp.eq.s32.totalorder %s9, 0
    %p85 = por %p83, %p84
    %p86 = scmp.ne.s32.totalorder %s78, %s80
    %p87 = scmp.eq.s32.totalorder %s14, 3
    %p88 = por %p86, %p87
    %p89 = scmp.ne.s32.totalorder %s80, %s81
    %p90 = scmp.eq.s32.totalorder %s14, 0
    %p91 = por %p89, %p90
    %p92 = scmp.ne.s32.totalorder %s80, %s81
    %p93 = scmp.eq.s32.totalorder %s15, 3
    %p94 = por %p92, %p93
    %p96 = scmp.ne.s32.totalorder %s81, %s95
    %p97 = scmp.eq.s32.totalorder %s15, 0
    %p98 = por %p96, %p97
    %s99 = ssub.s32 %s16, %s28
    %s100 = ssub.s32 %s17, %s24
    %s101 = sor.u32 %s99, %s100
    %p102 = scmp.eq.s32.totalorder %s101, 0
    %s104 = sadd.s32 %s103, 1
    %s105 = scalar_select %p102, %s103, %s104
    %p108 = pneg %p102
    %p109 = scmp.eq.s32.totalorder %s9, 3
    %p110 = por %p108, %p109
    %p111 = scmp.ne.s32.totalorder %s103, %s106
    %p112 = scmp.eq.s32.totalorder %s9, 0
    %p113 = por %p111, %p112
    %p114 = scmp.ne.s32.totalorder %s103, %s106
    %p115 = scmp.eq.s32.totalorder %s14, 3
    %p116 = por %p114, %p115
    %p117 = scmp.ne.s32.totalorder %s106, %s107
    %p118 = scmp.eq.s32.totalorder %s14, 0
    %p119 = por %p117, %p118
    %p120 = scmp.ne.s32.totalorder %s106, %s107
    %p121 = scmp.eq.s32.totalorder %s15, 3
    %p122 = por %p120, %p121
    %p124 = scmp.ne.s32.totalorder %s107, %s123
    %p125 = scmp.eq.s32.totalorder %s15, 0
    %p126 = por %p124, %p125
    %p127 = scmp.le.s32.totalorder 1, %s9
    %p128 = scmp.lt.s32.totalorder %s9, 5
    %p129 = pnand %p127, %p128
    %p130 = pneg %p129
    // Predicated region
    $region9: #{dcgan_generator.14} parent=5 // pred_check
      _
    $region10: #{dcgan_generator.14} parent=5 // pred_check_branch
      %132 = sbr.rel (%p129) target = $region12
    $region11: #{dcgan_generator.14} parent=5 // pred_region
      %s133 = ssub.s32 %s9, 1
      // Predicated region
      $region13: #{dcgan_generator.14} parent=11 // pred_check
        %p134 = pneg %p70
      $region14: #{dcgan_generator.14} parent=11 // pred_check_branch
        %136 = sbr.rel (%p134) target = $region16
      $region15: #{dcgan_generator.14} parent=11 // pred_region
        _
      $region16: #{dcgan_generator.14} parent=11 // pred_fallthru
        _
      // Predicated region
      $region17: #{dcgan_generator.14} parent=11 // pred_check
        %p137 = pneg %p91
      $region18: #{dcgan_generator.14} parent=11 // pred_check_branch
        %139 = sbr.rel (%p137) target = $region20
      $region19: #{dcgan_generator.14} parent=11 // pred_region
        _
      $region20: #{dcgan_generator.14} parent=11 // pred_fallthru
        _
    $region12: #{dcgan_generator.14} parent=5 // pred_fallthru
      _
    %p140 = scmp.lt.s32.totalorder %s9, 4
    // Predicated region
    $region21: #{dcgan_generator.14} parent=5 // pred_check
      %p141 = pneg %p140
    $region22: #{dcgan_generator.14} parent=5 // pred_check_branch
      %143 = sbr.rel (%p141) target = $region24
    $region23: #{dcgan_generator.14} parent=5 // pred_region
      // Predicated region
      $region25: #{dcgan_generator.14} parent=23 // pred_check
        %p144 = pneg %p43
      $region26: #{dcgan_generator.14} parent=23 // pred_check_branch
        %146 = sbr.rel (%p144) target = $region28
      $region27: #{dcgan_generator.14} parent=23 // pred_region
        %s147 = smul.u32 16, %s17
        %p148 = scmp.lt.s32.totalorder %s16, 3
        %s149 = scalar_select %p148, %s16, 3
        %p150 = scmp.lt.s32.totalorder %s147, 15
        %s151 = scalar_select %p150, %s147, 15
        %s152 = smul.addr %s149, 16
        %s153 = sadd.s32 %s151, %s152
        %s154 = smul.addr %s153, 4
        %s155 = scalar_lea.vmem %s0, %s154
        %s156 = smul.u32 16, %s17
      $region28: #{dcgan_generator.14} parent=23 // pred_fallthru
        _
    $region24: #{dcgan_generator.14} parent=5 // pred_fallthru
      _
    %p157 = scmp.le.s32.totalorder 1, %s9
    %p158 = scmp.lt.s32.totalorder %s9, 5
    %p159 = pnand %p157, %p158
    %p160 = pneg %p159
    // Predicated region
    $region29: #{dcgan_generator.14} parent=5 // pred_check
      _
    $region30: #{dcgan_generator.14} parent=5 // pred_check_branch
      %162 = sbr.rel (%p159) target = $region32
    $region31: #{dcgan_generator.14} parent=5 // pred_region
      %s163 = ssub.s32 %s9, 1
      %s164 = smul.u32 16, %s19
      %p165 = scmp.lt.s32.totalorder %s18, 3
      %s166 = scalar_select %p165, %s18, 3
      %p167 = scmp.lt.s32.totalorder %s164, 15
      %s168 = scalar_select %p167, %s164, 15
      %s169 = smul.addr %s166, 16
      %s170 = sadd.s32 %s168, %s169
      %s171 = smul.addr %s170, 4
      %s172 = scalar_lea.vmem %s0, %s171
      %p173 = pneg %p49
      %p174 = pneg %p46
      %p175 = pneg %p70
      %p176 = pneg %p67
      %p177 = pneg %p91
      %p178 = pneg %p88
      %p179 = pneg %p119
      %p180 = pneg %p116
      %s181 = smul.u32 16, %s19
      %p182 = scmp.lt.s32.totalorder %s18, 3
      %s183 = scalar_select %p182, %s18, 3
      %p184 = scmp.lt.s32.totalorder %s181, 15
      %s185 = scalar_select %p184, %s181, 15
      %s186 = smul.addr %s183, 16
      %s187 = sadd.s32 %s185, %s186
      %s188 = smul.addr %s187, 4
      %s189 = scalar_lea.vmem %s3, %s188
      %s190 = smul.u32 16, %s19
      %p191 = scmp.lt.s32.totalorder %s18, 3
      %s192 = scalar_select %p191, %s18, 3
      %p193 = scmp.lt.s32.totalorder %s190, 15
      %s194 = scalar_select %p193, %s190, 15
      %s195 = smul.addr %s192, 16
      %s196 = sadd.s32 %s194, %s195
      %s197 = smul.addr %s196, 4
      %s198 = scalar_lea.vmem %s0, %s197
      %s199 = smul.u32 16, %s19
      %s200 = smul.u32 16, %s19
      %p201 = scmp.lt.s32.totalorder %s18, 3
      %s202 = scalar_select %p201, %s18, 3
      %p203 = scmp.lt.s32.totalorder %s200, 15
      %s204 = scalar_select %p203, %s200, 15
      %s205 = smul.addr %s202, 16
      %s206 = sadd.s32 %s204, %s205
      %s207 = smul.addr %s206, 4
      %s208 = scalar_lea.vmem %s3, %s207
      %s209 = smul.u32 16, %s19
      %v210 = vld [vmem:[%s198] sm:$0xf]
      %v211 = vld [vmem:[%s198 + $0x4] sm:$0xf]
      %v212 = vld [vmem:[%s198 + $0x8] sm:$0xf]
      %v213 = vld [vmem:[%s198 + $0xc] sm:$0xf]
      %v214 = vld [vmem:[%s198 + $0x10] sm:$0xf]
      %v215 = vld [vmem:[%s198 + $0x14] sm:$0xf]
      %v216 = vld [vmem:[%s198 + $0x18] sm:$0xf]
      %v217 = vld [vmem:[%s198 + $0x1c] sm:$0xf]
      %v218 = vld [vmem:[%s198 + $0x20] sm:$0xf]
      %v219 = vld [vmem:[%s198 + $0x24] sm:$0xf]
      %v220 = vld [vmem:[%s198 + $0x28] sm:$0xf]
      %v221 = vld [vmem:[%s198 + $0x2c] sm:$0xf]
      %v222 = vld [vmem:[%s198 + $0x30] sm:$0xf]
      %v223 = vld [vmem:[%s198 + $0x34] sm:$0xf]
      %v224 = vld [vmem:[%s198 + $0x38] sm:$0xf]
      %v225 = vld [vmem:[%s198 + $0x3c] sm:$0xf]
      %v226 = vunpack.c.l.bf16 %v210
      %v227 = vunpack.c.l.bf16 %v211
      %v228 = vunpack.c.l.bf16 %v212
      %v229 = vunpack.c.l.bf16 %v213
      %v230 = vunpack.c.l.bf16 %v214
      %v231 = vunpack.c.l.bf16 %v215
      %v232 = vunpack.c.l.bf16 %v216
      %v233 = vunpack.c.l.bf16 %v217
      %v234 = vunpack.c.l.bf16 %v218
      %v235 = vunpack.c.l.bf16 %v219
      %v236 = vunpack.c.l.bf16 %v220
      %v237 = vunpack.c.l.bf16 %v221
      %v238 = vunpack.c.l.bf16 %v222
      %v239 = vunpack.c.l.bf16 %v223
      %v240 = vunpack.c.l.bf16 %v224
      %v241 = vunpack.c.l.bf16 %v225
      %v242 = vld [vmem:[%s1] sm:$0x1]
      %v244 = vlaneseq
      %v245 = vshrl.u32 %v244, 7
      %v246 = vsub.s32 0, %v245
      %v247 = vrot.slane %v242, %v246
      %v249 = vmul.f32 %v226, %v247
      %v250 = vmul.f32 %v227, %v247
      %v251 = vmul.f32 %v228, %v247
      %v252 = vmul.f32 %v229, %v247
      %v253 = vmul.f32 %v230, %v247
      %v254 = vmul.f32 %v231, %v247
      %v255 = vmul.f32 %v232, %v247
      %v256 = vmul.f32 %v233, %v247
      %v257 = vmul.f32 %v234, %v247
      %v258 = vmul.f32 %v235, %v247
      %v259 = vmul.f32 %v236, %v247
      %v260 = vmul.f32 %v237, %v247
      %v261 = vmul.f32 %v238, %v247
      %v262 = vmul.f32 %v239, %v247
      %v263 = vmul.f32 %v240, %v247
      %v264 = vmul.f32 %v241, %v247
      %v265 = vld [vmem:[%s2] sm:$0x1]
      %v267 = vlaneseq
      %v268 = vshrl.u32 %v267, 7
      %v269 = vsub.s32 0, %v268
      %v270 = vrot.slane %v265, %v269
      %v272 = vadd.f32 %v249, %v270
      %v273 = vadd.f32 %v250, %v270
      %v274 = vadd.f32 %v251, %v270
      %v275 = vadd.f32 %v252, %v270
      %v276 = vadd.f32 %v253, %v270
      %v277 = vadd.f32 %v254, %v270
      %v278 = vadd.f32 %v255, %v270
      %v279 = vadd.f32 %v256, %v270
      %v280 = vadd.f32 %v257, %v270
      %v281 = vadd.f32 %v258, %v270
      %v282 = vadd.f32 %v259, %v270
      %v283 = vadd.f32 %v260, %v270
      %v284 = vadd.f32 %v261, %v270
      %v285 = vadd.f32 %v262, %v270
      %v286 = vadd.f32 %v263, %v270
      %v287 = vadd.f32 %v264, %v270
      %vm288 = vcmp.gt.f32.partialorder %v272, 0.0
      %vm289 = vcmp.gt.f32.partialorder %v273, 0.0
      %vm290 = vcmp.gt.f32.partialorder %v274, 0.0
      %vm291 = vcmp.gt.f32.partialorder %v275, 0.0
      %vm292 = vcmp.gt.f32.partialorder %v276, 0.0
      %vm293 = vcmp.gt.f32.partialorder %v277, 0.0
      %vm294 = vcmp.gt.f32.partialorder %v278, 0.0
      %vm295 = vcmp.gt.f32.partialorder %v279, 0.0
      %vm296 = vcmp.gt.f32.partialorder %v280, 0.0
      %vm297 = vcmp.gt.f32.partialorder %v281, 0.0
      %vm298 = vcmp.gt.f32.partialorder %v282, 0.0
      %vm299 = vcmp.gt.f32.partialorder %v283, 0.0
      %vm300 = vcmp.gt.f32.partialorder %v284, 0.0
      %vm301 = vcmp.gt.f32.partialorder %v285, 0.0
      %vm302 = vcmp.gt.f32.partialorder %v286, 0.0
      %vm303 = vcmp.gt.f32.partialorder %v287, 0.0
      %v304 = vmul.f32 %v272, 0.2
      %v305 = vmul.f32 %v273, 0.2
      %v306 = vmul.f32 %v274, 0.2
      %v307 = vmul.f32 %v275, 0.2
      %v308 = vmul.f32 %v276, 0.2
      %v309 = vmul.f32 %v277, 0.2
      %v310 = vmul.f32 %v278, 0.2
      %v311 = vmul.f32 %v279, 0.2
      %v312 = vmul.f32 %v280, 0.2
      %v313 = vmul.f32 %v281, 0.2
      %v314 = vmul.f32 %v282, 0.2
      %v315 = vmul.f32 %v283, 0.2
      %v316 = vmul.f32 %v284, 0.2
      %v317 = vmul.f32 %v285, 0.2
      %v318 = vmul.f32 %v286, 0.2
      %v319 = vmul.f32 %v287, 0.2
      %v320 = vsel %vm288, %v272, %v304
      %v321 = vsel %vm289, %v273, %v305
      %v322 = vsel %vm290, %v274, %v306
      %v323 = vsel %vm291, %v275, %v307
      %v324 = vsel %vm292, %v276, %v308
      %v325 = vsel %vm293, %v277, %v309
      %v326 = vsel %vm294, %v278, %v310
      %v327 = vsel %vm295, %v279, %v311
      %v328 = vsel %vm296, %v280, %v312
      %v329 = vsel %vm297, %v281, %v313
      %v330 = vsel %vm298, %v282, %v314
      %v331 = vsel %vm299, %v283, %v315
      %v332 = vsel %vm300, %v284, %v316
      %v333 = vsel %vm301, %v285, %v317
      %v334 = vsel %vm302, %v286, %v318
      %v335 = vsel %vm303, %v287, %v319
      %v336 = vpack.c.bf16 %v321, %v320
      %v337 = vpack.c.bf16 %v323, %v322
      %v338 = vpack.c.bf16 %v325, %v324
      %v339 = vpack.c.bf16 %v327, %v326
      %v340 = vpack.c.bf16 %v329, %v328
      %v341 = vpack.c.bf16 %v331, %v330
      %v342 = vpack.c.bf16 %v333, %v332
      %v343 = vpack.c.bf16 %v335, %v334
      %v352 = vunpack.c.l.b16 %v336
      %v353 = vunpack.c.h.b16 %v336
      %v354 = vunpack.c.l.b16 %v337
      %v355 = vunpack.c.h.b16 %v337
      %v356 = vunpack.c.l.b16 %v338
      %v357 = vunpack.c.h.b16 %v338
      %v358 = vunpack.c.l.b16 %v339
      %v359 = vunpack.c.h.b16 %v339
      %v360 = vunpack.c.l.b16 %v340
      %v361 = vunpack.c.h.b16 %v340
      %v362 = vunpack.c.l.b16 %v341
      %v363 = vunpack.c.h.b16 %v341
      %v364 = vunpack.c.l.b16 %v342
      %v365 = vunpack.c.h.b16 %v342
      %v366 = vunpack.c.l.b16 %v343
      %v367 = vunpack.c.h.b16 %v343
      %v368 = vpack.c.b16 %v352, %v352
      %v369 = vpack.c.b16 %v353, %v353
      %v370 = vpack.c.b16 %v354, %v354
      %v371 = vpack.c.b16 %v355, %v355
      %v372 = vpack.c.b16 %v356, %v356
      %v373 = vpack.c.b16 %v357, %v357
      %v374 = vpack.c.b16 %v358, %v358
      %v375 = vpack.c.b16 %v359, %v359
      %v376 = vpack.c.b16 %v360, %v360
      %v377 = vpack.c.b16 %v361, %v361
      %v378 = vpack.c.b16 %v362, %v362
      %v379 = vpack.c.b16 %v363, %v363
      %v380 = vpack.c.b16 %v364, %v364
      %v381 = vpack.c.b16 %v365, %v365
      %v382 = vpack.c.b16 %v366, %v366
      %v383 = vpack.c.b16 %v367, %v367
      %400 = vst [vmem:[%s208] sm:$0xf] %v368
      %401 = vst [vmem:[%s208 + $0x4] sm:$0xf] %v369
      %402 = vst [vmem:[%s208 + $0x8] sm:$0xf] %v370
      %403 = vst [vmem:[%s208 + $0xc] sm:$0xf] %v371
      %404 = vst [vmem:[%s208 + $0x10] sm:$0xf] %v372
      %405 = vst [vmem:[%s208 + $0x14] sm:$0xf] %v373
      %406 = vst [vmem:[%s208 + $0x18] sm:$0xf] %v374
      %407 = vst [vmem:[%s208 + $0x1c] sm:$0xf] %v375
      %408 = vst [vmem:[%s208 + $0x20] sm:$0xf] %v376
      %409 = vst [vmem:[%s208 + $0x24] sm:$0xf] %v377
      %410 = vst [vmem:[%s208 + $0x28] sm:$0xf] %v378
      %411 = vst [vmem:[%s208 + $0x2c] sm:$0xf] %v379
      %412 = vst [vmem:[%s208 + $0x30] sm:$0xf] %v380
      %413 = vst [vmem:[%s208 + $0x34] sm:$0xf] %v381
      %414 = vst [vmem:[%s208 + $0x38] sm:$0xf] %v382
      %415 = vst [vmem:[%s208 + $0x3c] sm:$0xf] %v383
      %s416 = smul.u32 16, %s19
      %p417 = scmp.lt.s32.totalorder %s18, 3
      %s418 = scalar_select %p417, %s18, 3
      %p419 = scmp.lt.s32.totalorder %s416, 15
      %s420 = scalar_select %p419, %s416, 15
      %s421 = smul.addr %s418, 16
      %s422 = sadd.s32 %s420, %s421
      %s423 = smul.addr %s422, 4
      %s424 = scalar_lea.vmem %s3, %s423
      // Predicated region
      $region33: #{dcgan_generator.14} parent=31 // pred_check
        %p425 = pneg %p116
      $region34: #{dcgan_generator.14} parent=31 // pred_check_branch
        %427 = sbr.rel (%p425) target = $region36
      $region35: #{dcgan_generator.14} parent=31 // pred_region
        %s428 = smul.u32 16, %s19
      $region36: #{dcgan_generator.14} parent=31 // pred_fallthru
        _
    $region32: #{dcgan_generator.14} parent=5 // pred_fallthru
      _
    %p429 = scmp.le.s32.totalorder 2, %s9
    // Predicated region
    $region37: #{dcgan_generator.14} parent=5 // pred_check
      %p430 = pneg %p429
    $region38: #{dcgan_generator.14} parent=5 // pred_check_branch
      %432 = sbr.rel (%p430) target = $region40
    $region39: #{dcgan_generator.14} parent=5 // pred_region
      %s433 = ssub.s32 %s9, 2
      // Predicated region
      $region41: #{dcgan_generator.14} parent=39 // pred_check
        %p434 = pneg %p122
      $region42: #{dcgan_generator.14} parent=39 // pred_check_branch
        %436 = sbr.rel (%p434) target = $region44
      $region43: #{dcgan_generator.14} parent=39 // pred_region
        %s437 = smul.u32 16, %s21
        %p438 = scmp.lt.s32.totalorder %s20, 3
        %s439 = scalar_select %p438, %s20, 3
        %p440 = scmp.lt.s32.totalorder %s437, 15
        %s441 = scalar_select %p440, %s437, 15
        %s442 = smul.addr %s439, 16
        %s443 = sadd.s32 %s441, %s442
        %s444 = smul.addr %s443, 4
        %s445 = scalar_lea.vmem %s3, %s444
      $region44: #{dcgan_generator.14} parent=39 // pred_fallthru
        _
    $region40: #{dcgan_generator.14} parent=5 // pred_fallthru
      _
  $region6: #{dcgan_generator.14} parent=0 // loop_footer
    %s13 = sadd.s32 1, %s9
  $region7: #{dcgan_generator.14} parent=0 // loop_footer_branch
    %8 = sbr.rel target = $region3
  $region8: #{dcgan_generator.14} parent=0 // loop_exit
    _

// kernel: dcgan_generator.13
$region0: #{dcgan_generator.13}
  #allocation0 [shape = 'u32[]', space=smem, size = 0x4, offset = 0x4, fixed_abs, tag = 'smem constant byte address 0x4 - core index']
  #allocation1 [shape = 'u32[144,128]{1,0:T(1,128)}', space=vmem, size = 0x12000, scoped, tag = 'internal scratch']
  %s0 = inlined_call_operand.vmem [shape: bf16[4,128,256], index: 0, kind: input, shape index: {}]
  %s1 = inlined_call_operand.vmem [shape: bf16[4,256,128], index: 1, kind: input, shape index: {}]
  %s2 = inlined_call_operand.vmem [shape: bf16[4,128,128], index: 2, kind: output, shape index: {0}]
  %s3 = inlined_call_operand.vmem [shape: f32[4,8,128], index: 3, kind: output, shape index: {1}]
  %s4 = inlined_call_operand.vmem [shape: f32[4,8,128], index: 4, kind: output, shape index: {2}]
  %5 = xla_tuple %s2, %s3, %s4
  %s6 = sld [smem:[#allocation0]]
  $region57: #{dcgan_generator.13} parent=0
    _
  %s8 = ssub.s32 1, %s6
  %s9 = scalar_select 0, %s8, %s6
  loop: start=0, step=1, limit=6
  $region2: #{dcgan_generator.13} parent=0 // loop_pre_header
    _
  $region3: #{dcgan_generator.13} parent=0 // loop_header
    %s11 = sphi 0, %s15
    %p12 = scmp.ge.s32.totalorder %s11, 6
    %s18 = sphi 0, %s30
    %s19 = sphi 0, %s26
    %s20 = sphi 0, %s18
    %s21 = sphi 0, %s19
    %s22 = sphi 0, %s20
    %s23 = sphi 0, %s21
    %s35 = sphi 0, %s37
    %s38 = sphi 0, %s35
    %s39 = sphi 0, %s38
    %s55 = sphi 0, %s39
    %s61 = sphi 0, %s63
    %s64 = sphi 0, %s61
    %s65 = sphi 0, %s64
    %s81 = sphi 0, %s65
    %s89 = sphi 0, %s91
    %s92 = sphi 0, %s89
    %s93 = sphi 0, %s92
    %s109 = sphi 0, %s93
    %s117 = sphi 0, %s119
    %s120 = sphi 0, %s117
    %s121 = sphi 0, %s120
    %s137 = sphi 0, %s121
    %s145 = sphi 0, %s147
    %s148 = sphi 0, %s145
    %s149 = sphi 0, %s148
    %s165 = sphi 0, %s149
  $region4: #{dcgan_generator.13} parent=0 // loop_header_branch
    %14 = sbr.rel (%p12) target = $region8
  $region5: #{dcgan_generator.13} parent=0 // loop_body
    %s16 = ssub.s32 %s11, 1
    %s17 = ssub.s32 %s11, 2
    %s24 = sadd.s32 1, %s19
    %p25 = scmp.ge.s32.totalorder %s24, 1
    %s26 = scalar_select %p25, 0, %s24
    %s27 = sadd.s32 1, %s18
    %s28 = scalar_select %p25, %s27, %s18
    %p29 = scmp.ge.s32.totalorder %s28, 4
    %s30 = scalar_select %p29, 0, %s28
    %s31 = ssub.s32 %s18, %s30
    %s32 = ssub.s32 %s19, %s26
    %s33 = sor.u32 %s31, %s32
    %p34 = scmp.eq.s32.totalorder %s33, 0
    %s36 = sadd.s32 %s35, 1
    %s37 = scalar_select %p34, %s35, %s36
    %p40 = pneg %p34
    %p41 = scmp.eq.s32.totalorder %s11, 3
    %p42 = por %p40, %p41
    %p43 = scmp.ne.s32.totalorder %s35, %s38
    %p44 = scmp.eq.s32.totalorder %s11, 0
    %p45 = por %p43, %p44
    %p46 = scmp.ne.s32.totalorder %s35, %s38
    %p47 = scmp.eq.s32.totalorder %s16, 3
    %p48 = por %p46, %p47
    %p49 = scmp.ne.s32.totalorder %s38, %s39
    %p50 = scmp.eq.s32.totalorder %s16, 0
    %p51 = por %p49, %p50
    %p52 = scmp.ne.s32.totalorder %s38, %s39
    %p53 = scmp.eq.s32.totalorder %s17, 3
    %p54 = por %p52, %p53
    %p56 = scmp.ne.s32.totalorder %s39, %s55
    %p57 = scmp.eq.s32.totalorder %s17, 0
    %p58 = por %p56, %p57
    %s59 = ssub.s32 %s18, %s30
    %p60 = scmp.eq.s32.totalorder %s59, 0
    %s62 = sadd.s32 %s61, 1
    %s63 = scalar_select %p60, %s61, %s62
    %p66 = pneg %p60
    %p67 = scmp.eq.s32.totalorder %s11, 3
    %p68 = por %p66, %p67
    %p69 = scmp.ne.s32.totalorder %s61, %s64
    %p70 = scmp.eq.s32.totalorder %s11, 0
    %p71 = por %p69, %p70
    %p72 = scmp.ne.s32.totalorder %s61, %s64
    %p73 = scmp.eq.s32.totalorder %s16, 3
    %p74 = por %p72, %p73
    %p75 = scmp.ne.s32.totalorder %s64, %s65
    %p76 = scmp.eq.s32.totalorder %s16, 0
    %p77 = por %p75, %p76
    %p78 = scmp.ne.s32.totalorder %s64, %s65
    %p79 = scmp.eq.s32.totalorder %s17, 3
    %p80 = por %p78, %p79
    %p82 = scmp.ne.s32.totalorder %s65, %s81
    %p83 = scmp.eq.s32.totalorder %s17, 0
    %p84 = por %p82, %p83
    %s85 = ssub.s32 %s18, %s30
    %s86 = ssub.s32 %s19, %s26
    %s87 = sor.u32 %s85, %s86
    %p88 = scmp.eq.s32.totalorder %s87, 0
    %s90 = sadd.s32 %s89, 1
    %s91 = scalar_select %p88, %s89, %s90
    %p94 = pneg %p88
    %p95 = scmp.eq.s32.totalorder %s11, 3
    %p96 = por %p94, %p95
    %p97 = scmp.ne.s32.totalorder %s89, %s92
    %p98 = scmp.eq.s32.totalorder %s11, 0
    %p99 = por %p97, %p98
    %p100 = scmp.ne.s32.totalorder %s89, %s92
    %p101 = scmp.eq.s32.totalorder %s16, 3
    %p102 = por %p100, %p101
    %p103 = scmp.ne.s32.totalorder %s92, %s93
    %p104 = scmp.eq.s32.totalorder %s16, 0
    %p105 = por %p103, %p104
    %p106 = scmp.ne.s32.totalorder %s92, %s93
    %p107 = scmp.eq.s32.totalorder %s17, 3
    %p108 = por %p106, %p107
    %p110 = scmp.ne.s32.totalorder %s93, %s109
    %p111 = scmp.eq.s32.totalorder %s17, 0
    %p112 = por %p110, %p111
    %s113 = ssub.s32 %s18, %s30
    %s114 = ssub.s32 %s19, %s26
    %s115 = sor.u32 %s113, %s114
    %p116 = scmp.eq.s32.totalorder %s115, 0
    %s118 = sadd.s32 %s117, 1
    %s119 = scalar_select %p116, %s117, %s118
    %p122 = pneg %p116
    %p123 = scmp.eq.s32.totalorder %s11, 3
    %p124 = por %p122, %p123
    %p125 = scmp.ne.s32.totalorder %s117, %s120
    %p126 = scmp.eq.s32.totalorder %s11, 0
    %p127 = por %p125, %p126
    %p128 = scmp.ne.s32.totalorder %s117, %s120
    %p129 = scmp.eq.s32.totalorder %s16, 3
    %p130 = por %p128, %p129
    %p131 = scmp.ne.s32.totalorder %s120, %s121
    %p132 = scmp.eq.s32.totalorder %s16, 0
    %p133 = por %p131, %p132
    %p134 = scmp.ne.s32.totalorder %s120, %s121
    %p135 = scmp.eq.s32.totalorder %s17, 3
    %p136 = por %p134, %p135
    %p138 = scmp.ne.s32.totalorder %s121, %s137
    %p139 = scmp.eq.s32.totalorder %s17, 0
    %p140 = por %p138, %p139
    %s141 = ssub.s32 %s18, %s30
    %s142 = ssub.s32 %s19, %s26
    %s143 = sor.u32 %s141, %s142
    %p144 = scmp.eq.s32.totalorder %s143, 0
    %s146 = sadd.s32 %s145, 1
    %s147 = scalar_select %p144, %s145, %s146
    %p150 = pneg %p144
    %p151 = scmp.eq.s32.totalorder %s11, 3
    %p152 = por %p150, %p151
    %p153 = scmp.ne.s32.totalorder %s145, %s148
    %p154 = scmp.eq.s32.totalorder %s11, 0
    %p155 = por %p153, %p154
    %p156 = scmp.ne.s32.totalorder %s145, %s148
    %p157 = scmp.eq.s32.totalorder %s16, 3
    %p158 = por %p156, %p157
    %p159 = scmp.ne.s32.totalorder %s148, %s149
    %p160 = scmp.eq.s32.totalorder %s16, 0
    %p161 = por %p159, %p160
    %p162 = scmp.ne.s32.totalorder %s148, %s149
    %p163 = scmp.eq.s32.totalorder %s17, 3
    %p164 = por %p162, %p163
    %p166 = scmp.ne.s32.totalorder %s149, %s165
    %p167 = scmp.eq.s32.totalorder %s17, 0
    %p168 = por %p166, %p167
    %p169 = scmp.le.s32.totalorder 1, %s11
    %p170 = scmp.lt.s32.totalorder %s11, 5
    %p171 = pnand %p169, %p170
    %p172 = pneg %p171
    // Predicated region
    $region9: #{dcgan_generator.13} parent=5 // pred_check
      _
    $region10: #{dcgan_generator.13} parent=5 // pred_check_branch
      %174 = sbr.rel (%p171) target = $region12
    $region11: #{dcgan_generator.13} parent=5 // pred_region
      %s175 = ssub.s32 %s11, 1
    $region12: #{dcgan_generator.13} parent=5 // pred_fallthru
      _
    %p176 = scmp.lt.s32.totalorder %s11, 4
    // Predicated region
    $region13: #{dcgan_generator.13} parent=5 // pred_check
      %p177 = pneg %p176
    $region14: #{dcgan_generator.13} parent=5 // pred_check_branch
      %179 = sbr.rel (%p177) target = $region16
    $region15: #{dcgan_generator.13} parent=5 // pred_region
      // Predicated region
      $region17: #{dcgan_generator.13} parent=15 // pred_check
        %p180 = pneg %p45
      $region18: #{dcgan_generator.13} parent=15 // pred_check_branch
        %182 = sbr.rel (%p180) target = $region20
      $region19: #{dcgan_generator.13} parent=15 // pred_region
        %s183 = smul.u32 16, %s19
        %p184 = scmp.lt.s32.totalorder %s18, 3
        %s185 = scalar_select %p184, %s18, 3
        %p186 = scmp.lt.s32.totalorder %s183, 15
        %s187 = scalar_select %p186, %s183, 15
        %s188 = smul.addr %s187, 2
        %s189 = smul.addr %s185, 32
        %s190 = sadd.s32 %s188, %s189
        %s191 = smul.addr %s190, 4
        %s192 = scalar_lea.vmem %s0, %s191
        %s193 = smul.u32 16, %s19
      $region20: #{dcgan_generator.13} parent=15 // pred_fallthru
        _
      // Predicated region
      $region21: #{dcgan_generator.13} parent=15 // pred_check
        %p194 = pneg %p71
      $region22: #{dcgan_generator.13} parent=15 // pred_check_branch
        %196 = sbr.rel (%p194) target = $region24
      $region23: #{dcgan_generator.13} parent=15 // pred_region
        %p197 = scmp.lt.s32.totalorder %s18, 3
        %s198 = scalar_select %p197, %s18, 3
        %s199 = smul.addr %s198, 32
        %s200 = smul.addr %s199, 4
        %s201 = scalar_lea.vmem %s1, %s200
      $region24: #{dcgan_generator.13} parent=15 // pred_fallthru
        _
    $region16: #{dcgan_generator.13} parent=5 // pred_fallthru
      _
    %p202 = scmp.le.s32.totalorder 1, %s11
    %p203 = scmp.lt.s32.totalorder %s11, 5
    %p204 = pnand %p202, %p203
    %p205 = pneg %p204
    // Predicated region
    $region25: #{dcgan_generator.13} parent=5 // pred_check
      _
    $region26: #{dcgan_generator.13} parent=5 // pred_check_branch
      %207 = sbr.rel (%p204) target = $region28
    $region27: #{dcgan_generator.13} parent=5 // pred_region
      %s208 = ssub.s32 %s11, 1
      %s209 = smul.u32 16, %s21
      %p210 = scmp.lt.s32.totalorder %s20, 3
      %s211 = scalar_select %p210, %s20, 3
      %p212 = scmp.lt.s32.totalorder %s209, 15
      %s213 = scalar_select %p212, %s209, 15
      %s214 = smul.addr %s213, 2
      %s215 = smul.addr %s211, 32
      %s216 = sadd.s32 %s214, %s215
      %s217 = smul.addr %s216, 4
      %s218 = scalar_lea.vmem %s0, %s217
      %p219 = pneg %p51
      %p220 = pneg %p48
      %p221 = scmp.lt.s32.totalorder %s20, 3
      %s222 = scalar_select %p221, %s20, 3
      %s223 = smul.addr %s222, 32
      %s224 = smul.addr %s223, 4
      %s225 = scalar_lea.vmem %s1, %s224
      %p226 = pneg %p77
      %p227 = pneg %p74
      %p228 = pneg %p105
      %p229 = pneg %p102
      %s230 = smul.u32 16, %s21
      %p231 = scmp.lt.s32.totalorder %s20, 3
      %s232 = scalar_select %p231, %s20, 3
      %p233 = scmp.lt.s32.totalorder %s230, 15
      %s234 = scalar_select %p233, %s230, 15
      %s235 = smul.addr %s232, 16
      %s236 = sadd.s32 %s234, %s235
      %s237 = smul.addr %s236, 4
      %s238 = scalar_lea.vmem %s2, %s237
      %p239 = pneg %p133
      %p240 = pneg %p130
      %p241 = scmp.lt.s32.totalorder %s20, 3
      %s242 = scalar_select %p241, %s20, 3
      %p243 = scmp.lt.s32.totalorder %s21, 0
      %s244 = scalar_select %p243, %s21, 0
      %s245 = sadd.s32 %s244, %s242
      %s246 = smul.addr %s245, 8
      %s247 = scalar_lea.vmem %s3, %s246
      %p248 = pneg %p161
      %p249 = pneg %p158
      %p250 = scmp.lt.s32.totalorder %s20, 3
      %s251 = scalar_select %p250, %s20, 3
      %p252 = scmp.lt.s32.totalorder %s21, 0
      %s253 = scalar_select %p252, %s21, 0
      %s254 = sadd.s32 %s253, %s251
      %s255 = smul.addr %s254, 8
      %s256 = scalar_lea.vmem %s4, %s255
      %s257 = smul.u32 16, %s21
      %p258 = scmp.lt.s32.totalorder %s20, 3
      %s259 = scalar_select %p258, %s20, 3
      %p260 = scmp.lt.s32.totalorder %s257, 15
      %s261 = scalar_select %p260, %s257, 15
      %s262 = smul.addr %s261, 2
      %s263 = smul.addr %s259, 32
      %s264 = sadd.s32 %s262, %s263
      %s265 = smul.addr %s264, 4
      %s266 = scalar_lea.vmem %s0, %s265
      %s267 = smul.u32 16, %s21
      %p268 = scmp.lt.s32.totalorder %s20, 3
      %s269 = scalar_select %p268, %s20, 3
      %s270 = smul.addr %s269, 32
      %s271 = smul.addr %s270, 4
      %s272 = scalar_lea.vmem %s1, %s271
      %s273 = smul.u32 16, %s21
      %p274 = scmp.lt.s32.totalorder %s20, 3
      %s275 = scalar_select %p274, %s20, 3
      %p276 = scmp.lt.s32.totalorder %s273, 15
      %s277 = scalar_select %p276, %s273, 15
      %s278 = smul.addr %s275, 16
      %s279 = sadd.s32 %s277, %s278
      %s280 = smul.addr %s279, 4
      %s281 = scalar_lea.vmem %s2, %s280
      %s282 = smul.u32 16, %s21
      %p283 = scmp.lt.s32.totalorder %s20, 3
      %s284 = scalar_select %p283, %s20, 3
      %p285 = scmp.lt.s32.totalorder %s21, 0
      %s286 = scalar_select %p285, %s21, 0
      %s287 = sadd.s32 %s286, %s284
      %s288 = smul.addr %s287, 8
      %s289 = scalar_lea.vmem %s3, %s288
      %p290 = scmp.lt.s32.totalorder %s20, 3
      %s291 = scalar_select %p290, %s20, 3
      %p292 = scmp.lt.s32.totalorder %s21, 0
      %s293 = scalar_select %p292, %s21, 0
      %s294 = sadd.s32 %s293, %s291
      %s295 = smul.addr %s294, 8
      %s296 = scalar_lea.vmem %s4, %s295
      %v298 = vld [vmem:[%s266] sm:$0xff]
      %v299 = vld [vmem:[%s266 + $0x8] sm:$0xff]
      %v300 = vld [vmem:[%s266 + $0x10] sm:$0xff]
      %v301 = vld [vmem:[%s266 + $0x18] sm:$0xff]
      %v302 = vld [vmem:[%s266 + $0x20] sm:$0xff]
      %v303 = vld [vmem:[%s266 + $0x28] sm:$0xff]
      %v304 = vld [vmem:[%s266 + $0x30] sm:$0xff]
      %v305 = vld [vmem:[%s266 + $0x38] sm:$0xff]
      %v306 = vld [vmem:[%s266 + $0x40] sm:$0xff]
      %v307 = vld [vmem:[%s266 + $0x48] sm:$0xff]
      %v308 = vld [vmem:[%s266 + $0x50] sm:$0xff]
      %v309 = vld [vmem:[%s266 + $0x58] sm:$0xff]
      %v310 = vld [vmem:[%s266 + $0x60] sm:$0xff]
      %v311 = vld [vmem:[%s266 + $0x68] sm:$0xff]
      %v312 = vld [vmem:[%s266 + $0x70] sm:$0xff]
      %v313 = vld [vmem:[%s266 + $0x78] sm:$0xff]
      %v314 = vld [vmem:[%s272] sm:$0xf]
      %v315 = vld [vmem:[%s272 + $0x4] sm:$0xf]
      %v316 = vld [vmem:[%s272 + $0x8] sm:$0xf]
      %v317 = vld [vmem:[%s272 + $0xc] sm:$0xf]
      %v318 = vld [vmem:[%s272 + $0x10] sm:$0xf]
      %v319 = vld [vmem:[%s272 + $0x14] sm:$0xf]
      %v320 = vld [vmem:[%s272 + $0x18] sm:$0xf]
      %v321 = vld [vmem:[%s272 + $0x1c] sm:$0xf]
      %v322 = vld [vmem:[%s272 + $0x20] sm:$0xf]
      %v323 = vld [vmem:[%s272 + $0x24] sm:$0xf]
      %v324 = vld [vmem:[%s272 + $0x28] sm:$0xf]
      %v325 = vld [vmem:[%s272 + $0x2c] sm:$0xf]
      %v326 = vld [vmem:[%s272 + $0x30] sm:$0xf]
      %v327 = vld [vmem:[%s272 + $0x34] sm:$0xf]
      %v328 = vld [vmem:[%s272 + $0x38] sm:$0xf]
      %v329 = vld [vmem:[%s272 + $0x3c] sm:$0xf]
      %v330 = vld [vmem:[%s272 + $0x40] sm:$0xf]
      %v331 = vld [vmem:[%s272 + $0x44] sm:$0xf]
      %v332 = vld [vmem:[%s272 + $0x48] sm:$0xf]
      %v333 = vld [vmem:[%s272 + $0x4c] sm:$0xf]
      %v334 = vld [vmem:[%s272 + $0x50] sm:$0xf]
      %v335 = vld [vmem:[%s272 + $0x54] sm:$0xf]
      %v336 = vld [vmem:[%s272 + $0x58] sm:$0xf]
      %v337 = vld [vmem:[%s272 + $0x5c] sm:$0xf]
      %v338 = vld [vmem:[%s272 + $0x60] sm:$0xf]
      %v339 = vld [vmem:[%s272 + $0x64] sm:$0xf]
      %v340 = vld [vmem:[%s272 + $0x68] sm:$0xf]
      %v341 = vld [vmem:[%s272 + $0x6c] sm:$0xf]
      %v342 = vld [vmem:[%s272 + $0x70] sm:$0xf]
      %v343 = vld [vmem:[%s272 + $0x74] sm:$0xf]
      %v344 = vld [vmem:[%s272 + $0x78] sm:$0xf]
      %v345 = vld [vmem:[%s272 + $0x7c] sm:$0xf]
      %v362 = vunpack.c.l.b16 %v298
      %v363 = vunpack.c.h.b16 %v298
      %v364 = vunpack.c.l.b16 %v299
      %v365 = vunpack.c.h.b16 %v299
      %v366 = vunpack.c.l.b16 %v300
      %v367 = vunpack.c.h.b16 %v300
      %v368 = vunpack.c.l.b16 %v301
      %v369 = vunpack.c.h.b16 %v301
      %v370 = vunpack.c.l.b16 %v302
      %v371 = vunpack.c.h.b16 %v302
      %v372 = vunpack.c.l.b16 %v303
      %v373 = vunpack.c.h.b16 %v303
      %v374 = vunpack.c.l.b16 %v304
      %v375 = vunpack.c.h.b16 %v304
      %v376 = vunpack.c.l.b16 %v305
      %v377 = vunpack.c.h.b16 %v305
      %v378 = vunpack.c.l.b16 %v306
      %v379 = vunpack.c.h.b16 %v306
      %v380 = vunpack.c.l.b16 %v307
      %v381 = vunpack.c.h.b16 %v307
      %v382 = vunpack.c.l.b16 %v308
      %v383 = vunpack.c.h.b16 %v308
      %v384 = vunpack.c.l.b16 %v309
      %v385 = vunpack.c.h.b16 %v309
      %v386 = vunpack.c.l.b16 %v310
      %v387 = vunpack.c.h.b16 %v310
      %v388 = vunpack.c.l.b16 %v311
      %v389 = vunpack.c.h.b16 %v311
      %v390 = vunpack.c.l.b16 %v312
      %v391 = vunpack.c.h.b16 %v312
      %v392 = vunpack.c.l.b16 %v313
      %v393 = vunpack.c.h.b16 %v313
      %v394 = vpack.c.b16 %v364, %v362
      %v395 = vpack.c.b16 %v365, %v363
      %v396 = vpack.c.b16 %v368, %v366
      %v397 = vpack.c.b16 %v369, %v367
      %v398 = vpack.c.b16 %v372, %v370
      %v399 = vpack.c.b16 %v373, %v371
      %v400 = vpack.c.b16 %v376, %v374
      %v401 = vpack.c.b16 %v377, %v375
      %v402 = vpack.c.b16 %v380, %v378
      %v403 = vpack.c.b16 %v381, %v379
      %v404 = vpack.c.b16 %v384, %v382
      %v405 = vpack.c.b16 %v385, %v383
      %v406 = vpack.c.b16 %v388, %v386
      %v407 = vpack.c.b16 %v389, %v387
      %v408 = vpack.c.b16 %v392, %v390
      %v409 = vpack.c.b16 %v393, %v391
      %v458 = vunpack.c.l.b16 %v314
      %v459 = vunpack.c.l.b16 %v315
      %v460 = vunpack.c.l.b16 %v316
      %v461 = vunpack.c.l.b16 %v317
      %v462 = vunpack.c.l.b16 %v318
      %v463 = vunpack.c.l.b16 %v319
      %v464 = vunpack.c.l.b16 %v320
      %v465 = vunpack.c.l.b16 %v321
      %v466 = vunpack.c.l.b16 %v322
      %v467 = vunpack.c.l.b16 %v323
      %v468 = vunpack.c.l.b16 %v324
      %v469 = vunpack.c.l.b16 %v325
      %v470 = vunpack.c.l.b16 %v326
      %v471 = vunpack.c.l.b16 %v327
      %v472 = vunpack.c.l.b16 %v328
      %v473 = vunpack.c.l.b16 %v329
      %v474 = vunpack.c.l.b16 %v330
      %v475 = vunpack.c.l.b16 %v331
      %v476 = vunpack.c.l.b16 %v332
      %v477 = vunpack.c.l.b16 %v333
      %v478 = vunpack.c.l.b16 %v334
      %v479 = vunpack.c.l.b16 %v335
      %v480 = vunpack.c.l.b16 %v336
      %v481 = vunpack.c.l.b16 %v337
      %v482 = vunpack.c.l.b16 %v338
      %v483 = vunpack.c.l.b16 %v339
      %v484 = vunpack.c.l.b16 %v340
      %v485 = vunpack.c.l.b16 %v341
      %v486 = vunpack.c.l.b16 %v342
      %v487 = vunpack.c.l.b16 %v343
      %v488 = vunpack.c.l.b16 %v344
      %v489 = vunpack.c.l.b16 %v345
      %v490 = vpack.c.b16 %v459, %v458
      %v491 = vpack.c.b16 %v461, %v460
      %v492 = vpack.c.b16 %v463, %v462
      %v493 = vpack.c.b16 %v465, %v464
      %v494 = vpack.c.b16 %v467, %v466
      %v495 = vpack.c.b16 %v469, %v468
      %v496 = vpack.c.b16 %v471, %v470
      %v497 = vpack.c.b16 %v473, %v472
      %v498 = vpack.c.b16 %v475, %v474
      %v499 = vpack.c.b16 %v477, %v476
      %v500 = vpack.c.b16 %v479, %v478
      %v501 = vpack.c.b16 %v481, %v480
      %v502 = vpack.c.b16 %v483, %v482
      %v503 = vpack.c.b16 %v485, %v484
      %v504 = vpack.c.b16 %v487, %v486
      %v505 = vpack.c.b16 %v489, %v488
      %522 = vmatprep.subr.bf16.mxu0 0
      %523 = vmatpush1.bf16.msra.mxu0 %v490
      %524 = vmatprep.subr.bf16.mxu0 0
      %525 = vmatpush1.bf16.msra.mxu0 %v491
      %526 = vmatprep.subr.bf16.mxu0 0
      %527 = vmatpush1.bf16.msra.mxu0 %v492
      %528 = vmatprep.subr.bf16.mxu0 0
      %529 = vmatpush1.bf16.msra.mxu0 %v493
      %530 = vmatprep.subr.bf16.mxu0 0
      %531 = vmatpush1.bf16.msra.mxu0 %v494
      %532 = vmatprep.subr.bf16.mxu0 0
      %533 = vmatpush1.bf16.msra.mxu0 %v495
      %534 = vmatprep.subr.bf16.mxu0 0
      %535 = vmatpush1.bf16.msra.mxu0 %v496
      %536 = vmatprep.subr.bf16.mxu0 0
      %537 = vmatpush1.bf16.msra.mxu0 %v497
      %538 = vmatprep.subr.bf16.mxu0 0
      %539 = vmatpush1.bf16.msra.mxu0 %v498
      %540 = vmatprep.subr.bf16.mxu0 0
      %541 = vmatpush1.bf16.msra.mxu0 %v499
      %542 = vmatprep.subr.bf16.mxu0 0
      %543 = vmatpush1.bf16.msra.mxu0 %v500
      %544 = vmatprep.subr.bf16.mxu0 0
      %545 = vmatpush1.bf16.msra.mxu0 %v501
      %546 = vmatprep.subr.bf16.mxu0 0
      %547 = vmatpush1.bf16.msra.mxu0 %v502
      %548 = vmatprep.subr.bf16.mxu0 0
      %549 = vmatpush1.bf16.msra.mxu0 %v503
      %550 = vmatprep.subr.bf16.mxu0 0
      %551 = vmatpush1.bf16.msra.mxu0 %v504
      %552 = vmatprep.subr.bf16.mxu0 0
      %553 = vmatpush1.bf16.msra.mxu0 %v505
      %554 = vmatprep.mubr.bf16.mxu0 %v395
      %555 = vmatmul.mubr.bf16.gmra.mrb[0].mxu0 %v394
      %v556 = vpop.f32.mrb[0].mxu0
      %v557 = vadd.f32 0.0, %v556
      %v558 = vpop.f32.mrb[0].mxu0
      %v559 = vpop.f32.mrb[0].mxu0
      %v560 = vadd.f32 0.0, %v559
      %v561 = vpop.f32.mrb[0].mxu0
      %562 = vmatprep.mubr.bf16.mxu0 %v397
      %563 = vmatmul.mubr.bf16.gmra.mrb[0].mxu0 %v396
      %v564 = vpop.f32.mrb[0].mxu0
      %v565 = vadd.f32 0.0, %v564
      %v566 = vpop.f32.mrb[0].mxu0
      %v567 = vpop.f32.mrb[0].mxu0
      %v568 = vadd.f32 0.0, %v567
      %v569 = vpop.f32.mrb[0].mxu0
      %570 = vmatprep.mubr.bf16.mxu0 %v399
      %571 = vmatmul.mubr.bf16.gmra.mrb[0].mxu0 %v398
      %v572 = vpop.f32.mrb[0].mxu0
      %v573 = vadd.f32 0.0, %v572
      %v574 = vpop.f32.mrb[0].mxu0
      %v575 = vpop.f32.mrb[0].mxu0
      %v576 = vadd.f32 0.0, %v575
      %v577 = vpop.f32.mrb[0].mxu0
      %578 = vmatprep.mubr.bf16.mxu0 %v401
      %579 = vmatmul.mubr.bf16.gmra.mrb[0].mxu0 %v400
      %v580 = vpop.f32.mrb[0].mxu0
      %v581 = vadd.f32 0.0, %v580
      %v582 = vpop.f32.mrb[0].mxu0
      %v583 = vpop.f32.mrb[0].mxu0
      %v584 = vadd.f32 0.0, %v583
      %v585 = vpop.f32.mrb[0].mxu0
      %586 = vmatprep.mubr.bf16.mxu0 %v403
      %587 = vmatmul.mubr.bf16.gmra.mrb[0].mxu0 %v402
      %v588 = vpop.f32.mrb[0].mxu0
      %v589 = vadd.f32 0.0, %v588
      %v590 = vpop.f32.mrb[0].mxu0
      %v591 = vpop.f32.mrb[0].mxu0
      %v592 = vadd.f32 0.0, %v591
      %v593 = vpop.f32.mrb[0].mxu0
      %594 = vmatprep.mubr.bf16.mxu0 %v405
      %595 = vmatmul.mubr.bf16.gmra.mrb[0].mxu0 %v404
      %v596 = vpop.f32.mrb[0].mxu0
      %v597 = vadd.f32 0.0, %v596
      %v598 = vpop.f32.mrb[0].mxu0
      %v599 = vpop.f32.mrb[0].mxu0
      %v600 = vadd.f32 0.0, %v599
      %v601 = vpop.f32.mrb[0].mxu0
      %602 = vmatprep.mubr.bf16.mxu0 %v407
      %603 = vmatmul.mubr.bf16.gmra.mrb[0].mxu0 %v406
      %v604 = vpop.f32.mrb[0].mxu0
      %v605 = vadd.f32 0.0, %v604
      %v606 = vpop.f32.mrb[0].mxu0
      %v607 = vpop.f32.mrb[0].mxu0
      %v608 = vadd.f32 0.0, %v607
      %v609 = vpop.f32.mrb[0].mxu0
      %610 = vmatprep.mubr.bf16.mxu0 %v409
      %611 = vmatmul.mubr.bf16.gmra.mrb[0].mxu0 %v408
      %v612 = vpop.f32.mrb[0].mxu0
      %v613 = vadd.f32 0.0, %v612
      %v614 = vpop.f32.mrb[0].mxu0
      %v615 = vpop.f32.mrb[0].mxu0
      %v616 = vadd.f32 0.0, %v615
      %v617 = vpop.f32.mrb[0].mxu0
      %618 = vdwg.mxu0
      %v619 = vpack.c.bf16 %v560, %v557
      %v620 = vpack.c.bf16 %v568, %v565
      %v621 = vpack.c.bf16 %v576, %v573
      %v622 = vpack.c.bf16 %v584, %v581
      %v623 = vpack.c.bf16 %v592, %v589
      %v624 = vpack.c.bf16 %v600, %v597
      %v625 = vpack.c.bf16 %v608, %v605
      %v626 = vpack.c.bf16 %v616, %v613
      %v635 = vunpack.c.l.b16 %v619
      %v636 = vunpack.c.h.b16 %v619
      %v637 = vunpack.c.l.b16 %v620
      %v638 = vunpack.c.h.b16 %v620
      %v639 = vunpack.c.l.b16 %v621
      %v640 = vunpack.c.h.b16 %v621
      %v641 = vunpack.c.l.b16 %v622
      %v642 = vunpack.c.h.b16 %v622
      %v643 = vunpack.c.l.b16 %v623
      %v644 = vunpack.c.h.b16 %v623
      %v645 = vunpack.c.l.b16 %v624
      %v646 = vunpack.c.h.b16 %v624
      %v647 = vunpack.c.l.b16 %v625
      %v648 = vunpack.c.h.b16 %v625
      %v649 = vunpack.c.l.b16 %v626
      %v650 = vunpack.c.h.b16 %v626
      %v651 = vpack.c.b16 %v635, %v635
      %v652 = vpack.c.b16 %v636, %v636
      %v653 = vpack.c.b16 %v637, %v637
      %v654 = vpack.c.b16 %v638, %v638
      %v655 = vpack.c.b16 %v639, %v639
      %v656 = vpack.c.b16 %v640, %v640
      %v657 = vpack.c.b16 %v641, %v641
      %v658 = vpack.c.b16 %v642, %v642
      %v659 = vpack.c.b16 %v643, %v643
      %v660 = vpack.c.b16 %v644, %v644
      %v661 = vpack.c.b16 %v645, %v645
      %v662 = vpack.c.b16 %v646, %v646
      %v663 = vpack.c.b16 %v647, %v647
      %v664 = vpack.c.b16 %v648, %v648
      %v665 = vpack.c.b16 %v649, %v649
      %v666 = vpack.c.b16 %v650, %v650
      %683 = vst [vmem:[%s281] sm:$0xf] %v651
      %684 = vst [vmem:[%s281 + $0x4] sm:$0xf] %v652
      %685 = vst [vmem:[%s281 + $0x8] sm:$0xf] %v653
      %686 = vst [vmem:[%s281 + $0xc] sm:$0xf] %v654
      %687 = vst [vmem:[%s281 + $0x10] sm:$0xf] %v655
      %688 = vst [vmem:[%s281 + $0x14] sm:$0xf] %v656
      %689 = vst [vmem:[%s281 + $0x18] sm:$0xf] %v657
      %690 = vst [vmem:[%s281 + $0x1c] sm:$0xf] %v658
      %691 = vst [vmem:[%s281 + $0x20] sm:$0xf] %v659
      %692 = vst [vmem:[%s281 + $0x24] sm:$0xf] %v660
      %693 = vst [vmem:[%s281 + $0x28] sm:$0xf] %v661
      %694 = vst [vmem:[%s281 + $0x2c] sm:$0xf] %v662
      %695 = vst [vmem:[%s281 + $0x30] sm:$0xf] %v663
      %696 = vst [vmem:[%s281 + $0x34] sm:$0xf] %v664
      %697 = vst [vmem:[%s281 + $0x38] sm:$0xf] %v665
      %698 = vst [vmem:[%s281 + $0x3c] sm:$0xf] %v666
      %v699 = vadd.f32 %v557, %v560
      %v700 = vadd.f32 %v699, %v565
      %v701 = vadd.f32 %v700, %v568
      %v702 = vadd.f32 %v701, %v573
      %v703 = vadd.f32 %v702, %v576
      %v704 = vadd.f32 %v703, %v581
      %v705 = vadd.f32 %v704, %v584
      %v706 = vadd.f32 %v705, %v589
      %v707 = vadd.f32 %v706, %v592
      %v708 = vadd.f32 %v707, %v597
      %v709 = vadd.f32 %v708, %v600
      %v710 = vadd.f32 %v709, %v605
      %v711 = vadd.f32 %v710, %v608
      %v712 = vadd.f32 %v711, %v613
      %v713 = vadd.f32 %v712, %v616
      %v714 = vrot.slane %v713, 4
      %v715 = vadd.f32 %v713, %v714
      %v716 = vrot.slane %v715, 2
      %v717 = vadd.f32 %v715, %v716
      %v718 = vrot.slane %v717, 1
      %v719 = vadd.f32 %v717, %v718
      %v720 = vmul.f32 %v557, %v557
      %v721 = vmul.f32 %v560, %v560
      %v722 = vmul.f32 %v565, %v565
      %v723 = vmul.f32 %v568, %v568
      %v724 = vmul.f32 %v573, %v573
      %v725 = vmul.f32 %v576, %v576
      %v726 = vmul.f32 %v581, %v581
      %v727 = vmul.f32 %v584, %v584
      %v728 = vmul.f32 %v589, %v589
      %v729 = vmul.f32 %v592, %v592
      %v730 = vmul.f32 %v597, %v597
      %v731 = vmul.f32 %v600, %v600
      %v732 = vmul.f32 %v605, %v605
      %v733 = vmul.f32 %v608, %v608
      %v734 = vmul.f32 %v613, %v613
      %v735 = vmul.f32 %v616, %v616
      %v736 = vadd.f32 %v720, %v721
      %v737 = vadd.f32 %v736, %v722
      %v738 = vadd.f32 %v737, %v723
      %v739 = vadd.f32 %v738, %v724
      %v740 = vadd.f32 %v739, %v725
      %v741 = vadd.f32 %v740, %v726
      %v742 = vadd.f32 %v741, %v727
      %v743 = vadd.f32 %v742, %v728
      %v744 = vadd.f32 %v743, %v729
      %v745 = vadd.f32 %v744, %v730
      %v746 = vadd.f32 %v745, %v731
      %v747 = vadd.f32 %v746, %v732
      %v748 = vadd.f32 %v747, %v733
      %v749 = vadd.f32 %v748, %v734
      %v750 = vadd.f32 %v749, %v735
      %v751 = vrot.slane %v750, 4
      %v752 = vadd.f32 %v750, %v751
      %v753 = vrot.slane %v752, 2
      %v754 = vadd.f32 %v752, %v753
      %v755 = vrot.slane %v754, 1
      %v756 = vadd.f32 %v754, %v755
      %757 = vst [vmem:[%s289] sm:$0xff] %v719
      %758 = vst [vmem:[%s296] sm:$0xff] %v756
      %s759 = smul.u32 16, %s21
      %p760 = scmp.lt.s32.totalorder %s20, 3
      %s761 = scalar_select %p760, %s20, 3
      %p762 = scmp.lt.s32.totalorder %s759, 15
      %s763 = scalar_select %p762, %s759, 15
      %s764 = smul.addr %s761, 16
      %s765 = sadd.s32 %s763, %s764
      %s766 = smul.addr %s765, 4
      %s767 = scalar_lea.vmem %s2, %s766
      %p768 = scmp.lt.s32.totalorder %s20, 3
      %s769 = scalar_select %p768, %s20, 3
      %p770 = scmp.lt.s32.totalorder %s21, 0
      %s771 = scalar_select %p770, %s21, 0
      %s772 = sadd.s32 %s771, %s769
      %s773 = smul.addr %s772, 8
      %s774 = scalar_lea.vmem %s3, %s773
      %p775 = scmp.lt.s32.totalorder %s20, 3
      %s776 = scalar_select %p775, %s20, 3
      %p777 = scmp.lt.s32.totalorder %s21, 0
      %s778 = scalar_select %p777, %s21, 0
      %s779 = sadd.s32 %s778, %s776
      %s780 = smul.addr %s779, 8
      %s781 = scalar_lea.vmem %s4, %s780
      // Predicated region
      $region29: #{dcgan_generator.13} parent=27 // pred_check
        %p782 = pneg %p102
      $region30: #{dcgan_generator.13} parent=27 // pred_check_branch
        %784 = sbr.rel (%p782) target = $region32
      $region31: #{dcgan_generator.13} parent=27 // pred_region
        %s785 = smul.u32 16, %s21
      $region32: #{dcgan_generator.13} parent=27 // pred_fallthru
        _
      // Predicated region
      $region33: #{dcgan_generator.13} parent=27 // pred_check
        %p786 = pneg %p130
      $region34: #{dcgan_generator.13} parent=27 // pred_check_branch
        %788 = sbr.rel (%p786) target = $region36
      $region35: #{dcgan_generator.13} parent=27 // pred_region
        _
      $region36: #{dcgan_generator.13} parent=27 // pred_fallthru
        _
      // Predicated region
      $region37: #{dcgan_generator.13} parent=27 // pred_check
        %p789 = pneg %p158
      $region38: #{dcgan_generator.13} parent=27 // pred_check_branch
        %791 = sbr.rel (%p789) target = $region40
      $region39: #{dcgan_generator.13} parent=27 // pred_region
        _
      $region40: #{dcgan_generator.13} parent=27 // pred_fallthru
        _
    $region28: #{dcgan_generator.13} parent=5 // pred_fallthru
      _
    %p792 = scmp.le.s32.totalorder 2, %s11
    // Predicated region
    $region41: #{dcgan_generator.13} parent=5 // pred_check
      %p793 = pneg %p792
    $region42: #{dcgan_generator.13} parent=5 // pred_check_branch
      %795 = sbr.rel (%p793) target = $region44
    $region43: #{dcgan_generator.13} parent=5 // pred_region
      %s796 = ssub.s32 %s11, 2
      // Predicated region
      $region45: #{dcgan_generator.13} parent=43 // pred_check
        %p797 = pneg %p108
      $region46: #{dcgan_generator.13} parent=43 // pred_check_branch
        %799 = sbr.rel (%p797) target = $region48
      $region47: #{dcgan_generator.13} parent=43 // pred_region
        %s800 = smul.u32 16, %s23
        %p801 = scmp.lt.s32.totalorder %s22, 3
        %s802 = scalar_select %p801, %s22, 3
        %p803 = scmp.lt.s32.totalorder %s800, 15
        %s804 = scalar_select %p803, %s800, 15
        %s805 = smul.addr %s802, 16
        %s806 = sadd.s32 %s804, %s805
        %s807 = smul.addr %s806, 4
        %s808 = scalar_lea.vmem %s2, %s807
      $region48: #{dcgan_generator.13} parent=43 // pred_fallthru
        _
      // Predicated region
      $region49: #{dcgan_generator.13} parent=43 // pred_check
        %p809 = pneg %p136
      $region50: #{dcgan_generator.13} parent=43 // pred_check_branch
        %811 = sbr.rel (%p809) target = $region52
      $region51: #{dcgan_generator.13} parent=43 // pred_region
        %p812 = scmp.lt.s32.totalorder %s22, 3
        %s813 = scalar_select %p812, %s22, 3
        %p814 = scmp.lt.s32.totalorder %s23, 0
        %s815 = scalar_select %p814, %s23, 0
        %s816 = sadd.s32 %s815, %s813
        %s817 = smul.addr %s816, 8
        %s818 = scalar_lea.vmem %s3, %s817
      $region52: #{dcgan_generator.13} parent=43 // pred_fallthru
        _
      // Predicated region
      $region53: #{dcgan_generator.13} parent=43 // pred_check
        %p819 = pneg %p164
      $region54: #{dcgan_generator.13} parent=43 // pred_check_branch
        %821 = sbr.rel (%p819) target = $region56
      $region55: #{dcgan_generator.13} parent=43 // pred_region
        %p822 = scmp.lt.s32.totalorder %s22, 3
        %s823 = scalar_select %p822, %s22, 3
        %p824 = scmp.lt.s32.totalorder %s23, 0
        %s825 = scalar_select %p824, %s23, 0
        %s826 = sadd.s32 %s825, %s823
        %s827 = smul.addr %s826, 8
        %s828 = scalar_lea.vmem %s4, %s827
      $region56: #{dcgan_generator.13} parent=43 // pred_fallthru
        _
    $region44: #{dcgan_generator.13} parent=5 // pred_fallthru
      _
  $region6: #{dcgan_generator.13} parent=0 // loop_footer
    %s15 = sadd.s32 1, %s11
  $region7: #{dcgan_generator.13} parent=0 // loop_footer_branch
    %10 = sbr.rel target = $region3
  $region8: #{dcgan_generator.13} parent=0 // loop_exit
    _

// kernel: dcgan_generator.15
$region0: #{dcgan_generator.15}
  #allocation0 [shape = 'u32[]', space=smem, size = 0x4, offset = 0x4, fixed_abs, tag = 'smem constant byte address 0x4 - core index']
  #allocation1 [shape = 'u32[144,128]{1,0:T(1,128)}', space=vmem, size = 0x12000, scoped, tag = 'internal scratch']
  %s0 = inlined_call_operand.vmem [shape: bf16[4,512,128], index: 0, kind: input, shape index: {}]
  %s1 = inlined_call_operand.vmem [shape: bf16[4,128,128], index: 1, kind: input, shape index: {}]
  %s2 = inlined_call_operand.vmem [shape: bf16[4,512,128], index: 2, kind: output, shape index: {0}]
  %s3 = inlined_call_operand.vmem [shape: f32[4,8,128], index: 3, kind: output, shape index: {1}]
  %s4 = inlined_call_operand.vmem [shape: f32[4,8,128], index: 4, kind: output, shape index: {2}]
  %5 = xla_tuple %s2, %s3, %s4
  %s6 = sld [smem:[#allocation0]]
  $region57: #{dcgan_generator.15} parent=0
    _
  %s8 = ssub.s32 1, %s6
  %s9 = scalar_select 0, %s8, %s6
  loop: start=0, step=1, limit=6
  $region2: #{dcgan_generator.15} parent=0 // loop_pre_header
    _
  $region3: #{dcgan_generator.15} parent=0 // loop_header
    %s11 = sphi 0, %s15
    %p12 = scmp.ge.s32.totalorder %s11, 6
    %s18 = sphi 0, %s30
    %s19 = sphi 0, %s26
    %s20 = sphi 0, %s18
    %s21 = sphi 0, %s19
    %s22 = sphi 0, %s20
    %s23 = sphi 0, %s21
    %s35 = sphi 0, %s37
    %s38 = sphi 0, %s35
    %s39 = sphi 0, %s38
    %s55 = sphi 0, %s39
    %s61 = sphi 0, %s63
    %s64 = sphi 0, %s61
    %s65 = sphi 0, %s64
    %s81 = sphi 0, %s65
    %s89 = sphi 0, %s91
    %s92 = sphi 0, %s89
    %s93 = sphi 0, %s92
    %s109 = sphi 0, %s93
    %s117 = sphi 0, %s119
    %s120 = sphi 0, %s117
    %s121 = sphi 0, %s120
    %s137 = sphi 0, %s121
    %s145 = sphi 0, %s147
    %s148 = sphi 0, %s145
    %s149 = sphi 0, %s148
    %s165 = sphi 0, %s149
  $region4: #{dcgan_generator.15} parent=0 // loop_header_branch
    %14 = sbr.rel (%p12) target = $region8
  $region5: #{dcgan_generator.15} parent=0 // loop_body
    %s16 = ssub.s32 %s11, 1
    %s17 = ssub.s32 %s11, 2
    %s24 = sadd.s32 1, %s19
    %p25 = scmp.ge.s32.totalorder %s24, 1
    %s26 = scalar_select %p25, 0, %s24
    %s27 = sadd.s32 1, %s18
    %s28 = scalar_select %p25, %s27, %s18
    %p29 = scmp.ge.s32.totalorder %s28, 4
    %s30 = scalar_select %p29, 0, %s28
    %s31 = ssub.s32 %s18, %s30
    %s32 = ssub.s32 %s19, %s26
    %s33 = sor.u32 %s31, %s32
    %p34 = scmp.eq.s32.totalorder %s33, 0
    %s36 = sadd.s32 %s35, 1
    %s37 = scalar_select %p34, %s35, %s36
    %p40 = pneg %p34
    %p41 = scmp.eq.s32.totalorder %s11, 3
    %p42 = por %p40, %p41
    %p43 = scmp.ne.s32.totalorder %s35, %s38
    %p44 = scmp.eq.s32.totalorder %s11, 0
    %p45 = por %p43, %p44
    %p46 = scmp.ne.s32.totalorder %s35, %s38
    %p47 = scmp.eq.s32.totalorder %s16, 3
    %p48 = por %p46, %p47
    %p49 = scmp.ne.s32.totalorder %s38, %s39
    %p50 = scmp.eq.s32.totalorder %s16, 0
    %p51 = por %p49, %p50
    %p52 = scmp.ne.s32.totalorder %s38, %s39
    %p53 = scmp.eq.s32.totalorder %s17, 3
    %p54 = por %p52, %p53
    %p56 = scmp.ne.s32.totalorder %s39, %s55
    %p57 = scmp.eq.s32.totalorder %s17, 0
    %p58 = por %p56, %p57
    %s59 = ssub.s32 %s18, %s30
    %p60 = scmp.eq.s32.totalorder %s59, 0
    %s62 = sadd.s32 %s61, 1
    %s63 = scalar_select %p60, %s61, %s62
    %p66 = pneg %p60
    %p67 = scmp.eq.s32.totalorder %s11, 3
    %p68 = por %p66, %p67
    %p69 = scmp.ne.s32.totalorder %s61, %s64
    %p70 = scmp.eq.s32.totalorder %s11, 0
    %p71 = por %p69, %p70
    %p72 = scmp.ne.s32.totalorder %s61, %s64
    %p73 = scmp.eq.s32.totalorder %s16, 3
    %p74 = por %p72, %p73
    %p75 = scmp.ne.s32.totalorder %s64, %s65
    %p76 = scmp.eq.s32.totalorder %s16, 0
    %p77 = por %p75, %p76
    %p78 = scmp.ne.s32.totalorder %s64, %s65
    %p79 = scmp.eq.s32.totalorder %s17, 3
    %p80 = por %p78, %p79
    %p82 = scmp.ne.s32.totalorder %s65, %s81
    %p83 = scmp.eq.s32.totalorder %s17, 0
    %p84 = por %p82, %p83
    %s85 = ssub.s32 %s18, %s30
    %s86 = ssub.s32 %s19, %s26
    %s87 = sor.u32 %s85, %s86
    %p88 = scmp.eq.s32.totalorder %s87, 0
    %s90 = sadd.s32 %s89, 1
    %s91 = scalar_select %p88, %s89, %s90
    %p94 = pneg %p88
    %p95 = scmp.eq.s32.totalorder %s11, 3
    %p96 = por %p94, %p95
    %p97 = scmp.ne.s32.totalorder %s89, %s92
    %p98 = scmp.eq.s32.totalorder %s11, 0
    %p99 = por %p97, %p98
    %p100 = scmp.ne.s32.totalorder %s89, %s92
    %p101 = scmp.eq.s32.totalorder %s16, 3
    %p102 = por %p100, %p101
    %p103 = scmp.ne.s32.totalorder %s92, %s93
    %p104 = scmp.eq.s32.totalorder %s16, 0
    %p105 = por %p103, %p104
    %p106 = scmp.ne.s32.totalorder %s92, %s93
    %p107 = scmp.eq.s32.totalorder %s17, 3
    %p108 = por %p106, %p107
    %p110 = scmp.ne.s32.totalorder %s93, %s109
    %p111 = scmp.eq.s32.totalorder %s17, 0
    %p112 = por %p110, %p111
    %s113 = ssub.s32 %s18, %s30
    %s114 = ssub.s32 %s19, %s26
    %s115 = sor.u32 %s113, %s114
    %p116 = scmp.eq.s32.totalorder %s115, 0
    %s118 = sadd.s32 %s117, 1
    %s119 = scalar_select %p116, %s117, %s118
    %p122 = pneg %p116
    %p123 = scmp.eq.s32.totalorder %s11, 3
    %p124 = por %p122, %p123
    %p125 = scmp.ne.s32.totalorder %s117, %s120
    %p126 = scmp.eq.s32.totalorder %s11, 0
    %p127 = por %p125, %p126
    %p128 = scmp.ne.s32.totalorder %s117, %s120
    %p129 = scmp.eq.s32.totalorder %s16, 3
    %p130 = por %p128, %p129
    %p131 = scmp.ne.s32.totalorder %s120, %s121
    %p132 = scmp.eq.s32.totalorder %s16, 0
    %p133 = por %p131, %p132
    %p134 = scmp.ne.s32.totalorder %s120, %s121
    %p135 = scmp.eq.s32.totalorder %s17, 3
    %p136 = por %p134, %p135
    %p138 = scmp.ne.s32.totalorder %s121, %s137
    %p139 = scmp.eq.s32.totalorder %s17, 0
    %p140 = por %p138, %p139
    %s141 = ssub.s32 %s18, %s30
    %s142 = ssub.s32 %s19, %s26
    %s143 = sor.u32 %s141, %s142
    %p144 = scmp.eq.s32.totalorder %s143, 0
    %s146 = sadd.s32 %s145, 1
    %s147 = scalar_select %p144, %s145, %s146
    %p150 = pneg %p144
    %p151 = scmp.eq.s32.totalorder %s11, 3
    %p152 = por %p150, %p151
    %p153 = scmp.ne.s32.totalorder %s145, %s148
    %p154 = scmp.eq.s32.totalorder %s11, 0
    %p155 = por %p153, %p154
    %p156 = scmp.ne.s32.totalorder %s145, %s148
    %p157 = scmp.eq.s32.totalorder %s16, 3
    %p158 = por %p156, %p157
    %p159 = scmp.ne.s32.totalorder %s148, %s149
    %p160 = scmp.eq.s32.totalorder %s16, 0
    %p161 = por %p159, %p160
    %p162 = scmp.ne.s32.totalorder %s148, %s149
    %p163 = scmp.eq.s32.totalorder %s17, 3
    %p164 = por %p162, %p163
    %p166 = scmp.ne.s32.totalorder %s149, %s165
    %p167 = scmp.eq.s32.totalorder %s17, 0
    %p168 = por %p166, %p167
    %p169 = scmp.le.s32.totalorder 1, %s11
    %p170 = scmp.lt.s32.totalorder %s11, 5
    %p171 = pnand %p169, %p170
    %p172 = pneg %p171
    // Predicated region
    $region9: #{dcgan_generator.15} parent=5 // pred_check
      _
    $region10: #{dcgan_generator.15} parent=5 // pred_check_branch
      %174 = sbr.rel (%p171) target = $region12
    $region11: #{dcgan_generator.15} parent=5 // pred_region
      %s175 = ssub.s32 %s11, 1
    $region12: #{dcgan_generator.15} parent=5 // pred_fallthru
      _
    %p176 = scmp.lt.s32.totalorder %s11, 4
    // Predicated region
    $region13: #{dcgan_generator.15} parent=5 // pred_check
      %p177 = pneg %p176
    $region14: #{dcgan_generator.15} parent=5 // pred_check_branch
      %179 = sbr.rel (%p177) target = $region16
    $region15: #{dcgan_generator.15} parent=5 // pred_region
      // Predicated region
      $region17: #{dcgan_generator.15} parent=15 // pred_check
        %p180 = pneg %p45
      $region18: #{dcgan_generator.15} parent=15 // pred_check_branch
        %182 = sbr.rel (%p180) target = $region20
      $region19: #{dcgan_generator.15} parent=15 // pred_region
        %s183 = smul.u32 64, %s19
        %p184 = scmp.lt.s32.totalorder %s18, 3
        %s185 = scalar_select %p184, %s18, 3
        %p186 = scmp.lt.s32.totalorder %s183, 63
        %s187 = scalar_select %p186, %s183, 63
        %s188 = smul.addr %s185, 64
        %s189 = sadd.s32 %s187, %s188
        %s190 = smul.addr %s189, 4
        %s191 = scalar_lea.vmem %s0, %s190
        %s192 = smul.u32 64, %s19
      $region20: #{dcgan_generator.15} parent=15 // pred_fallthru
        _
      // Predicated region
      $region21: #{dcgan_generator.15} parent=15 // pred_check
        %p193 = pneg %p71
      $region22: #{dcgan_generator.15} parent=15 // pred_check_branch
        %195 = sbr.rel (%p193) target = $region24
      $region23: #{dcgan_generator.15} parent=15 // pred_region
        %p196 = scmp.lt.s32.totalorder %s18, 3
        %s197 = scalar_select %p196, %s18, 3
        %s198 = smul.addr %s197, 16
        %s199 = smul.addr %s198, 4
        %s200 = scalar_lea.vmem %s1, %s199
      $region24: #{dcgan_generator.15} parent=15 // pred_fallthru
        _
    $region16: #{dcgan_generator.15} parent=5 // pred_fallthru
      _
    %p201 = scmp.le.s32.totalorder 1, %s11
    %p202 = scmp.lt.s32.totalorder %s11, 5
    %p203 = pnand %p201, %p202
    %p204 = pneg %p203
    // Predicated region
    $region25: #{dcgan_generator.15} parent=5 // pred_check
      _
    $region26: #{dcgan_generator.15} parent=5 // pred_check_branch
      %206 = sbr.rel (%p203) target = $region28
    $region27: #{dcgan_generator.15} parent=5 // pred_region
      %s207 = ssub.s32 %s11, 1
      %s208 = smul.u32 64, %s21
      %p209 = scmp.lt.s32.totalorder %s20, 3
      %s210 = scalar_select %p209, %s20, 3
      %p211 = scmp.lt.s32.totalorder %s208, 63
      %s212 = scalar_select %p211, %s208, 63
      %s213 = smul.addr %s210, 64
      %s214 = sadd.s32 %s212, %s213
      %s215 = smul.addr %s214, 4
      %s216 = scalar_lea.vmem %s0, %s215
      %p217 = pneg %p51
      %p218 = pneg %p48
      %p219 = scmp.lt.s32.totalorder %s20, 3
      %s220 = scalar_select %p219, %s20, 3
      %s221 = smul.addr %s220, 16
      %s222 = smul.addr %s221, 4
      %s223 = scalar_lea.vmem %s1, %s222
      %p224 = pneg %p77
      %p225 = pneg %p74
      %p226 = pneg %p105
      %p227 = pneg %p102
      %s228 = smul.u32 64, %s21
      %p229 = scmp.lt.s32.totalorder %s20, 3
      %s230 = scalar_select %p229, %s20, 3
      %p231 = scmp.lt.s32.totalorder %s228, 63
      %s232 = scalar_select %p231, %s228, 63
      %s233 = smul.addr %s230, 64
      %s234 = sadd.s32 %s232, %s233
      %s235 = smul.addr %s234, 4
      %s236 = scalar_lea.vmem %s2, %s235
      %p237 = pneg %p133
      %p238 = pneg %p130
      %p239 = scmp.lt.s32.totalorder %s20, 3
      %s240 = scalar_select %p239, %s20, 3
      %p241 = scmp.lt.s32.totalorder %s21, 0
      %s242 = scalar_select %p241, %s21, 0
      %s243 = sadd.s32 %s242, %s240
      %s244 = smul.addr %s243, 8
      %s245 = scalar_lea.vmem %s3, %s244
      %p246 = pneg %p161
      %p247 = pneg %p158
      %p248 = scmp.lt.s32.totalorder %s20, 3
      %s249 = scalar_select %p248, %s20, 3
      %p250 = scmp.lt.s32.totalorder %s21, 0
      %s251 = scalar_select %p250, %s21, 0
      %s252 = sadd.s32 %s251, %s249
      %s253 = smul.addr %s252, 8
      %s254 = scalar_lea.vmem %s4, %s253
      %s255 = smul.u32 64, %s21
      %p256 = scmp.lt.s32.totalorder %s20, 3
      %s257 = scalar_select %p256, %s20, 3
      %p258 = scmp.lt.s32.totalorder %s255, 63
      %s259 = scalar_select %p258, %s255, 63
      %s260 = smul.addr %s257, 64
      %s261 = sadd.s32 %s259, %s260
      %s262 = smul.addr %s261, 4
      %s263 = scalar_lea.vmem %s0, %s262
      %s264 = smul.u32 64, %s21
      %p265 = scmp.lt.s32.totalorder %s20, 3
      %s266 = scalar_select %p265, %s20, 3
      %s267 = smul.addr %s266, 16
      %s268 = smul.addr %s267, 4
      %s269 = scalar_lea.vmem %s1, %s268
      %s270 = smul.u32 64, %s21
      %p271 = scmp.lt.s32.totalorder %s20, 3
      %s272 = scalar_select %p271, %s20, 3
      %p273 = scmp.lt.s32.totalorder %s270, 63
      %s274 = scalar_select %p273, %s270, 63
      %s275 = smul.addr %s272, 64
      %s276 = sadd.s32 %s274, %s275
      %s277 = smul.addr %s276, 4
      %s278 = scalar_lea.vmem %s2, %s277
      %s279 = smul.u32 64, %s21
      %p280 = scmp.lt.s32.totalorder %s20, 3
      %s281 = scalar_select %p280, %s20, 3
      %p282 = scmp.lt.s32.totalorder %s21, 0
      %s283 = scalar_select %p282, %s21, 0
      %s284 = sadd.s32 %s283, %s281
      %s285 = smul.addr %s284, 8
      %s286 = scalar_lea.vmem %s3, %s285
      %p287 = scmp.lt.s32.totalorder %s20, 3
      %s288 = scalar_select %p287, %s20, 3
      %p289 = scmp.lt.s32.totalorder %s21, 0
      %s290 = scalar_select %p289, %s21, 0
      %s291 = sadd.s32 %s290, %s288
      %s292 = smul.addr %s291, 8
      %s293 = scalar_lea.vmem %s4, %s292
      %v295 = vld [vmem:[%s263] sm:$0xf]
      %v296 = vld [vmem:[%s263 + $0x4] sm:$0xf]
      %v297 = vld [vmem:[%s263 + $0x8] sm:$0xf]
      %v298 = vld [vmem:[%s263 + $0xc] sm:$0xf]
      %v299 = vld [vmem:[%s263 + $0x10] sm:$0xf]
      %v300 = vld [vmem:[%s263 + $0x14] sm:$0xf]
      %v301 = vld [vmem:[%s263 + $0x18] sm:$0xf]
      %v302 = vld [vmem:[%s263 + $0x1c] sm:$0xf]
      %v303 = vld [vmem:[%s263 + $0x20] sm:$0xf]
      %v304 = vld [vmem:[%s263 + $0x24] sm:$0xf]
      %v305 = vld [vmem:[%s263 + $0x28] sm:$0xf]
      %v306 = vld [vmem:[%s263 + $0x2c] sm:$0xf]
      %v307 = vld [vmem:[%s263 + $0x30] sm:$0xf]
      %v308 = vld [vmem:[%s263 + $0x34] sm:$0xf]
      %v309 = vld [vmem:[%s263 + $0x38] sm:$0xf]
      %v310 = vld [vmem:[%s263 + $0x3c] sm:$0xf]
      %v311 = vld [vmem:[%s263 + $0x40] sm:$0xf]
      %v312 = vld [vmem:[%s263 + $0x44] sm:$0xf]
      %v313 = vld [vmem:[%s263 + $0x48] sm:$0xf]
      %v314 = vld [vmem:[%s263 + $0x4c] sm:$0xf]
      %v315 = vld [vmem:[%s263 + $0x50] sm:$0xf]
      %v316 = vld [vmem:[%s263 + $0x54] sm:$0xf]
      %v317 = vld [vmem:[%s263 + $0x58] sm:$0xf]
      %v318 = vld [vmem:[%s263 + $0x5c] sm:$0xf]
      %v319 = vld [vmem:[%s263 + $0x60] sm:$0xf]
      %v320 = vld [vmem:[%s263 + $0x64] sm:$0xf]
      %v321 = vld [vmem:[%s263 + $0x68] sm:$0xf]
      %v322 = vld [vmem:[%s263 + $0x6c] sm:$0xf]
      %v323 = vld [vmem:[%s263 + $0x70] sm:$0xf]
      %v324 = vld [vmem:[%s263 + $0x74] sm:$0xf]
      %v325 = vld [vmem:[%s263 + $0x78] sm:$0xf]
      %v326 = vld [vmem:[%s263 + $0x7c] sm:$0xf]
      %v327 = vld [vmem:[%s263 + $0x80] sm:$0xf]
      %v328 = vld [vmem:[%s263 + $0x84] sm:$0xf]
      %v329 = vld [vmem:[%s263 + $0x88] sm:$0xf]
      %v330 = vld [vmem:[%s263 + $0x8c] sm:$0xf]
      %v331 = vld [vmem:[%s263 + $0x90] sm:$0xf]
      %v332 = vld [vmem:[%s263 + $0x94] sm:$0xf]
      %v333 = vld [vmem:[%s263 + $0x98] sm:$0xf]
      %v334 = vld [vmem:[%s263 + $0x9c] sm:$0xf]
      %v335 = vld [vmem:[%s263 + $0xa0] sm:$0xf]
      %v336 = vld [vmem:[%s263 + $0xa4] sm:$0xf]
      %v337 = vld [vmem:[%s263 + $0xa8] sm:$0xf]
      %v338 = vld [vmem:[%s263 + $0xac] sm:$0xf]
      %v339 = vld [vmem:[%s263 + $0xb0] sm:$0xf]
      %v340 = vld [vmem:[%s263 + $0xb4] sm:$0xf]
      %v341 = vld [vmem:[%s263 + $0xb8] sm:$0xf]
      %v342 = vld [vmem:[%s263 + $0xbc] sm:$0xf]
      %v343 = vld [vmem:[%s263 + $0xc0] sm:$0xf]
      %v344 = vld [vmem:[%s263 + $0xc4] sm:$0xf]
      %v345 = vld [vmem:[%s263 + $0xc8] sm:$0xf]
      %v346 = vld [vmem:[%s263 + $0xcc] sm:$0xf]
      %v347 = vld [vmem:[%s263 + $0xd0] sm:$0xf]
      %v348 = vld [vmem:[%s263 + $0xd4] sm:$0xf]
      %v349 = vld [vmem:[%s263 + $0xd8] sm:$0xf]
      %v350 = vld [vmem:[%s263 + $0xdc] sm:$0xf]
      %v351 = vld [vmem:[%s263 + $0xe0] sm:$0xf]
      %v352 = vld [vmem:[%s263 + $0xe4] sm:$0xf]
      %v353 = vld [vmem:[%s263 + $0xe8] sm:$0xf]
      %v354 = vld [vmem:[%s263 + $0xec] sm:$0xf]
      %v355 = vld [vmem:[%s263 + $0xf0] sm:$0xf]
      %v356 = vld [vmem:[%s263 + $0xf4] sm:$0xf]
      %v357 = vld [vmem:[%s263 + $0xf8] sm:$0xf]
      %v358 = vld [vmem:[%s263 + $0xfc] sm:$0xf]
      %v359 = vld [vmem:[%s269] sm:$0xf]
      %v360 = vld [vmem:[%s269 + $0x4] sm:$0xf]
      %v361 = vld [vmem:[%s269 + $0x8] sm:$0xf]
      %v362 = vld [vmem:[%s269 + $0xc] sm:$0xf]
      %v363 = vld [vmem:[%s269 + $0x10] sm:$0xf]
      %v364 = vld [vmem:[%s269 + $0x14] sm:$0xf]
      %v365 = vld [vmem:[%s269 + $0x18] sm:$0xf]
      %v366 = vld [vmem:[%s269 + $0x1c] sm:$0xf]
      %v367 = vld [vmem:[%s269 + $0x20] sm:$0xf]
      %v368 = vld [vmem:[%s269 + $0x24] sm:$0xf]
      %v369 = vld [vmem:[%s269 + $0x28] sm:$0xf]
      %v370 = vld [vmem:[%s269 + $0x2c] sm:$0xf]
      %v371 = vld [vmem:[%s269 + $0x30] sm:$0xf]
      %v372 = vld [vmem:[%s269 + $0x34] sm:$0xf]
      %v373 = vld [vmem:[%s269 + $0x38] sm:$0xf]
      %v374 = vld [vmem:[%s269 + $0x3c] sm:$0xf]
      %v439 = vunpack.c.l.b16 %v295
      %v440 = vunpack.c.l.b16 %v296
      %v441 = vunpack.c.l.b16 %v297
      %v442 = vunpack.c.l.b16 %v298
      %v443 = vunpack.c.l.b16 %v299
      %v444 = vunpack.c.l.b16 %v300
      %v445 = vunpack.c.l.b16 %v301
      %v446 = vunpack.c.l.b16 %v302
      %v447 = vunpack.c.l.b16 %v303
      %v448 = vunpack.c.l.b16 %v304
      %v449 = vunpack.c.l.b16 %v305
      %v450 = vunpack.c.l.b16 %v306
      %v451 = vunpack.c.l.b16 %v307
      %v452 = vunpack.c.l.b16 %v308
      %v453 = vunpack.c.l.b16 %v309
      %v454 = vunpack.c.l.b16 %v310
      %v455 = vunpack.c.l.b16 %v311
      %v456 = vunpack.c.l.b16 %v312
      %v457 = vunpack.c.l.b16 %v313
      %v458 = vunpack.c.l.b16 %v314
      %v459 = vunpack.c.l.b16 %v315
      %v460 = vunpack.c.l.b16 %v316
      %v461 = vunpack.c.l.b16 %v317
      %v462 = vunpack.c.l.b16 %v318
      %v463 = vunpack.c.l.b16 %v319
      %v464 = vunpack.c.l.b16 %v320
      %v465 = vunpack.c.l.b16 %v321
      %v466 = vunpack.c.l.b16 %v322
      %v467 = vunpack.c.l.b16 %v323
      %v468 = vunpack.c.l.b16 %v324
      %v469 = vunpack.c.l.b16 %v325
      %v470 = vunpack.c.l.b16 %v326
      %v471 = vunpack.c.l.b16 %v327
      %v472 = vunpack.c.l.b16 %v328
      %v473 = vunpack.c.l.b16 %v329
      %v474 = vunpack.c.l.b16 %v330
      %v475 = vunpack.c.l.b16 %v331
      %v476 = vunpack.c.l.b16 %v332
      %v477 = vunpack.c.l.b16 %v333
      %v478 = vunpack.c.l.b16 %v334
      %v479 = vunpack.c.l.b16 %v335
      %v480 = vunpack.c.l.b16 %v336
      %v481 = vunpack.c.l.b16 %v337
      %v482 = vunpack.c.l.b16 %v338
      %v483 = vunpack.c.l.b16 %v339
      %v484 = vunpack.c.l.b16 %v340
      %v485 = vunpack.c.l.b16 %v341
      %v486 = vunpack.c.l.b16 %v342
      %v487 = vunpack.c.l.b16 %v343
      %v488 = vunpack.c.l.b16 %v344
      %v489 = vunpack.c.l.b16 %v345
      %v490 = vunpack.c.l.b16 %v346
      %v491 = vunpack.c.l.b16 %v347
      %v492 = vunpack.c.l.b16 %v348
      %v493 = vunpack.c.l.b16 %v349
      %v494 = vunpack.c.l.b16 %v350
      %v495 = vunpack.c.l.b16 %v351
      %v496 = vunpack.c.l.b16 %v352
      %v497 = vunpack.c.l.b16 %v353
      %v498 = vunpack.c.l.b16 %v354
      %v499 = vunpack.c.l.b16 %v355
      %v500 = vunpack.c.l.b16 %v356
      %v501 = vunpack.c.l.b16 %v357
      %v502 = vunpack.c.l.b16 %v358
      %v503 = vpack.c.b16 %v440, %v439
      %v504 = vpack.c.b16 %v442, %v441
      %v505 = vpack.c.b16 %v444, %v443
      %v506 = vpack.c.b16 %v446, %v445
      %v507 = vpack.c.b16 %v448, %v447
      %v508 = vpack.c.b16 %v450, %v449
      %v509 = vpack.c.b16 %v452, %v451
      %v510 = vpack.c.b16 %v454, %v453
      %v511 = vpack.c.b16 %v456, %v455
      %v512 = vpack.c.b16 %v458, %v457
      %v513 = vpack.c.b16 %v460, %v459
      %v514 = vpack.c.b16 %v462, %v461
      %v515 = vpack.c.b16 %v464, %v463
      %v516 = vpack.c.b16 %v466, %v465
      %v517 = vpack.c.b16 %v468, %v467
      %v518 = vpack.c.b16 %v470, %v469
      %v519 = vpack.c.b16 %v472, %v471
      %v520 = vpack.c.b16 %v474, %v473
      %v521 = vpack.c.b16 %v476, %v475
      %v522 = vpack.c.b16 %v478, %v477
      %v523 = vpack.c.b16 %v480, %v479
      %v524 = vpack.c.b16 %v482, %v481
      %v525 = vpack.c.b16 %v484, %v483
      %v526 = vpack.c.b16 %v486, %v485
      %v527 = vpack.c.b16 %v488, %v487
      %v528 = vpack.c.b16 %v490, %v489
      %v529 = vpack.c.b16 %v492, %v491
      %v530 = vpack.c.b16 %v494, %v493
      %v531 = vpack.c.b16 %v496, %v495
      %v532 = vpack.c.b16 %v498, %v497
      %v533 = vpack.c.b16 %v500, %v499
      %v534 = vpack.c.b16 %v502, %v501
      %v583 = vunpack.c.l.b16 %v359
      %v584 = vunpack.c.l.b16 %v360
      %v585 = vunpack.c.l.b16 %v361
      %v586 = vunpack.c.l.b16 %v362
      %v587 = vunpack.c.l.b16 %v363
      %v588 = vunpack.c.l.b16 %v364
      %v589 = vunpack.c.l.b16 %v365
      %v590 = vunpack.c.l.b16 %v366
      %v591 = vunpack.c.l.b16 %v367
      %v592 = vunpack.c.l.b16 %v368
      %v593 = vunpack.c.l.b16 %v369
      %v594 = vunpack.c.l.b16 %v370
      %v595 = vunpack.c.l.b16 %v371
      %v596 = vunpack.c.l.b16 %v372
      %v597 = vunpack.c.l.b16 %v373
      %v598 = vunpack.c.l.b16 %v374
      %v599 = vpack.c.b16 %v584, %v583
      %v600 = vpack.c.b16 %v586, %v585
      %v601 = vpack.c.b16 %v588, %v587
      %v602 = vpack.c.b16 %v590, %v589
      %v603 = vpack.c.b16 %v592, %v591
      %v604 = vpack.c.b16 %v594, %v593
      %v605 = vpack.c.b16 %v596, %v595
      %v606 = vpack.c.b16 %v598, %v597
      %615 = vmatprep.subr.bf16.mxu0 0
      %616 = vmatpush1.bf16.msra.mxu0 %v599
      %617 = vmatprep.subr.bf16.mxu0 0
      %618 = vmatpush1.bf16.msra.mxu0 %v600
      %619 = vmatprep.subr.bf16.mxu0 0
      %620 = vmatpush1.bf16.msra.mxu0 %v601
      %621 = vmatprep.subr.bf16.mxu0 0
      %622 = vmatpush1.bf16.msra.mxu0 %v602
      %623 = vmatprep.subr.bf16.mxu0 0
      %624 = vmatpush1.bf16.msra.mxu0 %v603
      %625 = vmatprep.subr.bf16.mxu0 0
      %626 = vmatpush1.bf16.msra.mxu0 %v604
      %627 = vmatprep.subr.bf16.mxu0 0
      %628 = vmatpush1.bf16.msra.mxu0 %v605
      %629 = vmatprep.subr.bf16.mxu0 0
      %630 = vmatpush1.bf16.msra.mxu0 %v606
      %631 = vmatprep.subr.bf16.mxu0 0
      %632 = vmatpush1.bf16.msra.mxu0 0
      %633 = vmatprep.subr.bf16.mxu0 0
      %634 = vmatpush1.bf16.msra.mxu0 0
      %635 = vmatprep.subr.bf16.mxu0 0
      %636 = vmatpush1.bf16.msra.mxu0 0
      %637 = vmatprep.subr.bf16.mxu0 0
      %638 = vmatpush1.bf16.msra.mxu0 0
      %639 = vmatprep.subr.bf16.mxu0 0
      %640 = vmatpush1.bf16.msra.mxu0 0
      %641 = vmatprep.subr.bf16.mxu0 0
      %642 = vmatpush1.bf16.msra.mxu0 0
      %643 = vmatprep.subr.bf16.mxu0 0
      %644 = vmatpush1.bf16.msra.mxu0 0
      %645 = vmatprep.subr.bf16.mxu0 0
      %646 = vmatpush1.bf16.msra.mxu0 0
      %647 = vmatprep.mubr.bf16.mxu0 0
      %648 = vmatmul.mubr.bf16.gmra.mrb[0].mxu0 %v503
      %v649 = vpop.f32.mrb[0].mxu0
      %v650 = vadd.f32 0.0, %v649
      %v651 = vpop.f32.mrb[0].mxu0
      %v652 = vpop.f32.mrb[0].mxu0
      %v653 = vadd.f32 0.0, %v652
      %v654 = vpop.f32.mrb[0].mxu0
      %655 = vmatprep.mubr.bf16.mxu0 0
      %656 = vmatmul.mubr.bf16.gmra.mrb[0].mxu0 %v504
      %v657 = vpop.f32.mrb[0].mxu0
      %v658 = vadd.f32 0.0, %v657
      %v659 = vpop.f32.mrb[0].mxu0
      %v660 = vpop.f32.mrb[0].mxu0
      %v661 = vadd.f32 0.0, %v660
      %v662 = vpop.f32.mrb[0].mxu0
      %663 = vmatprep.mubr.bf16.mxu0 0
      %664 = vmatmul.mubr.bf16.gmra.mrb[0].mxu0 %v505
      %v665 = vpop.f32.mrb[0].mxu0
      %v666 = vadd.f32 0.0, %v665
      %v667 = vpop.f32.mrb[0].mxu0
      %v668 = vpop.f32.mrb[0].mxu0
      %v669 = vadd.f32 0.0, %v668
      %v670 = vpop.f32.mrb[0].mxu0
      %671 = vmatprep.mubr.bf16.mxu0 0
      %672 = vmatmul.mubr.bf16.gmra.mrb[0].mxu0 %v506
      %v673 = vpop.f32.mrb[0].mxu0
      %v674 = vadd.f32 0.0, %v673
      %v675 = vpop.f32.mrb[0].mxu0
      %v676 = vpop.f32.mrb[0].mxu0
      %v677 = vadd.f32 0.0, %v676
      %v678 = vpop.f32.mrb[0].mxu0
      %679 = vmatprep.mubr.bf16.mxu0 0
      %680 = vmatmul.mubr.bf16.gmra.mrb[0].mxu0 %v507
      %v681 = vpop.f32.mrb[0].mxu0
      %v682 = vadd.f32 0.0, %v681
      %v683 = vpop.f32.mrb[0].mxu0
      %v684 = vpop.f32.mrb[0].mxu0
      %v685 = vadd.f32 0.0, %v684
      %v686 = vpop.f32.mrb[0].mxu0
      %687 = vmatprep.mubr.bf16.mxu0 0
      %688 = vmatmul.mubr.bf16.gmra.mrb[0].mxu0 %v508
      %v689 = vpop.f32.mrb[0].mxu0
      %v690 = vadd.f32 0.0, %v689
      %v691 = vpop.f32.mrb[0].mxu0
      %v692 = vpop.f32.mrb[0].mxu0
      %v693 = vadd.f32 0.0, %v692
      %v694 = vpop.f32.mrb[0].mxu0
      %695 = vmatprep.mubr.bf16.mxu0 0
      %696 = vmatmul.mubr.bf16.gmra.mrb[0].mxu0 %v509
      %v697 = vpop.f32.mrb[0].mxu0
      %v698 = vadd.f32 0.0, %v697
      %v699 = vpop.f32.mrb[0].mxu0
      %v700 = vpop.f32.mrb[0].mxu0
      %v701 = vadd.f32 0.0, %v700
      %v702 = vpop.f32.mrb[0].mxu0
      %703 = vmatprep.mubr.bf16.mxu0 0
      %704 = vmatmul.mubr.bf16.gmra.mrb[0].mxu0 %v510
      %v705 = vpop.f32.mrb[0].mxu0
      %v706 = vadd.f32 0.0, %v705
      %v707 = vpop.f32.mrb[0].mxu0
      %v708 = vpop.f32.mrb[0].mxu0
      %v709 = vadd.f32 0.0, %v708
      %v710 = vpop.f32.mrb[0].mxu0
      %711 = vmatprep.mubr.bf16.mxu0 0
      %712 = vmatmul.mubr.bf16.gmra.mrb[0].mxu0 %v511
      %v713 = vpop.f32.mrb[0].mxu0
      %v714 = vadd.f32 0.0, %v713
      %v715 = vpop.f32.mrb[0].mxu0
      %v716 = vpop.f32.mrb[0].mxu0
      %v717 = vadd.f32 0.0, %v716
      %v718 = vpop.f32.mrb[0].mxu0
      %719 = vmatprep.mubr.bf16.mxu0 0
      %720 = vmatmul.mubr.bf16.gmra.mrb[0].mxu0 %v512
      %v721 = vpop.f32.mrb[0].mxu0
      %v722 = vadd.f32 0.0, %v721
      %v723 = vpop.f32.mrb[0].mxu0
      %v724 = vpop.f32.mrb[0].mxu0
      %v725 = vadd.f32 0.0, %v724
      %v726 = vpop.f32.mrb[0].mxu0
      %727 = vmatprep.mubr.bf16.mxu0 0
      %728 = vmatmul.mubr.bf16.gmra.mrb[0].mxu0 %v513
      %v729 = vpop.f32.mrb[0].mxu0
      %v730 = vadd.f32 0.0, %v729
      %v731 = vpop.f32.mrb[0].mxu0
      %v732 = vpop.f32.mrb[0].mxu0
      %v733 = vadd.f32 0.0, %v732
      %v734 = vpop.f32.mrb[0].mxu0
      %735 = vmatprep.mubr.bf16.mxu0 0
      %736 = vmatmul.mubr.bf16.gmra.mrb[0].mxu0 %v514
      %v737 = vpop.f32.mrb[0].mxu0
      %v738 = vadd.f32 0.0, %v737
      %v739 = vpop.f32.mrb[0].mxu0
      %v740 = vpop.f32.mrb[0].mxu0
      %v741 = vadd.f32 0.0, %v740
      %v742 = vpop.f32.mrb[0].mxu0
      %743 = vmatprep.mubr.bf16.mxu0 0
      %744 = vmatmul.mubr.bf16.gmra.mrb[0].mxu0 %v515
      %v745 = vpop.f32.mrb[0].mxu0
      %v746 = vadd.f32 0.0, %v745
      %v747 = vpop.f32.mrb[0].mxu0
      %v748 = vpop.f32.mrb[0].mxu0
      %v749 = vadd.f32 0.0, %v748
      %v750 = vpop.f32.mrb[0].mxu0
      %751 = vmatprep.mubr.bf16.mxu0 0
      %752 = vmatmul.mubr.bf16.gmra.mrb[0].mxu0 %v516
      %v753 = vpop.f32.mrb[0].mxu0
      %v754 = vadd.f32 0.0, %v753
      %v755 = vpop.f32.mrb[0].mxu0
      %v756 = vpop.f32.mrb[0].mxu0
      %v757 = vadd.f32 0.0, %v756
      %v758 = vpop.f32.mrb[0].mxu0
      %759 = vmatprep.mubr.bf16.mxu0 0
      %760 = vmatmul.mubr.bf16.gmra.mrb[0].mxu0 %v517
      %v761 = vpop.f32.mrb[0].mxu0
      %v762 = vadd.f32 0.0, %v761
      %v763 = vpop.f32.mrb[0].mxu0
      %v764 = vpop.f32.mrb[0].mxu0
      %v765 = vadd.f32 0.0, %v764
      %v766 = vpop.f32.mrb[0].mxu0
      %767 = vmatprep.mubr.bf16.mxu0 0
      %768 = vmatmul.mubr.bf16.gmra.mrb[0].mxu0 %v518
      %v769 = vpop.f32.mrb[0].mxu0
      %v770 = vadd.f32 0.0, %v769
      %v771 = vpop.f32.mrb[0].mxu0
      %v772 = vpop.f32.mrb[0].mxu0
      %v773 = vadd.f32 0.0, %v772
      %v774 = vpop.f32.mrb[0].mxu0
      %775 = vmatprep.mubr.bf16.mxu0 0
      %776 = vmatmul.mubr.bf16.gmra.mrb[0].mxu0 %v519
      %v777 = vpop.f32.mrb[0].mxu0
      %v778 = vadd.f32 0.0, %v777
      %v779 = vpop.f32.mrb[0].mxu0
      %v780 = vpop.f32.mrb[0].mxu0
      %v781 = vadd.f32 0.0, %v780
      %v782 = vpop.f32.mrb[0].mxu0
      %783 = vmatprep.mubr.bf16.mxu0 0
      %784 = vmatmul.mubr.bf16.gmra.mrb[0].mxu0 %v520
      %v785 = vpop.f32.mrb[0].mxu0
      %v786 = vadd.f32 0.0, %v785
      %v787 = vpop.f32.mrb[0].mxu0
      %v788 = vpop.f32.mrb[0].mxu0
      %v789 = vadd.f32 0.0, %v788
      %v790 = vpop.f32.mrb[0].mxu0
      %791 = vmatprep.mubr.bf16.mxu0 0
      %792 = vmatmul.mubr.bf16.gmra.mrb[0].mxu0 %v521
      %v793 = vpop.f32.mrb[0].mxu0
      %v794 = vadd.f32 0.0, %v793
      %v795 = vpop.f32.mrb[0].mxu0
      %v796 = vpop.f32.mrb[0].mxu0
      %v797 = vadd.f32 0.0, %v796
      %v798 = vpop.f32.mrb[0].mxu0
      %799 = vmatprep.mubr.bf16.mxu0 0
      %800 = vmatmul.mubr.bf16.gmra.mrb[0].mxu0 %v522
      %v801 = vpop.f32.mrb[0].mxu0
      %v802 = vadd.f32 0.0, %v801
      %v803 = vpop.f32.mrb[0].mxu0
      %v804 = vpop.f32.mrb[0].mxu0
      %v805 = vadd.f32 0.0, %v804
      %v806 = vpop.f32.mrb[0].mxu0
      %807 = vmatprep.mubr.bf16.mxu0 0
      %808 = vmatmul.mubr.bf16.gmra.mrb[0].mxu0 %v523
      %v809 = vpop.f32.mrb[0].mxu0
      %v810 = vadd.f32 0.0, %v809
      %v811 = vpop.f32.mrb[0].mxu0
      %v812 = vpop.f32.mrb[0].mxu0
      %v813 = vadd.f32 0.0, %v812
      %v814 = vpop.f32.mrb[0].mxu0
      %815 = vmatprep.mubr.bf16.mxu0 0
      %816 = vmatmul.mubr.bf16.gmra.mrb[0].mxu0 %v524
      %v817 = vpop.f32.mrb[0].mxu0
      %v818 = vadd.f32 0.0, %v817
      %v819 = vpop.f32.mrb[0].mxu0
      %v820 = vpop.f32.mrb[0].mxu0
      %v821 = vadd.f32 0.0, %v820
      %v822 = vpop.f32.mrb[0].mxu0
      %823 = vmatprep.mubr.bf16.mxu0 0
      %824 = vmatmul.mubr.bf16.gmra.mrb[0].mxu0 %v525
      %v825 = vpop.f32.mrb[0].mxu0
      %v826 = vadd.f32 0.0, %v825
      %v827 = vpop.f32.mrb[0].mxu0
      %v828 = vpop.f32.mrb[0].mxu0
      %v829 = vadd.f32 0.0, %v828
      %v830 = vpop.f32.mrb[0].mxu0
      %831 = vmatprep.mubr.bf16.mxu0 0
      %832 = vmatmul.mubr.bf16.gmra.mrb[0].mxu0 %v526
      %v833 = vpop.f32.mrb[0].mxu0
      %v834 = vadd.f32 0.0, %v833
      %v835 = vpop.f32.mrb[0].mxu0
      %v836 = vpop.f32.mrb[0].mxu0
      %v837 = vadd.f32 0.0, %v836
      %v838 = vpop.f32.mrb[0].mxu0
      %839 = vmatprep.mubr.bf16.mxu0 0
      %840 = vmatmul.mubr.bf16.gmra.mrb[0].mxu0 %v527
      %v841 = vpop.f32.mrb[0].mxu0
      %v842 = vadd.f32 0.0, %v841
      %v843 = vpop.f32.mrb[0].mxu0
      %v844 = vpop.f32.mrb[0].mxu0
      %v845 = vadd.f32 0.0, %v844
      %v846 = vpop.f32.mrb[0].mxu0
      %847 = vmatprep.mubr.bf16.mxu0 0
      %848 = vmatmul.mubr.bf16.gmra.mrb[0].mxu0 %v528
      %v849 = vpop.f32.mrb[0].mxu0
      %v850 = vadd.f32 0.0, %v849
      %v851 = vpop.f32.mrb[0].mxu0
      %v852 = vpop.f32.mrb[0].mxu0
      %v853 = vadd.f32 0.0, %v852
      %v854 = vpop.f32.mrb[0].mxu0
      %855 = vmatprep.mubr.bf16.mxu0 0
      %856 = vmatmul.mubr.bf16.gmra.mrb[0].mxu0 %v529
      %v857 = vpop.f32.mrb[0].mxu0
      %v858 = vadd.f32 0.0, %v857
      %v859 = vpop.f32.mrb[0].mxu0
      %v860 = vpop.f32.mrb[0].mxu0
      %v861 = vadd.f32 0.0, %v860
      %v862 = vpop.f32.mrb[0].mxu0
      %863 = vmatprep.mubr.bf16.mxu0 0
      %864 = vmatmul.mubr.bf16.gmra.mrb[0].mxu0 %v530
      %v865 = vpop.f32.mrb[0].mxu0
      %v866 = vadd.f32 0.0, %v865
      %v867 = vpop.f32.mrb[0].mxu0
      %v868 = vpop.f32.mrb[0].mxu0
      %v869 = vadd.f32 0.0, %v868
      %v870 = vpop.f32.mrb[0].mxu0
      %871 = vmatprep.mubr.bf16.mxu0 0
      %872 = vmatmul.mubr.bf16.gmra.mrb[0].mxu0 %v531
      %v873 = vpop.f32.mrb[0].mxu0
      %v874 = vadd.f32 0.0, %v873
      %v875 = vpop.f32.mrb[0].mxu0
      %v876 = vpop.f32.mrb[0].mxu0
      %v877 = vadd.f32 0.0, %v876
      %v878 = vpop.f32.mrb[0].mxu0
      %879 = vmatprep.mubr.bf16.mxu0 0
      %880 = vmatmul.mubr.bf16.gmra.mrb[0].mxu0 %v532
      %v881 = vpop.f32.mrb[0].mxu0
      %v882 = vadd.f32 0.0, %v881
      %v883 = vpop.f32.mrb[0].mxu0
      %v884 = vpop.f32.mrb[0].mxu0
      %v885 = vadd.f32 0.0, %v884
      %v886 = vpop.f32.mrb[0].mxu0
      %887 = vmatprep.mubr.bf16.mxu0 0
      %888 = vmatmul.mubr.bf16.gmra.mrb[0].mxu0 %v533
      %v889 = vpop.f32.mrb[0].mxu0
      %v890 = vadd.f32 0.0, %v889
      %v891 = vpop.f32.mrb[0].mxu0
      %v892 = vpop.f32.mrb[0].mxu0
      %v893 = vadd.f32 0.0, %v892
      %v894 = vpop.f32.mrb[0].mxu0
      %895 = vmatprep.mubr.bf16.mxu0 0
      %896 = vmatmul.mubr.bf16.gmra.mrb[0].mxu0 %v534
      %v897 = vpop.f32.mrb[0].mxu0
      %v898 = vadd.f32 0.0, %v897
      %v899 = vpop.f32.mrb[0].mxu0
      %v900 = vpop.f32.mrb[0].mxu0
      %v901 = vadd.f32 0.0, %v900
      %v902 = vpop.f32.mrb[0].mxu0
      %903 = vdwg.mxu0
      %v904 = vpack.c.bf16 %v653, %v650
      %v905 = vpack.c.bf16 %v661, %v658
      %v906 = vpack.c.bf16 %v669, %v666
      %v907 = vpack.c.bf16 %v677, %v674
      %v908 = vpack.c.bf16 %v685, %v682
      %v909 = vpack.c.bf16 %v693, %v690
      %v910 = vpack.c.bf16 %v701, %v698
      %v911 = vpack.c.bf16 %v709, %v706
      %v912 = vpack.c.bf16 %v717, %v714
      %v913 = vpack.c.bf16 %v725, %v722
      %v914 = vpack.c.bf16 %v733, %v730
      %v915 = vpack.c.bf16 %v741, %v738
      %v916 = vpack.c.bf16 %v749, %v746
      %v917 = vpack.c.bf16 %v757, %v754
      %v918 = vpack.c.bf16 %v765, %v762
      %v919 = vpack.c.bf16 %v773, %v770
      %v920 = vpack.c.bf16 %v781, %v778
      %v921 = vpack.c.bf16 %v789, %v786
      %v922 = vpack.c.bf16 %v797, %v794
      %v923 = vpack.c.bf16 %v805, %v802
      %v924 = vpack.c.bf16 %v813, %v810
      %v925 = vpack.c.bf16 %v821, %v818
      %v926 = vpack.c.bf16 %v829, %v826
      %v927 = vpack.c.bf16 %v837, %v834
      %v928 = vpack.c.bf16 %v845, %v842
      %v929 = vpack.c.bf16 %v853, %v850
      %v930 = vpack.c.bf16 %v861, %v858
      %v931 = vpack.c.bf16 %v869, %v866
      %v932 = vpack.c.bf16 %v877, %v874
      %v933 = vpack.c.bf16 %v885, %v882
      %v934 = vpack.c.bf16 %v893, %v890
      %v935 = vpack.c.bf16 %v901, %v898
      %v968 = vunpack.c.l.b16 %v904
      %v969 = vunpack.c.h.b16 %v904
      %v970 = vunpack.c.l.b16 %v905
      %v971 = vunpack.c.h.b16 %v905
      %v972 = vunpack.c.l.b16 %v906
      %v973 = vunpack.c.h.b16 %v906
      %v974 = vunpack.c.l.b16 %v907
      %v975 = vunpack.c.h.b16 %v907
      %v976 = vunpack.c.l.b16 %v908
      %v977 = vunpack.c.h.b16 %v908
      %v978 = vunpack.c.l.b16 %v909
      %v979 = vunpack.c.h.b16 %v909
      %v980 = vunpack.c.l.b16 %v910
      %v981 = vunpack.c.h.b16 %v910
      %v982 = vunpack.c.l.b16 %v911
      %v983 = vunpack.c.h.b16 %v911
      %v984 = vunpack.c.l.b16 %v912
      %v985 = vunpack.c.h.b16 %v912
      %v986 = vunpack.c.l.b16 %v913
      %v987 = vunpack.c.h.b16 %v913
      %v988 = vunpack.c.l.b16 %v914
      %v989 = vunpack.c.h.b16 %v914
      %v990 = vunpack.c.l.b16 %v915
      %v991 = vunpack.c.h.b16 %v915
      %v992 = vunpack.c.l.b16 %v916
      %v993 = vunpack.c.h.b16 %v916
      %v994 = vunpack.c.l.b16 %v917
      %v995 = vunpack.c.h.b16 %v917
      %v996 = vunpack.c.l.b16 %v918
      %v997 = vunpack.c.h.b16 %v918
      %v998 = vunpack.c.l.b16 %v919
      %v999 = vunpack.c.h.b16 %v919
      %v1000 = vunpack.c.l.b16 %v920
      %v1001 = vunpack.c.h.b16 %v920
      %v1002 = vunpack.c.l.b16 %v921
      %v1003 = vunpack.c.h.b16 %v921
      %v1004 = vunpack.c.l.b16 %v922
      %v1005 = vunpack.c.h.b16 %v922
      %v1006 = vunpack.c.l.b16 %v923
      %v1007 = vunpack.c.h.b16 %v923
      %v1008 = vunpack.c.l.b16 %v924
      %v1009 = vunpack.c.h.b16 %v924
      %v1010 = vunpack.c.l.b16 %v925
      %v1011 = vunpack.c.h.b16 %v925
      %v1012 = vunpack.c.l.b16 %v926
      %v1013 = vunpack.c.h.b16 %v926
      %v1014 = vunpack.c.l.b16 %v927
      %v1015 = vunpack.c.h.b16 %v927
      %v1016 = vunpack.c.l.b16 %v928
      %v1017 = vunpack.c.h.b16 %v928
      %v1018 = vunpack.c.l.b16 %v929
      %v1019 = vunpack.c.h.b16 %v929
      %v1020 = vunpack.c.l.b16 %v930
      %v1021 = vunpack.c.h.b16 %v930
      %v1022 = vunpack.c.l.b16 %v931
      %v1023 = vunpack.c.h.b16 %v931
      %v1024 = vunpack.c.l.b16 %v932
      %v1025 = vunpack.c.h.b16 %v932
      %v1026 = vunpack.c.l.b16 %v933
      %v1027 = vunpack.c.h.b16 %v933
      %v1028 = vunpack.c.l.b16 %v934
      %v1029 = vunpack.c.h.b16 %v934
      %v1030 = vunpack.c.l.b16 %v935
      %v1031 = vunpack.c.h.b16 %v935
      %v1032 = vpack.c.b16 %v968, %v968
      %v1033 = vpack.c.b16 %v969, %v969
      %v1034 = vpack.c.b16 %v970, %v970
      %v1035 = vpack.c.b16 %v971, %v971
      %v1036 = vpack.c.b16 %v972, %v972
      %v1037 = vpack.c.b16 %v973, %v973
      %v1038 = vpack.c.b16 %v974, %v974
      %v1039 = vpack.c.b16 %v975, %v975
      %v1040 = vpack.c.b16 %v976, %v976
      %v1041 = vpack.c.b16 %v977, %v977
      %v1042 = vpack.c.b16 %v978, %v978
      %v1043 = vpack.c.b16 %v979, %v979
      %v1044 = vpack.c.b16 %v980, %v980
      %v1045 = vpack.c.b16 %v981, %v981
      %v1046 = vpack.c.b16 %v982, %v982
      %v1047 = vpack.c.b16 %v983, %v983
      %v1048 = vpack.c.b16 %v984, %v984
      %v1049 = vpack.c.b16 %v985, %v985
      %v1050 = vpack.c.b16 %v986, %v986
      %v1051 = vpack.c.b16 %v987, %v987
      %v1052 = vpack.c.b16 %v988, %v988
      %v1053 = vpack.c.b16 %v989, %v989
      %v1054 = vpack.c.b16 %v990, %v990
      %v1055 = vpack.c.b16 %v991, %v991
      %v1056 = vpack.c.b16 %v992, %v992
      %v1057 = vpack.c.b16 %v993, %v993
      %v1058 = vpack.c.b16 %v994, %v994
      %v1059 = vpack.c.b16 %v995, %v995
      %v1060 = vpack.c.b16 %v996, %v996
      %v1061 = vpack.c.b16 %v997, %v997
      %v1062 = vpack.c.b16 %v998, %v998
      %v1063 = vpack.c.b16 %v999, %v999
      %v1064 = vpack.c.b16 %v1000, %v1000
      %v1065 = vpack.c.b16 %v1001, %v1001
      %v1066 = vpack.c.b16 %v1002, %v1002
      %v1067 = vpack.c.b16 %v1003, %v1003
      %v1068 = vpack.c.b16 %v1004, %v1004
      %v1069 = vpack.c.b16 %v1005, %v1005
      %v1070 = vpack.c.b16 %v1006, %v1006
      %v1071 = vpack.c.b16 %v1007, %v1007
      %v1072 = vpack.c.b16 %v1008, %v1008
      %v1073 = vpack.c.b16 %v1009, %v1009
      %v1074 = vpack.c.b16 %v1010, %v1010
      %v1075 = vpack.c.b16 %v1011, %v1011
      %v1076 = vpack.c.b16 %v1012, %v1012
      %v1077 = vpack.c.b16 %v1013, %v1013
      %v1078 = vpack.c.b16 %v1014, %v1014
      %v1079 = vpack.c.b16 %v1015, %v1015
      %v1080 = vpack.c.b16 %v1016, %v1016
      %v1081 = vpack.c.b16 %v1017, %v1017
      %v1082 = vpack.c.b16 %v1018, %v1018
      %v1083 = vpack.c.b16 %v1019, %v1019
      %v1084 = vpack.c.b16 %v1020, %v1020
      %v1085 = vpack.c.b16 %v1021, %v1021
      %v1086 = vpack.c.b16 %v1022, %v1022
      %v1087 = vpack.c.b16 %v1023, %v1023
      %v1088 = vpack.c.b16 %v1024, %v1024
      %v1089 = vpack.c.b16 %v1025, %v1025
      %v1090 = vpack.c.b16 %v1026, %v1026
      %v1091 = vpack.c.b16 %v1027, %v1027
      %v1092 = vpack.c.b16 %v1028, %v1028
      %v1093 = vpack.c.b16 %v1029, %v1029
      %v1094 = vpack.c.b16 %v1030, %v1030
      %v1095 = vpack.c.b16 %v1031, %v1031
      %1160 = vst [vmem:[%s278] sm:$0xf] %v1032
      %1161 = vst [vmem:[%s278 + $0x4] sm:$0xf] %v1033
      %1162 = vst [vmem:[%s278 + $0x8] sm:$0xf] %v1034
      %1163 = vst [vmem:[%s278 + $0xc] sm:$0xf] %v1035
      %1164 = vst [vmem:[%s278 + $0x10] sm:$0xf] %v1036
      %1165 = vst [vmem:[%s278 + $0x14] sm:$0xf] %v1037
      %1166 = vst [vmem:[%s278 + $0x18] sm:$0xf] %v1038
      %1167 = vst [vmem:[%s278 + $0x1c] sm:$0xf] %v1039
      %1168 = vst [vmem:[%s278 + $0x20] sm:$0xf] %v1040
      %1169 = vst [vmem:[%s278 + $0x24] sm:$0xf] %v1041
      %1170 = vst [vmem:[%s278 + $0x28] sm:$0xf] %v1042
      %1171 = vst [vmem:[%s278 + $0x2c] sm:$0xf] %v1043
      %1172 = vst [vmem:[%s278 + $0x30] sm:$0xf] %v1044
      %1173 = vst [vmem:[%s278 + $0x34] sm:$0xf] %v1045
      %1174 = vst [vmem:[%s278 + $0x38] sm:$0xf] %v1046
      %1175 = vst [vmem:[%s278 + $0x3c] sm:$0xf] %v1047
      %1176 = vst [vmem:[%s278 + $0x40] sm:$0xf] %v1048
      %1177 = vst [vmem:[%s278 + $0x44] sm:$0xf] %v1049
      %1178 = vst [vmem:[%s278 + $0x48] sm:$0xf] %v1050
      %1179 = vst [vmem:[%s278 + $0x4c] sm:$0xf] %v1051
      %1180 = vst [vmem:[%s278 + $0x50] sm:$0xf] %v1052
      %1181 = vst [vmem:[%s278 + $0x54] sm:$0xf] %v1053
      %1182 = vst [vmem:[%s278 + $0x58] sm:$0xf] %v1054
      %1183 = vst [vmem:[%s278 + $0x5c] sm:$0xf] %v1055
      %1184 = vst [vmem:[%s278 + $0x60] sm:$0xf] %v1056
      %1185 = vst [vmem:[%s278 + $0x64] sm:$0xf] %v1057
      %1186 = vst [vmem:[%s278 + $0x68] sm:$0xf] %v1058
      %1187 = vst [vmem:[%s278 + $0x6c] sm:$0xf] %v1059
      %1188 = vst [vmem:[%s278 + $0x70] sm:$0xf] %v1060
      %1189 = vst [vmem:[%s278 + $0x74] sm:$0xf] %v1061
      %1190 = vst [vmem:[%s278 + $0x78] sm:$0xf] %v1062
      %1191 = vst [vmem:[%s278 + $0x7c] sm:$0xf] %v1063
      %1192 = vst [vmem:[%s278 + $0x80] sm:$0xf] %v1064
      %1193 = vst [vmem:[%s278 + $0x84] sm:$0xf] %v1065
      %1194 = vst [vmem:[%s278 + $0x88] sm:$0xf] %v1066
      %1195 = vst [vmem:[%s278 + $0x8c] sm:$0xf] %v1067
      %1196 = vst [vmem:[%s278 + $0x90] sm:$0xf] %v1068
      %1197 = vst [vmem:[%s278 + $0x94] sm:$0xf] %v1069
      %1198 = vst [vmem:[%s278 + $0x98] sm:$0xf] %v1070
      %1199 = vst [vmem:[%s278 + $0x9c] sm:$0xf] %v1071
      %1200 = vst [vmem:[%s278 + $0xa0] sm:$0xf] %v1072
      %1201 = vst [vmem:[%s278 + $0xa4] sm:$0xf] %v1073
      %1202 = vst [vmem:[%s278 + $0xa8] sm:$0xf] %v1074
      %1203 = vst [vmem:[%s278 + $0xac] sm:$0xf] %v1075
      %1204 = vst [vmem:[%s278 + $0xb0] sm:$0xf] %v1076
      %1205 = vst [vmem:[%s278 + $0xb4] sm:$0xf] %v1077
      %1206 = vst [vmem:[%s278 + $0xb8] sm:$0xf] %v1078
      %1207 = vst [vmem:[%s278 + $0xbc] sm:$0xf] %v1079
      %1208 = vst [vmem:[%s278 + $0xc0] sm:$0xf] %v1080
      %1209 = vst [vmem:[%s278 + $0xc4] sm:$0xf] %v1081
      %1210 = vst [vmem:[%s278 + $0xc8] sm:$0xf] %v1082
      %1211 = vst [vmem:[%s278 + $0xcc] sm:$0xf] %v1083
      %1212 = vst [vmem:[%s278 + $0xd0] sm:$0xf] %v1084
      %1213 = vst [vmem:[%s278 + $0xd4] sm:$0xf] %v1085
      %1214 = vst [vmem:[%s278 + $0xd8] sm:$0xf] %v1086
      %1215 = vst [vmem:[%s278 + $0xdc] sm:$0xf] %v1087
      %1216 = vst [vmem:[%s278 + $0xe0] sm:$0xf] %v1088
      %1217 = vst [vmem:[%s278 + $0xe4] sm:$0xf] %v1089
      %1218 = vst [vmem:[%s278 + $0xe8] sm:$0xf] %v1090
      %1219 = vst [vmem:[%s278 + $0xec] sm:$0xf] %v1091
      %1220 = vst [vmem:[%s278 + $0xf0] sm:$0xf] %v1092
      %1221 = vst [vmem:[%s278 + $0xf4] sm:$0xf] %v1093
      %1222 = vst [vmem:[%s278 + $0xf8] sm:$0xf] %v1094
      %1223 = vst [vmem:[%s278 + $0xfc] sm:$0xf] %v1095
      %v1224 = vadd.f32 %v650, %v653
      %v1225 = vadd.f32 %v1224, %v658
      %v1226 = vadd.f32 %v1225, %v661
      %v1227 = vadd.f32 %v1226, %v666
      %v1228 = vadd.f32 %v1227, %v669
      %v1229 = vadd.f32 %v1228, %v674
      %v1230 = vadd.f32 %v1229, %v677
      %v1231 = vadd.f32 %v1230, %v682
      %v1232 = vadd.f32 %v1231, %v685
      %v1233 = vadd.f32 %v1232, %v690
      %v1234 = vadd.f32 %v1233, %v693
      %v1235 = vadd.f32 %v1234, %v698
      %v1236 = vadd.f32 %v1235, %v701
      %v1237 = vadd.f32 %v1236, %v706
      %v1238 = vadd.f32 %v1237, %v709
      %v1239 = vadd.f32 %v1238, %v714
      %v1240 = vadd.f32 %v1239, %v717
      %v1241 = vadd.f32 %v1240, %v722
      %v1242 = vadd.f32 %v1241, %v725
      %v1243 = vadd.f32 %v1242, %v730
      %v1244 = vadd.f32 %v1243, %v733
      %v1245 = vadd.f32 %v1244, %v738
      %v1246 = vadd.f32 %v1245, %v741
      %v1247 = vadd.f32 %v1246, %v746
      %v1248 = vadd.f32 %v1247, %v749
      %v1249 = vadd.f32 %v1248, %v754
      %v1250 = vadd.f32 %v1249, %v757
      %v1251 = vadd.f32 %v1250, %v762
      %v1252 = vadd.f32 %v1251, %v765
      %v1253 = vadd.f32 %v1252, %v770
      %v1254 = vadd.f32 %v1253, %v773
      %v1255 = vadd.f32 %v1254, %v778
      %v1256 = vadd.f32 %v1255, %v781
      %v1257 = vadd.f32 %v1256, %v786
      %v1258 = vadd.f32 %v1257, %v789
      %v1259 = vadd.f32 %v1258, %v794
      %v1260 = vadd.f32 %v1259, %v797
      %v1261 = vadd.f32 %v1260, %v802
      %v1262 = vadd.f32 %v1261, %v805
      %v1263 = vadd.f32 %v1262, %v810
      %v1264 = vadd.f32 %v1263, %v813
      %v1265 = vadd.f32 %v1264, %v818
      %v1266 = vadd.f32 %v1265, %v821
      %v1267 = vadd.f32 %v1266, %v826
      %v1268 = vadd.f32 %v1267, %v829
      %v1269 = vadd.f32 %v1268, %v834
      %v1270 = vadd.f32 %v1269, %v837
      %v1271 = vadd.f32 %v1270, %v842
      %v1272 = vadd.f32 %v1271, %v845
      %v1273 = vadd.f32 %v1272, %v850
      %v1274 = vadd.f32 %v1273, %v853
      %v1275 = vadd.f32 %v1274, %v858
      %v1276 = vadd.f32 %v1275, %v861
      %v1277 = vadd.f32 %v1276, %v866
      %v1278 = vadd.f32 %v1277, %v869
      %v1279 = vadd.f32 %v1278, %v874
      %v1280 = vadd.f32 %v1279, %v877
      %v1281 = vadd.f32 %v1280, %v882
      %v1282 = vadd.f32 %v1281, %v885
      %v1283 = vadd.f32 %v1282, %v890
      %v1284 = vadd.f32 %v1283, %v893
      %v1285 = vadd.f32 %v1284, %v898
      %v1286 = vadd.f32 %v1285, %v901
      %v1287 = vrot.slane %v1286, 4
      %v1288 = vadd.f32 %v1286, %v1287
      %v1289 = vrot.slane %v1288, 2
      %v1290 = vadd.f32 %v1288, %v1289
      %v1291 = vrot.slane %v1290, 1
      %v1292 = vadd.f32 %v1290, %v1291
      %v1293 = vmul.f32 %v650, %v650
      %v1294 = vmul.f32 %v653, %v653
      %v1295 = vmul.f32 %v658, %v658
      %v1296 = vmul.f32 %v661, %v661
      %v1297 = vmul.f32 %v666, %v666
      %v1298 = vmul.f32 %v669, %v669
      %v1299 = vmul.f32 %v674, %v674
      %v1300 = vmul.f32 %v677, %v677
      %v1301 = vmul.f32 %v682, %v682
      %v1302 = vmul.f32 %v685, %v685
      %v1303 = vmul.f32 %v690, %v690
      %v1304 = vmul.f32 %v693, %v693
      %v1305 = vmul.f32 %v698, %v698
      %v1306 = vmul.f32 %v701, %v701
      %v1307 = vmul.f32 %v706, %v706
      %v1308 = vmul.f32 %v709, %v709
      %v1309 = vmul.f32 %v714, %v714
      %v1310 = vmul.f32 %v717, %v717
      %v1311 = vmul.f32 %v722, %v722
      %v1312 = vmul.f32 %v725, %v725
      %v1313 = vmul.f32 %v730, %v730
      %v1314 = vmul.f32 %v733, %v733
      %v1315 = vmul.f32 %v738, %v738
      %v1316 = vmul.f32 %v741, %v741
      %v1317 = vmul.f32 %v746, %v746
      %v1318 = vmul.f32 %v749, %v749
      %v1319 = vmul.f32 %v754, %v754
      %v1320 = vmul.f32 %v757, %v757
      %v1321 = vmul.f32 %v762, %v762
      %v1322 = vmul.f32 %v765, %v765
      %v1323 = vmul.f32 %v770, %v770
      %v1324 = vmul.f32 %v773, %v773
      %v1325 = vmul.f32 %v778, %v778
      %v1326 = vmul.f32 %v781, %v781
      %v1327 = vmul.f32 %v786, %v786
      %v1328 = vmul.f32 %v789, %v789
      %v1329 = vmul.f32 %v794, %v794
      %v1330 = vmul.f32 %v797, %v797
      %v1331 = vmul.f32 %v802, %v802
      %v1332 = vmul.f32 %v805, %v805
      %v1333 = vmul.f32 %v810, %v810
      %v1334 = vmul.f32 %v813, %v813
      %v1335 = vmul.f32 %v818, %v818
      %v1336 = vmul.f32 %v821, %v821
      %v1337 = vmul.f32 %v826, %v826
      %v1338 = vmul.f32 %v829, %v829
      %v1339 = vmul.f32 %v834, %v834
      %v1340 = vmul.f32 %v837, %v837
      %v1341 = vmul.f32 %v842, %v842
      %v1342 = vmul.f32 %v845, %v845
      %v1343 = vmul.f32 %v850, %v850
      %v1344 = vmul.f32 %v853, %v853
      %v1345 = vmul.f32 %v858, %v858
      %v1346 = vmul.f32 %v861, %v861
      %v1347 = vmul.f32 %v866, %v866
      %v1348 = vmul.f32 %v869, %v869
      %v1349 = vmul.f32 %v874, %v874
      %v1350 = vmul.f32 %v877, %v877
      %v1351 = vmul.f32 %v882, %v882
      %v1352 = vmul.f32 %v885, %v885
      %v1353 = vmul.f32 %v890, %v890
      %v1354 = vmul.f32 %v893, %v893
      %v1355 = vmul.f32 %v898, %v898
      %v1356 = vmul.f32 %v901, %v901
      %v1357 = vadd.f32 %v1293, %v1294
      %v1358 = vadd.f32 %v1357, %v1295
      %v1359 = vadd.f32 %v1358, %v1296
      %v1360 = vadd.f32 %v1359, %v1297
      %v1361 = vadd.f32 %v1360, %v1298
      %v1362 = vadd.f32 %v1361, %v1299
      %v1363 = vadd.f32 %v1362, %v1300
      %v1364 = vadd.f32 %v1363, %v1301
      %v1365 = vadd.f32 %v1364, %v1302
      %v1366 = vadd.f32 %v1365, %v1303
      %v1367 = vadd.f32 %v1366, %v1304
      %v1368 = vadd.f32 %v1367, %v1305
      %v1369 = vadd.f32 %v1368, %v1306
      %v1370 = vadd.f32 %v1369, %v1307
      %v1371 = vadd.f32 %v1370, %v1308
      %v1372 = vadd.f32 %v1371, %v1309
      %v1373 = vadd.f32 %v1372, %v1310
      %v1374 = vadd.f32 %v1373, %v1311
      %v1375 = vadd.f32 %v1374, %v1312
      %v1376 = vadd.f32 %v1375, %v1313
      %v1377 = vadd.f32 %v1376, %v1314
      %v1378 = vadd.f32 %v1377, %v1315
      %v1379 = vadd.f32 %v1378, %v1316
      %v1380 = vadd.f32 %v1379, %v1317
      %v1381 = vadd.f32 %v1380, %v1318
      %v1382 = vadd.f32 %v1381, %v1319
      %v1383 = vadd.f32 %v1382, %v1320
      %v1384 = vadd.f32 %v1383, %v1321
      %v1385 = vadd.f32 %v1384, %v1322
      %v1386 = vadd.f32 %v1385, %v1323
      %v1387 = vadd.f32 %v1386, %v1324
      %v1388 = vadd.f32 %v1387, %v1325
      %v1389 = vadd.f32 %v1388, %v1326
      %v1390 = vadd.f32 %v1389, %v1327
      %v1391 = vadd.f32 %v1390, %v1328
      %v1392 = vadd.f32 %v1391, %v1329
      %v1393 = vadd.f32 %v1392, %v1330
      %v1394 = vadd.f32 %v1393, %v1331
      %v1395 = vadd.f32 %v1394, %v1332
      %v1396 = vadd.f32 %v1395, %v1333
      %v1397 = vadd.f32 %v1396, %v1334
      %v1398 = vadd.f32 %v1397, %v1335
      %v1399 = vadd.f32 %v1398, %v1336
      %v1400 = vadd.f32 %v1399, %v1337
      %v1401 = vadd.f32 %v1400, %v1338
      %v1402 = vadd.f32 %v1401, %v1339
      %v1403 = vadd.f32 %v1402, %v1340
      %v1404 = vadd.f32 %v1403, %v1341
      %v1405 = vadd.f32 %v1404, %v1342
      %v1406 = vadd.f32 %v1405, %v1343
      %v1407 = vadd.f32 %v1406, %v1344
      %v1408 = vadd.f32 %v1407, %v1345
      %v1409 = vadd.f32 %v1408, %v1346
      %v1410 = vadd.f32 %v1409, %v1347
      %v1411 = vadd.f32 %v1410, %v1348
      %v1412 = vadd.f32 %v1411, %v1349
      %v1413 = vadd.f32 %v1412, %v1350
      %v1414 = vadd.f32 %v1413, %v1351
      %v1415 = vadd.f32 %v1414, %v1352
      %v1416 = vadd.f32 %v1415, %v1353
      %v1417 = vadd.f32 %v1416, %v1354
      %v1418 = vadd.f32 %v1417, %v1355
      %v1419 = vadd.f32 %v1418, %v1356
      %v1420 = vrot.slane %v1419, 4
      %v1421 = vadd.f32 %v1419, %v1420
      %v1422 = vrot.slane %v1421, 2
      %v1423 = vadd.f32 %v1421, %v1422
      %v1424 = vrot.slane %v1423, 1
      %v1425 = vadd.f32 %v1423, %v1424
      %1426 = vst [vmem:[%s286] sm:$0xff] %v1292
      %1427 = vst [vmem:[%s293] sm:$0xff] %v1425
      %s1428 = smul.u32 64, %s21
      %p1429 = scmp.lt.s32.totalorder %s20, 3
      %s1430 = scalar_select %p1429, %s20, 3
      %p1431 = scmp.lt.s32.totalorder %s1428, 63
      %s1432 = scalar_select %p1431, %s1428, 63
      %s1433 = smul.addr %s1430, 64
      %s1434 = sadd.s32 %s1432, %s1433
      %s1435 = smul.addr %s1434, 4
      %s1436 = scalar_lea.vmem %s2, %s1435
      %p1437 = scmp.lt.s32.totalorder %s20, 3
      %s1438 = scalar_select %p1437, %s20, 3
      %p1439 = scmp.lt.s32.totalorder %s21, 0
      %s1440 = scalar_select %p1439, %s21, 0
      %s1441 = sadd.s32 %s1440, %s1438
      %s1442 = smul.addr %s1441, 8
      %s1443 = scalar_lea.vmem %s3, %s1442
      %p1444 = scmp.lt.s32.totalorder %s20, 3
      %s1445 = scalar_select %p1444, %s20, 3
      %p1446 = scmp.lt.s32.totalorder %s21, 0
      %s1447 = scalar_select %p1446, %s21, 0
      %s1448 = sadd.s32 %s1447, %s1445
      %s1449 = smul.addr %s1448, 8
      %s1450 = scalar_lea.vmem %s4, %s1449
      // Predicated region
      $region29: #{dcgan_generator.15} parent=27 // pred_check
        %p1451 = pneg %p102
      $region30: #{dcgan_generator.15} parent=27 // pred_check_branch
        %1453 = sbr.rel (%p1451) target = $region32
      $region31: #{dcgan_generator.15} parent=27 // pred_region
        %s1454 = smul.u32 64, %s21
      $region32: #{dcgan_generator.15} parent=27 // pred_fallthru
        _
      // Predicated region
      $region33: #{dcgan_generator.15} parent=27 // pred_check
        %p1455 = pneg %p130
      $region34: #{dcgan_generator.15} parent=27 // pred_check_branch
        %1457 = sbr.rel (%p1455) target = $region36
      $region35: #{dcgan_generator.15} parent=27 // pred_region
        _
      $region36: #{dcgan_generator.15} parent=27 // pred_fallthru
        _
      // Predicated region
      $region37: #{dcgan_generator.15} parent=27 // pred_check
        %p1458 = pneg %p158
      $region38: #{dcgan_generator.15} parent=27 // pred_check_branch
        %1460 = sbr.rel (%p1458) target = $region40
      $region39: #{dcgan_generator.15} parent=27 // pred_region
        _
      $region40: #{dcgan_generator.15} parent=27 // pred_fallthru
        _
    $region28: #{dcgan_generator.15} parent=5 // pred_fallthru
      _
    %p1461 = scmp.le.s32.totalorder 2, %s11
    // Predicated region
    $region41: #{dcgan_generator.15} parent=5 // pred_check
      %p1462 = pneg %p1461
    $region42: #{dcgan_generator.15} parent=5 // pred_check_branch
      %1464 = sbr.rel (%p1462) target = $region44
    $region43: #{dcgan_generator.15} parent=5 // pred_region
      %s1465 = ssub.s32 %s11, 2
      // Predicated region
      $region45: #{dcgan_generator.15} parent=43 // pred_check
        %p1466 = pneg %p108
      $region46: #{dcgan_generator.15} parent=43 // pred_check_branch
        %1468 = sbr.rel (%p1466) target = $region48
      $region47: #{dcgan_generator.15} parent=43 // pred_region
        %s1469 = smul.u32 64, %s23
        %p1470 = scmp.lt.s32.totalorder %s22, 3
        %s1471 = scalar_select %p1470, %s22, 3
        %p1472 = scmp.lt.s32.totalorder %s1469, 63
        %s1473 = scalar_select %p1472, %s1469, 63
        %s1474 = smul.addr %s1471, 64
        %s1475 = sadd.s32 %s1473, %s1474
        %s1476 = smul.addr %s1475, 4
        %s1477 = scalar_lea.vmem %s2, %s1476
      $region48: #{dcgan_generator.15} parent=43 // pred_fallthru
        _
      // Predicated region
      $region49: #{dcgan_generator.15} parent=43 // pred_check
        %p1478 = pneg %p136
      $region50: #{dcgan_generator.15} parent=43 // pred_check_branch
        %1480 = sbr.rel (%p1478) target = $region52
      $region51: #{dcgan_generator.15} parent=43 // pred_region
        %p1481 = scmp.lt.s32.totalorder %s22, 3
        %s1482 = scalar_select %p1481, %s22, 3
        %p1483 = scmp.lt.s32.totalorder %s23, 0
        %s1484 = scalar_select %p1483, %s23, 0
        %s1485 = sadd.s32 %s1484, %s1482
        %s1486 = smul.addr %s1485, 8
        %s1487 = scalar_lea.vmem %s3, %s1486
      $region52: #{dcgan_generator.15} parent=43 // pred_fallthru
        _
      // Predicated region
      $region53: #{dcgan_generator.15} parent=43 // pred_check
        %p1488 = pneg %p164
      $region54: #{dcgan_generator.15} parent=43 // pred_check_branch
        %1490 = sbr.rel (%p1488) target = $region56
      $region55: #{dcgan_generator.15} parent=43 // pred_region
        %p1491 = scmp.lt.s32.totalorder %s22, 3
        %s1492 = scalar_select %p1491, %s22, 3
        %p1493 = scmp.lt.s32.totalorder %s23, 0
        %s1494 = scalar_select %p1493, %s23, 0
        %s1495 = sadd.s32 %s1494, %s1492
        %s1496 = smul.addr %s1495, 8
        %s1497 = scalar_lea.vmem %s4, %s1496
      $region56: #{dcgan_generator.15} parent=43 // pred_fallthru
        _
    $region44: #{dcgan_generator.15} parent=5 // pred_fallthru
      _
  $region6: #{dcgan_generator.15} parent=0 // loop_footer
    %s15 = sadd.s32 1, %s11
  $region7: #{dcgan_generator.15} parent=0 // loop_footer_branch
    %10 = sbr.rel target = $region3
  $region8: #{dcgan_generator.15} parent=0 // loop_exit
    _

// kernel: dcgan_generator.16
$region0: #{dcgan_generator.16}
  #allocation0 [shape = 'u32[]', space=smem, size = 0x4, offset = 0x4, fixed_abs, tag = 'smem constant byte address 0x4 - core index']
  #allocation1 [shape = 'u32[144,128]{1,0:T(1,128)}', space=vmem, size = 0x12000, scoped, tag = 'internal scratch']
  %s0 = inlined_call_operand.vmem [shape: bf16[4,512,128], index: 0, kind: input, shape index: {}]
  %s1 = inlined_call_operand.vmem [shape: f32[1,128], index: 1, kind: input, shape index: {}]
  %s2 = inlined_call_operand.vmem [shape: f32[1,128], index: 2, kind: input, shape index: {}]
  %s3 = inlined_call_operand.vmem [shape: bf16[4,512,128], index: 3, kind: output, shape index: {}]
  %s4 = sld [smem:[#allocation0]]
  $region45: #{dcgan_generator.16} parent=0
    _
  %s6 = ssub.s32 1, %s4
  %s7 = scalar_select 0, %s6, %s4
  loop: start=0, step=1, limit=6
  $region2: #{dcgan_generator.16} parent=0 // loop_pre_header
    _
  $region3: #{dcgan_generator.16} parent=0 // loop_header
    %s9 = sphi 0, %s13
    %p10 = scmp.ge.s32.totalorder %s9, 6
    %s16 = sphi 0, %s28
    %s17 = sphi 0, %s24
    %s18 = sphi 0, %s16
    %s19 = sphi 0, %s17
    %s20 = sphi 0, %s18
    %s21 = sphi 0, %s19
    %s33 = sphi 0, %s35
    %s36 = sphi 0, %s33
    %s37 = sphi 0, %s36
    %s53 = sphi 0, %s37
    %s57 = sphi 0, %s57
    %s59 = sphi 0, %s57
    %s60 = sphi 0, %s59
    %s74 = sphi 0, %s60
    %s78 = sphi 0, %s78
    %s80 = sphi 0, %s78
    %s81 = sphi 0, %s80
    %s95 = sphi 0, %s81
    %s103 = sphi 0, %s105
    %s106 = sphi 0, %s103
    %s107 = sphi 0, %s106
    %s123 = sphi 0, %s107
  $region4: #{dcgan_generator.16} parent=0 // loop_header_branch
    %12 = sbr.rel (%p10) target = $region8
  $region5: #{dcgan_generator.16} parent=0 // loop_body
    %s14 = ssub.s32 %s9, 1
    %s15 = ssub.s32 %s9, 2
    %s22 = sadd.s32 1, %s17
    %p23 = scmp.ge.s32.totalorder %s22, 1
    %s24 = scalar_select %p23, 0, %s22
    %s25 = sadd.s32 1, %s16
    %s26 = scalar_select %p23, %s25, %s16
    %p27 = scmp.ge.s32.totalorder %s26, 4
    %s28 = scalar_select %p27, 0, %s26
    %s29 = ssub.s32 %s16, %s28
    %s30 = ssub.s32 %s17, %s24
    %s31 = sor.u32 %s29, %s30
    %p32 = scmp.eq.s32.totalorder %s31, 0
    %s34 = sadd.s32 %s33, 1
    %s35 = scalar_select %p32, %s33, %s34
    %p38 = pneg %p32
    %p39 = scmp.eq.s32.totalorder %s9, 3
    %p40 = por %p38, %p39
    %p41 = scmp.ne.s32.totalorder %s33, %s36
    %p42 = scmp.eq.s32.totalorder %s9, 0
    %p43 = por %p41, %p42
    %p44 = scmp.ne.s32.totalorder %s33, %s36
    %p45 = scmp.eq.s32.totalorder %s14, 3
    %p46 = por %p44, %p45
    %p47 = scmp.ne.s32.totalorder %s36, %s37
    %p48 = scmp.eq.s32.totalorder %s14, 0
    %p49 = por %p47, %p48
    %p50 = scmp.ne.s32.totalorder %s36, %s37
    %p51 = scmp.eq.s32.totalorder %s15, 3
    %p52 = por %p50, %p51
    %p54 = scmp.ne.s32.totalorder %s37, %s53
    %p55 = scmp.eq.s32.totalorder %s15, 0
    %p56 = por %p54, %p55
    %s58 = sadd.s32 %s57, 1
    %p61 = scmp.eq.s32.totalorder %s9, 3
    %p62 = scmp.ne.s32.totalorder %s57, %s59
    %p63 = scmp.eq.s32.totalorder %s9, 0
    %p64 = por %p62, %p63
    %p65 = scmp.ne.s32.totalorder %s57, %s59
    %p66 = scmp.eq.s32.totalorder %s14, 3
    %p67 = por %p65, %p66
    %p68 = scmp.ne.s32.totalorder %s59, %s60
    %p69 = scmp.eq.s32.totalorder %s14, 0
    %p70 = por %p68, %p69
    %p71 = scmp.ne.s32.totalorder %s59, %s60
    %p72 = scmp.eq.s32.totalorder %s15, 3
    %p73 = por %p71, %p72
    %p75 = scmp.ne.s32.totalorder %s60, %s74
    %p76 = scmp.eq.s32.totalorder %s15, 0
    %p77 = por %p75, %p76
    %s79 = sadd.s32 %s78, 1
    %p82 = scmp.eq.s32.totalorder %s9, 3
    %p83 = scmp.ne.s32.totalorder %s78, %s80
    %p84 = scmp.eq.s32.totalorder %s9, 0
    %p85 = por %p83, %p84
    %p86 = scmp.ne.s32.totalorder %s78, %s80
    %p87 = scmp.eq.s32.totalorder %s14, 3
    %p88 = por %p86, %p87
    %p89 = scmp.ne.s32.totalorder %s80, %s81
    %p90 = scmp.eq.s32.totalorder %s14, 0
    %p91 = por %p89, %p90
    %p92 = scmp.ne.s32.totalorder %s80, %s81
    %p93 = scmp.eq.s32.totalorder %s15, 3
    %p94 = por %p92, %p93
    %p96 = scmp.ne.s32.totalorder %s81, %s95
    %p97 = scmp.eq.s32.totalorder %s15, 0
    %p98 = por %p96, %p97
    %s99 = ssub.s32 %s16, %s28
    %s100 = ssub.s32 %s17, %s24
    %s101 = sor.u32 %s99, %s100
    %p102 = scmp.eq.s32.totalorder %s101, 0
    %s104 = sadd.s32 %s103, 1
    %s105 = scalar_select %p102, %s103, %s104
    %p108 = pneg %p102
    %p109 = scmp.eq.s32.totalorder %s9, 3
    %p110 = por %p108, %p109
    %p111 = scmp.ne.s32.totalorder %s103, %s106
    %p112 = scmp.eq.s32.totalorder %s9, 0
    %p113 = por %p111, %p112
    %p114 = scmp.ne.s32.totalorder %s103, %s106
    %p115 = scmp.eq.s32.totalorder %s14, 3
    %p116 = por %p114, %p115
    %p117 = scmp.ne.s32.totalorder %s106, %s107
    %p118 = scmp.eq.s32.totalorder %s14, 0
    %p119 = por %p117, %p118
    %p120 = scmp.ne.s32.totalorder %s106, %s107
    %p121 = scmp.eq.s32.totalorder %s15, 3
    %p122 = por %p120, %p121
    %p124 = scmp.ne.s32.totalorder %s107, %s123
    %p125 = scmp.eq.s32.totalorder %s15, 0
    %p126 = por %p124, %p125
    %p127 = scmp.le.s32.totalorder 1, %s9
    %p128 = scmp.lt.s32.totalorder %s9, 5
    %p129 = pnand %p127, %p128
    %p130 = pneg %p129
    // Predicated region
    $region9: #{dcgan_generator.16} parent=5 // pred_check
      _
    $region10: #{dcgan_generator.16} parent=5 // pred_check_branch
      %132 = sbr.rel (%p129) target = $region12
    $region11: #{dcgan_generator.16} parent=5 // pred_region
      %s133 = ssub.s32 %s9, 1
      // Predicated region
      $region13: #{dcgan_generator.16} parent=11 // pred_check
        %p134 = pneg %p70
      $region14: #{dcgan_generator.16} parent=11 // pred_check_branch
        %136 = sbr.rel (%p134) target = $region16
      $region15: #{dcgan_generator.16} parent=11 // pred_region
        _
      $region16: #{dcgan_generator.16} parent=11 // pred_fallthru
        _
      // Predicated region
      $region17: #{dcgan_generator.16} parent=11 // pred_check
        %p137 = pneg %p91
      $region18: #{dcgan_generator.16} parent=11 // pred_check_branch
        %139 = sbr.rel (%p137) target = $region20
      $region19: #{dcgan_generator.16} parent=11 // pred_region
        _
      $region20: #{dcgan_generator.16} parent=11 // pred_fallthru
        _
    $region12: #{dcgan_generator.16} parent=5 // pred_fallthru
      _
    %p140 = scmp.lt.s32.totalorder %s9, 4
    // Predicated region
    $region21: #{dcgan_generator.16} parent=5 // pred_check
      %p141 = pneg %p140
    $region22: #{dcgan_generator.16} parent=5 // pred_check_branch
      %143 = sbr.rel (%p141) target = $region24
    $region23: #{dcgan_generator.16} parent=5 // pred_region
      // Predicated region
      $region25: #{dcgan_generator.16} parent=23 // pred_check
        %p144 = pneg %p43
      $region26: #{dcgan_generator.16} parent=23 // pred_check_branch
        %146 = sbr.rel (%p144) target = $region28
      $region27: #{dcgan_generator.16} parent=23 // pred_region
        %s147 = smul.u32 64, %s17
        %p148 = scmp.lt.s32.totalorder %s16, 3
        %s149 = scalar_select %p148, %s16, 3
        %p150 = scmp.lt.s32.totalorder %s147, 63
        %s151 = scalar_select %p150, %s147, 63
        %s152 = smul.addr %s149, 64
        %s153 = sadd.s32 %s151, %s152
        %s154 = smul.addr %s153, 4
        %s155 = scalar_lea.vmem %s0, %s154
        %s156 = smul.u32 64, %s17
      $region28: #{dcgan_generator.16} parent=23 // pred_fallthru
        _
    $region24: #{dcgan_generator.16} parent=5 // pred_fallthru
      _
    %p157 = scmp.le.s32.totalorder 1, %s9
    %p158 = scmp.lt.s32.totalorder %s9, 5
    %p159 = pnand %p157, %p158
    %p160 = pneg %p159
    // Predicated region
    $region29: #{dcgan_generator.16} parent=5 // pred_check
      _
    $region30: #{dcgan_generator.16} parent=5 // pred_check_branch
      %162 = sbr.rel (%p159) target = $region32
    $region31: #{dcgan_generator.16} parent=5 // pred_region
      %s163 = ssub.s32 %s9, 1
      %s164 = smul.u32 64, %s19
      %p165 = scmp.lt.s32.totalorder %s18, 3
      %s166 = scalar_select %p165, %s18, 3
      %p167 = scmp.lt.s32.totalorder %s164, 63
      %s168 = scalar_select %p167, %s164, 63
      %s169 = smul.addr %s166, 64
      %s170 = sadd.s32 %s168, %s169
      %s171 = smul.addr %s170, 4
      %s172 = scalar_lea.vmem %s0, %s171
      %p173 = pneg %p49
      %p174 = pneg %p46
      %p175 = pneg %p70
      %p176 = pneg %p67
      %p177 = pneg %p91
      %p178 = pneg %p88
      %p179 = pneg %p119
      %p180 = pneg %p116
      %s181 = smul.u32 64, %s19
      %p182 = scmp.lt.s32.totalorder %s18, 3
      %s183 = scalar_select %p182, %s18, 3
      %p184 = scmp.lt.s32.totalorder %s181, 63
      %s185 = scalar_select %p184, %s181, 63
      %s186 = smul.addr %s183, 64
      %s187 = sadd.s32 %s185, %s186
      %s188 = smul.addr %s187, 4
      %s189 = scalar_lea.vmem %s3, %s188
      %s190 = smul.u32 64, %s19
      %p191 = scmp.lt.s32.totalorder %s18, 3
      %s192 = scalar_select %p191, %s18, 3
      %p193 = scmp.lt.s32.totalorder %s190, 63
      %s194 = scalar_select %p193, %s190, 63
      %s195 = smul.addr %s192, 64
      %s196 = sadd.s32 %s194, %s195
      %s197 = smul.addr %s196, 4
      %s198 = scalar_lea.vmem %s0, %s197
      %s199 = smul.u32 64, %s19
      %s200 = smul.u32 64, %s19
      %p201 = scmp.lt.s32.totalorder %s18, 3
      %s202 = scalar_select %p201, %s18, 3
      %p203 = scmp.lt.s32.totalorder %s200, 63
      %s204 = scalar_select %p203, %s200, 63
      %s205 = smul.addr %s202, 64
      %s206 = sadd.s32 %s204, %s205
      %s207 = smul.addr %s206, 4
      %s208 = scalar_lea.vmem %s3, %s207
      %s209 = smul.u32 64, %s19
      %v210 = vld [vmem:[%s198] sm:$0xf]
      %v211 = vld [vmem:[%s198 + $0x4] sm:$0xf]
      %v212 = vld [vmem:[%s198 + $0x8] sm:$0xf]
      %v213 = vld [vmem:[%s198 + $0xc] sm:$0xf]
      %v214 = vld [vmem:[%s198 + $0x10] sm:$0xf]
      %v215 = vld [vmem:[%s198 + $0x14] sm:$0xf]
      %v216 = vld [vmem:[%s198 + $0x18] sm:$0xf]
      %v217 = vld [vmem:[%s198 + $0x1c] sm:$0xf]
      %v218 = vld [vmem:[%s198 + $0x20] sm:$0xf]
      %v219 = vld [vmem:[%s198 + $0x24] sm:$0xf]
      %v220 = vld [vmem:[%s198 + $0x28] sm:$0xf]
      %v221 = vld [vmem:[%s198 + $0x2c] sm:$0xf]
      %v222 = vld [vmem:[%s198 + $0x30] sm:$0xf]
      %v223 = vld [vmem:[%s198 + $0x34] sm:$0xf]
      %v224 = vld [vmem:[%s198 + $0x38] sm:$0xf]
      %v225 = vld [vmem:[%s198 + $0x3c] sm:$0xf]
      %v226 = vld [vmem:[%s198 + $0x40] sm:$0xf]
      %v227 = vld [vmem:[%s198 + $0x44] sm:$0xf]
      %v228 = vld [vmem:[%s198 + $0x48] sm:$0xf]
      %v229 = vld [vmem:[%s198 + $0x4c] sm:$0xf]
      %v230 = vld [vmem:[%s198 + $0x50] sm:$0xf]
      %v231 = vld [vmem:[%s198 + $0x54] sm:$0xf]
      %v232 = vld [vmem:[%s198 + $0x58] sm:$0xf]
      %v233 = vld [vmem:[%s198 + $0x5c] sm:$0xf]
      %v234 = vld [vmem:[%s198 + $0x60] sm:$0xf]
      %v235 = vld [vmem:[%s198 + $0x64] sm:$0xf]
      %v236 = vld [vmem:[%s198 + $0x68] sm:$0xf]
      %v237 = vld [vmem:[%s198 + $0x6c] sm:$0xf]
      %v238 = vld [vmem:[%s198 + $0x70] sm:$0xf]
      %v239 = vld [vmem:[%s198 + $0x74] sm:$0xf]
      %v240 = vld [vmem:[%s198 + $0x78] sm:$0xf]
      %v241 = vld [vmem:[%s198 + $0x7c] sm:$0xf]
      %v242 = vld [vmem:[%s198 + $0x80] sm:$0xf]
      %v243 = vld [vmem:[%s198 + $0x84] sm:$0xf]
      %v244 = vld [vmem:[%s198 + $0x88] sm:$0xf]
      %v245 = vld [vmem:[%s198 + $0x8c] sm:$0xf]
      %v246 = vld [vmem:[%s198 + $0x90] sm:$0xf]
      %v247 = vld [vmem:[%s198 + $0x94] sm:$0xf]
      %v248 = vld [vmem:[%s198 + $0x98] sm:$0xf]
      %v249 = vld [vmem:[%s198 + $0x9c] sm:$0xf]
      %v250 = vld [vmem:[%s198 + $0xa0] sm:$0xf]
      %v251 = vld [vmem:[%s198 + $0xa4] sm:$0xf]
      %v252 = vld [vmem:[%s198 + $0xa8] sm:$0xf]
      %v253 = vld [vmem:[%s198 + $0xac] sm:$0xf]
      %v254 = vld [vmem:[%s198 + $0xb0] sm:$0xf]
      %v255 = vld [vmem:[%s198 + $0xb4] sm:$0xf]
      %v256 = vld [vmem:[%s198 + $0xb8] sm:$0xf]
      %v257 = vld [vmem:[%s198 + $0xbc] sm:$0xf]
      %v258 = vld [vmem:[%s198 + $0xc0] sm:$0xf]
      %v259 = vld [vmem:[%s198 + $0xc4] sm:$0xf]
      %v260 = vld [vmem:[%s198 + $0xc8] sm:$0xf]
      %v261 = vld [vmem:[%s198 + $0xcc] sm:$0xf]
      %v262 = vld [vmem:[%s198 + $0xd0] sm:$0xf]
      %v263 = vld [vmem:[%s198 + $0xd4] sm:$0xf]
      %v264 = vld [vmem:[%s198 + $0xd8] sm:$0xf]
      %v265 = vld [vmem:[%s198 + $0xdc] sm:$0xf]
      %v266 = vld [vmem:[%s198 + $0xe0] sm:$0xf]
      %v267 = vld [vmem:[%s198 + $0xe4] sm:$0xf]
      %v268 = vld [vmem:[%s198 + $0xe8] sm:$0xf]
      %v269 = vld [vmem:[%s198 + $0xec] sm:$0xf]
      %v270 = vld [vmem:[%s198 + $0xf0] sm:$0xf]
      %v271 = vld [vmem:[%s198 + $0xf4] sm:$0xf]
      %v272 = vld [vmem:[%s198 + $0xf8] sm:$0xf]
      %v273 = vld [vmem:[%s198 + $0xfc] sm:$0xf]
      %v274 = vunpack.c.l.bf16 %v210
      %v275 = vunpack.c.l.bf16 %v211
      %v276 = vunpack.c.l.bf16 %v212
      %v277 = vunpack.c.l.bf16 %v213
      %v278 = vunpack.c.l.bf16 %v214
      %v279 = vunpack.c.l.bf16 %v215
      %v280 = vunpack.c.l.bf16 %v216
      %v281 = vunpack.c.l.bf16 %v217
      %v282 = vunpack.c.l.bf16 %v218
      %v283 = vunpack.c.l.bf16 %v219
      %v284 = vunpack.c.l.bf16 %v220
      %v285 = vunpack.c.l.bf16 %v221
      %v286 = vunpack.c.l.bf16 %v222
      %v287 = vunpack.c.l.bf16 %v223
      %v288 = vunpack.c.l.bf16 %v224
      %v289 = vunpack.c.l.bf16 %v225
      %v290 = vunpack.c.l.bf16 %v226
      %v291 = vunpack.c.l.bf16 %v227
      %v292 = vunpack.c.l.bf16 %v228
      %v293 = vunpack.c.l.bf16 %v229
      %v294 = vunpack.c.l.bf16 %v230
      %v295 = vunpack.c.l.bf16 %v231
      %v296 = vunpack.c.l.bf16 %v232
      %v297 = vunpack.c.l.bf16 %v233
      %v298 = vunpack.c.l.bf16 %v234
      %v299 = vunpack.c.l.bf16 %v235
      %v300 = vunpack.c.l.bf16 %v236
      %v301 = vunpack.c.l.bf16 %v237
      %v302 = vunpack.c.l.bf16 %v238
      %v303 = vunpack.c.l.bf16 %v239
      %v304 = vunpack.c.l.bf16 %v240
      %v305 = vunpack.c.l.bf16 %v241
      %v306 = vunpack.c.l.bf16 %v242
      %v307 = vunpack.c.l.bf16 %v243
      %v308 = vunpack.c.l.bf16 %v244
      %v309 = vunpack.c.l.bf16 %v245
      %v310 = vunpack.c.l.bf16 %v246
      %v311 = vunpack.c.l.bf16 %v247
      %v312 = vunpack.c.l.bf16 %v248
      %v313 = vunpack.c.l.bf16 %v249
      %v314 = vunpack.c.l.bf16 %v250
      %v315 = vunpack.c.l.bf16 %v251
      %v316 = vunpack.c.l.bf16 %v252
      %v317 = vunpack.c.l.bf16 %v253
      %v318 = vunpack.c.l.bf16 %v254
      %v319 = vunpack.c.l.bf16 %v255
      %v320 = vunpack.c.l.bf16 %v256
      %v321 = vunpack.c.l.bf16 %v257
      %v322 = vunpack.c.l.bf16 %v258
      %v323 = vunpack.c.l.bf16 %v259
      %v324 = vunpack.c.l.bf16 %v260
      %v325 = vunpack.c.l.bf16 %v261
      %v326 = vunpack.c.l.bf16 %v262
      %v327 = vunpack.c.l.bf16 %v263
      %v328 = vunpack.c.l.bf16 %v264
      %v329 = vunpack.c.l.bf16 %v265
      %v330 = vunpack.c.l.bf16 %v266
      %v331 = vunpack.c.l.bf16 %v267
      %v332 = vunpack.c.l.bf16 %v268
      %v333 = vunpack.c.l.bf16 %v269
      %v334 = vunpack.c.l.bf16 %v270
      %v335 = vunpack.c.l.bf16 %v271
      %v336 = vunpack.c.l.bf16 %v272
      %v337 = vunpack.c.l.bf16 %v273
      %v338 = vld [vmem:[%s1] sm:$0x1]
      %v340 = vlaneseq
      %v341 = vshrl.u32 %v340, 7
      %v342 = vsub.s32 0, %v341
      %v343 = vrot.slane %v338, %v342
      %v345 = vmul.f32 %v274, %v343
      %v346 = vmul.f32 %v275, %v343
      %v347 = vmul.f32 %v276, %v343
      %v348 = vmul.f32 %v277, %v343
      %v349 = vmul.f32 %v278, %v343
      %v350 = vmul.f32 %v279, %v343
      %v351 = vmul.f32 %v280, %v343
      %v352 = vmul.f32 %v281, %v343
      %v353 = vmul.f32 %v282, %v343
      %v354 = vmul.f32 %v283, %v343
      %v355 = vmul.f32 %v284, %v343
      %v356 = vmul.f32 %v285, %v343
      %v357 = vmul.f32 %v286, %v343
      %v358 = vmul.f32 %v287, %v343
      %v359 = vmul.f32 %v288, %v343
      %v360 = vmul.f32 %v289, %v343
      %v361 = vmul.f32 %v290, %v343
      %v362 = vmul.f32 %v291, %v343
      %v363 = vmul.f32 %v292, %v343
      %v364 = vmul.f32 %v293, %v343
      %v365 = vmul.f32 %v294, %v343
      %v366 = vmul.f32 %v295, %v343
      %v367 = vmul.f32 %v296, %v343
      %v368 = vmul.f32 %v297, %v343
      %v369 = vmul.f32 %v298, %v343
      %v370 = vmul.f32 %v299, %v343
      %v371 = vmul.f32 %v300, %v343
      %v372 = vmul.f32 %v301, %v343
      %v373 = vmul.f32 %v302, %v343
      %v374 = vmul.f32 %v303, %v343
      %v375 = vmul.f32 %v304, %v343
      %v376 = vmul.f32 %v305, %v343
      %v377 = vmul.f32 %v306, %v343
      %v378 = vmul.f32 %v307, %v343
      %v379 = vmul.f32 %v308, %v343
      %v380 = vmul.f32 %v309, %v343
      %v381 = vmul.f32 %v310, %v343
      %v382 = vmul.f32 %v311, %v343
      %v383 = vmul.f32 %v312, %v343
      %v384 = vmul.f32 %v313, %v343
      %v385 = vmul.f32 %v314, %v343
      %v386 = vmul.f32 %v315, %v343
      %v387 = vmul.f32 %v316, %v343
      %v388 = vmul.f32 %v317, %v343
      %v389 = vmul.f32 %v318, %v343
      %v390 = vmul.f32 %v319, %v343
      %v391 = vmul.f32 %v320, %v343
      %v392 = vmul.f32 %v321, %v343
      %v393 = vmul.f32 %v322, %v343
      %v394 = vmul.f32 %v323, %v343
      %v395 = vmul.f32 %v324, %v343
      %v396 = vmul.f32 %v325, %v343
      %v397 = vmul.f32 %v326, %v343
      %v398 = vmul.f32 %v327, %v343
      %v399 = vmul.f32 %v328, %v343
      %v400 = vmul.f32 %v329, %v343
      %v401 = vmul.f32 %v330, %v343
      %v402 = vmul.f32 %v331, %v343
      %v403 = vmul.f32 %v332, %v343
      %v404 = vmul.f32 %v333, %v343
      %v405 = vmul.f32 %v334, %v343
      %v406 = vmul.f32 %v335, %v343
      %v407 = vmul.f32 %v336, %v343
      %v408 = vmul.f32 %v337, %v343
      %v409 = vld [vmem:[%s2] sm:$0x1]
      %v411 = vlaneseq
      %v412 = vshrl.u32 %v411, 7
      %v413 = vsub.s32 0, %v412
      %v414 = vrot.slane %v409, %v413
      %v416 = vadd.f32 %v345, %v414
      %v417 = vadd.f32 %v346, %v414
      %v418 = vadd.f32 %v347, %v414
      %v419 = vadd.f32 %v348, %v414
      %v420 = vadd.f32 %v349, %v414
      %v421 = vadd.f32 %v350, %v414
      %v422 = vadd.f32 %v351, %v414
      %v423 = vadd.f32 %v352, %v414
      %v424 = vadd.f32 %v353, %v414
      %v425 = vadd.f32 %v354, %v414
      %v426 = vadd.f32 %v355, %v414
      %v427 = vadd.f32 %v356, %v414
      %v428 = vadd.f32 %v357, %v414
      %v429 = vadd.f32 %v358, %v414
      %v430 = vadd.f32 %v359, %v414
      %v431 = vadd.f32 %v360, %v414
      %v432 = vadd.f32 %v361, %v414
      %v433 = vadd.f32 %v362, %v414
      %v434 = vadd.f32 %v363, %v414
      %v435 = vadd.f32 %v364, %v414
      %v436 = vadd.f32 %v365, %v414
      %v437 = vadd.f32 %v366, %v414
      %v438 = vadd.f32 %v367, %v414
      %v439 = vadd.f32 %v368, %v414
      %v440 = vadd.f32 %v369, %v414
      %v441 = vadd.f32 %v370, %v414
      %v442 = vadd.f32 %v371, %v414
      %v443 = vadd.f32 %v372, %v414
      %v444 = vadd.f32 %v373, %v414
      %v445 = vadd.f32 %v374, %v414
      %v446 = vadd.f32 %v375, %v414
      %v447 = vadd.f32 %v376, %v414
      %v448 = vadd.f32 %v377, %v414
      %v449 = vadd.f32 %v378, %v414
      %v450 = vadd.f32 %v379, %v414
      %v451 = vadd.f32 %v380, %v414
      %v452 = vadd.f32 %v381, %v414
      %v453 = vadd.f32 %v382, %v414
      %v454 = vadd.f32 %v383, %v414
      %v455 = vadd.f32 %v384, %v414
      %v456 = vadd.f32 %v385, %v414
      %v457 = vadd.f32 %v386, %v414
      %v458 = vadd.f32 %v387, %v414
      %v459 = vadd.f32 %v388, %v414
      %v460 = vadd.f32 %v389, %v414
      %v461 = vadd.f32 %v390, %v414
      %v462 = vadd.f32 %v391, %v414
      %v463 = vadd.f32 %v392, %v414
      %v464 = vadd.f32 %v393, %v414
      %v465 = vadd.f32 %v394, %v414
      %v466 = vadd.f32 %v395, %v414
      %v467 = vadd.f32 %v396, %v414
      %v468 = vadd.f32 %v397, %v414
      %v469 = vadd.f32 %v398, %v414
      %v470 = vadd.f32 %v399, %v414
      %v471 = vadd.f32 %v400, %v414
      %v472 = vadd.f32 %v401, %v414
      %v473 = vadd.f32 %v402, %v414
      %v474 = vadd.f32 %v403, %v414
      %v475 = vadd.f32 %v404, %v414
      %v476 = vadd.f32 %v405, %v414
      %v477 = vadd.f32 %v406, %v414
      %v478 = vadd.f32 %v407, %v414
      %v479 = vadd.f32 %v408, %v414
      %vm480 = vcmp.gt.f32.partialorder %v416, 0.0
      %vm481 = vcmp.gt.f32.partialorder %v417, 0.0
      %vm482 = vcmp.gt.f32.partialorder %v418, 0.0
      %vm483 = vcmp.gt.f32.partialorder %v419, 0.0
      %vm484 = vcmp.gt.f32.partialorder %v420, 0.0
      %vm485 = vcmp.gt.f32.partialorder %v421, 0.0
      %vm486 = vcmp.gt.f32.partialorder %v422, 0.0
      %vm487 = vcmp.gt.f32.partialorder %v423, 0.0
      %vm488 = vcmp.gt.f32.partialorder %v424, 0.0
      %vm489 = vcmp.gt.f32.partialorder %v425, 0.0
      %vm490 = vcmp.gt.f32.partialorder %v426, 0.0
      %vm491 = vcmp.gt.f32.partialorder %v427, 0.0
      %vm492 = vcmp.gt.f32.partialorder %v428, 0.0
      %vm493 = vcmp.gt.f32.partialorder %v429, 0.0
      %vm494 = vcmp.gt.f32.partialorder %v430, 0.0
      %vm495 = vcmp.gt.f32.partialorder %v431, 0.0
      %vm496 = vcmp.gt.f32.partialorder %v432, 0.0
      %vm497 = vcmp.gt.f32.partialorder %v433, 0.0
      %vm498 = vcmp.gt.f32.partialorder %v434, 0.0
      %vm499 = vcmp.gt.f32.partialorder %v435, 0.0
      %vm500 = vcmp.gt.f32.partialorder %v436, 0.0
      %vm501 = vcmp.gt.f32.partialorder %v437, 0.0
      %vm502 = vcmp.gt.f32.partialorder %v438, 0.0
      %vm503 = vcmp.gt.f32.partialorder %v439, 0.0
      %vm504 = vcmp.gt.f32.partialorder %v440, 0.0
      %vm505 = vcmp.gt.f32.partialorder %v441, 0.0
      %vm506 = vcmp.gt.f32.partialorder %v442, 0.0
      %vm507 = vcmp.gt.f32.partialorder %v443, 0.0
      %vm508 = vcmp.gt.f32.partialorder %v444, 0.0
      %vm509 = vcmp.gt.f32.partialorder %v445, 0.0
      %vm510 = vcmp.gt.f32.partialorder %v446, 0.0
      %vm511 = vcmp.gt.f32.partialorder %v447, 0.0
      %vm512 = vcmp.gt.f32.partialorder %v448, 0.0
      %vm513 = vcmp.gt.f32.partialorder %v449, 0.0
      %vm514 = vcmp.gt.f32.partialorder %v450, 0.0
      %vm515 = vcmp.gt.f32.partialorder %v451, 0.0
      %vm516 = vcmp.gt.f32.partialorder %v452, 0.0
      %vm517 = vcmp.gt.f32.partialorder %v453, 0.0
      %vm518 = vcmp.gt.f32.partialorder %v454, 0.0
      %vm519 = vcmp.gt.f32.partialorder %v455, 0.0
      %vm520 = vcmp.gt.f32.partialorder %v456, 0.0
      %vm521 = vcmp.gt.f32.partialorder %v457, 0.0
      %vm522 = vcmp.gt.f32.partialorder %v458, 0.0
      %vm523 = vcmp.gt.f32.partialorder %v459, 0.0
      %vm524 = vcmp.gt.f32.partialorder %v460, 0.0
      %vm525 = vcmp.gt.f32.partialorder %v461, 0.0
      %vm526 = vcmp.gt.f32.partialorder %v462, 0.0
      %vm527 = vcmp.gt.f32.partialorder %v463, 0.0
      %vm528 = vcmp.gt.f32.partialorder %v464, 0.0
      %vm529 = vcmp.gt.f32.partialorder %v465, 0.0
      %vm530 = vcmp.gt.f32.partialorder %v466, 0.0
      %vm531 = vcmp.gt.f32.partialorder %v467, 0.0
      %vm532 = vcmp.gt.f32.partialorder %v468, 0.0
      %vm533 = vcmp.gt.f32.partialorder %v469, 0.0
      %vm534 = vcmp.gt.f32.partialorder %v470, 0.0
      %vm535 = vcmp.gt.f32.partialorder %v471, 0.0
      %vm536 = vcmp.gt.f32.partialorder %v472, 0.0
      %vm537 = vcmp.gt.f32.partialorder %v473, 0.0
      %vm538 = vcmp.gt.f32.partialorder %v474, 0.0
      %vm539 = vcmp.gt.f32.partialorder %v475, 0.0
      %vm540 = vcmp.gt.f32.partialorder %v476, 0.0
      %vm541 = vcmp.gt.f32.partialorder %v477, 0.0
      %vm542 = vcmp.gt.f32.partialorder %v478, 0.0
      %vm543 = vcmp.gt.f32.partialorder %v479, 0.0
      %v544 = vmul.f32 %v416, 0.2
      %v545 = vmul.f32 %v417, 0.2
      %v546 = vmul.f32 %v418, 0.2
      %v547 = vmul.f32 %v419, 0.2
      %v548 = vmul.f32 %v420, 0.2
      %v549 = vmul.f32 %v421, 0.2
      %v550 = vmul.f32 %v422, 0.2
      %v551 = vmul.f32 %v423, 0.2
      %v552 = vmul.f32 %v424, 0.2
      %v553 = vmul.f32 %v425, 0.2
      %v554 = vmul.f32 %v426, 0.2
      %v555 = vmul.f32 %v427, 0.2
      %v556 = vmul.f32 %v428, 0.2
      %v557 = vmul.f32 %v429, 0.2
      %v558 = vmul.f32 %v430, 0.2
      %v559 = vmul.f32 %v431, 0.2
      %v560 = vmul.f32 %v432, 0.2
      %v561 = vmul.f32 %v433, 0.2
      %v562 = vmul.f32 %v434, 0.2
      %v563 = vmul.f32 %v435, 0.2
      %v564 = vmul.f32 %v436, 0.2
      %v565 = vmul.f32 %v437, 0.2
      %v566 = vmul.f32 %v438, 0.2
      %v567 = vmul.f32 %v439, 0.2
      %v568 = vmul.f32 %v440, 0.2
      %v569 = vmul.f32 %v441, 0.2
      %v570 = vmul.f32 %v442, 0.2
      %v571 = vmul.f32 %v443, 0.2
      %v572 = vmul.f32 %v444, 0.2
      %v573 = vmul.f32 %v445, 0.2
      %v574 = vmul.f32 %v446, 0.2
      %v575 = vmul.f32 %v447, 0.2
      %v576 = vmul.f32 %v448, 0.2
      %v577 = vmul.f32 %v449, 0.2
      %v578 = vmul.f32 %v450, 0.2
      %v579 = vmul.f32 %v451, 0.2
      %v580 = vmul.f32 %v452, 0.2
      %v581 = vmul.f32 %v453, 0.2
      %v582 = vmul.f32 %v454, 0.2
      %v583 = vmul.f32 %v455, 0.2
      %v584 = vmul.f32 %v456, 0.2
      %v585 = vmul.f32 %v457, 0.2
      %v586 = vmul.f32 %v458, 0.2
      %v587 = vmul.f32 %v459, 0.2
      %v588 = vmul.f32 %v460, 0.2
      %v589 = vmul.f32 %v461, 0.2
      %v590 = vmul.f32 %v462, 0.2
      %v591 = vmul.f32 %v463, 0.2
      %v592 = vmul.f32 %v464, 0.2
      %v593 = vmul.f32 %v465, 0.2
      %v594 = vmul.f32 %v466, 0.2
      %v595 = vmul.f32 %v467, 0.2
      %v596 = vmul.f32 %v468, 0.2
      %v597 = vmul.f32 %v469, 0.2
      %v598 = vmul.f32 %v470, 0.2
      %v599 = vmul.f32 %v471, 0.2
      %v600 = vmul.f32 %v472, 0.2
      %v601 = vmul.f32 %v473, 0.2
      %v602 = vmul.f32 %v474, 0.2
      %v603 = vmul.f32 %v475, 0.2
      %v604 = vmul.f32 %v476, 0.2
      %v605 = vmul.f32 %v477, 0.2
      %v606 = vmul.f32 %v478, 0.2
      %v607 = vmul.f32 %v479, 0.2
      %v608 = vsel %vm480, %v416, %v544
      %v609 = vsel %vm481, %v417, %v545
      %v610 = vsel %vm482, %v418, %v546
      %v611 = vsel %vm483, %v419, %v547
      %v612 = vsel %vm484, %v420, %v548
      %v613 = vsel %vm485, %v421, %v549
      %v614 = vsel %vm486, %v422, %v550
      %v615 = vsel %vm487, %v423, %v551
      %v616 = vsel %vm488, %v424, %v552
      %v617 = vsel %vm489, %v425, %v553
      %v618 = vsel %vm490, %v426, %v554
      %v619 = vsel %vm491, %v427, %v555
      %v620 = vsel %vm492, %v428, %v556
      %v621 = vsel %vm493, %v429, %v557
      %v622 = vsel %vm494, %v430, %v558
      %v623 = vsel %vm495, %v431, %v559
      %v624 = vsel %vm496, %v432, %v560
      %v625 = vsel %vm497, %v433, %v561
      %v626 = vsel %vm498, %v434, %v562
      %v627 = vsel %vm499, %v435, %v563
      %v628 = vsel %vm500, %v436, %v564
      %v629 = vsel %vm501, %v437, %v565
      %v630 = vsel %vm502, %v438, %v566
      %v631 = vsel %vm503, %v439, %v567
      %v632 = vsel %vm504, %v440, %v568
      %v633 = vsel %vm505, %v441, %v569
      %v634 = vsel %vm506, %v442, %v570
      %v635 = vsel %vm507, %v443, %v571
      %v636 = vsel %vm508, %v444, %v572
      %v637 = vsel %vm509, %v445, %v573
      %v638 = vsel %vm510, %v446, %v574
      %v639 = vsel %vm511, %v447, %v575
      %v640 = vsel %vm512, %v448, %v576
      %v641 = vsel %vm513, %v449, %v577
      %v642 = vsel %vm514, %v450, %v578
      %v643 = vsel %vm515, %v451, %v579
      %v644 = vsel %vm516, %v452, %v580
      %v645 = vsel %vm517, %v453, %v581
      %v646 = vsel %vm518, %v454, %v582
      %v647 = vsel %vm519, %v455, %v583
      %v648 = vsel %vm520, %v456, %v584
      %v649 = vsel %vm521, %v457, %v585
      %v650 = vsel %vm522, %v458, %v586
      %v651 = vsel %vm523, %v459, %v587
      %v652 = vsel %vm524, %v460, %v588
      %v653 = vsel %vm525, %v461, %v589
      %v654 = vsel %vm526, %v462, %v590
      %v655 = vsel %vm527, %v463, %v591
      %v656 = vsel %vm528, %v464, %v592
      %v657 = vsel %vm529, %v465, %v593
      %v658 = vsel %vm530, %v466, %v594
      %v659 = vsel %vm531, %v467, %v595
      %v660 = vsel %vm532, %v468, %v596
      %v661 = vsel %vm533, %v469, %v597
      %v662 = vsel %vm534, %v470, %v598
      %v663 = vsel %vm535, %v471, %v599
      %v664 = vsel %vm536, %v472, %v600
      %v665 = vsel %vm537, %v473, %v601
      %v666 = vsel %vm538, %v474, %v602
      %v667 = vsel %vm539, %v475, %v603
      %v668 = vsel %vm540, %v476, %v604
      %v669 = vsel %vm541, %v477, %v605
      %v670 = vsel %vm542, %v478, %v606
      %v671 = vsel %vm543, %v479, %v607
      %v672 = vpack.c.bf16 %v609, %v608
      %v673 = vpack.c.bf16 %v611, %v610
      %v674 = vpack.c.bf16 %v613, %v612
      %v675 = vpack.c.bf16 %v615, %v614
      %v676 = vpack.c.bf16 %v617, %v616
      %v677 = vpack.c.bf16 %v619, %v618
      %v678 = vpack.c.bf16 %v621, %v620
      %v679 = vpack.c.bf16 %v623, %v622
      %v680 = vpack.c.bf16 %v625, %v624
      %v681 = vpack.c.bf16 %v627, %v626
      %v682 = vpack.c.bf16 %v629, %v628
      %v683 = vpack.c.bf16 %v631, %v630
      %v684 = vpack.c.bf16 %v633, %v632
      %v685 = vpack.c.bf16 %v635, %v634
      %v686 = vpack.c.bf16 %v637, %v636
      %v687 = vpack.c.bf16 %v639, %v638
      %v688 = vpack.c.bf16 %v641, %v640
      %v689 = vpack.c.bf16 %v643, %v642
      %v690 = vpack.c.bf16 %v645, %v644
      %v691 = vpack.c.bf16 %v647, %v646
      %v692 = vpack.c.bf16 %v649, %v648
      %v693 = vpack.c.bf16 %v651, %v650
      %v694 = vpack.c.bf16 %v653, %v652
      %v695 = vpack.c.bf16 %v655, %v654
      %v696 = vpack.c.bf16 %v657, %v656
      %v697 = vpack.c.bf16 %v659, %v658
      %v698 = vpack.c.bf16 %v661, %v660
      %v699 = vpack.c.bf16 %v663, %v662
      %v700 = vpack.c.bf16 %v665, %v664
      %v701 = vpack.c.bf16 %v667, %v666
      %v702 = vpack.c.bf16 %v669, %v668
      %v703 = vpack.c.bf16 %v671, %v670
      %v736 = vunpack.c.l.b16 %v672
      %v737 = vunpack.c.h.b16 %v672
      %v738 = vunpack.c.l.b16 %v673
      %v739 = vunpack.c.h.b16 %v673
      %v740 = vunpack.c.l.b16 %v674
      %v741 = vunpack.c.h.b16 %v674
      %v742 = vunpack.c.l.b16 %v675
      %v743 = vunpack.c.h.b16 %v675
      %v744 = vunpack.c.l.b16 %v676
      %v745 = vunpack.c.h.b16 %v676
      %v746 = vunpack.c.l.b16 %v677
      %v747 = vunpack.c.h.b16 %v677
      %v748 = vunpack.c.l.b16 %v678
      %v749 = vunpack.c.h.b16 %v678
      %v750 = vunpack.c.l.b16 %v679
      %v751 = vunpack.c.h.b16 %v679
      %v752 = vunpack.c.l.b16 %v680
      %v753 = vunpack.c.h.b16 %v680
      %v754 = vunpack.c.l.b16 %v681
      %v755 = vunpack.c.h.b16 %v681
      %v756 = vunpack.c.l.b16 %v682
      %v757 = vunpack.c.h.b16 %v682
      %v758 = vunpack.c.l.b16 %v683
      %v759 = vunpack.c.h.b16 %v683
      %v760 = vunpack.c.l.b16 %v684
      %v761 = vunpack.c.h.b16 %v684
      %v762 = vunpack.c.l.b16 %v685
      %v763 = vunpack.c.h.b16 %v685
      %v764 = vunpack.c.l.b16 %v686
      %v765 = vunpack.c.h.b16 %v686
      %v766 = vunpack.c.l.b16 %v687
      %v767 = vunpack.c.h.b16 %v687
      %v768 = vunpack.c.l.b16 %v688
      %v769 = vunpack.c.h.b16 %v688
      %v770 = vunpack.c.l.b16 %v689
      %v771 = vunpack.c.h.b16 %v689
      %v772 = vunpack.c.l.b16 %v690
      %v773 = vunpack.c.h.b16 %v690
      %v774 = vunpack.c.l.b16 %v691
      %v775 = vunpack.c.h.b16 %v691
      %v776 = vunpack.c.l.b16 %v692
      %v777 = vunpack.c.h.b16 %v692
      %v778 = vunpack.c.l.b16 %v693
      %v779 = vunpack.c.h.b16 %v693
      %v780 = vunpack.c.l.b16 %v694
      %v781 = vunpack.c.h.b16 %v694
      %v782 = vunpack.c.l.b16 %v695
      %v783 = vunpack.c.h.b16 %v695
      %v784 = vunpack.c.l.b16 %v696
      %v785 = vunpack.c.h.b16 %v696
      %v786 = vunpack.c.l.b16 %v697
      %v787 = vunpack.c.h.b16 %v697
      %v788 = vunpack.c.l.b16 %v698
      %v789 = vunpack.c.h.b16 %v698
      %v790 = vunpack.c.l.b16 %v699
      %v791 = vunpack.c.h.b16 %v699
      %v792 = vunpack.c.l.b16 %v700
      %v793 = vunpack.c.h.b16 %v700
      %v794 = vunpack.c.l.b16 %v701
      %v795 = vunpack.c.h.b16 %v701
      %v796 = vunpack.c.l.b16 %v702
      %v797 = vunpack.c.h.b16 %v702
      %v798 = vunpack.c.l.b16 %v703
      %v799 = vunpack.c.h.b16 %v703
      %v800 = vpack.c.b16 %v736, %v736
      %v801 = vpack.c.b16 %v737, %v737
      %v802 = vpack.c.b16 %v738, %v738
      %v803 = vpack.c.b16 %v739, %v739
      %v804 = vpack.c.b16 %v740, %v740
      %v805 = vpack.c.b16 %v741, %v741
      %v806 = vpack.c.b16 %v742, %v742
      %v807 = vpack.c.b16 %v743, %v743
      %v808 = vpack.c.b16 %v744, %v744
      %v809 = vpack.c.b16 %v745, %v745
      %v810 = vpack.c.b16 %v746, %v746
      %v811 = vpack.c.b16 %v747, %v747
      %v812 = vpack.c.b16 %v748, %v748
      %v813 = vpack.c.b16 %v749, %v749
      %v814 = vpack.c.b16 %v750, %v750
      %v815 = vpack.c.b16 %v751, %v751
      %v816 = vpack.c.b16 %v752, %v752
      %v817 = vpack.c.b16 %v753, %v753
      %v818 = vpack.c.b16 %v754, %v754
      %v819 = vpack.c.b16 %v755, %v755
      %v820 = vpack.c.b16 %v756, %v756
      %v821 = vpack.c.b16 %v757, %v757
      %v822 = vpack.c.b16 %v758, %v758
      %v823 = vpack.c.b16 %v759, %v759
      %v824 = vpack.c.b16 %v760, %v760
      %v825 = vpack.c.b16 %v761, %v761
      %v826 = vpack.c.b16 %v762, %v762
      %v827 = vpack.c.b16 %v763, %v763
      %v828 = vpack.c.b16 %v764, %v764
      %v829 = vpack.c.b16 %v765, %v765
      %v830 = vpack.c.b16 %v766, %v766
      %v831 = vpack.c.b16 %v767, %v767
      %v832 = vpack.c.b16 %v768, %v768
      %v833 = vpack.c.b16 %v769, %v769
      %v834 = vpack.c.b16 %v770, %v770
      %v835 = vpack.c.b16 %v771, %v771
      %v836 = vpack.c.b16 %v772, %v772
      %v837 = vpack.c.b16 %v773, %v773
      %v838 = vpack.c.b16 %v774, %v774
      %v839 = vpack.c.b16 %v775, %v775
      %v840 = vpack.c.b16 %v776, %v776
      %v841 = vpack.c.b16 %v777, %v777
      %v842 = vpack.c.b16 %v778, %v778
      %v843 = vpack.c.b16 %v779, %v779
      %v844 = vpack.c.b16 %v780, %v780
      %v845 = vpack.c.b16 %v781, %v781
      %v846 = vpack.c.b16 %v782, %v782
      %v847 = vpack.c.b16 %v783, %v783
      %v848 = vpack.c.b16 %v784, %v784
      %v849 = vpack.c.b16 %v785, %v785
      %v850 = vpack.c.b16 %v786, %v786
      %v851 = vpack.c.b16 %v787, %v787
      %v852 = vpack.c.b16 %v788, %v788
      %v853 = vpack.c.b16 %v789, %v789
      %v854 = vpack.c.b16 %v790, %v790
      %v855 = vpack.c.b16 %v791, %v791
      %v856 = vpack.c.b16 %v792, %v792
      %v857 = vpack.c.b16 %v793, %v793
      %v858 = vpack.c.b16 %v794, %v794
      %v859 = vpack.c.b16 %v795, %v795
      %v860 = vpack.c.b16 %v796, %v796
      %v861 = vpack.c.b16 %v797, %v797
      %v862 = vpack.c.b16 %v798, %v798
      %v863 = vpack.c.b16 %v799, %v799
      %928 = vst [vmem:[%s208] sm:$0xf] %v800
      %929 = vst [vmem:[%s208 + $0x4] sm:$0xf] %v801
      %930 = vst [vmem:[%s208 + $0x8] sm:$0xf] %v802
      %931 = vst [vmem:[%s208 + $0xc] sm:$0xf] %v803
      %932 = vst [vmem:[%s208 + $0x10] sm:$0xf] %v804
      %933 = vst [vmem:[%s208 + $0x14] sm:$0xf] %v805
      %934 = vst [vmem:[%s208 + $0x18] sm:$0xf] %v806
      %935 = vst [vmem:[%s208 + $0x1c] sm:$0xf] %v807
      %936 = vst [vmem:[%s208 + $0x20] sm:$0xf] %v808
      %937 = vst [vmem:[%s208 + $0x24] sm:$0xf] %v809
      %938 = vst [vmem:[%s208 + $0x28] sm:$0xf] %v810
      %939 = vst [vmem:[%s208 + $0x2c] sm:$0xf] %v811
      %940 = vst [vmem:[%s208 + $0x30] sm:$0xf] %v812
      %941 = vst [vmem:[%s208 + $0x34] sm:$0xf] %v813
      %942 = vst [vmem:[%s208 + $0x38] sm:$0xf] %v814
      %943 = vst [vmem:[%s208 + $0x3c] sm:$0xf] %v815
      %944 = vst [vmem:[%s208 + $0x40] sm:$0xf] %v816
      %945 = vst [vmem:[%s208 + $0x44] sm:$0xf] %v817
      %946 = vst [vmem:[%s208 + $0x48] sm:$0xf] %v818
      %947 = vst [vmem:[%s208 + $0x4c] sm:$0xf] %v819
      %948 = vst [vmem:[%s208 + $0x50] sm:$0xf] %v820
      %949 = vst [vmem:[%s208 + $0x54] sm:$0xf] %v821
      %950 = vst [vmem:[%s208 + $0x58] sm:$0xf] %v822
      %951 = vst [vmem:[%s208 + $0x5c] sm:$0xf] %v823
      %952 = vst [vmem:[%s208 + $0x60] sm:$0xf] %v824
      %953 = vst [vmem:[%s208 + $0x64] sm:$0xf] %v825
      %954 = vst [vmem:[%s208 + $0x68] sm:$0xf] %v826
      %955 = vst [vmem:[%s208 + $0x6c] sm:$0xf] %v827
      %956 = vst [vmem:[%s208 + $0x70] sm:$0xf] %v828
      %957 = vst [vmem:[%s208 + $0x74] sm:$0xf] %v829
      %958 = vst [vmem:[%s208 + $0x78] sm:$0xf] %v830
      %959 = vst [vmem:[%s208 + $0x7c] sm:$0xf] %v831
      %960 = vst [vmem:[%s208 + $0x80] sm:$0xf] %v832
      %961 = vst [vmem:[%s208 + $0x84] sm:$0xf] %v833
      %962 = vst [vmem:[%s208 + $0x88] sm:$0xf] %v834
      %963 = vst [vmem:[%s208 + $0x8c] sm:$0xf] %v835
      %964 = vst [vmem:[%s208 + $0x90] sm:$0xf] %v836
      %965 = vst [vmem:[%s208 + $0x94] sm:$0xf] %v837
      %966 = vst [vmem:[%s208 + $0x98] sm:$0xf] %v838
      %967 = vst [vmem:[%s208 + $0x9c] sm:$0xf] %v839
      %968 = vst [vmem:[%s208 + $0xa0] sm:$0xf] %v840
      %969 = vst [vmem:[%s208 + $0xa4] sm:$0xf] %v841
      %970 = vst [vmem:[%s208 + $0xa8] sm:$0xf] %v842
      %971 = vst [vmem:[%s208 + $0xac] sm:$0xf] %v843
      %972 = vst [vmem:[%s208 + $0xb0] sm:$0xf] %v844
      %973 = vst [vmem:[%s208 + $0xb4] sm:$0xf] %v845
      %974 = vst [vmem:[%s208 + $0xb8] sm:$0xf] %v846
      %975 = vst [vmem:[%s208 + $0xbc] sm:$0xf] %v847
      %976 = vst [vmem:[%s208 + $0xc0] sm:$0xf] %v848
      %977 = vst [vmem:[%s208 + $0xc4] sm:$0xf] %v849
      %978 = vst [vmem:[%s208 + $0xc8] sm:$0xf] %v850
      %979 = vst [vmem:[%s208 + $0xcc] sm:$0xf] %v851
      %980 = vst [vmem:[%s208 + $0xd0] sm:$0xf] %v852
      %981 = vst [vmem:[%s208 + $0xd4] sm:$0xf] %v853
      %982 = vst [vmem:[%s208 + $0xd8] sm:$0xf] %v854
      %983 = vst [vmem:[%s208 + $0xdc] sm:$0xf] %v855
      %984 = vst [vmem:[%s208 + $0xe0] sm:$0xf] %v856
      %985 = vst [vmem:[%s208 + $0xe4] sm:$0xf] %v857
      %986 = vst [vmem:[%s208 + $0xe8] sm:$0xf] %v858
      %987 = vst [vmem:[%s208 + $0xec] sm:$0xf] %v859
      %988 = vst [vmem:[%s208 + $0xf0] sm:$0xf] %v860
      %989 = vst [vmem:[%s208 + $0xf4] sm:$0xf] %v861
      %990 = vst [vmem:[%s208 + $0xf8] sm:$0xf] %v862
      %991 = vst [vmem:[%s208 + $0xfc] sm:$0xf] %v863
      %s992 = smul.u32 64, %s19
      %p993 = scmp.lt.s32.totalorder %s18, 3
      %s994 = scalar_select %p993, %s18, 3
      %p995 = scmp.lt.s32.totalorder %s992, 63
      %s996 = scalar_select %p995, %s992, 63
      %s997 = smul.addr %s994, 64
      %s998 = sadd.s32 %s996, %s997
      %s999 = smul.addr %s998, 4
      %s1000 = scalar_lea.vmem %s3, %s999
      // Predicated region
      $region33: #{dcgan_generator.16} parent=31 // pred_check
        %p1001 = pneg %p116
      $region34: #{dcgan_generator.16} parent=31 // pred_check_branch
        %1003 = sbr.rel (%p1001) target = $region36
      $region35: #{dcgan_generator.16} parent=31 // pred_region
        %s1004 = smul.u32 64, %s19
      $region36: #{dcgan_generator.16} parent=31 // pred_fallthru
        _
    $region32: #{dcgan_generator.16} parent=5 // pred_fallthru
      _
    %p1005 = scmp.le.s32.totalorder 2, %s9
    // Predicated region
    $region37: #{dcgan_generator.16} parent=5 // pred_check
      %p1006 = pneg %p1005
    $region38: #{dcgan_generator.16} parent=5 // pred_check_branch
      %1008 = sbr.rel (%p1006) target = $region40
    $region39: #{dcgan_generator.16} parent=5 // pred_region
      %s1009 = ssub.s32 %s9, 2
      // Predicated region
      $region41: #{dcgan_generator.16} parent=39 // pred_check
        %p1010 = pneg %p122
      $region42: #{dcgan_generator.16} parent=39 // pred_check_branch
        %1012 = sbr.rel (%p1010) target = $region44
      $region43: #{dcgan_generator.16} parent=39 // pred_region
        %s1013 = smul.u32 64, %s21
        %p1014 = scmp.lt.s32.totalorder %s20, 3
        %s1015 = scalar_select %p1014, %s20, 3
        %p1016 = scmp.lt.s32.totalorder %s1013, 63
        %s1017 = scalar_select %p1016, %s1013, 63
        %s1018 = smul.addr %s1015, 64
        %s1019 = sadd.s32 %s1017, %s1018
        %s1020 = smul.addr %s1019, 4
        %s1021 = scalar_lea.vmem %s3, %s1020
      $region44: #{dcgan_generator.16} parent=39 // pred_fallthru
        _
    $region40: #{dcgan_generator.16} parent=5 // pred_fallthru
      _
  $region6: #{dcgan_generator.16} parent=0 // loop_footer
    %s13 = sadd.s32 1, %s9
  $region7: #{dcgan_generator.16} parent=0 // loop_footer_branch
    %8 = sbr.rel target = $region3
  $region8: #{dcgan_generator.16} parent=0 // loop_exit
    _

// kernel: dcgan_generator.17
$region0: #{dcgan_generator.17}
  #allocation0 [shape = 'u32[]', space=smem, size = 0x4, offset = 0x4, fixed_abs, tag = 'smem constant byte address 0x4 - core index']
  #allocation1 [shape = 'u32[144,128]{1,0:T(1,128)}', space=vmem, size = 0x12000, scoped, tag = 'internal scratch']
  %s0 = inlined_call_operand.vmem [shape: bf16[4,2048,128], index: 0, kind: input, shape index: {}]
  %s1 = inlined_call_operand.vmem [shape: bf16[4,128,128], index: 1, kind: input, shape index: {}]
  %s2 = inlined_call_operand.vmem [shape: f32[4,2048,128], index: 2, kind: output, shape index: {}]
  %s3 = sld [smem:[#allocation0]]
  $region41: #{dcgan_generator.17} parent=0
    _
  %s5 = ssub.s32 1, %s3
  %s6 = scalar_select 0, %s5, %s3
  loop: start=0, step=1, limit=6
  $region2: #{dcgan_generator.17} parent=0 // loop_pre_header
    _
  $region3: #{dcgan_generator.17} parent=0 // loop_header
    %s8 = sphi 0, %s12
    %p9 = scmp.ge.s32.totalorder %s8, 6
    %s15 = sphi 0, %s27
    %s16 = sphi 0, %s23
    %s17 = sphi 0, %s15
    %s18 = sphi 0, %s16
    %s19 = sphi 0, %s17
    %s20 = sphi 0, %s18
    %s32 = sphi 0, %s34
    %s35 = sphi 0, %s32
    %s36 = sphi 0, %s35
    %s52 = sphi 0, %s36
    %s58 = sphi 0, %s60
    %s61 = sphi 0, %s58
    %s62 = sphi 0, %s61
    %s78 = sphi 0, %s62
    %s86 = sphi 0, %s88
    %s89 = sphi 0, %s86
    %s90 = sphi 0, %s89
    %s106 = sphi 0, %s90
  $region4: #{dcgan_generator.17} parent=0 // loop_header_branch
    %11 = sbr.rel (%p9) target = $region8
  $region5: #{dcgan_generator.17} parent=0 // loop_body
    %s13 = ssub.s32 %s8, 1
    %s14 = ssub.s32 %s8, 2
    %s21 = sadd.s32 1, %s16
    %p22 = scmp.ge.s32.totalorder %s21, 1
    %s23 = scalar_select %p22, 0, %s21
    %s24 = sadd.s32 1, %s15
    %s25 = scalar_select %p22, %s24, %s15
    %p26 = scmp.ge.s32.totalorder %s25, 4
    %s27 = scalar_select %p26, 0, %s25
    %s28 = ssub.s32 %s15, %s27
    %s29 = ssub.s32 %s16, %s23
    %s30 = sor.u32 %s28, %s29
    %p31 = scmp.eq.s32.totalorder %s30, 0
    %s33 = sadd.s32 %s32, 1
    %s34 = scalar_select %p31, %s32, %s33
    %p37 = pneg %p31
    %p38 = scmp.eq.s32.totalorder %s8, 3
    %p39 = por %p37, %p38
    %p40 = scmp.ne.s32.totalorder %s32, %s35
    %p41 = scmp.eq.s32.totalorder %s8, 0
    %p42 = por %p40, %p41
    %p43 = scmp.ne.s32.totalorder %s32, %s35
    %p44 = scmp.eq.s32.totalorder %s13, 3
    %p45 = por %p43, %p44
    %p46 = scmp.ne.s32.totalorder %s35, %s36
    %p47 = scmp.eq.s32.totalorder %s13, 0
    %p48 = por %p46, %p47
    %p49 = scmp.ne.s32.totalorder %s35, %s36
    %p50 = scmp.eq.s32.totalorder %s14, 3
    %p51 = por %p49, %p50
    %p53 = scmp.ne.s32.totalorder %s36, %s52
    %p54 = scmp.eq.s32.totalorder %s14, 0
    %p55 = por %p53, %p54
    %s56 = ssub.s32 %s15, %s27
    %p57 = scmp.eq.s32.totalorder %s56, 0
    %s59 = sadd.s32 %s58, 1
    %s60 = scalar_select %p57, %s58, %s59
    %p63 = pneg %p57
    %p64 = scmp.eq.s32.totalorder %s8, 3
    %p65 = por %p63, %p64
    %p66 = scmp.ne.s32.totalorder %s58, %s61
    %p67 = scmp.eq.s32.totalorder %s8, 0
    %p68 = por %p66, %p67
    %p69 = scmp.ne.s32.totalorder %s58, %s61
    %p70 = scmp.eq.s32.totalorder %s13, 3
    %p71 = por %p69, %p70
    %p72 = scmp.ne.s32.totalorder %s61, %s62
    %p73 = scmp.eq.s32.totalorder %s13, 0
    %p74 = por %p72, %p73
    %p75 = scmp.ne.s32.totalorder %s61, %s62
    %p76 = scmp.eq.s32.totalorder %s14, 3
    %p77 = por %p75, %p76
    %p79 = scmp.ne.s32.totalorder %s62, %s78
    %p80 = scmp.eq.s32.totalorder %s14, 0
    %p81 = por %p79, %p80
    %s82 = ssub.s32 %s15, %s27
    %s83 = ssub.s32 %s16, %s23
    %s84 = sor.u32 %s82, %s83
    %p85 = scmp.eq.s32.totalorder %s84, 0
    %s87 = sadd.s32 %s86, 1
    %s88 = scalar_select %p85, %s86, %s87
    %p91 = pneg %p85
    %p92 = scmp.eq.s32.totalorder %s8, 3
    %p93 = por %p91, %p92
    %p94 = scmp.ne.s32.totalorder %s86, %s89
    %p95 = scmp.eq.s32.totalorder %s8, 0
    %p96 = por %p94, %p95
    %p97 = scmp.ne.s32.totalorder %s86, %s89
    %p98 = scmp.eq.s32.totalorder %s13, 3
    %p99 = por %p97, %p98
    %p100 = scmp.ne.s32.totalorder %s89, %s90
    %p101 = scmp.eq.s32.totalorder %s13, 0
    %p102 = por %p100, %p101
    %p103 = scmp.ne.s32.totalorder %s89, %s90
    %p104 = scmp.eq.s32.totalorder %s14, 3
    %p105 = por %p103, %p104
    %p107 = scmp.ne.s32.totalorder %s90, %s106
    %p108 = scmp.eq.s32.totalorder %s14, 0
    %p109 = por %p107, %p108
    %p110 = scmp.le.s32.totalorder 1, %s8
    %p111 = scmp.lt.s32.totalorder %s8, 5
    %p112 = pnand %p110, %p111
    %p113 = pneg %p112
    // Predicated region
    $region9: #{dcgan_generator.17} parent=5 // pred_check
      _
    $region10: #{dcgan_generator.17} parent=5 // pred_check_branch
      %115 = sbr.rel (%p112) target = $region12
    $region11: #{dcgan_generator.17} parent=5 // pred_region
      %s116 = ssub.s32 %s8, 1
    $region12: #{dcgan_generator.17} parent=5 // pred_fallthru
      _
    %p117 = scmp.lt.s32.totalorder %s8, 4
    // Predicated region
    $region13: #{dcgan_generator.17} parent=5 // pred_check
      %p118 = pneg %p117
    $region14: #{dcgan_generator.17} parent=5 // pred_check_branch
      %120 = sbr.rel (%p118) target = $region16
    $region15: #{dcgan_generator.17} parent=5 // pred_region
      // Predicated region
      $region17: #{dcgan_generator.17} parent=15 // pred_check
        %p121 = pneg %p42
      $region18: #{dcgan_generator.17} parent=15 // pred_check_branch
        %123 = sbr.rel (%p121) target = $region20
      $region19: #{dcgan_generator.17} parent=15 // pred_region
        %s124 = smul.u32 256, %s16
        %p125 = scmp.lt.s32.totalorder %s15, 3
        %s126 = scalar_select %p125, %s15, 3
        %p127 = scmp.lt.s32.totalorder %s124, 255
        %s128 = scalar_select %p127, %s124, 255
        %s129 = smul.addr %s126, 256
        %s130 = sadd.s32 %s128, %s129
        %s131 = smul.addr %s130, 4
        %s132 = scalar_lea.vmem %s0, %s131
        %s133 = smul.u32 256, %s16
      $region20: #{dcgan_generator.17} parent=15 // pred_fallthru
        _
      // Predicated region
      $region21: #{dcgan_generator.17} parent=15 // pred_check
        %p134 = pneg %p68
      $region22: #{dcgan_generator.17} parent=15 // pred_check_branch
        %136 = sbr.rel (%p134) target = $region24
      $region23: #{dcgan_generator.17} parent=15 // pred_region
        %p137 = scmp.lt.s32.totalorder %s15, 3
        %s138 = scalar_select %p137, %s15, 3
        %s139 = smul.addr %s138, 16
        %s140 = smul.addr %s139, 4
        %s141 = scalar_lea.vmem %s1, %s140
      $region24: #{dcgan_generator.17} parent=15 // pred_fallthru
        _
    $region16: #{dcgan_generator.17} parent=5 // pred_fallthru
      _
    %p142 = scmp.le.s32.totalorder 1, %s8
    %p143 = scmp.lt.s32.totalorder %s8, 5
    %p144 = pnand %p142, %p143
    %p145 = pneg %p144
    // Predicated region
    $region25: #{dcgan_generator.17} parent=5 // pred_check
      _
    $region26: #{dcgan_generator.17} parent=5 // pred_check_branch
      %147 = sbr.rel (%p144) target = $region28
    $region27: #{dcgan_generator.17} parent=5 // pred_region
      %s148 = ssub.s32 %s8, 1
      %s149 = smul.u32 256, %s18
      %p150 = scmp.lt.s32.totalorder %s17, 3
      %s151 = scalar_select %p150, %s17, 3
      %p152 = scmp.lt.s32.totalorder %s149, 255
      %s153 = scalar_select %p152, %s149, 255
      %s154 = smul.addr %s151, 256
      %s155 = sadd.s32 %s153, %s154
      %s156 = smul.addr %s155, 4
      %s157 = scalar_lea.vmem %s0, %s156
      %p158 = pneg %p48
      %p159 = pneg %p45
      %p160 = scmp.lt.s32.totalorder %s17, 3
      %s161 = scalar_select %p160, %s17, 3
      %s162 = smul.addr %s161, 16
      %s163 = smul.addr %s162, 4
      %s164 = scalar_lea.vmem %s1, %s163
      %p165 = pneg %p74
      %p166 = pneg %p71
      %p167 = pneg %p102
      %p168 = pneg %p99
      %s169 = smul.u32 256, %s18
      %p170 = scmp.lt.s32.totalorder %s17, 3
      %s171 = scalar_select %p170, %s17, 3
      %p172 = scmp.lt.s32.totalorder %s169, 255
      %s173 = scalar_select %p172, %s169, 255
      %s174 = smul.addr %s171, 256
      %s175 = sadd.s32 %s173, %s174
      %s176 = smul.addr %s175, 8
      %s177 = scalar_lea.vmem %s2, %s176
      %s178 = smul.u32 256, %s18
      %p179 = scmp.lt.s32.totalorder %s17, 3
      %s180 = scalar_select %p179, %s17, 3
      %p181 = scmp.lt.s32.totalorder %s178, 255
      %s182 = scalar_select %p181, %s178, 255
      %s183 = smul.addr %s180, 256
      %s184 = sadd.s32 %s182, %s183
      %s185 = smul.addr %s184, 4
      %s186 = scalar_lea.vmem %s0, %s185
      %s187 = smul.u32 256, %s18
      %p188 = scmp.lt.s32.totalorder %s17, 3
      %s189 = scalar_select %p188, %s17, 3
      %s190 = smul.addr %s189, 16
      %s191 = smul.addr %s190, 4
      %s192 = scalar_lea.vmem %s1, %s191
      %s193 = smul.u32 256, %s18
      %p194 = scmp.lt.s32.totalorder %s17, 3
      %s195 = scalar_select %p194, %s17, 3
      %p196 = scmp.lt.s32.totalorder %s193, 255
      %s197 = scalar_select %p196, %s193, 255
      %s198 = smul.addr %s195, 256
      %s199 = sadd.s32 %s197, %s198
      %s200 = smul.addr %s199, 8
      %s201 = scalar_lea.vmem %s2, %s200
      %s202 = smul.u32 256, %s18
      %v204 = vld [vmem:[%s186] sm:$0xf]
      %v205 = vld [vmem:[%s186 + $0x4] sm:$0xf]
      %v206 = vld [vmem:[%s186 + $0x8] sm:$0xf]
      %v207 = vld [vmem:[%s186 + $0xc] sm:$0xf]
      %v208 = vld [vmem:[%s186 + $0x10] sm:$0xf]
      %v209 = vld [vmem:[%s186 + $0x14] sm:$0xf]
      %v210 = vld [vmem:[%s186 + $0x18] sm:$0xf]
      %v211 = vld [vmem:[%s186 + $0x1c] sm:$0xf]
      %v212 = vld [vmem:[%s186 + $0x20] sm:$0xf]
      %v213 = vld [vmem:[%s186 + $0x24] sm:$0xf]
      %v214 = vld [vmem:[%s186 + $0x28] sm:$0xf]
      %v215 = vld [vmem:[%s186 + $0x2c] sm:$0xf]
      %v216 = vld [vmem:[%s186 + $0x30] sm:$0xf]
      %v217 = vld [vmem:[%s186 + $0x34] sm:$0xf]
      %v218 = vld [vmem:[%s186 + $0x38] sm:$0xf]
      %v219 = vld [vmem:[%s186 + $0x3c] sm:$0xf]
      %v220 = vld [vmem:[%s186 + $0x40] sm:$0xf]
      %v221 = vld [vmem:[%s186 + $0x44] sm:$0xf]
      %v222 = vld [vmem:[%s186 + $0x48] sm:$0xf]
      %v223 = vld [vmem:[%s186 + $0x4c] sm:$0xf]
      %v224 = vld [vmem:[%s186 + $0x50] sm:$0xf]
      %v225 = vld [vmem:[%s186 + $0x54] sm:$0xf]
      %v226 = vld [vmem:[%s186 + $0x58] sm:$0xf]
      %v227 = vld [vmem:[%s186 + $0x5c] sm:$0xf]
      %v228 = vld [vmem:[%s186 + $0x60] sm:$0xf]
      %v229 = vld [vmem:[%s186 + $0x64] sm:$0xf]
      %v230 = vld [vmem:[%s186 + $0x68] sm:$0xf]
      %v231 = vld [vmem:[%s186 + $0x6c] sm:$0xf]
      %v232 = vld [vmem:[%s186 + $0x70] sm:$0xf]
      %v233 = vld [vmem:[%s186 + $0x74] sm:$0xf]
      %v234 = vld [vmem:[%s186 + $0x78] sm:$0xf]
      %v235 = vld [vmem:[%s186 + $0x7c] sm:$0xf]
      %v236 = vld [vmem:[%s186 + $0x80] sm:$0xf]
      %v237 = vld [vmem:[%s186 + $0x84] sm:$0xf]
      %v238 = vld [vmem:[%s186 + $0x88] sm:$0xf]
      %v239 = vld [vmem:[%s186 + $0x8c] sm:$0xf]
      %v240 = vld [vmem:[%s186 + $0x90] sm:$0xf]
      %v241 = vld [vmem:[%s186 + $0x94] sm:$0xf]
      %v242 = vld [vmem:[%s186 + $0x98] sm:$0xf]
      %v243 = vld [vmem:[%s186 + $0x9c] sm:$0xf]
      %v244 = vld [vmem:[%s186 + $0xa0] sm:$0xf]
      %v245 = vld [vmem:[%s186 + $0xa4] sm:$0xf]
      %v246 = vld [vmem:[%s186 + $0xa8] sm:$0xf]
      %v247 = vld [vmem:[%s186 + $0xac] sm:$0xf]
      %v248 = vld [vmem:[%s186 + $0xb0] sm:$0xf]
      %v249 = vld [vmem:[%s186 + $0xb4] sm:$0xf]
      %v250 = vld [vmem:[%s186 + $0xb8] sm:$0xf]
      %v251 = vld [vmem:[%s186 + $0xbc] sm:$0xf]
      %v252 = vld [vmem:[%s186 + $0xc0] sm:$0xf]
      %v253 = vld [vmem:[%s186 + $0xc4] sm:$0xf]
      %v254 = vld [vmem:[%s186 + $0xc8] sm:$0xf]
      %v255 = vld [vmem:[%s186 + $0xcc] sm:$0xf]
      %v256 = vld [vmem:[%s186 + $0xd0] sm:$0xf]
      %v257 = vld [vmem:[%s186 + $0xd4] sm:$0xf]
      %v258 = vld [vmem:[%s186 + $0xd8] sm:$0xf]
      %v259 = vld [vmem:[%s186 + $0xdc] sm:$0xf]
      %v260 = vld [vmem:[%s186 + $0xe0] sm:$0xf]
      %v261 = vld [vmem:[%s186 + $0xe4] sm:$0xf]
      %v262 = vld [vmem:[%s186 + $0xe8] sm:$0xf]
      %v263 = vld [vmem:[%s186 + $0xec] sm:$0xf]
      %v264 = vld [vmem:[%s186 + $0xf0] sm:$0xf]
      %v265 = vld [vmem:[%s186 + $0xf4] sm:$0xf]
      %v266 = vld [vmem:[%s186 + $0xf8] sm:$0xf]
      %v267 = vld [vmem:[%s186 + $0xfc] sm:$0xf]
      %v268 = vld [vmem:[%s186 + $0x100] sm:$0xf]
      %v269 = vld [vmem:[%s186 + $0x104] sm:$0xf]
      %v270 = vld [vmem:[%s186 + $0x108] sm:$0xf]
      %v271 = vld [vmem:[%s186 + $0x10c] sm:$0xf]
      %v272 = vld [vmem:[%s186 + $0x110] sm:$0xf]
      %v273 = vld [vmem:[%s186 + $0x114] sm:$0xf]
      %v274 = vld [vmem:[%s186 + $0x118] sm:$0xf]
      %v275 = vld [vmem:[%s186 + $0x11c] sm:$0xf]
      %v276 = vld [vmem:[%s186 + $0x120] sm:$0xf]
      %v277 = vld [vmem:[%s186 + $0x124] sm:$0xf]
      %v278 = vld [vmem:[%s186 + $0x128] sm:$0xf]
      %v279 = vld [vmem:[%s186 + $0x12c] sm:$0xf]
      %v280 = vld [vmem:[%s186 + $0x130] sm:$0xf]
      %v281 = vld [vmem:[%s186 + $0x134] sm:$0xf]
      %v282 = vld [vmem:[%s186 + $0x138] sm:$0xf]
      %v283 = vld [vmem:[%s186 + $0x13c] sm:$0xf]
      %v284 = vld [vmem:[%s186 + $0x140] sm:$0xf]
      %v285 = vld [vmem:[%s186 + $0x144] sm:$0xf]
      %v286 = vld [vmem:[%s186 + $0x148] sm:$0xf]
      %v287 = vld [vmem:[%s186 + $0x14c] sm:$0xf]
      %v288 = vld [vmem:[%s186 + $0x150] sm:$0xf]
      %v289 = vld [vmem:[%s186 + $0x154] sm:$0xf]
      %v290 = vld [vmem:[%s186 + $0x158] sm:$0xf]
      %v291 = vld [vmem:[%s186 + $0x15c] sm:$0xf]
      %v292 = vld [vmem:[%s186 + $0x160] sm:$0xf]
      %v293 = vld [vmem:[%s186 + $0x164] sm:$0xf]
      %v294 = vld [vmem:[%s186 + $0x168] sm:$0xf]
      %v295 = vld [vmem:[%s186 + $0x16c] sm:$0xf]
      %v296 = vld [vmem:[%s186 + $0x170] sm:$0xf]
      %v297 = vld [vmem:[%s186 + $0x174] sm:$0xf]
      %v298 = vld [vmem:[%s186 + $0x178] sm:$0xf]
      %v299 = vld [vmem:[%s186 + $0x17c] sm:$0xf]
      %v300 = vld [vmem:[%s186 + $0x180] sm:$0xf]
      %v301 = vld [vmem:[%s186 + $0x184] sm:$0xf]
      %v302 = vld [vmem:[%s186 + $0x188] sm:$0xf]
      %v303 = vld [vmem:[%s186 + $0x18c] sm:$0xf]
      %v304 = vld [vmem:[%s186 + $0x190] sm:$0xf]
      %v305 = vld [vmem:[%s186 + $0x194] sm:$0xf]
      %v306 = vld [vmem:[%s186 + $0x198] sm:$0xf]
      %v307 = vld [vmem:[%s186 + $0x19c] sm:$0xf]
      %v308 = vld [vmem:[%s186 + $0x1a0] sm:$0xf]
      %v309 = vld [vmem:[%s186 + $0x1a4] sm:$0xf]
      %v310 = vld [vmem:[%s186 + $0x1a8] sm:$0xf]
      %v311 = vld [vmem:[%s186 + $0x1ac] sm:$0xf]
      %v312 = vld [vmem:[%s186 + $0x1b0] sm:$0xf]
      %v313 = vld [vmem:[%s186 + $0x1b4] sm:$0xf]
      %v314 = vld [vmem:[%s186 + $0x1b8] sm:$0xf]
      %v315 = vld [vmem:[%s186 + $0x1bc] sm:$0xf]
      %v316 = vld [vmem:[%s186 + $0x1c0] sm:$0xf]
      %v317 = vld [vmem:[%s186 + $0x1c4] sm:$0xf]
      %v318 = vld [vmem:[%s186 + $0x1c8] sm:$0xf]
      %v319 = vld [vmem:[%s186 + $0x1cc] sm:$0xf]
      %v320 = vld [vmem:[%s186 + $0x1d0] sm:$0xf]
      %v321 = vld [vmem:[%s186 + $0x1d4] sm:$0xf]
      %v322 = vld [vmem:[%s186 + $0x1d8] sm:$0xf]
      %v323 = vld [vmem:[%s186 + $0x1dc] sm:$0xf]
      %v324 = vld [vmem:[%s186 + $0x1e0] sm:$0xf]
      %v325 = vld [vmem:[%s186 + $0x1e4] sm:$0xf]
      %v326 = vld [vmem:[%s186 + $0x1e8] sm:$0xf]
      %v327 = vld [vmem:[%s186 + $0x1ec] sm:$0xf]
      %v328 = vld [vmem:[%s186 + $0x1f0] sm:$0xf]
      %v329 = vld [vmem:[%s186 + $0x1f4] sm:$0xf]
      %v330 = vld [vmem:[%s186 + $0x1f8] sm:$0xf]
      %v331 = vld [vmem:[%s186 + $0x1fc] sm:$0xf]
      %v332 = vld [vmem:[%s186 + $0x200] sm:$0xf]
      %v333 = vld [vmem:[%s186 + $0x204] sm:$0xf]
      %v334 = vld [vmem:[%s186 + $0x208] sm:$0xf]
      %v335 = vld [vmem:[%s186 + $0x20c] sm:$0xf]
      %v336 = vld [vmem:[%s186 + $0x210] sm:$0xf]
      %v337 = vld [vmem:[%s186 + $0x214] sm:$0xf]
      %v338 = vld [vmem:[%s186 + $0x218] sm:$0xf]
      %v339 = vld [vmem:[%s186 + $0x21c] sm:$0xf]
      %v340 = vld [vmem:[%s186 + $0x220] sm:$0xf]
      %v341 = vld [vmem:[%s186 + $0x224] sm:$0xf]
      %v342 = vld [vmem:[%s186 + $0x228] sm:$0xf]
      %v343 = vld [vmem:[%s186 + $0x22c] sm:$0xf]
      %v344 = vld [vmem:[%s186 + $0x230] sm:$0xf]
      %v345 = vld [vmem:[%s186 + $0x234] sm:$0xf]
      %v346 = vld [vmem:[%s186 + $0x238] sm:$0xf]
      %v347 = vld [vmem:[%s186 + $0x23c] sm:$0xf]
      %v348 = vld [vmem:[%s186 + $0x240] sm:$0xf]
      %v349 = vld [vmem:[%s186 + $0x244] sm:$0xf]
      %v350 = vld [vmem:[%s186 + $0x248] sm:$0xf]
      %v351 = vld [vmem:[%s186 + $0x24c] sm:$0xf]
      %v352 = vld [vmem:[%s186 + $0x250] sm:$0xf]
      %v353 = vld [vmem:[%s186 + $0x254] sm:$0xf]
      %v354 = vld [vmem:[%s186 + $0x258] sm:$0xf]
      %v355 = vld [vmem:[%s186 + $0x25c] sm:$0xf]
      %v356 = vld [vmem:[%s186 + $0x260] sm:$0xf]
      %v357 = vld [vmem:[%s186 + $0x264] sm:$0xf]
      %v358 = vld [vmem:[%s186 + $0x268] sm:$0xf]
      %v359 = vld [vmem:[%s186 + $0x26c] sm:$0xf]
      %v360 = vld [vmem:[%s186 + $0x270] sm:$0xf]
      %v361 = vld [vmem:[%s186 + $0x274] sm:$0xf]
      %v362 = vld [vmem:[%s186 + $0x278] sm:$0xf]
      %v363 = vld [vmem:[%s186 + $0x27c] sm:$0xf]
      %v364 = vld [vmem:[%s186 + $0x280] sm:$0xf]
      %v365 = vld [vmem:[%s186 + $0x284] sm:$0xf]
      %v366 = vld [vmem:[%s186 + $0x288] sm:$0xf]
      %v367 = vld [vmem:[%s186 + $0x28c] sm:$0xf]
      %v368 = vld [vmem:[%s186 + $0x290] sm:$0xf]
      %v369 = vld [vmem:[%s186 + $0x294] sm:$0xf]
      %v370 = vld [vmem:[%s186 + $0x298] sm:$0xf]
      %v371 = vld [vmem:[%s186 + $0x29c] sm:$0xf]
      %v372 = vld [vmem:[%s186 + $0x2a0] sm:$0xf]
      %v373 = vld [vmem:[%s186 + $0x2a4] sm:$0xf]
      %v374 = vld [vmem:[%s186 + $0x2a8] sm:$0xf]
      %v375 = vld [vmem:[%s186 + $0x2ac] sm:$0xf]
      %v376 = vld [vmem:[%s186 + $0x2b0] sm:$0xf]
      %v377 = vld [vmem:[%s186 + $0x2b4] sm:$0xf]
      %v378 = vld [vmem:[%s186 + $0x2b8] sm:$0xf]
      %v379 = vld [vmem:[%s186 + $0x2bc] sm:$0xf]
      %v380 = vld [vmem:[%s186 + $0x2c0] sm:$0xf]
      %v381 = vld [vmem:[%s186 + $0x2c4] sm:$0xf]
      %v382 = vld [vmem:[%s186 + $0x2c8] sm:$0xf]
      %v383 = vld [vmem:[%s186 + $0x2cc] sm:$0xf]
      %v384 = vld [vmem:[%s186 + $0x2d0] sm:$0xf]
      %v385 = vld [vmem:[%s186 + $0x2d4] sm:$0xf]
      %v386 = vld [vmem:[%s186 + $0x2d8] sm:$0xf]
      %v387 = vld [vmem:[%s186 + $0x2dc] sm:$0xf]
      %v388 = vld [vmem:[%s186 + $0x2e0] sm:$0xf]
      %v389 = vld [vmem:[%s186 + $0x2e4] sm:$0xf]
      %v390 = vld [vmem:[%s186 + $0x2e8] sm:$0xf]
      %v391 = vld [vmem:[%s186 + $0x2ec] sm:$0xf]
      %v392 = vld [vmem:[%s186 + $0x2f0] sm:$0xf]
      %v393 = vld [vmem:[%s186 + $0x2f4] sm:$0xf]
      %v394 = vld [vmem:[%s186 + $0x2f8] sm:$0xf]
      %v395 = vld [vmem:[%s186 + $0x2fc] sm:$0xf]
      %v396 = vld [vmem:[%s186 + $0x300] sm:$0xf]
      %v397 = vld [vmem:[%s186 + $0x304] sm:$0xf]
      %v398 = vld [vmem:[%s186 + $0x308] sm:$0xf]
      %v399 = vld [vmem:[%s186 + $0x30c] sm:$0xf]
      %v400 = vld [vmem:[%s186 + $0x310] sm:$0xf]
      %v401 = vld [vmem:[%s186 + $0x314] sm:$0xf]
      %v402 = vld [vmem:[%s186 + $0x318] sm:$0xf]
      %v403 = vld [vmem:[%s186 + $0x31c] sm:$0xf]
      %v404 = vld [vmem:[%s186 + $0x320] sm:$0xf]
      %v405 = vld [vmem:[%s186 + $0x324] sm:$0xf]
      %v406 = vld [vmem:[%s186 + $0x328] sm:$0xf]
      %v407 = vld [vmem:[%s186 + $0x32c] sm:$0xf]
      %v408 = vld [vmem:[%s186 + $0x330] sm:$0xf]
      %v409 = vld [vmem:[%s186 + $0x334] sm:$0xf]
      %v410 = vld [vmem:[%s186 + $0x338] sm:$0xf]
      %v411 = vld [vmem:[%s186 + $0x33c] sm:$0xf]
      %v412 = vld [vmem:[%s186 + $0x340] sm:$0xf]
      %v413 = vld [vmem:[%s186 + $0x344] sm:$0xf]
      %v414 = vld [vmem:[%s186 + $0x348] sm:$0xf]
      %v415 = vld [vmem:[%s186 + $0x34c] sm:$0xf]
      %v416 = vld [vmem:[%s186 + $0x350] sm:$0xf]
      %v417 = vld [vmem:[%s186 + $0x354] sm:$0xf]
      %v418 = vld [vmem:[%s186 + $0x358] sm:$0xf]
      %v419 = vld [vmem:[%s186 + $0x35c] sm:$0xf]
      %v420 = vld [vmem:[%s186 + $0x360] sm:$0xf]
      %v421 = vld [vmem:[%s186 + $0x364] sm:$0xf]
      %v422 = vld [vmem:[%s186 + $0x368] sm:$0xf]
      %v423 = vld [vmem:[%s186 + $0x36c] sm:$0xf]
      %v424 = vld [vmem:[%s186 + $0x370] sm:$0xf]
      %v425 = vld [vmem:[%s186 + $0x374] sm:$0xf]
      %v426 = vld [vmem:[%s186 + $0x378] sm:$0xf]
      %v427 = vld [vmem:[%s186 + $0x37c] sm:$0xf]
      %v428 = vld [vmem:[%s186 + $0x380] sm:$0xf]
      %v429 = vld [vmem:[%s186 + $0x384] sm:$0xf]
      %v430 = vld [vmem:[%s186 + $0x388] sm:$0xf]
      %v431 = vld [vmem:[%s186 + $0x38c] sm:$0xf]
      %v432 = vld [vmem:[%s186 + $0x390] sm:$0xf]
      %v433 = vld [vmem:[%s186 + $0x394] sm:$0xf]
      %v434 = vld [vmem:[%s186 + $0x398] sm:$0xf]
      %v435 = vld [vmem:[%s186 + $0x39c] sm:$0xf]
      %v436 = vld [vmem:[%s186 + $0x3a0] sm:$0xf]
      %v437 = vld [vmem:[%s186 + $0x3a4] sm:$0xf]
      %v438 = vld [vmem:[%s186 + $0x3a8] sm:$0xf]
      %v439 = vld [vmem:[%s186 + $0x3ac] sm:$0xf]
      %v440 = vld [vmem:[%s186 + $0x3b0] sm:$0xf]
      %v441 = vld [vmem:[%s186 + $0x3b4] sm:$0xf]
      %v442 = vld [vmem:[%s186 + $0x3b8] sm:$0xf]
      %v443 = vld [vmem:[%s186 + $0x3bc] sm:$0xf]
      %v444 = vld [vmem:[%s186 + $0x3c0] sm:$0xf]
      %v445 = vld [vmem:[%s186 + $0x3c4] sm:$0xf]
      %v446 = vld [vmem:[%s186 + $0x3c8] sm:$0xf]
      %v447 = vld [vmem:[%s186 + $0x3cc] sm:$0xf]
      %v448 = vld [vmem:[%s186 + $0x3d0] sm:$0xf]
      %v449 = vld [vmem:[%s186 + $0x3d4] sm:$0xf]
      %v450 = vld [vmem:[%s186 + $0x3d8] sm:$0xf]
      %v451 = vld [vmem:[%s186 + $0x3dc] sm:$0xf]
      %v452 = vld [vmem:[%s186 + $0x3e0] sm:$0xf]
      %v453 = vld [vmem:[%s186 + $0x3e4] sm:$0xf]
      %v454 = vld [vmem:[%s186 + $0x3e8] sm:$0xf]
      %v455 = vld [vmem:[%s186 + $0x3ec] sm:$0xf]
      %v456 = vld [vmem:[%s186 + $0x3f0] sm:$0xf]
      %v457 = vld [vmem:[%s186 + $0x3f4] sm:$0xf]
      %v458 = vld [vmem:[%s186 + $0x3f8] sm:$0xf]
      %v459 = vld [vmem:[%s186 + $0x3fc] sm:$0xf]
      %v460 = vld [vmem:[%s192] sm:$0xf]
      %v461 = vld [vmem:[%s192 + $0x4] sm:$0xf]
      %v462 = vld [vmem:[%s192 + $0x8] sm:$0xf]
      %v463 = vld [vmem:[%s192 + $0xc] sm:$0xf]
      %v464 = vld [vmem:[%s192 + $0x10] sm:$0xf]
      %v465 = vld [vmem:[%s192 + $0x14] sm:$0xf]
      %v466 = vld [vmem:[%s192 + $0x18] sm:$0xf]
      %v467 = vld [vmem:[%s192 + $0x1c] sm:$0xf]
      %v468 = vld [vmem:[%s192 + $0x20] sm:$0xf]
      %v469 = vld [vmem:[%s192 + $0x24] sm:$0xf]
      %v470 = vld [vmem:[%s192 + $0x28] sm:$0xf]
      %v471 = vld [vmem:[%s192 + $0x2c] sm:$0xf]
      %v472 = vld [vmem:[%s192 + $0x30] sm:$0xf]
      %v473 = vld [vmem:[%s192 + $0x34] sm:$0xf]
      %v474 = vld [vmem:[%s192 + $0x38] sm:$0xf]
      %v475 = vld [vmem:[%s192 + $0x3c] sm:$0xf]
      %v732 = vunpack.c.l.b16 %v204
      %v733 = vunpack.c.l.b16 %v205
      %v734 = vunpack.c.l.b16 %v206
      %v735 = vunpack.c.l.b16 %v207
      %v736 = vunpack.c.l.b16 %v208
      %v737 = vunpack.c.l.b16 %v209
      %v738 = vunpack.c.l.b16 %v210
      %v739 = vunpack.c.l.b16 %v211
      %v740 = vunpack.c.l.b16 %v212
      %v741 = vunpack.c.l.b16 %v213
      %v742 = vunpack.c.l.b16 %v214
      %v743 = vunpack.c.l.b16 %v215
      %v744 = vunpack.c.l.b16 %v216
      %v745 = vunpack.c.l.b16 %v217
      %v746 = vunpack.c.l.b16 %v218
      %v747 = vunpack.c.l.b16 %v219
      %v748 = vunpack.c.l.b16 %v220
      %v749 = vunpack.c.l.b16 %v221
      %v750 = vunpack.c.l.b16 %v222
      %v751 = vunpack.c.l.b16 %v223
      %v752 = vunpack.c.l.b16 %v224
      %v753 = vunpack.c.l.b16 %v225
      %v754 = vunpack.c.l.b16 %v226
      %v755 = vunpack.c.l.b16 %v227
      %v756 = vunpack.c.l.b16 %v228
      %v757 = vunpack.c.l.b16 %v229
      %v758 = vunpack.c.l.b16 %v230
      %v759 = vunpack.c.l.b16 %v231
      %v760 = vunpack.c.l.b16 %v232
      %v761 = vunpack.c.l.b16 %v233
      %v762 = vunpack.c.l.b16 %v234
      %v763 = vunpack.c.l.b16 %v235
      %v764 = vunpack.c.l.b16 %v236
      %v765 = vunpack.c.l.b16 %v237
      %v766 = vunpack.c.l.b16 %v238
      %v767 = vunpack.c.l.b16 %v239
      %v768 = vunpack.c.l.b16 %v240
      %v769 = vunpack.c.l.b16 %v241
      %v770 = vunpack.c.l.b16 %v242
      %v771 = vunpack.c.l.b16 %v243
      %v772 = vunpack.c.l.b16 %v244
      %v773 = vunpack.c.l.b16 %v245
      %v774 = vunpack.c.l.b16 %v246
      %v775 = vunpack.c.l.b16 %v247
      %v776 = vunpack.c.l.b16 %v248
      %v777 = vunpack.c.l.b16 %v249
      %v778 = vunpack.c.l.b16 %v250
      %v779 = vunpack.c.l.b16 %v251
      %v780 = vunpack.c.l.b16 %v252
      %v781 = vunpack.c.l.b16 %v253
      %v782 = vunpack.c.l.b16 %v254
      %v783 = vunpack.c.l.b16 %v255
      %v784 = vunpack.c.l.b16 %v256
      %v785 = vunpack.c.l.b16 %v257
      %v786 = vunpack.c.l.b16 %v258
      %v787 = vunpack.c.l.b16 %v259
      %v788 = vunpack.c.l.b16 %v260
      %v789 = vunpack.c.l.b16 %v261
      %v790 = vunpack.c.l.b16 %v262
      %v791 = vunpack.c.l.b16 %v263
      %v792 = vunpack.c.l.b16 %v264
      %v793 = vunpack.c.l.b16 %v265
      %v794 = vunpack.c.l.b16 %v266
      %v795 = vunpack.c.l.b16 %v267
      %v796 = vunpack.c.l.b16 %v268
      %v797 = vunpack.c.l.b16 %v269
      %v798 = vunpack.c.l.b16 %v270
      %v799 = vunpack.c.l.b16 %v271
      %v800 = vunpack.c.l.b16 %v272
      %v801 = vunpack.c.l.b16 %v273
      %v802 = vunpack.c.l.b16 %v274
      %v803 = vunpack.c.l.b16 %v275
      %v804 = vunpack.c.l.b16 %v276
      %v805 = vunpack.c.l.b16 %v277
      %v806 = vunpack.c.l.b16 %v278
      %v807 = vunpack.c.l.b16 %v279
      %v808 = vunpack.c.l.b16 %v280
      %v809 = vunpack.c.l.b16 %v281
      %v810 = vunpack.c.l.b16 %v282
      %v811 = vunpack.c.l.b16 %v283
      %v812 = vunpack.c.l.b16 %v284
      %v813 = vunpack.c.l.b16 %v285
      %v814 = vunpack.c.l.b16 %v286
      %v815 = vunpack.c.l.b16 %v287
      %v816 = vunpack.c.l.b16 %v288
      %v817 = vunpack.c.l.b16 %v289
      %v818 = vunpack.c.l.b16 %v290
      %v819 = vunpack.c.l.b16 %v291
      %v820 = vunpack.c.l.b16 %v292
      %v821 = vunpack.c.l.b16 %v293
      %v822 = vunpack.c.l.b16 %v294
      %v823 = vunpack.c.l.b16 %v295
      %v824 = vunpack.c.l.b16 %v296
      %v825 = vunpack.c.l.b16 %v297
      %v826 = vunpack.c.l.b16 %v298
      %v827 = vunpack.c.l.b16 %v299
      %v828 = vunpack.c.l.b16 %v300
      %v829 = vunpack.c.l.b16 %v301
      %v830 = vunpack.c.l.b16 %v302
      %v831 = vunpack.c.l.b16 %v303
      %v832 = vunpack.c.l.b16 %v304
      %v833 = vunpack.c.l.b16 %v305
      %v834 = vunpack.c.l.b16 %v306
      %v835 = vunpack.c.l.b16 %v307
      %v836 = vunpack.c.l.b16 %v308
      %v837 = vunpack.c.l.b16 %v309
      %v838 = vunpack.c.l.b16 %v310
      %v839 = vunpack.c.l.b16 %v311
      %v840 = vunpack.c.l.b16 %v312
      %v841 = vunpack.c.l.b16 %v313
      %v842 = vunpack.c.l.b16 %v314
      %v843 = vunpack.c.l.b16 %v315
      %v844 = vunpack.c.l.b16 %v316
      %v845 = vunpack.c.l.b16 %v317
      %v846 = vunpack.c.l.b16 %v318
      %v847 = vunpack.c.l.b16 %v319
      %v848 = vunpack.c.l.b16 %v320
      %v849 = vunpack.c.l.b16 %v321
      %v850 = vunpack.c.l.b16 %v322
      %v851 = vunpack.c.l.b16 %v323
      %v852 = vunpack.c.l.b16 %v324
      %v853 = vunpack.c.l.b16 %v325
      %v854 = vunpack.c.l.b16 %v326
      %v855 = vunpack.c.l.b16 %v327
      %v856 = vunpack.c.l.b16 %v328
      %v857 = vunpack.c.l.b16 %v329
      %v858 = vunpack.c.l.b16 %v330
      %v859 = vunpack.c.l.b16 %v331
      %v860 = vunpack.c.l.b16 %v332
      %v861 = vunpack.c.l.b16 %v333
      %v862 = vunpack.c.l.b16 %v334
      %v863 = vunpack.c.l.b16 %v335
      %v864 = vunpack.c.l.b16 %v336
      %v865 = vunpack.c.l.b16 %v337
      %v866 = vunpack.c.l.b16 %v338
      %v867 = vunpack.c.l.b16 %v339
      %v868 = vunpack.c.l.b16 %v340
      %v869 = vunpack.c.l.b16 %v341
      %v870 = vunpack.c.l.b16 %v342
      %v871 = vunpack.c.l.b16 %v343
      %v872 = vunpack.c.l.b16 %v344
      %v873 = vunpack.c.l.b16 %v345
      %v874 = vunpack.c.l.b16 %v346
      %v875 = vunpack.c.l.b16 %v347
      %v876 = vunpack.c.l.b16 %v348
      %v877 = vunpack.c.l.b16 %v349
      %v878 = vunpack.c.l.b16 %v350
      %v879 = vunpack.c.l.b16 %v351
      %v880 = vunpack.c.l.b16 %v352
      %v881 = vunpack.c.l.b16 %v353
      %v882 = vunpack.c.l.b16 %v354
      %v883 = vunpack.c.l.b16 %v355
      %v884 = vunpack.c.l.b16 %v356
      %v885 = vunpack.c.l.b16 %v357
      %v886 = vunpack.c.l.b16 %v358
      %v887 = vunpack.c.l.b16 %v359
      %v888 = vunpack.c.l.b16 %v360
      %v889 = vunpack.c.l.b16 %v361
      %v890 = vunpack.c.l.b16 %v362
      %v891 = vunpack.c.l.b16 %v363
      %v892 = vunpack.c.l.b16 %v364
      %v893 = vunpack.c.l.b16 %v365
      %v894 = vunpack.c.l.b16 %v366
      %v895 = vunpack.c.l.b16 %v367
      %v896 = vunpack.c.l.b16 %v368
      %v897 = vunpack.c.l.b16 %v369
      %v898 = vunpack.c.l.b16 %v370
      %v899 = vunpack.c.l.b16 %v371
      %v900 = vunpack.c.l.b16 %v372
      %v901 = vunpack.c.l.b16 %v373
      %v902 = vunpack.c.l.b16 %v374
      %v903 = vunpack.c.l.b16 %v375
      %v904 = vunpack.c.l.b16 %v376
      %v905 = vunpack.c.l.b16 %v377
      %v906 = vunpack.c.l.b16 %v378
      %v907 = vunpack.c.l.b16 %v379
      %v908 = vunpack.c.l.b16 %v380
      %v909 = vunpack.c.l.b16 %v381
      %v910 = vunpack.c.l.b16 %v382
      %v911 = vunpack.c.l.b16 %v383
      %v912 = vunpack.c.l.b16 %v384
      %v913 = vunpack.c.l.b16 %v385
      %v914 = vunpack.c.l.b16 %v386
      %v915 = vunpack.c.l.b16 %v387
      %v916 = vunpack.c.l.b16 %v388
      %v917 = vunpack.c.l.b16 %v389
      %v918 = vunpack.c.l.b16 %v390
      %v919 = vunpack.c.l.b16 %v391
      %v920 = vunpack.c.l.b16 %v392
      %v921 = vunpack.c.l.b16 %v393
      %v922 = vunpack.c.l.b16 %v394
      %v923 = vunpack.c.l.b16 %v395
      %v924 = vunpack.c.l.b16 %v396
      %v925 = vunpack.c.l.b16 %v397
      %v926 = vunpack.c.l.b16 %v398
      %v927 = vunpack.c.l.b16 %v399
      %v928 = vunpack.c.l.b16 %v400
      %v929 = vunpack.c.l.b16 %v401
      %v930 = vunpack.c.l.b16 %v402
      %v931 = vunpack.c.l.b16 %v403
      %v932 = vunpack.c.l.b16 %v404
      %v933 = vunpack.c.l.b16 %v405
      %v934 = vunpack.c.l.b16 %v406
      %v935 = vunpack.c.l.b16 %v407
      %v936 = vunpack.c.l.b16 %v408
      %v937 = vunpack.c.l.b16 %v409
      %v938 = vunpack.c.l.b16 %v410
      %v939 = vunpack.c.l.b16 %v411
      %v940 = vunpack.c.l.b16 %v412
      %v941 = vunpack.c.l.b16 %v413
      %v942 = vunpack.c.l.b16 %v414
      %v943 = vunpack.c.l.b16 %v415
      %v944 = vunpack.c.l.b16 %v416
      %v945 = vunpack.c.l.b16 %v417
      %v946 = vunpack.c.l.b16 %v418
      %v947 = vunpack.c.l.b16 %v419
      %v948 = vunpack.c.l.b16 %v420
      %v949 = vunpack.c.l.b16 %v421
      %v950 = vunpack.c.l.b16 %v422
      %v951 = vunpack.c.l.b16 %v423
      %v952 = vunpack.c.l.b16 %v424
      %v953 = vunpack.c.l.b16 %v425
      %v954 = vunpack.c.l.b16 %v426
      %v955 = vunpack.c.l.b16 %v427
      %v956 = vunpack.c.l.b16 %v428
      %v957 = vunpack.c.l.b16 %v429
      %v958 = vunpack.c.l.b16 %v430
      %v959 = vunpack.c.l.b16 %v431
      %v960 = vunpack.c.l.b16 %v432
      %v961 = vunpack.c.l.b16 %v433
      %v962 = vunpack.c.l.b16 %v434
      %v963 = vunpack.c.l.b16 %v435
      %v964 = vunpack.c.l.b16 %v436
      %v965 = vunpack.c.l.b16 %v437
      %v966 = vunpack.c.l.b16 %v438
      %v967 = vunpack.c.l.b16 %v439
      %v968 = vunpack.c.l.b16 %v440
      %v969 = vunpack.c.l.b16 %v441
      %v970 = vunpack.c.l.b16 %v442
      %v971 = vunpack.c.l.b16 %v443
      %v972 = vunpack.c.l.b16 %v444
      %v973 = vunpack.c.l.b16 %v445
      %v974 = vunpack.c.l.b16 %v446
      %v975 = vunpack.c.l.b16 %v447
      %v976 = vunpack.c.l.b16 %v448
      %v977 = vunpack.c.l.b16 %v449
      %v978 = vunpack.c.l.b16 %v450
      %v979 = vunpack.c.l.b16 %v451
      %v980 = vunpack.c.l.b16 %v452
      %v981 = vunpack.c.l.b16 %v453
      %v982 = vunpack.c.l.b16 %v454
      %v983 = vunpack.c.l.b16 %v455
      %v984 = vunpack.c.l.b16 %v456
      %v985 = vunpack.c.l.b16 %v457
      %v986 = vunpack.c.l.b16 %v458
      %v987 = vunpack.c.l.b16 %v459
      %v988 = vpack.c.b16 %v733, %v732
      %v989 = vpack.c.b16 %v735, %v734
      %v990 = vpack.c.b16 %v737, %v736
      %v991 = vpack.c.b16 %v739, %v738
      %v992 = vpack.c.b16 %v741, %v740
      %v993 = vpack.c.b16 %v743, %v742
      %v994 = vpack.c.b16 %v745, %v744
      %v995 = vpack.c.b16 %v747, %v746
      %v996 = vpack.c.b16 %v749, %v748
      %v997 = vpack.c.b16 %v751, %v750
      %v998 = vpack.c.b16 %v753, %v752
      %v999 = vpack.c.b16 %v755, %v754
      %v1000 = vpack.c.b16 %v757, %v756
      %v1001 = vpack.c.b16 %v759, %v758
      %v1002 = vpack.c.b16 %v761, %v760
      %v1003 = vpack.c.b16 %v763, %v762
      %v1004 = vpack.c.b16 %v765, %v764
      %v1005 = vpack.c.b16 %v767, %v766
      %v1006 = vpack.c.b16 %v769, %v768
      %v1007 = vpack.c.b16 %v771, %v770
      %v1008 = vpack.c.b16 %v773, %v772
      %v1009 = vpack.c.b16 %v775, %v774
      %v1010 = vpack.c.b16 %v777, %v776
      %v1011 = vpack.c.b16 %v779, %v778
      %v1012 = vpack.c.b16 %v781, %v780
      %v1013 = vpack.c.b16 %v783, %v782
      %v1014 = vpack.c.b16 %v785, %v784
      %v1015 = vpack.c.b16 %v787, %v786
      %v1016 = vpack.c.b16 %v789, %v788
      %v1017 = vpack.c.b16 %v791, %v790
      %v1018 = vpack.c.b16 %v793, %v792
      %v1019 = vpack.c.b16 %v795, %v794
      %v1020 = vpack.c.b16 %v797, %v796
      %v1021 = vpack.c.b16 %v799, %v798
      %v1022 = vpack.c.b16 %v801, %v800
      %v1023 = vpack.c.b16 %v803, %v802
      %v1024 = vpack.c.b16 %v805, %v804
      %v1025 = vpack.c.b16 %v807, %v806
      %v1026 = vpack.c.b16 %v809, %v808
      %v1027 = vpack.c.b16 %v811, %v810
      %v1028 = vpack.c.b16 %v813, %v812
      %v1029 = vpack.c.b16 %v815, %v814
      %v1030 = vpack.c.b16 %v817, %v816
      %v1031 = vpack.c.b16 %v819, %v818
      %v1032 = vpack.c.b16 %v821, %v820
      %v1033 = vpack.c.b16 %v823, %v822
      %v1034 = vpack.c.b16 %v825, %v824
      %v1035 = vpack.c.b16 %v827, %v826
      %v1036 = vpack.c.b16 %v829, %v828
      %v1037 = vpack.c.b16 %v831, %v830
      %v1038 = vpack.c.b16 %v833, %v832
      %v1039 = vpack.c.b16 %v835, %v834
      %v1040 = vpack.c.b16 %v837, %v836
      %v1041 = vpack.c.b16 %v839, %v838
      %v1042 = vpack.c.b16 %v841, %v840
      %v1043 = vpack.c.b16 %v843, %v842
      %v1044 = vpack.c.b16 %v845, %v844
      %v1045 = vpack.c.b16 %v847, %v846
      %v1046 = vpack.c.b16 %v849, %v848
      %v1047 = vpack.c.b16 %v851, %v850
      %v1048 = vpack.c.b16 %v853, %v852
      %v1049 = vpack.c.b16 %v855, %v854
      %v1050 = vpack.c.b16 %v857, %v856
      %v1051 = vpack.c.b16 %v859, %v858
      %v1052 = vpack.c.b16 %v861, %v860
      %v1053 = vpack.c.b16 %v863, %v862
      %v1054 = vpack.c.b16 %v865, %v864
      %v1055 = vpack.c.b16 %v867, %v866
      %v1056 = vpack.c.b16 %v869, %v868
      %v1057 = vpack.c.b16 %v871, %v870
      %v1058 = vpack.c.b16 %v873, %v872
      %v1059 = vpack.c.b16 %v875, %v874
      %v1060 = vpack.c.b16 %v877, %v876
      %v1061 = vpack.c.b16 %v879, %v878
      %v1062 = vpack.c.b16 %v881, %v880
      %v1063 = vpack.c.b16 %v883, %v882
      %v1064 = vpack.c.b16 %v885, %v884
      %v1065 = vpack.c.b16 %v887, %v886
      %v1066 = vpack.c.b16 %v889, %v888
      %v1067 = vpack.c.b16 %v891, %v890
      %v1068 = vpack.c.b16 %v893, %v892
      %v1069 = vpack.c.b16 %v895, %v894
      %v1070 = vpack.c.b16 %v897, %v896
      %v1071 = vpack.c.b16 %v899, %v898
      %v1072 = vpack.c.b16 %v901, %v900
      %v1073 = vpack.c.b16 %v903, %v902
      %v1074 = vpack.c.b16 %v905, %v904
      %v1075 = vpack.c.b16 %v907, %v906
      %v1076 = vpack.c.b16 %v909, %v908
      %v1077 = vpack.c.b16 %v911, %v910
      %v1078 = vpack.c.b16 %v913, %v912
      %v1079 = vpack.c.b16 %v915, %v914
      %v1080 = vpack.c.b16 %v917, %v916
      %v1081 = vpack.c.b16 %v919, %v918
      %v1082 = vpack.c.b16 %v921, %v920
      %v1083 = vpack.c.b16 %v923, %v922
      %v1084 = vpack.c.b16 %v925, %v924
      %v1085 = vpack.c.b16 %v927, %v926
      %v1086 = vpack.c.b16 %v929, %v928
      %v1087 = vpack.c.b16 %v931, %v930
      %v1088 = vpack.c.b16 %v933, %v932
      %v1089 = vpack.c.b16 %v935, %v934
      %v1090 = vpack.c.b16 %v937, %v936
      %v1091 = vpack.c.b16 %v939, %v938
      %v1092 = vpack.c.b16 %v941, %v940
      %v1093 = vpack.c.b16 %v943, %v942
      %v1094 = vpack.c.b16 %v945, %v944
      %v1095 = vpack.c.b16 %v947, %v946
      %v1096 = vpack.c.b16 %v949, %v948
      %v1097 = vpack.c.b16 %v951, %v950
      %v1098 = vpack.c.b16 %v953, %v952
      %v1099 = vpack.c.b16 %v955, %v954
      %v1100 = vpack.c.b16 %v957, %v956
      %v1101 = vpack.c.b16 %v959, %v958
      %v1102 = vpack.c.b16 %v961, %v960
      %v1103 = vpack.c.b16 %v963, %v962
      %v1104 = vpack.c.b16 %v965, %v964
      %v1105 = vpack.c.b16 %v967, %v966
      %v1106 = vpack.c.b16 %v969, %v968
      %v1107 = vpack.c.b16 %v971, %v970
      %v1108 = vpack.c.b16 %v973, %v972
      %v1109 = vpack.c.b16 %v975, %v974
      %v1110 = vpack.c.b16 %v977, %v976
      %v1111 = vpack.c.b16 %v979, %v978
      %v1112 = vpack.c.b16 %v981, %v980
      %v1113 = vpack.c.b16 %v983, %v982
      %v1114 = vpack.c.b16 %v985, %v984
      %v1115 = vpack.c.b16 %v987, %v986
      %v1260 = vunpack.c.l.b16 %v460
      %v1261 = vunpack.c.l.b16 %v461
      %v1262 = vunpack.c.l.b16 %v462
      %v1263 = vunpack.c.l.b16 %v463
      %v1264 = vunpack.c.l.b16 %v464
      %v1265 = vunpack.c.l.b16 %v465
      %v1266 = vunpack.c.l.b16 %v466
      %v1267 = vunpack.c.l.b16 %v467
      %v1268 = vunpack.c.l.b16 %v468
      %v1269 = vunpack.c.l.b16 %v469
      %v1270 = vunpack.c.l.b16 %v470
      %v1271 = vunpack.c.l.b16 %v471
      %v1272 = vunpack.c.l.b16 %v472
      %v1273 = vunpack.c.l.b16 %v473
      %v1274 = vunpack.c.l.b16 %v474
      %v1275 = vunpack.c.l.b16 %v475
      %v1276 = vpack.c.b16 %v1261, %v1260
      %v1277 = vpack.c.b16 %v1263, %v1262
      %v1278 = vpack.c.b16 %v1265, %v1264
      %v1279 = vpack.c.b16 %v1267, %v1266
      %v1280 = vpack.c.b16 %v1269, %v1268
      %v1281 = vpack.c.b16 %v1271, %v1270
      %v1282 = vpack.c.b16 %v1273, %v1272
      %v1283 = vpack.c.b16 %v1275, %v1274
      %1292 = vmatprep.subr.bf16.mxu0 0
      %1293 = vmatpush1.bf16.msra.mxu0 %v1276
      %1294 = vmatprep.subr.bf16.mxu0 0
      %1295 = vmatpush1.bf16.msra.mxu0 %v1277
      %1296 = vmatprep.subr.bf16.mxu0 0
      %1297 = vmatpush1.bf16.msra.mxu0 %v1278
      %1298 = vmatprep.subr.bf16.mxu0 0
      %1299 = vmatpush1.bf16.msra.mxu0 %v1279
      %1300 = vmatprep.subr.bf16.mxu0 0
      %1301 = vmatpush1.bf16.msra.mxu0 %v1280
      %1302 = vmatprep.subr.bf16.mxu0 0
      %1303 = vmatpush1.bf16.msra.mxu0 %v1281
      %1304 = vmatprep.subr.bf16.mxu0 0
      %1305 = vmatpush1.bf16.msra.mxu0 %v1282
      %1306 = vmatprep.subr.bf16.mxu0 0
      %1307 = vmatpush1.bf16.msra.mxu0 %v1283
      %1308 = vmatprep.subr.bf16.mxu0 0
      %1309 = vmatpush1.bf16.msra.mxu0 0
      %1310 = vmatprep.subr.bf16.mxu0 0
      %1311 = vmatpush1.bf16.msra.mxu0 0
      %1312 = vmatprep.subr.bf16.mxu0 0
      %1313 = vmatpush1.bf16.msra.mxu0 0
      %1314 = vmatprep.subr.bf16.mxu0 0
      %1315 = vmatpush1.bf16.msra.mxu0 0
      %1316 = vmatprep.subr.bf16.mxu0 0
      %1317 = vmatpush1.bf16.msra.mxu0 0
      %1318 = vmatprep.subr.bf16.mxu0 0
      %1319 = vmatpush1.bf16.msra.mxu0 0
      %1320 = vmatprep.subr.bf16.mxu0 0
      %1321 = vmatpush1.bf16.msra.mxu0 0
      %1322 = vmatprep.subr.bf16.mxu0 0
      %1323 = vmatpush1.bf16.msra.mxu0 0
      %1324 = vmatprep.mubr.bf16.mxu0 0
      %1325 = vmatmul.mubr.bf16.gmra.mrb[0].mxu0 %v988
      %v1326 = vpop.f32.mrb[0].mxu0
      %v1327 = vadd.f32 0.0, %v1326
      %v1328 = vpop.f32.mrb[0].mxu0
      %v1329 = vpop.f32.mrb[0].mxu0
      %v1330 = vadd.f32 0.0, %v1329
      %v1331 = vpop.f32.mrb[0].mxu0
      %1332 = vmatprep.mubr.bf16.mxu0 0
      %1333 = vmatmul.mubr.bf16.gmra.mrb[0].mxu0 %v989
      %v1334 = vpop.f32.mrb[0].mxu0
      %v1335 = vadd.f32 0.0, %v1334
      %v1336 = vpop.f32.mrb[0].mxu0
      %v1337 = vpop.f32.mrb[0].mxu0
      %v1338 = vadd.f32 0.0, %v1337
      %v1339 = vpop.f32.mrb[0].mxu0
      %1340 = vmatprep.mubr.bf16.mxu0 0
      %1341 = vmatmul.mubr.bf16.gmra.mrb[0].mxu0 %v990
      %v1342 = vpop.f32.mrb[0].mxu0
      %v1343 = vadd.f32 0.0, %v1342
      %v1344 = vpop.f32.mrb[0].mxu0
      %v1345 = vpop.f32.mrb[0].mxu0
      %v1346 = vadd.f32 0.0, %v1345
      %v1347 = vpop.f32.mrb[0].mxu0
      %1348 = vmatprep.mubr.bf16.mxu0 0
      %1349 = vmatmul.mubr.bf16.gmra.mrb[0].mxu0 %v991
      %v1350 = vpop.f32.mrb[0].mxu0
      %v1351 = vadd.f32 0.0, %v1350
      %v1352 = vpop.f32.mrb[0].mxu0
      %v1353 = vpop.f32.mrb[0].mxu0
      %v1354 = vadd.f32 0.0, %v1353
      %v1355 = vpop.f32.mrb[0].mxu0
      %1356 = vmatprep.mubr.bf16.mxu0 0
      %1357 = vmatmul.mubr.bf16.gmra.mrb[0].mxu0 %v992
      %v1358 = vpop.f32.mrb[0].mxu0
      %v1359 = vadd.f32 0.0, %v1358
      %v1360 = vpop.f32.mrb[0].mxu0
      %v1361 = vpop.f32.mrb[0].mxu0
      %v1362 = vadd.f32 0.0, %v1361
      %v1363 = vpop.f32.mrb[0].mxu0
      %1364 = vmatprep.mubr.bf16.mxu0 0
      %1365 = vmatmul.mubr.bf16.gmra.mrb[0].mxu0 %v993
      %v1366 = vpop.f32.mrb[0].mxu0
      %v1367 = vadd.f32 0.0, %v1366
      %v1368 = vpop.f32.mrb[0].mxu0
      %v1369 = vpop.f32.mrb[0].mxu0
      %v1370 = vadd.f32 0.0, %v1369
      %v1371 = vpop.f32.mrb[0].mxu0
      %1372 = vmatprep.mubr.bf16.mxu0 0
      %1373 = vmatmul.mubr.bf16.gmra.mrb[0].mxu0 %v994
      %v1374 = vpop.f32.mrb[0].mxu0
      %v1375 = vadd.f32 0.0, %v1374
      %v1376 = vpop.f32.mrb[0].mxu0
      %v1377 = vpop.f32.mrb[0].mxu0
      %v1378 = vadd.f32 0.0, %v1377
      %v1379 = vpop.f32.mrb[0].mxu0
      %1380 = vmatprep.mubr.bf16.mxu0 0
      %1381 = vmatmul.mubr.bf16.gmra.mrb[0].mxu0 %v995
      %v1382 = vpop.f32.mrb[0].mxu0
      %v1383 = vadd.f32 0.0, %v1382
      %v1384 = vpop.f32.mrb[0].mxu0
      %v1385 = vpop.f32.mrb[0].mxu0
      %v1386 = vadd.f32 0.0, %v1385
      %v1387 = vpop.f32.mrb[0].mxu0
      %1388 = vmatprep.mubr.bf16.mxu0 0
      %1389 = vmatmul.mubr.bf16.gmra.mrb[0].mxu0 %v996
      %v1390 = vpop.f32.mrb[0].mxu0
      %v1391 = vadd.f32 0.0, %v1390
      %v1392 = vpop.f32.mrb[0].mxu0
      %v1393 = vpop.f32.mrb[0].mxu0
      %v1394 = vadd.f32 0.0, %v1393
      %v1395 = vpop.f32.mrb[0].mxu0
      %1396 = vmatprep.mubr.bf16.mxu0 0
      %1397 = vmatmul.mubr.bf16.gmra.mrb[0].mxu0 %v997
      %v1398 = vpop.f32.mrb[0].mxu0
      %v1399 = vadd.f32 0.0, %v1398
      %v1400 = vpop.f32.mrb[0].mxu0
      %v1401 = vpop.f32.mrb[0].mxu0
      %v1402 = vadd.f32 0.0, %v1401
      %v1403 = vpop.f32.mrb[0].mxu0
      %1404 = vmatprep.mubr.bf16.mxu0 0
      %1405 = vmatmul.mubr.bf16.gmra.mrb[0].mxu0 %v998
      %v1406 = vpop.f32.mrb[0].mxu0
      %v1407 = vadd.f32 0.0, %v1406
      %v1408 = vpop.f32.mrb[0].mxu0
      %v1409 = vpop.f32.mrb[0].mxu0
      %v1410 = vadd.f32 0.0, %v1409
      %v1411 = vpop.f32.mrb[0].mxu0
      %1412 = vmatprep.mubr.bf16.mxu0 0
      %1413 = vmatmul.mubr.bf16.gmra.mrb[0].mxu0 %v999
      %v1414 = vpop.f32.mrb[0].mxu0
      %v1415 = vadd.f32 0.0, %v1414
      %v1416 = vpop.f32.mrb[0].mxu0
      %v1417 = vpop.f32.mrb[0].mxu0
      %v1418 = vadd.f32 0.0, %v1417
      %v1419 = vpop.f32.mrb[0].mxu0
      %1420 = vmatprep.mubr.bf16.mxu0 0
      %1421 = vmatmul.mubr.bf16.gmra.mrb[0].mxu0 %v1000
      %v1422 = vpop.f32.mrb[0].mxu0
      %v1423 = vadd.f32 0.0, %v1422
      %v1424 = vpop.f32.mrb[0].mxu0
      %v1425 = vpop.f32.mrb[0].mxu0
      %v1426 = vadd.f32 0.0, %v1425
      %v1427 = vpop.f32.mrb[0].mxu0
      %1428 = vmatprep.mubr.bf16.mxu0 0
      %1429 = vmatmul.mubr.bf16.gmra.mrb[0].mxu0 %v1001
      %v1430 = vpop.f32.mrb[0].mxu0
      %v1431 = vadd.f32 0.0, %v1430
      %v1432 = vpop.f32.mrb[0].mxu0
      %v1433 = vpop.f32.mrb[0].mxu0
      %v1434 = vadd.f32 0.0, %v1433
      %v1435 = vpop.f32.mrb[0].mxu0
      %1436 = vmatprep.mubr.bf16.mxu0 0
      %1437 = vmatmul.mubr.bf16.gmra.mrb[0].mxu0 %v1002
      %v1438 = vpop.f32.mrb[0].mxu0
      %v1439 = vadd.f32 0.0, %v1438
      %v1440 = vpop.f32.mrb[0].mxu0
      %v1441 = vpop.f32.mrb[0].mxu0
      %v1442 = vadd.f32 0.0, %v1441
      %v1443 = vpop.f32.mrb[0].mxu0
      %1444 = vmatprep.mubr.bf16.mxu0 0
      %1445 = vmatmul.mubr.bf16.gmra.mrb[0].mxu0 %v1003
      %v1446 = vpop.f32.mrb[0].mxu0
      %v1447 = vadd.f32 0.0, %v1446
      %v1448 = vpop.f32.mrb[0].mxu0
      %v1449 = vpop.f32.mrb[0].mxu0
      %v1450 = vadd.f32 0.0, %v1449
      %v1451 = vpop.f32.mrb[0].mxu0
      %1452 = vmatprep.mubr.bf16.mxu0 0
      %1453 = vmatmul.mubr.bf16.gmra.mrb[0].mxu0 %v1004
      %v1454 = vpop.f32.mrb[0].mxu0
      %v1455 = vadd.f32 0.0, %v1454
      %v1456 = vpop.f32.mrb[0].mxu0
      %v1457 = vpop.f32.mrb[0].mxu0
      %v1458 = vadd.f32 0.0, %v1457
      %v1459 = vpop.f32.mrb[0].mxu0
      %1460 = vmatprep.mubr.bf16.mxu0 0
      %1461 = vmatmul.mubr.bf16.gmra.mrb[0].mxu0 %v1005
      %v1462 = vpop.f32.mrb[0].mxu0
      %v1463 = vadd.f32 0.0, %v1462
      %v1464 = vpop.f32.mrb[0].mxu0
      %v1465 = vpop.f32.mrb[0].mxu0
      %v1466 = vadd.f32 0.0, %v1465
      %v1467 = vpop.f32.mrb[0].mxu0
      %1468 = vmatprep.mubr.bf16.mxu0 0
      %1469 = vmatmul.mubr.bf16.gmra.mrb[0].mxu0 %v1006
      %v1470 = vpop.f32.mrb[0].mxu0
      %v1471 = vadd.f32 0.0, %v1470
      %v1472 = vpop.f32.mrb[0].mxu0
      %v1473 = vpop.f32.mrb[0].mxu0
      %v1474 = vadd.f32 0.0, %v1473
      %v1475 = vpop.f32.mrb[0].mxu0
      %1476 = vmatprep.mubr.bf16.mxu0 0
      %1477 = vmatmul.mubr.bf16.gmra.mrb[0].mxu0 %v1007
      %v1478 = vpop.f32.mrb[0].mxu0
      %v1479 = vadd.f32 0.0, %v1478
      %v1480 = vpop.f32.mrb[0].mxu0
      %v1481 = vpop.f32.mrb[0].mxu0
      %v1482 = vadd.f32 0.0, %v1481
      %v1483 = vpop.f32.mrb[0].mxu0
      %1484 = vmatprep.mubr.bf16.mxu0 0
      %1485 = vmatmul.mubr.bf16.gmra.mrb[0].mxu0 %v1008
      %v1486 = vpop.f32.mrb[0].mxu0
      %v1487 = vadd.f32 0.0, %v1486
      %v1488 = vpop.f32.mrb[0].mxu0
      %v1489 = vpop.f32.mrb[0].mxu0
      %v1490 = vadd.f32 0.0, %v1489
      %v1491 = vpop.f32.mrb[0].mxu0
      %1492 = vmatprep.mubr.bf16.mxu0 0
      %1493 = vmatmul.mubr.bf16.gmra.mrb[0].mxu0 %v1009
      %v1494 = vpop.f32.mrb[0].mxu0
      %v1495 = vadd.f32 0.0, %v1494
      %v1496 = vpop.f32.mrb[0].mxu0
      %v1497 = vpop.f32.mrb[0].mxu0
      %v1498 = vadd.f32 0.0, %v1497
      %v1499 = vpop.f32.mrb[0].mxu0
      %1500 = vmatprep.mubr.bf16.mxu0 0
      %1501 = vmatmul.mubr.bf16.gmra.mrb[0].mxu0 %v1010
      %v1502 = vpop.f32.mrb[0].mxu0
      %v1503 = vadd.f32 0.0, %v1502
      %v1504 = vpop.f32.mrb[0].mxu0
      %v1505 = vpop.f32.mrb[0].mxu0
      %v1506 = vadd.f32 0.0, %v1505
      %v1507 = vpop.f32.mrb[0].mxu0
      %1508 = vmatprep.mubr.bf16.mxu0 0
      %1509 = vmatmul.mubr.bf16.gmra.mrb[0].mxu0 %v1011
      %v1510 = vpop.f32.mrb[0].mxu0
      %v1511 = vadd.f32 0.0, %v1510
      %v1512 = vpop.f32.mrb[0].mxu0
      %v1513 = vpop.f32.mrb[0].mxu0
      %v1514 = vadd.f32 0.0, %v1513
      %v1515 = vpop.f32.mrb[0].mxu0
      %1516 = vmatprep.mubr.bf16.mxu0 0
      %1517 = vmatmul.mubr.bf16.gmra.mrb[0].mxu0 %v1012
      %v1518 = vpop.f32.mrb[0].mxu0
      %v1519 = vadd.f32 0.0, %v1518
      %v1520 = vpop.f32.mrb[0].mxu0
      %v1521 = vpop.f32.mrb[0].mxu0
      %v1522 = vadd.f32 0.0, %v1521
      %v1523 = vpop.f32.mrb[0].mxu0
      %1524 = vmatprep.mubr.bf16.mxu0 0
      %1525 = vmatmul.mubr.bf16.gmra.mrb[0].mxu0 %v1013
      %v1526 = vpop.f32.mrb[0].mxu0
      %v1527 = vadd.f32 0.0, %v1526
      %v1528 = vpop.f32.mrb[0].mxu0
      %v1529 = vpop.f32.mrb[0].mxu0
      %v1530 = vadd.f32 0.0, %v1529
      %v1531 = vpop.f32.mrb[0].mxu0
      %1532 = vmatprep.mubr.bf16.mxu0 0
      %1533 = vmatmul.mubr.bf16.gmra.mrb[0].mxu0 %v1014
      %v1534 = vpop.f32.mrb[0].mxu0
      %v1535 = vadd.f32 0.0, %v1534
      %v1536 = vpop.f32.mrb[0].mxu0
      %v1537 = vpop.f32.mrb[0].mxu0
      %v1538 = vadd.f32 0.0, %v1537
      %v1539 = vpop.f32.mrb[0].mxu0
      %1540 = vmatprep.mubr.bf16.mxu0 0
      %1541 = vmatmul.mubr.bf16.gmra.mrb[0].mxu0 %v1015
      %v1542 = vpop.f32.mrb[0].mxu0
      %v1543 = vadd.f32 0.0, %v1542
      %v1544 = vpop.f32.mrb[0].mxu0
      %v1545 = vpop.f32.mrb[0].mxu0
      %v1546 = vadd.f32 0.0, %v1545
      %v1547 = vpop.f32.mrb[0].mxu0
      %1548 = vmatprep.mubr.bf16.mxu0 0
      %1549 = vmatmul.mubr.bf16.gmra.mrb[0].mxu0 %v1016
      %v1550 = vpop.f32.mrb[0].mxu0
      %v1551 = vadd.f32 0.0, %v1550
      %v1552 = vpop.f32.mrb[0].mxu0
      %v1553 = vpop.f32.mrb[0].mxu0
      %v1554 = vadd.f32 0.0, %v1553
      %v1555 = vpop.f32.mrb[0].mxu0
      %1556 = vmatprep.mubr.bf16.mxu0 0
      %1557 = vmatmul.mubr.bf16.gmra.mrb[0].mxu0 %v1017
      %v1558 = vpop.f32.mrb[0].mxu0
      %v1559 = vadd.f32 0.0, %v1558
      %v1560 = vpop.f32.mrb[0].mxu0
      %v1561 = vpop.f32.mrb[0].mxu0
      %v1562 = vadd.f32 0.0, %v1561
      %v1563 = vpop.f32.mrb[0].mxu0
      %1564 = vmatprep.mubr.bf16.mxu0 0
      %1565 = vmatmul.mubr.bf16.gmra.mrb[0].mxu0 %v1018
      %v1566 = vpop.f32.mrb[0].mxu0
      %v1567 = vadd.f32 0.0, %v1566
      %v1568 = vpop.f32.mrb[0].mxu0
      %v1569 = vpop.f32.mrb[0].mxu0
      %v1570 = vadd.f32 0.0, %v1569
      %v1571 = vpop.f32.mrb[0].mxu0
      %1572 = vmatprep.mubr.bf16.mxu0 0
      %1573 = vmatmul.mubr.bf16.gmra.mrb[0].mxu0 %v1019
      %v1574 = vpop.f32.mrb[0].mxu0
      %v1575 = vadd.f32 0.0, %v1574
      %v1576 = vpop.f32.mrb[0].mxu0
      %v1577 = vpop.f32.mrb[0].mxu0
      %v1578 = vadd.f32 0.0, %v1577
      %v1579 = vpop.f32.mrb[0].mxu0
      %1580 = vmatprep.mubr.bf16.mxu0 0
      %1581 = vmatmul.mubr.bf16.gmra.mrb[0].mxu0 %v1020
      %v1582 = vpop.f32.mrb[0].mxu0
      %v1583 = vadd.f32 0.0, %v1582
      %v1584 = vpop.f32.mrb[0].mxu0
      %v1585 = vpop.f32.mrb[0].mxu0
      %v1586 = vadd.f32 0.0, %v1585
      %v1587 = vpop.f32.mrb[0].mxu0
      %1588 = vmatprep.mubr.bf16.mxu0 0
      %1589 = vmatmul.mubr.bf16.gmra.mrb[0].mxu0 %v1021
      %v1590 = vpop.f32.mrb[0].mxu0
      %v1591 = vadd.f32 0.0, %v1590
      %v1592 = vpop.f32.mrb[0].mxu0
      %v1593 = vpop.f32.mrb[0].mxu0
      %v1594 = vadd.f32 0.0, %v1593
      %v1595 = vpop.f32.mrb[0].mxu0
      %1596 = vmatprep.mubr.bf16.mxu0 0
      %1597 = vmatmul.mubr.bf16.gmra.mrb[0].mxu0 %v1022
      %v1598 = vpop.f32.mrb[0].mxu0
      %v1599 = vadd.f32 0.0, %v1598
      %v1600 = vpop.f32.mrb[0].mxu0
      %v1601 = vpop.f32.mrb[0].mxu0
      %v1602 = vadd.f32 0.0, %v1601
      %v1603 = vpop.f32.mrb[0].mxu0
      %1604 = vmatprep.mubr.bf16.mxu0 0
      %1605 = vmatmul.mubr.bf16.gmra.mrb[0].mxu0 %v1023
      %v1606 = vpop.f32.mrb[0].mxu0
      %v1607 = vadd.f32 0.0, %v1606
      %v1608 = vpop.f32.mrb[0].mxu0
      %v1609 = vpop.f32.mrb[0].mxu0
      %v1610 = vadd.f32 0.0, %v1609
      %v1611 = vpop.f32.mrb[0].mxu0
      %1612 = vmatprep.mubr.bf16.mxu0 0
      %1613 = vmatmul.mubr.bf16.gmra.mrb[0].mxu0 %v1024
      %v1614 = vpop.f32.mrb[0].mxu0
      %v1615 = vadd.f32 0.0, %v1614
      %v1616 = vpop.f32.mrb[0].mxu0
      %v1617 = vpop.f32.mrb[0].mxu0
      %v1618 = vadd.f32 0.0, %v1617
      %v1619 = vpop.f32.mrb[0].mxu0
      %1620 = vmatprep.mubr.bf16.mxu0 0
      %1621 = vmatmul.mubr.bf16.gmra.mrb[0].mxu0 %v1025
      %v1622 = vpop.f32.mrb[0].mxu0
      %v1623 = vadd.f32 0.0, %v1622
      %v1624 = vpop.f32.mrb[0].mxu0
      %v1625 = vpop.f32.mrb[0].mxu0
      %v1626 = vadd.f32 0.0, %v1625
      %v1627 = vpop.f32.mrb[0].mxu0
      %1628 = vmatprep.mubr.bf16.mxu0 0
      %1629 = vmatmul.mubr.bf16.gmra.mrb[0].mxu0 %v1026
      %v1630 = vpop.f32.mrb[0].mxu0
      %v1631 = vadd.f32 0.0, %v1630
      %v1632 = vpop.f32.mrb[0].mxu0
      %v1633 = vpop.f32.mrb[0].mxu0
      %v1634 = vadd.f32 0.0, %v1633
      %v1635 = vpop.f32.mrb[0].mxu0
      %1636 = vmatprep.mubr.bf16.mxu0 0
      %1637 = vmatmul.mubr.bf16.gmra.mrb[0].mxu0 %v1027
      %v1638 = vpop.f32.mrb[0].mxu0
      %v1639 = vadd.f32 0.0, %v1638
      %v1640 = vpop.f32.mrb[0].mxu0
      %v1641 = vpop.f32.mrb[0].mxu0
      %v1642 = vadd.f32 0.0, %v1641
      %v1643 = vpop.f32.mrb[0].mxu0
      %1644 = vmatprep.mubr.bf16.mxu0 0
      %1645 = vmatmul.mubr.bf16.gmra.mrb[0].mxu0 %v1028
      %v1646 = vpop.f32.mrb[0].mxu0
      %v1647 = vadd.f32 0.0, %v1646
      %v1648 = vpop.f32.mrb[0].mxu0
      %v1649 = vpop.f32.mrb[0].mxu0
      %v1650 = vadd.f32 0.0, %v1649
      %v1651 = vpop.f32.mrb[0].mxu0
      %1652 = vmatprep.mubr.bf16.mxu0 0
      %1653 = vmatmul.mubr.bf16.gmra.mrb[0].mxu0 %v1029
      %v1654 = vpop.f32.mrb[0].mxu0
      %v1655 = vadd.f32 0.0, %v1654
      %v1656 = vpop.f32.mrb[0].mxu0
      %v1657 = vpop.f32.mrb[0].mxu0
      %v1658 = vadd.f32 0.0, %v1657
      %v1659 = vpop.f32.mrb[0].mxu0
      %1660 = vmatprep.mubr.bf16.mxu0 0
      %1661 = vmatmul.mubr.bf16.gmra.mrb[0].mxu0 %v1030
      %v1662 = vpop.f32.mrb[0].mxu0
      %v1663 = vadd.f32 0.0, %v1662
      %v1664 = vpop.f32.mrb[0].mxu0
      %v1665 = vpop.f32.mrb[0].mxu0
      %v1666 = vadd.f32 0.0, %v1665
      %v1667 = vpop.f32.mrb[0].mxu0
      %1668 = vmatprep.mubr.bf16.mxu0 0
      %1669 = vmatmul.mubr.bf16.gmra.mrb[0].mxu0 %v1031
      %v1670 = vpop.f32.mrb[0].mxu0
      %v1671 = vadd.f32 0.0, %v1670
      %v1672 = vpop.f32.mrb[0].mxu0
      %v1673 = vpop.f32.mrb[0].mxu0
      %v1674 = vadd.f32 0.0, %v1673
      %v1675 = vpop.f32.mrb[0].mxu0
      %1676 = vmatprep.mubr.bf16.mxu0 0
      %1677 = vmatmul.mubr.bf16.gmra.mrb[0].mxu0 %v1032
      %v1678 = vpop.f32.mrb[0].mxu0
      %v1679 = vadd.f32 0.0, %v1678
      %v1680 = vpop.f32.mrb[0].mxu0
      %v1681 = vpop.f32.mrb[0].mxu0
      %v1682 = vadd.f32 0.0, %v1681
      %v1683 = vpop.f32.mrb[0].mxu0
      %1684 = vmatprep.mubr.bf16.mxu0 0
      %1685 = vmatmul.mubr.bf16.gmra.mrb[0].mxu0 %v1033
      %v1686 = vpop.f32.mrb[0].mxu0
      %v1687 = vadd.f32 0.0, %v1686
      %v1688 = vpop.f32.mrb[0].mxu0
      %v1689 = vpop.f32.mrb[0].mxu0
      %v1690 = vadd.f32 0.0, %v1689
      %v1691 = vpop.f32.mrb[0].mxu0
      %1692 = vmatprep.mubr.bf16.mxu0 0
      %1693 = vmatmul.mubr.bf16.gmra.mrb[0].mxu0 %v1034
      %v1694 = vpop.f32.mrb[0].mxu0
      %v1695 = vadd.f32 0.0, %v1694
      %v1696 = vpop.f32.mrb[0].mxu0
      %v1697 = vpop.f32.mrb[0].mxu0
      %v1698 = vadd.f32 0.0, %v1697
      %v1699 = vpop.f32.mrb[0].mxu0
      %1700 = vmatprep.mubr.bf16.mxu0 0
      %1701 = vmatmul.mubr.bf16.gmra.mrb[0].mxu0 %v1035
      %v1702 = vpop.f32.mrb[0].mxu0
      %v1703 = vadd.f32 0.0, %v1702
      %v1704 = vpop.f32.mrb[0].mxu0
      %v1705 = vpop.f32.mrb[0].mxu0
      %v1706 = vadd.f32 0.0, %v1705
      %v1707 = vpop.f32.mrb[0].mxu0
      %1708 = vmatprep.mubr.bf16.mxu0 0
      %1709 = vmatmul.mubr.bf16.gmra.mrb[0].mxu0 %v1036
      %v1710 = vpop.f32.mrb[0].mxu0
      %v1711 = vadd.f32 0.0, %v1710
      %v1712 = vpop.f32.mrb[0].mxu0
      %v1713 = vpop.f32.mrb[0].mxu0
      %v1714 = vadd.f32 0.0, %v1713
      %v1715 = vpop.f32.mrb[0].mxu0
      %1716 = vmatprep.mubr.bf16.mxu0 0
      %1717 = vmatmul.mubr.bf16.gmra.mrb[0].mxu0 %v1037
      %v1718 = vpop.f32.mrb[0].mxu0
      %v1719 = vadd.f32 0.0, %v1718
      %v1720 = vpop.f32.mrb[0].mxu0
      %v1721 = vpop.f32.mrb[0].mxu0
      %v1722 = vadd.f32 0.0, %v1721
      %v1723 = vpop.f32.mrb[0].mxu0
      %1724 = vmatprep.mubr.bf16.mxu0 0
      %1725 = vmatmul.mubr.bf16.gmra.mrb[0].mxu0 %v1038
      %v1726 = vpop.f32.mrb[0].mxu0
      %v1727 = vadd.f32 0.0, %v1726
      %v1728 = vpop.f32.mrb[0].mxu0
      %v1729 = vpop.f32.mrb[0].mxu0
      %v1730 = vadd.f32 0.0, %v1729
      %v1731 = vpop.f32.mrb[0].mxu0
      %1732 = vmatprep.mubr.bf16.mxu0 0
      %1733 = vmatmul.mubr.bf16.gmra.mrb[0].mxu0 %v1039
      %v1734 = vpop.f32.mrb[0].mxu0
      %v1735 = vadd.f32 0.0, %v1734
      %v1736 = vpop.f32.mrb[0].mxu0
      %v1737 = vpop.f32.mrb[0].mxu0
      %v1738 = vadd.f32 0.0, %v1737
      %v1739 = vpop.f32.mrb[0].mxu0
      %1740 = vmatprep.mubr.bf16.mxu0 0
      %1741 = vmatmul.mubr.bf16.gmra.mrb[0].mxu0 %v1040
      %v1742 = vpop.f32.mrb[0].mxu0
      %v1743 = vadd.f32 0.0, %v1742
      %v1744 = vpop.f32.mrb[0].mxu0
      %v1745 = vpop.f32.mrb[0].mxu0
      %v1746 = vadd.f32 0.0, %v1745
      %v1747 = vpop.f32.mrb[0].mxu0
      %1748 = vmatprep.mubr.bf16.mxu0 0
      %1749 = vmatmul.mubr.bf16.gmra.mrb[0].mxu0 %v1041
      %v1750 = vpop.f32.mrb[0].mxu0
      %v1751 = vadd.f32 0.0, %v1750
      %v1752 = vpop.f32.mrb[0].mxu0
      %v1753 = vpop.f32.mrb[0].mxu0
      %v1754 = vadd.f32 0.0, %v1753
      %v1755 = vpop.f32.mrb[0].mxu0
      %1756 = vmatprep.mubr.bf16.mxu0 0
      %1757 = vmatmul.mubr.bf16.gmra.mrb[0].mxu0 %v1042
      %v1758 = vpop.f32.mrb[0].mxu0
      %v1759 = vadd.f32 0.0, %v1758
      %v1760 = vpop.f32.mrb[0].mxu0
      %v1761 = vpop.f32.mrb[0].mxu0
      %v1762 = vadd.f32 0.0, %v1761
      %v1763 = vpop.f32.mrb[0].mxu0
      %1764 = vmatprep.mubr.bf16.mxu0 0
      %1765 = vmatmul.mubr.bf16.gmra.mrb[0].mxu0 %v1043
      %v1766 = vpop.f32.mrb[0].mxu0
      %v1767 = vadd.f32 0.0, %v1766
      %v1768 = vpop.f32.mrb[0].mxu0
      %v1769 = vpop.f32.mrb[0].mxu0
      %v1770 = vadd.f32 0.0, %v1769
      %v1771 = vpop.f32.mrb[0].mxu0
      %1772 = vmatprep.mubr.bf16.mxu0 0
      %1773 = vmatmul.mubr.bf16.gmra.mrb[0].mxu0 %v1044
      %v1774 = vpop.f32.mrb[0].mxu0
      %v1775 = vadd.f32 0.0, %v1774
      %v1776 = vpop.f32.mrb[0].mxu0
      %v1777 = vpop.f32.mrb[0].mxu0
      %v1778 = vadd.f32 0.0, %v1777
      %v1779 = vpop.f32.mrb[0].mxu0
      %1780 = vmatprep.mubr.bf16.mxu0 0
      %1781 = vmatmul.mubr.bf16.gmra.mrb[0].mxu0 %v1045
      %v1782 = vpop.f32.mrb[0].mxu0
      %v1783 = vadd.f32 0.0, %v1782
      %v1784 = vpop.f32.mrb[0].mxu0
      %v1785 = vpop.f32.mrb[0].mxu0
      %v1786 = vadd.f32 0.0, %v1785
      %v1787 = vpop.f32.mrb[0].mxu0
      %1788 = vmatprep.mubr.bf16.mxu0 0
      %1789 = vmatmul.mubr.bf16.gmra.mrb[0].mxu0 %v1046
      %v1790 = vpop.f32.mrb[0].mxu0
      %v1791 = vadd.f32 0.0, %v1790
      %v1792 = vpop.f32.mrb[0].mxu0
      %v1793 = vpop.f32.mrb[0].mxu0
      %v1794 = vadd.f32 0.0, %v1793
      %v1795 = vpop.f32.mrb[0].mxu0
      %1796 = vmatprep.mubr.bf16.mxu0 0
      %1797 = vmatmul.mubr.bf16.gmra.mrb[0].mxu0 %v1047
      %v1798 = vpop.f32.mrb[0].mxu0
      %v1799 = vadd.f32 0.0, %v1798
      %v1800 = vpop.f32.mrb[0].mxu0
      %v1801 = vpop.f32.mrb[0].mxu0
      %v1802 = vadd.f32 0.0, %v1801
      %v1803 = vpop.f32.mrb[0].mxu0
      %1804 = vmatprep.mubr.bf16.mxu0 0
      %1805 = vmatmul.mubr.bf16.gmra.mrb[0].mxu0 %v1048
      %v1806 = vpop.f32.mrb[0].mxu0
      %v1807 = vadd.f32 0.0, %v1806
      %v1808 = vpop.f32.mrb[0].mxu0
      %v1809 = vpop.f32.mrb[0].mxu0
      %v1810 = vadd.f32 0.0, %v1809
      %v1811 = vpop.f32.mrb[0].mxu0
      %1812 = vmatprep.mubr.bf16.mxu0 0
      %1813 = vmatmul.mubr.bf16.gmra.mrb[0].mxu0 %v1049
      %v1814 = vpop.f32.mrb[0].mxu0
      %v1815 = vadd.f32 0.0, %v1814
      %v1816 = vpop.f32.mrb[0].mxu0
      %v1817 = vpop.f32.mrb[0].mxu0
      %v1818 = vadd.f32 0.0, %v1817
      %v1819 = vpop.f32.mrb[0].mxu0
      %1820 = vmatprep.mubr.bf16.mxu0 0
      %1821 = vmatmul.mubr.bf16.gmra.mrb[0].mxu0 %v1050
      %v1822 = vpop.f32.mrb[0].mxu0
      %v1823 = vadd.f32 0.0, %v1822
      %v1824 = vpop.f32.mrb[0].mxu0
      %v1825 = vpop.f32.mrb[0].mxu0
      %v1826 = vadd.f32 0.0, %v1825
      %v1827 = vpop.f32.mrb[0].mxu0
      %1828 = vmatprep.mubr.bf16.mxu0 0
      %1829 = vmatmul.mubr.bf16.gmra.mrb[0].mxu0 %v1051
      %v1830 = vpop.f32.mrb[0].mxu0
      %v1831 = vadd.f32 0.0, %v1830
      %v1832 = vpop.f32.mrb[0].mxu0
      %v1833 = vpop.f32.mrb[0].mxu0
      %v1834 = vadd.f32 0.0, %v1833
      %v1835 = vpop.f32.mrb[0].mxu0
      %1836 = vmatprep.mubr.bf16.mxu0 0
      %1837 = vmatmul.mubr.bf16.gmra.mrb[0].mxu0 %v1052
      %v1838 = vpop.f32.mrb[0].mxu0
      %v1839 = vadd.f32 0.0, %v1838
      %v1840 = vpop.f32.mrb[0].mxu0
      %v1841 = vpop.f32.mrb[0].mxu0
      %v1842 = vadd.f32 0.0, %v1841
      %v1843 = vpop.f32.mrb[0].mxu0
      %1844 = vmatprep.mubr.bf16.mxu0 0
      %1845 = vmatmul.mubr.bf16.gmra.mrb[0].mxu0 %v1053
      %v1846 = vpop.f32.mrb[0].mxu0
      %v1847 = vadd.f32 0.0, %v1846
      %v1848 = vpop.f32.mrb[0].mxu0
      %v1849 = vpop.f32.mrb[0].mxu0
      %v1850 = vadd.f32 0.0, %v1849
      %v1851 = vpop.f32.mrb[0].mxu0
      %1852 = vmatprep.mubr.bf16.mxu0 0
      %1853 = vmatmul.mubr.bf16.gmra.mrb[0].mxu0 %v1054
      %v1854 = vpop.f32.mrb[0].mxu0
      %v1855 = vadd.f32 0.0, %v1854
      %v1856 = vpop.f32.mrb[0].mxu0
      %v1857 = vpop.f32.mrb[0].mxu0
      %v1858 = vadd.f32 0.0, %v1857
      %v1859 = vpop.f32.mrb[0].mxu0
      %1860 = vmatprep.mubr.bf16.mxu0 0
      %1861 = vmatmul.mubr.bf16.gmra.mrb[0].mxu0 %v1055
      %v1862 = vpop.f32.mrb[0].mxu0
      %v1863 = vadd.f32 0.0, %v1862
      %v1864 = vpop.f32.mrb[0].mxu0
      %v1865 = vpop.f32.mrb[0].mxu0
      %v1866 = vadd.f32 0.0, %v1865
      %v1867 = vpop.f32.mrb[0].mxu0
      %1868 = vmatprep.mubr.bf16.mxu0 0
      %1869 = vmatmul.mubr.bf16.gmra.mrb[0].mxu0 %v1056
      %v1870 = vpop.f32.mrb[0].mxu0
      %v1871 = vadd.f32 0.0, %v1870
      %v1872 = vpop.f32.mrb[0].mxu0
      %v1873 = vpop.f32.mrb[0].mxu0
      %v1874 = vadd.f32 0.0, %v1873
      %v1875 = vpop.f32.mrb[0].mxu0
      %1876 = vmatprep.mubr.bf16.mxu0 0
      %1877 = vmatmul.mubr.bf16.gmra.mrb[0].mxu0 %v1057
      %v1878 = vpop.f32.mrb[0].mxu0
      %v1879 = vadd.f32 0.0, %v1878
      %v1880 = vpop.f32.mrb[0].mxu0
      %v1881 = vpop.f32.mrb[0].mxu0
      %v1882 = vadd.f32 0.0, %v1881
      %v1883 = vpop.f32.mrb[0].mxu0
      %1884 = vmatprep.mubr.bf16.mxu0 0
      %1885 = vmatmul.mubr.bf16.gmra.mrb[0].mxu0 %v1058
      %v1886 = vpop.f32.mrb[0].mxu0
      %v1887 = vadd.f32 0.0, %v1886
      %v1888 = vpop.f32.mrb[0].mxu0
      %v1889 = vpop.f32.mrb[0].mxu0
      %v1890 = vadd.f32 0.0, %v1889
      %v1891 = vpop.f32.mrb[0].mxu0
      %1892 = vmatprep.mubr.bf16.mxu0 0
      %1893 = vmatmul.mubr.bf16.gmra.mrb[0].mxu0 %v1059
      %v1894 = vpop.f32.mrb[0].mxu0
      %v1895 = vadd.f32 0.0, %v1894
      %v1896 = vpop.f32.mrb[0].mxu0
      %v1897 = vpop.f32.mrb[0].mxu0
      %v1898 = vadd.f32 0.0, %v1897
      %v1899 = vpop.f32.mrb[0].mxu0
      %1900 = vmatprep.mubr.bf16.mxu0 0
      %1901 = vmatmul.mubr.bf16.gmra.mrb[0].mxu0 %v1060
      %v1902 = vpop.f32.mrb[0].mxu0
      %v1903 = vadd.f32 0.0, %v1902
      %v1904 = vpop.f32.mrb[0].mxu0
      %v1905 = vpop.f32.mrb[0].mxu0
      %v1906 = vadd.f32 0.0, %v1905
      %v1907 = vpop.f32.mrb[0].mxu0
      %1908 = vmatprep.mubr.bf16.mxu0 0
      %1909 = vmatmul.mubr.bf16.gmra.mrb[0].mxu0 %v1061
      %v1910 = vpop.f32.mrb[0].mxu0
      %v1911 = vadd.f32 0.0, %v1910
      %v1912 = vpop.f32.mrb[0].mxu0
      %v1913 = vpop.f32.mrb[0].mxu0
      %v1914 = vadd.f32 0.0, %v1913
      %v1915 = vpop.f32.mrb[0].mxu0
      %1916 = vmatprep.mubr.bf16.mxu0 0
      %1917 = vmatmul.mubr.bf16.gmra.mrb[0].mxu0 %v1062
      %v1918 = vpop.f32.mrb[0].mxu0
      %v1919 = vadd.f32 0.0, %v1918
      %v1920 = vpop.f32.mrb[0].mxu0
      %v1921 = vpop.f32.mrb[0].mxu0
      %v1922 = vadd.f32 0.0, %v1921
      %v1923 = vpop.f32.mrb[0].mxu0
      %1924 = vmatprep.mubr.bf16.mxu0 0
      %1925 = vmatmul.mubr.bf16.gmra.mrb[0].mxu0 %v1063
      %v1926 = vpop.f32.mrb[0].mxu0
      %v1927 = vadd.f32 0.0, %v1926
      %v1928 = vpop.f32.mrb[0].mxu0
      %v1929 = vpop.f32.mrb[0].mxu0
      %v1930 = vadd.f32 0.0, %v1929
      %v1931 = vpop.f32.mrb[0].mxu0
      %1932 = vmatprep.mubr.bf16.mxu0 0
      %1933 = vmatmul.mubr.bf16.gmra.mrb[0].mxu0 %v1064
      %v1934 = vpop.f32.mrb[0].mxu0
      %v1935 = vadd.f32 0.0, %v1934
      %v1936 = vpop.f32.mrb[0].mxu0
      %v1937 = vpop.f32.mrb[0].mxu0
      %v1938 = vadd.f32 0.0, %v1937
      %v1939 = vpop.f32.mrb[0].mxu0
      %1940 = vmatprep.mubr.bf16.mxu0 0
      %1941 = vmatmul.mubr.bf16.gmra.mrb[0].mxu0 %v1065
      %v1942 = vpop.f32.mrb[0].mxu0
      %v1943 = vadd.f32 0.0, %v1942
      %v1944 = vpop.f32.mrb[0].mxu0
      %v1945 = vpop.f32.mrb[0].mxu0
      %v1946 = vadd.f32 0.0, %v1945
      %v1947 = vpop.f32.mrb[0].mxu0
      %1948 = vmatprep.mubr.bf16.mxu0 0
      %1949 = vmatmul.mubr.bf16.gmra.mrb[0].mxu0 %v1066
      %v1950 = vpop.f32.mrb[0].mxu0
      %v1951 = vadd.f32 0.0, %v1950
      %v1952 = vpop.f32.mrb[0].mxu0
      %v1953 = vpop.f32.mrb[0].mxu0
      %v1954 = vadd.f32 0.0, %v1953
      %v1955 = vpop.f32.mrb[0].mxu0
      %1956 = vmatprep.mubr.bf16.mxu0 0
      %1957 = vmatmul.mubr.bf16.gmra.mrb[0].mxu0 %v1067
      %v1958 = vpop.f32.mrb[0].mxu0
      %v1959 = vadd.f32 0.0, %v1958
      %v1960 = vpop.f32.mrb[0].mxu0
      %v1961 = vpop.f32.mrb[0].mxu0
      %v1962 = vadd.f32 0.0, %v1961
      %v1963 = vpop.f32.mrb[0].mxu0
      %1964 = vmatprep.mubr.bf16.mxu0 0
      %1965 = vmatmul.mubr.bf16.gmra.mrb[0].mxu0 %v1068
      %v1966 = vpop.f32.mrb[0].mxu0
      %v1967 = vadd.f32 0.0, %v1966
      %v1968 = vpop.f32.mrb[0].mxu0
      %v1969 = vpop.f32.mrb[0].mxu0
      %v1970 = vadd.f32 0.0, %v1969
      %v1971 = vpop.f32.mrb[0].mxu0
      %1972 = vmatprep.mubr.bf16.mxu0 0
      %1973 = vmatmul.mubr.bf16.gmra.mrb[0].mxu0 %v1069
      %v1974 = vpop.f32.mrb[0].mxu0
      %v1975 = vadd.f32 0.0, %v1974
      %v1976 = vpop.f32.mrb[0].mxu0
      %v1977 = vpop.f32.mrb[0].mxu0
      %v1978 = vadd.f32 0.0, %v1977
      %v1979 = vpop.f32.mrb[0].mxu0
      %1980 = vmatprep.mubr.bf16.mxu0 0
      %1981 = vmatmul.mubr.bf16.gmra.mrb[0].mxu0 %v1070
      %v1982 = vpop.f32.mrb[0].mxu0
      %v1983 = vadd.f32 0.0, %v1982
      %v1984 = vpop.f32.mrb[0].mxu0
      %v1985 = vpop.f32.mrb[0].mxu0
      %v1986 = vadd.f32 0.0, %v1985
      %v1987 = vpop.f32.mrb[0].mxu0
      %1988 = vmatprep.mubr.bf16.mxu0 0
      %1989 = vmatmul.mubr.bf16.gmra.mrb[0].mxu0 %v1071
      %v1990 = vpop.f32.mrb[0].mxu0
      %v1991 = vadd.f32 0.0, %v1990
      %v1992 = vpop.f32.mrb[0].mxu0
      %v1993 = vpop.f32.mrb[0].mxu0
      %v1994 = vadd.f32 0.0, %v1993
      %v1995 = vpop.f32.mrb[0].mxu0
      %1996 = vmatprep.mubr.bf16.mxu0 0
      %1997 = vmatmul.mubr.bf16.gmra.mrb[0].mxu0 %v1072
      %v1998 = vpop.f32.mrb[0].mxu0
      %v1999 = vadd.f32 0.0, %v1998
      %v2000 = vpop.f32.mrb[0].mxu0
      %v2001 = vpop.f32.mrb[0].mxu0
      %v2002 = vadd.f32 0.0, %v2001
      %v2003 = vpop.f32.mrb[0].mxu0
      %2004 = vmatprep.mubr.bf16.mxu0 0
      %2005 = vmatmul.mubr.bf16.gmra.mrb[0].mxu0 %v1073
      %v2006 = vpop.f32.mrb[0].mxu0
      %v2007 = vadd.f32 0.0, %v2006
      %v2008 = vpop.f32.mrb[0].mxu0
      %v2009 = vpop.f32.mrb[0].mxu0
      %v2010 = vadd.f32 0.0, %v2009
      %v2011 = vpop.f32.mrb[0].mxu0
      %2012 = vmatprep.mubr.bf16.mxu0 0
      %2013 = vmatmul.mubr.bf16.gmra.mrb[0].mxu0 %v1074
      %v2014 = vpop.f32.mrb[0].mxu0
      %v2015 = vadd.f32 0.0, %v2014
      %v2016 = vpop.f32.mrb[0].mxu0
      %v2017 = vpop.f32.mrb[0].mxu0
      %v2018 = vadd.f32 0.0, %v2017
      %v2019 = vpop.f32.mrb[0].mxu0
      %2020 = vmatprep.mubr.bf16.mxu0 0
      %2021 = vmatmul.mubr.bf16.gmra.mrb[0].mxu0 %v1075
      %v2022 = vpop.f32.mrb[0].mxu0
      %v2023 = vadd.f32 0.0, %v2022
      %v2024 = vpop.f32.mrb[0].mxu0
      %v2025 = vpop.f32.mrb[0].mxu0
      %v2026 = vadd.f32 0.0, %v2025
      %v2027 = vpop.f32.mrb[0].mxu0
      %2028 = vmatprep.mubr.bf16.mxu0 0
      %2029 = vmatmul.mubr.bf16.gmra.mrb[0].mxu0 %v1076
      %v2030 = vpop.f32.mrb[0].mxu0
      %v2031 = vadd.f32 0.0, %v2030
      %v2032 = vpop.f32.mrb[0].mxu0
      %v2033 = vpop.f32.mrb[0].mxu0
      %v2034 = vadd.f32 0.0, %v2033
      %v2035 = vpop.f32.mrb[0].mxu0
      %2036 = vmatprep.mubr.bf16.mxu0 0
      %2037 = vmatmul.mubr.bf16.gmra.mrb[0].mxu0 %v1077
      %v2038 = vpop.f32.mrb[0].mxu0
      %v2039 = vadd.f32 0.0, %v2038
      %v2040 = vpop.f32.mrb[0].mxu0
      %v2041 = vpop.f32.mrb[0].mxu0
      %v2042 = vadd.f32 0.0, %v2041
      %v2043 = vpop.f32.mrb[0].mxu0
      %2044 = vmatprep.mubr.bf16.mxu0 0
      %2045 = vmatmul.mubr.bf16.gmra.mrb[0].mxu0 %v1078
      %v2046 = vpop.f32.mrb[0].mxu0
      %v2047 = vadd.f32 0.0, %v2046
      %v2048 = vpop.f32.mrb[0].mxu0
      %v2049 = vpop.f32.mrb[0].mxu0
      %v2050 = vadd.f32 0.0, %v2049
      %v2051 = vpop.f32.mrb[0].mxu0
      %2052 = vmatprep.mubr.bf16.mxu0 0
      %2053 = vmatmul.mubr.bf16.gmra.mrb[0].mxu0 %v1079
      %v2054 = vpop.f32.mrb[0].mxu0
      %v2055 = vadd.f32 0.0, %v2054
      %v2056 = vpop.f32.mrb[0].mxu0
      %v2057 = vpop.f32.mrb[0].mxu0
      %v2058 = vadd.f32 0.0, %v2057
      %v2059 = vpop.f32.mrb[0].mxu0
      %2060 = vmatprep.mubr.bf16.mxu0 0
      %2061 = vmatmul.mubr.bf16.gmra.mrb[0].mxu0 %v1080
      %v2062 = vpop.f32.mrb[0].mxu0
      %v2063 = vadd.f32 0.0, %v2062
      %v2064 = vpop.f32.mrb[0].mxu0
      %v2065 = vpop.f32.mrb[0].mxu0
      %v2066 = vadd.f32 0.0, %v2065
      %v2067 = vpop.f32.mrb[0].mxu0
      %2068 = vmatprep.mubr.bf16.mxu0 0
      %2069 = vmatmul.mubr.bf16.gmra.mrb[0].mxu0 %v1081
      %v2070 = vpop.f32.mrb[0].mxu0
      %v2071 = vadd.f32 0.0, %v2070
      %v2072 = vpop.f32.mrb[0].mxu0
      %v2073 = vpop.f32.mrb[0].mxu0
      %v2074 = vadd.f32 0.0, %v2073
      %v2075 = vpop.f32.mrb[0].mxu0
      %2076 = vmatprep.mubr.bf16.mxu0 0
      %2077 = vmatmul.mubr.bf16.gmra.mrb[0].mxu0 %v1082
      %v2078 = vpop.f32.mrb[0].mxu0
      %v2079 = vadd.f32 0.0, %v2078
      %v2080 = vpop.f32.mrb[0].mxu0
      %v2081 = vpop.f32.mrb[0].mxu0
      %v2082 = vadd.f32 0.0, %v2081
      %v2083 = vpop.f32.mrb[0].mxu0
      %2084 = vmatprep.mubr.bf16.mxu0 0
      %2085 = vmatmul.mubr.bf16.gmra.mrb[0].mxu0 %v1083
      %v2086 = vpop.f32.mrb[0].mxu0
      %v2087 = vadd.f32 0.0, %v2086
      %v2088 = vpop.f32.mrb[0].mxu0
      %v2089 = vpop.f32.mrb[0].mxu0
      %v2090 = vadd.f32 0.0, %v2089
      %v2091 = vpop.f32.mrb[0].mxu0
      %2092 = vmatprep.mubr.bf16.mxu0 0
      %2093 = vmatmul.mubr.bf16.gmra.mrb[0].mxu0 %v1084
      %v2094 = vpop.f32.mrb[0].mxu0
      %v2095 = vadd.f32 0.0, %v2094
      %v2096 = vpop.f32.mrb[0].mxu0
      %v2097 = vpop.f32.mrb[0].mxu0
      %v2098 = vadd.f32 0.0, %v2097
      %v2099 = vpop.f32.mrb[0].mxu0
      %2100 = vmatprep.mubr.bf16.mxu0 0
      %2101 = vmatmul.mubr.bf16.gmra.mrb[0].mxu0 %v1085
      %v2102 = vpop.f32.mrb[0].mxu0
      %v2103 = vadd.f32 0.0, %v2102
      %v2104 = vpop.f32.mrb[0].mxu0
      %v2105 = vpop.f32.mrb[0].mxu0
      %v2106 = vadd.f32 0.0, %v2105
      %v2107 = vpop.f32.mrb[0].mxu0
      %2108 = vmatprep.mubr.bf16.mxu0 0
      %2109 = vmatmul.mubr.bf16.gmra.mrb[0].mxu0 %v1086
      %v2110 = vpop.f32.mrb[0].mxu0
      %v2111 = vadd.f32 0.0, %v2110
      %v2112 = vpop.f32.mrb[0].mxu0
      %v2113 = vpop.f32.mrb[0].mxu0
      %v2114 = vadd.f32 0.0, %v2113
      %v2115 = vpop.f32.mrb[0].mxu0
      %2116 = vmatprep.mubr.bf16.mxu0 0
      %2117 = vmatmul.mubr.bf16.gmra.mrb[0].mxu0 %v1087
      %v2118 = vpop.f32.mrb[0].mxu0
      %v2119 = vadd.f32 0.0, %v2118
      %v2120 = vpop.f32.mrb[0].mxu0
      %v2121 = vpop.f32.mrb[0].mxu0
      %v2122 = vadd.f32 0.0, %v2121
      %v2123 = vpop.f32.mrb[0].mxu0
      %2124 = vmatprep.mubr.bf16.mxu0 0
      %2125 = vmatmul.mubr.bf16.gmra.mrb[0].mxu0 %v1088
      %v2126 = vpop.f32.mrb[0].mxu0
      %v2127 = vadd.f32 0.0, %v2126
      %v2128 = vpop.f32.mrb[0].mxu0
      %v2129 = vpop.f32.mrb[0].mxu0
      %v2130 = vadd.f32 0.0, %v2129
      %v2131 = vpop.f32.mrb[0].mxu0
      %2132 = vmatprep.mubr.bf16.mxu0 0
      %2133 = vmatmul.mubr.bf16.gmra.mrb[0].mxu0 %v1089
      %v2134 = vpop.f32.mrb[0].mxu0
      %v2135 = vadd.f32 0.0, %v2134
      %v2136 = vpop.f32.mrb[0].mxu0
      %v2137 = vpop.f32.mrb[0].mxu0
      %v2138 = vadd.f32 0.0, %v2137
      %v2139 = vpop.f32.mrb[0].mxu0
      %2140 = vmatprep.mubr.bf16.mxu0 0
      %2141 = vmatmul.mubr.bf16.gmra.mrb[0].mxu0 %v1090
      %v2142 = vpop.f32.mrb[0].mxu0
      %v2143 = vadd.f32 0.0, %v2142
      %v2144 = vpop.f32.mrb[0].mxu0
      %v2145 = vpop.f32.mrb[0].mxu0
      %v2146 = vadd.f32 0.0, %v2145
      %v2147 = vpop.f32.mrb[0].mxu0
      %2148 = vmatprep.mubr.bf16.mxu0 0
      %2149 = vmatmul.mubr.bf16.gmra.mrb[0].mxu0 %v1091
      %v2150 = vpop.f32.mrb[0].mxu0
      %v2151 = vadd.f32 0.0, %v2150
      %v2152 = vpop.f32.mrb[0].mxu0
      %v2153 = vpop.f32.mrb[0].mxu0
      %v2154 = vadd.f32 0.0, %v2153
      %v2155 = vpop.f32.mrb[0].mxu0
      %2156 = vmatprep.mubr.bf16.mxu0 0
      %2157 = vmatmul.mubr.bf16.gmra.mrb[0].mxu0 %v1092
      %v2158 = vpop.f32.mrb[0].mxu0
      %v2159 = vadd.f32 0.0, %v2158
      %v2160 = vpop.f32.mrb[0].mxu0
      %v2161 = vpop.f32.mrb[0].mxu0
      %v2162 = vadd.f32 0.0, %v2161
      %v2163 = vpop.f32.mrb[0].mxu0
      %2164 = vmatprep.mubr.bf16.mxu0 0
      %2165 = vmatmul.mubr.bf16.gmra.mrb[0].mxu0 %v1093
      %v2166 = vpop.f32.mrb[0].mxu0
      %v2167 = vadd.f32 0.0, %v2166
      %v2168 = vpop.f32.mrb[0].mxu0
      %v2169 = vpop.f32.mrb[0].mxu0
      %v2170 = vadd.f32 0.0, %v2169
      %v2171 = vpop.f32.mrb[0].mxu0
      %2172 = vmatprep.mubr.bf16.mxu0 0
      %2173 = vmatmul.mubr.bf16.gmra.mrb[0].mxu0 %v1094
      %v2174 = vpop.f32.mrb[0].mxu0
      %v2175 = vadd.f32 0.0, %v2174
      %v2176 = vpop.f32.mrb[0].mxu0
      %v2177 = vpop.f32.mrb[0].mxu0
      %v2178 = vadd.f32 0.0, %v2177
      %v2179 = vpop.f32.mrb[0].mxu0
      %2180 = vmatprep.mubr.bf16.mxu0 0
      %2181 = vmatmul.mubr.bf16.gmra.mrb[0].mxu0 %v1095
      %v2182 = vpop.f32.mrb[0].mxu0
      %v2183 = vadd.f32 0.0, %v2182
      %v2184 = vpop.f32.mrb[0].mxu0
      %v2185 = vpop.f32.mrb[0].mxu0
      %v2186 = vadd.f32 0.0, %v2185
      %v2187 = vpop.f32.mrb[0].mxu0
      %2188 = vmatprep.mubr.bf16.mxu0 0
      %2189 = vmatmul.mubr.bf16.gmra.mrb[0].mxu0 %v1096
      %v2190 = vpop.f32.mrb[0].mxu0
      %v2191 = vadd.f32 0.0, %v2190
      %v2192 = vpop.f32.mrb[0].mxu0
      %v2193 = vpop.f32.mrb[0].mxu0
      %v2194 = vadd.f32 0.0, %v2193
      %v2195 = vpop.f32.mrb[0].mxu0
      %2196 = vmatprep.mubr.bf16.mxu0 0
      %2197 = vmatmul.mubr.bf16.gmra.mrb[0].mxu0 %v1097
      %v2198 = vpop.f32.mrb[0].mxu0
      %v2199 = vadd.f32 0.0, %v2198
      %v2200 = vpop.f32.mrb[0].mxu0
      %v2201 = vpop.f32.mrb[0].mxu0
      %v2202 = vadd.f32 0.0, %v2201
      %v2203 = vpop.f32.mrb[0].mxu0
      %2204 = vmatprep.mubr.bf16.mxu0 0
      %2205 = vmatmul.mubr.bf16.gmra.mrb[0].mxu0 %v1098
      %v2206 = vpop.f32.mrb[0].mxu0
      %v2207 = vadd.f32 0.0, %v2206
      %v2208 = vpop.f32.mrb[0].mxu0
      %v2209 = vpop.f32.mrb[0].mxu0
      %v2210 = vadd.f32 0.0, %v2209
      %v2211 = vpop.f32.mrb[0].mxu0
      %2212 = vmatprep.mubr.bf16.mxu0 0
      %2213 = vmatmul.mubr.bf16.gmra.mrb[0].mxu0 %v1099
      %v2214 = vpop.f32.mrb[0].mxu0
      %v2215 = vadd.f32 0.0, %v2214
      %v2216 = vpop.f32.mrb[0].mxu0
      %v2217 = vpop.f32.mrb[0].mxu0
      %v2218 = vadd.f32 0.0, %v2217
      %v2219 = vpop.f32.mrb[0].mxu0
      %2220 = vmatprep.mubr.bf16.mxu0 0
      %2221 = vmatmul.mubr.bf16.gmra.mrb[0].mxu0 %v1100
      %v2222 = vpop.f32.mrb[0].mxu0
      %v2223 = vadd.f32 0.0, %v2222
      %v2224 = vpop.f32.mrb[0].mxu0
      %v2225 = vpop.f32.mrb[0].mxu0
      %v2226 = vadd.f32 0.0, %v2225
      %v2227 = vpop.f32.mrb[0].mxu0
      %2228 = vmatprep.mubr.bf16.mxu0 0
      %2229 = vmatmul.mubr.bf16.gmra.mrb[0].mxu0 %v1101
      %v2230 = vpop.f32.mrb[0].mxu0
      %v2231 = vadd.f32 0.0, %v2230
      %v2232 = vpop.f32.mrb[0].mxu0
      %v2233 = vpop.f32.mrb[0].mxu0
      %v2234 = vadd.f32 0.0, %v2233
      %v2235 = vpop.f32.mrb[0].mxu0
      %2236 = vmatprep.mubr.bf16.mxu0 0
      %2237 = vmatmul.mubr.bf16.gmra.mrb[0].mxu0 %v1102
      %v2238 = vpop.f32.mrb[0].mxu0
      %v2239 = vadd.f32 0.0, %v2238
      %v2240 = vpop.f32.mrb[0].mxu0
      %v2241 = vpop.f32.mrb[0].mxu0
      %v2242 = vadd.f32 0.0, %v2241
      %v2243 = vpop.f32.mrb[0].mxu0
      %2244 = vmatprep.mubr.bf16.mxu0 0
      %2245 = vmatmul.mubr.bf16.gmra.mrb[0].mxu0 %v1103
      %v2246 = vpop.f32.mrb[0].mxu0
      %v2247 = vadd.f32 0.0, %v2246
      %v2248 = vpop.f32.mrb[0].mxu0
      %v2249 = vpop.f32.mrb[0].mxu0
      %v2250 = vadd.f32 0.0, %v2249
      %v2251 = vpop.f32.mrb[0].mxu0
      %2252 = vmatprep.mubr.bf16.mxu0 0
      %2253 = vmatmul.mubr.bf16.gmra.mrb[0].mxu0 %v1104
      %v2254 = vpop.f32.mrb[0].mxu0
      %v2255 = vadd.f32 0.0, %v2254
      %v2256 = vpop.f32.mrb[0].mxu0
      %v2257 = vpop.f32.mrb[0].mxu0
      %v2258 = vadd.f32 0.0, %v2257
      %v2259 = vpop.f32.mrb[0].mxu0
      %2260 = vmatprep.mubr.bf16.mxu0 0
      %2261 = vmatmul.mubr.bf16.gmra.mrb[0].mxu0 %v1105
      %v2262 = vpop.f32.mrb[0].mxu0
      %v2263 = vadd.f32 0.0, %v2262
      %v2264 = vpop.f32.mrb[0].mxu0
      %v2265 = vpop.f32.mrb[0].mxu0
      %v2266 = vadd.f32 0.0, %v2265
      %v2267 = vpop.f32.mrb[0].mxu0
      %2268 = vmatprep.mubr.bf16.mxu0 0
      %2269 = vmatmul.mubr.bf16.gmra.mrb[0].mxu0 %v1106
      %v2270 = vpop.f32.mrb[0].mxu0
      %v2271 = vadd.f32 0.0, %v2270
      %v2272 = vpop.f32.mrb[0].mxu0
      %v2273 = vpop.f32.mrb[0].mxu0
      %v2274 = vadd.f32 0.0, %v2273
      %v2275 = vpop.f32.mrb[0].mxu0
      %2276 = vmatprep.mubr.bf16.mxu0 0
      %2277 = vmatmul.mubr.bf16.gmra.mrb[0].mxu0 %v1107
      %v2278 = vpop.f32.mrb[0].mxu0
      %v2279 = vadd.f32 0.0, %v2278
      %v2280 = vpop.f32.mrb[0].mxu0
      %v2281 = vpop.f32.mrb[0].mxu0
      %v2282 = vadd.f32 0.0, %v2281
      %v2283 = vpop.f32.mrb[0].mxu0
      %2284 = vmatprep.mubr.bf16.mxu0 0
      %2285 = vmatmul.mubr.bf16.gmra.mrb[0].mxu0 %v1108
      %v2286 = vpop.f32.mrb[0].mxu0
      %v2287 = vadd.f32 0.0, %v2286
      %v2288 = vpop.f32.mrb[0].mxu0
      %v2289 = vpop.f32.mrb[0].mxu0
      %v2290 = vadd.f32 0.0, %v2289
      %v2291 = vpop.f32.mrb[0].mxu0
      %2292 = vmatprep.mubr.bf16.mxu0 0
      %2293 = vmatmul.mubr.bf16.gmra.mrb[0].mxu0 %v1109
      %v2294 = vpop.f32.mrb[0].mxu0
      %v2295 = vadd.f32 0.0, %v2294
      %v2296 = vpop.f32.mrb[0].mxu0
      %v2297 = vpop.f32.mrb[0].mxu0
      %v2298 = vadd.f32 0.0, %v2297
      %v2299 = vpop.f32.mrb[0].mxu0
      %2300 = vmatprep.mubr.bf16.mxu0 0
      %2301 = vmatmul.mubr.bf16.gmra.mrb[0].mxu0 %v1110
      %v2302 = vpop.f32.mrb[0].mxu0
      %v2303 = vadd.f32 0.0, %v2302
      %v2304 = vpop.f32.mrb[0].mxu0
      %v2305 = vpop.f32.mrb[0].mxu0
      %v2306 = vadd.f32 0.0, %v2305
      %v2307 = vpop.f32.mrb[0].mxu0
      %2308 = vmatprep.mubr.bf16.mxu0 0
      %2309 = vmatmul.mubr.bf16.gmra.mrb[0].mxu0 %v1111
      %v2310 = vpop.f32.mrb[0].mxu0
      %v2311 = vadd.f32 0.0, %v2310
      %v2312 = vpop.f32.mrb[0].mxu0
      %v2313 = vpop.f32.mrb[0].mxu0
      %v2314 = vadd.f32 0.0, %v2313
      %v2315 = vpop.f32.mrb[0].mxu0
      %2316 = vmatprep.mubr.bf16.mxu0 0
      %2317 = vmatmul.mubr.bf16.gmra.mrb[0].mxu0 %v1112
      %v2318 = vpop.f32.mrb[0].mxu0
      %v2319 = vadd.f32 0.0, %v2318
      %v2320 = vpop.f32.mrb[0].mxu0
      %v2321 = vpop.f32.mrb[0].mxu0
      %v2322 = vadd.f32 0.0, %v2321
      %v2323 = vpop.f32.mrb[0].mxu0
      %2324 = vmatprep.mubr.bf16.mxu0 0
      %2325 = vmatmul.mubr.bf16.gmra.mrb[0].mxu0 %v1113
      %v2326 = vpop.f32.mrb[0].mxu0
      %v2327 = vadd.f32 0.0, %v2326
      %v2328 = vpop.f32.mrb[0].mxu0
      %v2329 = vpop.f32.mrb[0].mxu0
      %v2330 = vadd.f32 0.0, %v2329
      %v2331 = vpop.f32.mrb[0].mxu0
      %2332 = vmatprep.mubr.bf16.mxu0 0
      %2333 = vmatmul.mubr.bf16.gmra.mrb[0].mxu0 %v1114
      %v2334 = vpop.f32.mrb[0].mxu0
      %v2335 = vadd.f32 0.0, %v2334
      %v2336 = vpop.f32.mrb[0].mxu0
      %v2337 = vpop.f32.mrb[0].mxu0
      %v2338 = vadd.f32 0.0, %v2337
      %v2339 = vpop.f32.mrb[0].mxu0
      %2340 = vmatprep.mubr.bf16.mxu0 0
      %2341 = vmatmul.mubr.bf16.gmra.mrb[0].mxu0 %v1115
      %v2342 = vpop.f32.mrb[0].mxu0
      %v2343 = vadd.f32 0.0, %v2342
      %v2344 = vpop.f32.mrb[0].mxu0
      %v2345 = vpop.f32.mrb[0].mxu0
      %v2346 = vadd.f32 0.0, %v2345
      %v2347 = vpop.f32.mrb[0].mxu0
      %2348 = vdwg.mxu0
      %v2349 = vtanh.pop %v1327
      %v2350 = vtanh.pop %v1330
      %v2351 = vtanh.pop %v1335
      %v2352 = vtanh.pop %v1338
      %v2353 = vtanh.pop %v1343
      %v2354 = vtanh.pop %v1346
      %v2355 = vtanh.pop %v1351
      %v2356 = vtanh.pop %v1354
      %v2357 = vtanh.pop %v1359
      %v2358 = vtanh.pop %v1362
      %v2359 = vtanh.pop %v1367
      %v2360 = vtanh.pop %v1370
      %v2361 = vtanh.pop %v1375
      %v2362 = vtanh.pop %v1378
      %v2363 = vtanh.pop %v1383
      %v2364 = vtanh.pop %v1386
      %v2365 = vtanh.pop %v1391
      %v2366 = vtanh.pop %v1394
      %v2367 = vtanh.pop %v1399
      %v2368 = vtanh.pop %v1402
      %v2369 = vtanh.pop %v1407
      %v2370 = vtanh.pop %v1410
      %v2371 = vtanh.pop %v1415
      %v2372 = vtanh.pop %v1418
      %v2373 = vtanh.pop %v1423
      %v2374 = vtanh.pop %v1426
      %v2375 = vtanh.pop %v1431
      %v2376 = vtanh.pop %v1434
      %v2377 = vtanh.pop %v1439
      %v2378 = vtanh.pop %v1442
      %v2379 = vtanh.pop %v1447
      %v2380 = vtanh.pop %v1450
      %v2381 = vtanh.pop %v1455
      %v2382 = vtanh.pop %v1458
      %v2383 = vtanh.pop %v1463
      %v2384 = vtanh.pop %v1466
      %v2385 = vtanh.pop %v1471
      %v2386 = vtanh.pop %v1474
      %v2387 = vtanh.pop %v1479
      %v2388 = vtanh.pop %v1482
      %v2389 = vtanh.pop %v1487
      %v2390 = vtanh.pop %v1490
      %v2391 = vtanh.pop %v1495
      %v2392 = vtanh.pop %v1498
      %v2393 = vtanh.pop %v1503
      %v2394 = vtanh.pop %v1506
      %v2395 = vtanh.pop %v1511
      %v2396 = vtanh.pop %v1514
      %v2397 = vtanh.pop %v1519
      %v2398 = vtanh.pop %v1522
      %v2399 = vtanh.pop %v1527
      %v2400 = vtanh.pop %v1530
      %v2401 = vtanh.pop %v1535
      %v2402 = vtanh.pop %v1538
      %v2403 = vtanh.pop %v1543
      %v2404 = vtanh.pop %v1546
      %v2405 = vtanh.pop %v1551
      %v2406 = vtanh.pop %v1554
      %v2407 = vtanh.pop %v1559
      %v2408 = vtanh.pop %v1562
      %v2409 = vtanh.pop %v1567
      %v2410 = vtanh.pop %v1570
      %v2411 = vtanh.pop %v1575
      %v2412 = vtanh.pop %v1578
      %v2413 = vtanh.pop %v1583
      %v2414 = vtanh.pop %v1586
      %v2415 = vtanh.pop %v1591
      %v2416 = vtanh.pop %v1594
      %v2417 = vtanh.pop %v1599
      %v2418 = vtanh.pop %v1602
      %v2419 = vtanh.pop %v1607
      %v2420 = vtanh.pop %v1610
      %v2421 = vtanh.pop %v1615
      %v2422 = vtanh.pop %v1618
      %v2423 = vtanh.pop %v1623
      %v2424 = vtanh.pop %v1626
      %v2425 = vtanh.pop %v1631
      %v2426 = vtanh.pop %v1634
      %v2427 = vtanh.pop %v1639
      %v2428 = vtanh.pop %v1642
      %v2429 = vtanh.pop %v1647
      %v2430 = vtanh.pop %v1650
      %v2431 = vtanh.pop %v1655
      %v2432 = vtanh.pop %v1658
      %v2433 = vtanh.pop %v1663
      %v2434 = vtanh.pop %v1666
      %v2435 = vtanh.pop %v1671
      %v2436 = vtanh.pop %v1674
      %v2437 = vtanh.pop %v1679
      %v2438 = vtanh.pop %v1682
      %v2439 = vtanh.pop %v1687
      %v2440 = vtanh.pop %v1690
      %v2441 = vtanh.pop %v1695
      %v2442 = vtanh.pop %v1698
      %v2443 = vtanh.pop %v1703
      %v2444 = vtanh.pop %v1706
      %v2445 = vtanh.pop %v1711
      %v2446 = vtanh.pop %v1714
      %v2447 = vtanh.pop %v1719
      %v2448 = vtanh.pop %v1722
      %v2449 = vtanh.pop %v1727
      %v2450 = vtanh.pop %v1730
      %v2451 = vtanh.pop %v1735
      %v2452 = vtanh.pop %v1738
      %v2453 = vtanh.pop %v1743
      %v2454 = vtanh.pop %v1746
      %v2455 = vtanh.pop %v1751
      %v2456 = vtanh.pop %v1754
      %v2457 = vtanh.pop %v1759
      %v2458 = vtanh.pop %v1762
      %v2459 = vtanh.pop %v1767
      %v2460 = vtanh.pop %v1770
      %v2461 = vtanh.pop %v1775
      %v2462 = vtanh.pop %v1778
      %v2463 = vtanh.pop %v1783
      %v2464 = vtanh.pop %v1786
      %v2465 = vtanh.pop %v1791
      %v2466 = vtanh.pop %v1794
      %v2467 = vtanh.pop %v1799
      %v2468 = vtanh.pop %v1802
      %v2469 = vtanh.pop %v1807
      %v2470 = vtanh.pop %v1810
      %v2471 = vtanh.pop %v1815
      %v2472 = vtanh.pop %v1818
      %v2473 = vtanh.pop %v1823
      %v2474 = vtanh.pop %v1826
      %v2475 = vtanh.pop %v1831
      %v2476 = vtanh.pop %v1834
      %v2477 = vtanh.pop %v1839
      %v2478 = vtanh.pop %v1842
      %v2479 = vtanh.pop %v1847
      %v2480 = vtanh.pop %v1850
      %v2481 = vtanh.pop %v1855
      %v2482 = vtanh.pop %v1858
      %v2483 = vtanh.pop %v1863
      %v2484 = vtanh.pop %v1866
      %v2485 = vtanh.pop %v1871
      %v2486 = vtanh.pop %v1874
      %v2487 = vtanh.pop %v1879
      %v2488 = vtanh.pop %v1882
      %v2489 = vtanh.pop %v1887
      %v2490 = vtanh.pop %v1890
      %v2491 = vtanh.pop %v1895
      %v2492 = vtanh.pop %v1898
      %v2493 = vtanh.pop %v1903
      %v2494 = vtanh.pop %v1906
      %v2495 = vtanh.pop %v1911
      %v2496 = vtanh.pop %v1914
      %v2497 = vtanh.pop %v1919
      %v2498 = vtanh.pop %v1922
      %v2499 = vtanh.pop %v1927
      %v2500 = vtanh.pop %v1930
      %v2501 = vtanh.pop %v1935
      %v2502 = vtanh.pop %v1938
      %v2503 = vtanh.pop %v1943
      %v2504 = vtanh.pop %v1946
      %v2505 = vtanh.pop %v1951
      %v2506 = vtanh.pop %v1954
      %v2507 = vtanh.pop %v1959
      %v2508 = vtanh.pop %v1962
      %v2509 = vtanh.pop %v1967
      %v2510 = vtanh.pop %v1970
      %v2511 = vtanh.pop %v1975
      %v2512 = vtanh.pop %v1978
      %v2513 = vtanh.pop %v1983
      %v2514 = vtanh.pop %v1986
      %v2515 = vtanh.pop %v1991
      %v2516 = vtanh.pop %v1994
      %v2517 = vtanh.pop %v1999
      %v2518 = vtanh.pop %v2002
      %v2519 = vtanh.pop %v2007
      %v2520 = vtanh.pop %v2010
      %v2521 = vtanh.pop %v2015
      %v2522 = vtanh.pop %v2018
      %v2523 = vtanh.pop %v2023
      %v2524 = vtanh.pop %v2026
      %v2525 = vtanh.pop %v2031
      %v2526 = vtanh.pop %v2034
      %v2527 = vtanh.pop %v2039
      %v2528 = vtanh.pop %v2042
      %v2529 = vtanh.pop %v2047
      %v2530 = vtanh.pop %v2050
      %v2531 = vtanh.pop %v2055
      %v2532 = vtanh.pop %v2058
      %v2533 = vtanh.pop %v2063
      %v2534 = vtanh.pop %v2066
      %v2535 = vtanh.pop %v2071
      %v2536 = vtanh.pop %v2074
      %v2537 = vtanh.pop %v2079
      %v2538 = vtanh.pop %v2082
      %v2539 = vtanh.pop %v2087
      %v2540 = vtanh.pop %v2090
      %v2541 = vtanh.pop %v2095
      %v2542 = vtanh.pop %v2098
      %v2543 = vtanh.pop %v2103
      %v2544 = vtanh.pop %v2106
      %v2545 = vtanh.pop %v2111
      %v2546 = vtanh.pop %v2114
      %v2547 = vtanh.pop %v2119
      %v2548 = vtanh.pop %v2122
      %v2549 = vtanh.pop %v2127
      %v2550 = vtanh.pop %v2130
      %v2551 = vtanh.pop %v2135
      %v2552 = vtanh.pop %v2138
      %v2553 = vtanh.pop %v2143
      %v2554 = vtanh.pop %v2146
      %v2555 = vtanh.pop %v2151
      %v2556 = vtanh.pop %v2154
      %v2557 = vtanh.pop %v2159
      %v2558 = vtanh.pop %v2162
      %v2559 = vtanh.pop %v2167
      %v2560 = vtanh.pop %v2170
      %v2561 = vtanh.pop %v2175
      %v2562 = vtanh.pop %v2178
      %v2563 = vtanh.pop %v2183
      %v2564 = vtanh.pop %v2186
      %v2565 = vtanh.pop %v2191
      %v2566 = vtanh.pop %v2194
      %v2567 = vtanh.pop %v2199
      %v2568 = vtanh.pop %v2202
      %v2569 = vtanh.pop %v2207
      %v2570 = vtanh.pop %v2210
      %v2571 = vtanh.pop %v2215
      %v2572 = vtanh.pop %v2218
      %v2573 = vtanh.pop %v2223
      %v2574 = vtanh.pop %v2226
      %v2575 = vtanh.pop %v2231
      %v2576 = vtanh.pop %v2234
      %v2577 = vtanh.pop %v2239
      %v2578 = vtanh.pop %v2242
      %v2579 = vtanh.pop %v2247
      %v2580 = vtanh.pop %v2250
      %v2581 = vtanh.pop %v2255
      %v2582 = vtanh.pop %v2258
      %v2583 = vtanh.pop %v2263
      %v2584 = vtanh.pop %v2266
      %v2585 = vtanh.pop %v2271
      %v2586 = vtanh.pop %v2274
      %v2587 = vtanh.pop %v2279
      %v2588 = vtanh.pop %v2282
      %v2589 = vtanh.pop %v2287
      %v2590 = vtanh.pop %v2290
      %v2591 = vtanh.pop %v2295
      %v2592 = vtanh.pop %v2298
      %v2593 = vtanh.pop %v2303
      %v2594 = vtanh.pop %v2306
      %v2595 = vtanh.pop %v2311
      %v2596 = vtanh.pop %v2314
      %v2597 = vtanh.pop %v2319
      %v2598 = vtanh.pop %v2322
      %v2599 = vtanh.pop %v2327
      %v2600 = vtanh.pop %v2330
      %v2601 = vtanh.pop %v2335
      %v2602 = vtanh.pop %v2338
      %v2603 = vtanh.pop %v2343
      %v2604 = vtanh.pop %v2346
      %2605 = vst [vmem:[%s201] sm:$0xff] %v2349
      %2606 = vst [vmem:[%s201 + $0x8] sm:$0xff] %v2350
      %2607 = vst [vmem:[%s201 + $0x10] sm:$0xff] %v2351
      %2608 = vst [vmem:[%s201 + $0x18] sm:$0xff] %v2352
      %2609 = vst [vmem:[%s201 + $0x20] sm:$0xff] %v2353
      %2610 = vst [vmem:[%s201 + $0x28] sm:$0xff] %v2354
      %2611 = vst [vmem:[%s201 + $0x30] sm:$0xff] %v2355
      %2612 = vst [vmem:[%s201 + $0x38] sm:$0xff] %v2356
      %2613 = vst [vmem:[%s201 + $0x40] sm:$0xff] %v2357
      %2614 = vst [vmem:[%s201 + $0x48] sm:$0xff] %v2358
      %2615 = vst [vmem:[%s201 + $0x50] sm:$0xff] %v2359
      %2616 = vst [vmem:[%s201 + $0x58] sm:$0xff] %v2360
      %2617 = vst [vmem:[%s201 + $0x60] sm:$0xff] %v2361
      %2618 = vst [vmem:[%s201 + $0x68] sm:$0xff] %v2362
      %2619 = vst [vmem:[%s201 + $0x70] sm:$0xff] %v2363
      %2620 = vst [vmem:[%s201 + $0x78] sm:$0xff] %v2364
      %2621 = vst [vmem:[%s201 + $0x80] sm:$0xff] %v2365
      %2622 = vst [vmem:[%s201 + $0x88] sm:$0xff] %v2366
      %2623 = vst [vmem:[%s201 + $0x90] sm:$0xff] %v2367
      %2624 = vst [vmem:[%s201 + $0x98] sm:$0xff] %v2368
      %2625 = vst [vmem:[%s201 + $0xa0] sm:$0xff] %v2369
      %2626 = vst [vmem:[%s201 + $0xa8] sm:$0xff] %v2370
      %2627 = vst [vmem:[%s201 + $0xb0] sm:$0xff] %v2371
      %2628 = vst [vmem:[%s201 + $0xb8] sm:$0xff] %v2372
      %2629 = vst [vmem:[%s201 + $0xc0] sm:$0xff] %v2373
      %2630 = vst [vmem:[%s201 + $0xc8] sm:$0xff] %v2374
      %2631 = vst [vmem:[%s201 + $0xd0] sm:$0xff] %v2375
      %2632 = vst [vmem:[%s201 + $0xd8] sm:$0xff] %v2376
      %2633 = vst [vmem:[%s201 + $0xe0] sm:$0xff] %v2377
      %2634 = vst [vmem:[%s201 + $0xe8] sm:$0xff] %v2378
      %2635 = vst [vmem:[%s201 + $0xf0] sm:$0xff] %v2379
      %2636 = vst [vmem:[%s201 + $0xf8] sm:$0xff] %v2380
      %2637 = vst [vmem:[%s201 + $0x100] sm:$0xff] %v2381
      %2638 = vst [vmem:[%s201 + $0x108] sm:$0xff] %v2382
      %2639 = vst [vmem:[%s201 + $0x110] sm:$0xff] %v2383
      %2640 = vst [vmem:[%s201 + $0x118] sm:$0xff] %v2384
      %2641 = vst [vmem:[%s201 + $0x120] sm:$0xff] %v2385
      %2642 = vst [vmem:[%s201 + $0x128] sm:$0xff] %v2386
      %2643 = vst [vmem:[%s201 + $0x130] sm:$0xff] %v2387
      %2644 = vst [vmem:[%s201 + $0x138] sm:$0xff] %v2388
      %2645 = vst [vmem:[%s201 + $0x140] sm:$0xff] %v2389
      %2646 = vst [vmem:[%s201 + $0x148] sm:$0xff] %v2390
      %2647 = vst [vmem:[%s201 + $0x150] sm:$0xff] %v2391
      %2648 = vst [vmem:[%s201 + $0x158] sm:$0xff] %v2392
      %2649 = vst [vmem:[%s201 + $0x160] sm:$0xff] %v2393
      %2650 = vst [vmem:[%s201 + $0x168] sm:$0xff] %v2394
      %2651 = vst [vmem:[%s201 + $0x170] sm:$0xff] %v2395
      %2652 = vst [vmem:[%s201 + $0x178] sm:$0xff] %v2396
      %2653 = vst [vmem:[%s201 + $0x180] sm:$0xff] %v2397
      %2654 = vst [vmem:[%s201 + $0x188] sm:$0xff] %v2398
      %2655 = vst [vmem:[%s201 + $0x190] sm:$0xff] %v2399
      %2656 = vst [vmem:[%s201 + $0x198] sm:$0xff] %v2400
      %2657 = vst [vmem:[%s201 + $0x1a0] sm:$0xff] %v2401
      %2658 = vst [vmem:[%s201 + $0x1a8] sm:$0xff] %v2402
      %2659 = vst [vmem:[%s201 + $0x1b0] sm:$0xff] %v2403
      %2660 = vst [vmem:[%s201 + $0x1b8] sm:$0xff] %v2404
      %2661 = vst [vmem:[%s201 + $0x1c0] sm:$0xff] %v2405
      %2662 = vst [vmem:[%s201 + $0x1c8] sm:$0xff] %v2406
      %2663 = vst [vmem:[%s201 + $0x1d0] sm:$0xff] %v2407
      %2664 = vst [vmem:[%s201 + $0x1d8] sm:$0xff] %v2408
      %2665 = vst [vmem:[%s201 + $0x1e0] sm:$0xff] %v2409
      %2666 = vst [vmem:[%s201 + $0x1e8] sm:$0xff] %v2410
      %2667 = vst [vmem:[%s201 + $0x1f0] sm:$0xff] %v2411
      %2668 = vst [vmem:[%s201 + $0x1f8] sm:$0xff] %v2412
      %2669 = vst [vmem:[%s201 + $0x200] sm:$0xff] %v2413
      %2670 = vst [vmem:[%s201 + $0x208] sm:$0xff] %v2414
      %2671 = vst [vmem:[%s201 + $0x210] sm:$0xff] %v2415
      %2672 = vst [vmem:[%s201 + $0x218] sm:$0xff] %v2416
      %2673 = vst [vmem:[%s201 + $0x220] sm:$0xff] %v2417
      %2674 = vst [vmem:[%s201 + $0x228] sm:$0xff] %v2418
      %2675 = vst [vmem:[%s201 + $0x230] sm:$0xff] %v2419
      %2676 = vst [vmem:[%s201 + $0x238] sm:$0xff] %v2420
      %2677 = vst [vmem:[%s201 + $0x240] sm:$0xff] %v2421
      %2678 = vst [vmem:[%s201 + $0x248] sm:$0xff] %v2422
      %2679 = vst [vmem:[%s201 + $0x250] sm:$0xff] %v2423
      %2680 = vst [vmem:[%s201 + $0x258] sm:$0xff] %v2424
      %2681 = vst [vmem:[%s201 + $0x260] sm:$0xff] %v2425
      %2682 = vst [vmem:[%s201 + $0x268] sm:$0xff] %v2426
      %2683 = vst [vmem:[%s201 + $0x270] sm:$0xff] %v2427
      %2684 = vst [vmem:[%s201 + $0x278] sm:$0xff] %v2428
      %2685 = vst [vmem:[%s201 + $0x280] sm:$0xff] %v2429
      %2686 = vst [vmem:[%s201 + $0x288] sm:$0xff] %v2430
      %2687 = vst [vmem:[%s201 + $0x290] sm:$0xff] %v2431
      %2688 = vst [vmem:[%s201 + $0x298] sm:$0xff] %v2432
      %2689 = vst [vmem:[%s201 + $0x2a0] sm:$0xff] %v2433
      %2690 = vst [vmem:[%s201 + $0x2a8] sm:$0xff] %v2434
      %2691 = vst [vmem:[%s201 + $0x2b0] sm:$0xff] %v2435
      %2692 = vst [vmem:[%s201 + $0x2b8] sm:$0xff] %v2436
      %2693 = vst [vmem:[%s201 + $0x2c0] sm:$0xff] %v2437
      %2694 = vst [vmem:[%s201 + $0x2c8] sm:$0xff] %v2438
      %2695 = vst [vmem:[%s201 + $0x2d0] sm:$0xff] %v2439
      %2696 = vst [vmem:[%s201 + $0x2d8] sm:$0xff] %v2440
      %2697 = vst [vmem:[%s201 + $0x2e0] sm:$0xff] %v2441
      %2698 = vst [vmem:[%s201 + $0x2e8] sm:$0xff] %v2442
      %2699 = vst [vmem:[%s201 + $0x2f0] sm:$0xff] %v2443
      %2700 = vst [vmem:[%s201 + $0x2f8] sm:$0xff] %v2444
      %2701 = vst [vmem:[%s201 + $0x300] sm:$0xff] %v2445
      %2702 = vst [vmem:[%s201 + $0x308] sm:$0xff] %v2446
      %2703 = vst [vmem:[%s201 + $0x310] sm:$0xff] %v2447
      %2704 = vst [vmem:[%s201 + $0x318] sm:$0xff] %v2448
      %2705 = vst [vmem:[%s201 + $0x320] sm:$0xff] %v2449
      %2706 = vst [vmem:[%s201 + $0x328] sm:$0xff] %v2450
      %2707 = vst [vmem:[%s201 + $0x330] sm:$0xff] %v2451
      %2708 = vst [vmem:[%s201 + $0x338] sm:$0xff] %v2452
      %2709 = vst [vmem:[%s201 + $0x340] sm:$0xff] %v2453
      %2710 = vst [vmem:[%s201 + $0x348] sm:$0xff] %v2454
      %2711 = vst [vmem:[%s201 + $0x350] sm:$0xff] %v2455
      %2712 = vst [vmem:[%s201 + $0x358] sm:$0xff] %v2456
      %2713 = vst [vmem:[%s201 + $0x360] sm:$0xff] %v2457
      %2714 = vst [vmem:[%s201 + $0x368] sm:$0xff] %v2458
      %2715 = vst [vmem:[%s201 + $0x370] sm:$0xff] %v2459
      %2716 = vst [vmem:[%s201 + $0x378] sm:$0xff] %v2460
      %2717 = vst [vmem:[%s201 + $0x380] sm:$0xff] %v2461
      %2718 = vst [vmem:[%s201 + $0x388] sm:$0xff] %v2462
      %2719 = vst [vmem:[%s201 + $0x390] sm:$0xff] %v2463
      %2720 = vst [vmem:[%s201 + $0x398] sm:$0xff] %v2464
      %2721 = vst [vmem:[%s201 + $0x3a0] sm:$0xff] %v2465
      %2722 = vst [vmem:[%s201 + $0x3a8] sm:$0xff] %v2466
      %2723 = vst [vmem:[%s201 + $0x3b0] sm:$0xff] %v2467
      %2724 = vst [vmem:[%s201 + $0x3b8] sm:$0xff] %v2468
      %2725 = vst [vmem:[%s201 + $0x3c0] sm:$0xff] %v2469
      %2726 = vst [vmem:[%s201 + $0x3c8] sm:$0xff] %v2470
      %2727 = vst [vmem:[%s201 + $0x3d0] sm:$0xff] %v2471
      %2728 = vst [vmem:[%s201 + $0x3d8] sm:$0xff] %v2472
      %2729 = vst [vmem:[%s201 + $0x3e0] sm:$0xff] %v2473
      %2730 = vst [vmem:[%s201 + $0x3e8] sm:$0xff] %v2474
      %2731 = vst [vmem:[%s201 + $0x3f0] sm:$0xff] %v2475
      %2732 = vst [vmem:[%s201 + $0x3f8] sm:$0xff] %v2476
      %2733 = vst [vmem:[%s201 + $0x400] sm:$0xff] %v2477
      %2734 = vst [vmem:[%s201 + $0x408] sm:$0xff] %v2478
      %2735 = vst [vmem:[%s201 + $0x410] sm:$0xff] %v2479
      %2736 = vst [vmem:[%s201 + $0x418] sm:$0xff] %v2480
      %2737 = vst [vmem:[%s201 + $0x420] sm:$0xff] %v2481
      %2738 = vst [vmem:[%s201 + $0x428] sm:$0xff] %v2482
      %2739 = vst [vmem:[%s201 + $0x430] sm:$0xff] %v2483
      %2740 = vst [vmem:[%s201 + $0x438] sm:$0xff] %v2484
      %2741 = vst [vmem:[%s201 + $0x440] sm:$0xff] %v2485
      %2742 = vst [vmem:[%s201 + $0x448] sm:$0xff] %v2486
      %2743 = vst [vmem:[%s201 + $0x450] sm:$0xff] %v2487
      %2744 = vst [vmem:[%s201 + $0x458] sm:$0xff] %v2488
      %2745 = vst [vmem:[%s201 + $0x460] sm:$0xff] %v2489
      %2746 = vst [vmem:[%s201 + $0x468] sm:$0xff] %v2490
      %2747 = vst [vmem:[%s201 + $0x470] sm:$0xff] %v2491
      %2748 = vst [vmem:[%s201 + $0x478] sm:$0xff] %v2492
      %2749 = vst [vmem:[%s201 + $0x480] sm:$0xff] %v2493
      %2750 = vst [vmem:[%s201 + $0x488] sm:$0xff] %v2494
      %2751 = vst [vmem:[%s201 + $0x490] sm:$0xff] %v2495
      %2752 = vst [vmem:[%s201 + $0x498] sm:$0xff] %v2496
      %2753 = vst [vmem:[%s201 + $0x4a0] sm:$0xff] %v2497
      %2754 = vst [vmem:[%s201 + $0x4a8] sm:$0xff] %v2498
      %2755 = vst [vmem:[%s201 + $0x4b0] sm:$0xff] %v2499
      %2756 = vst [vmem:[%s201 + $0x4b8] sm:$0xff] %v2500
      %2757 = vst [vmem:[%s201 + $0x4c0] sm:$0xff] %v2501
      %2758 = vst [vmem:[%s201 + $0x4c8] sm:$0xff] %v2502
      %2759 = vst [vmem:[%s201 + $0x4d0] sm:$0xff] %v2503
      %2760 = vst [vmem:[%s201 + $0x4d8] sm:$0xff] %v2504
      %2761 = vst [vmem:[%s201 + $0x4e0] sm:$0xff] %v2505
      %2762 = vst [vmem:[%s201 + $0x4e8] sm:$0xff] %v2506
      %2763 = vst [vmem:[%s201 + $0x4f0] sm:$0xff] %v2507
      %2764 = vst [vmem:[%s201 + $0x4f8] sm:$0xff] %v2508
      %2765 = vst [vmem:[%s201 + $0x500] sm:$0xff] %v2509
      %2766 = vst [vmem:[%s201 + $0x508] sm:$0xff] %v2510
      %2767 = vst [vmem:[%s201 + $0x510] sm:$0xff] %v2511
      %2768 = vst [vmem:[%s201 + $0x518] sm:$0xff] %v2512
      %2769 = vst [vmem:[%s201 + $0x520] sm:$0xff] %v2513
      %2770 = vst [vmem:[%s201 + $0x528] sm:$0xff] %v2514
      %2771 = vst [vmem:[%s201 + $0x530] sm:$0xff] %v2515
      %2772 = vst [vmem:[%s201 + $0x538] sm:$0xff] %v2516
      %2773 = vst [vmem:[%s201 + $0x540] sm:$0xff] %v2517
      %2774 = vst [vmem:[%s201 + $0x548] sm:$0xff] %v2518
      %2775 = vst [vmem:[%s201 + $0x550] sm:$0xff] %v2519
      %2776 = vst [vmem:[%s201 + $0x558] sm:$0xff] %v2520
      %2777 = vst [vmem:[%s201 + $0x560] sm:$0xff] %v2521
      %2778 = vst [vmem:[%s201 + $0x568] sm:$0xff] %v2522
      %2779 = vst [vmem:[%s201 + $0x570] sm:$0xff] %v2523
      %2780 = vst [vmem:[%s201 + $0x578] sm:$0xff] %v2524
      %2781 = vst [vmem:[%s201 + $0x580] sm:$0xff] %v2525
      %2782 = vst [vmem:[%s201 + $0x588] sm:$0xff] %v2526
      %2783 = vst [vmem:[%s201 + $0x590] sm:$0xff] %v2527
      %2784 = vst [vmem:[%s201 + $0x598] sm:$0xff] %v2528
      %2785 = vst [vmem:[%s201 + $0x5a0] sm:$0xff] %v2529
      %2786 = vst [vmem:[%s201 + $0x5a8] sm:$0xff] %v2530
      %2787 = vst [vmem:[%s201 + $0x5b0] sm:$0xff] %v2531
      %2788 = vst [vmem:[%s201 + $0x5b8] sm:$0xff] %v2532
      %2789 = vst [vmem:[%s201 + $0x5c0] sm:$0xff] %v2533
      %2790 = vst [vmem:[%s201 + $0x5c8] sm:$0xff] %v2534
      %2791 = vst [vmem:[%s201 + $0x5d0] sm:$0xff] %v2535
      %2792 = vst [vmem:[%s201 + $0x5d8] sm:$0xff] %v2536
      %2793 = vst [vmem:[%s201 + $0x5e0] sm:$0xff] %v2537
      %2794 = vst [vmem:[%s201 + $0x5e8] sm:$0xff] %v2538
      %2795 = vst [vmem:[%s201 + $0x5f0] sm:$0xff] %v2539
      %2796 = vst [vmem:[%s201 + $0x5f8] sm:$0xff] %v2540
      %2797 = vst [vmem:[%s201 + $0x600] sm:$0xff] %v2541
      %2798 = vst [vmem:[%s201 + $0x608] sm:$0xff] %v2542
      %2799 = vst [vmem:[%s201 + $0x610] sm:$0xff] %v2543
      %2800 = vst [vmem:[%s201 + $0x618] sm:$0xff] %v2544
      %2801 = vst [vmem:[%s201 + $0x620] sm:$0xff] %v2545
      %2802 = vst [vmem:[%s201 + $0x628] sm:$0xff] %v2546
      %2803 = vst [vmem:[%s201 + $0x630] sm:$0xff] %v2547
      %2804 = vst [vmem:[%s201 + $0x638] sm:$0xff] %v2548
      %2805 = vst [vmem:[%s201 + $0x640] sm:$0xff] %v2549
      %2806 = vst [vmem:[%s201 + $0x648] sm:$0xff] %v2550
      %2807 = vst [vmem:[%s201 + $0x650] sm:$0xff] %v2551
      %2808 = vst [vmem:[%s201 + $0x658] sm:$0xff] %v2552
      %2809 = vst [vmem:[%s201 + $0x660] sm:$0xff] %v2553
      %2810 = vst [vmem:[%s201 + $0x668] sm:$0xff] %v2554
      %2811 = vst [vmem:[%s201 + $0x670] sm:$0xff] %v2555
      %2812 = vst [vmem:[%s201 + $0x678] sm:$0xff] %v2556
      %2813 = vst [vmem:[%s201 + $0x680] sm:$0xff] %v2557
      %2814 = vst [vmem:[%s201 + $0x688] sm:$0xff] %v2558
      %2815 = vst [vmem:[%s201 + $0x690] sm:$0xff] %v2559
      %2816 = vst [vmem:[%s201 + $0x698] sm:$0xff] %v2560
      %2817 = vst [vmem:[%s201 + $0x6a0] sm:$0xff] %v2561
      %2818 = vst [vmem:[%s201 + $0x6a8] sm:$0xff] %v2562
      %2819 = vst [vmem:[%s201 + $0x6b0] sm:$0xff] %v2563
      %2820 = vst [vmem:[%s201 + $0x6b8] sm:$0xff] %v2564
      %2821 = vst [vmem:[%s201 + $0x6c0] sm:$0xff] %v2565
      %2822 = vst [vmem:[%s201 + $0x6c8] sm:$0xff] %v2566
      %2823 = vst [vmem:[%s201 + $0x6d0] sm:$0xff] %v2567
      %2824 = vst [vmem:[%s201 + $0x6d8] sm:$0xff] %v2568
      %2825 = vst [vmem:[%s201 + $0x6e0] sm:$0xff] %v2569
      %2826 = vst [vmem:[%s201 + $0x6e8] sm:$0xff] %v2570
      %2827 = vst [vmem:[%s201 + $0x6f0] sm:$0xff] %v2571
      %2828 = vst [vmem:[%s201 + $0x6f8] sm:$0xff] %v2572
      %2829 = vst [vmem:[%s201 + $0x700] sm:$0xff] %v2573
      %2830 = vst [vmem:[%s201 + $0x708] sm:$0xff] %v2574
      %2831 = vst [vmem:[%s201 + $0x710] sm:$0xff] %v2575
      %2832 = vst [vmem:[%s201 + $0x718] sm:$0xff] %v2576
      %2833 = vst [vmem:[%s201 + $0x720] sm:$0xff] %v2577
      %2834 = vst [vmem:[%s201 + $0x728] sm:$0xff] %v2578
      %2835 = vst [vmem:[%s201 + $0x730] sm:$0xff] %v2579
      %2836 = vst [vmem:[%s201 + $0x738] sm:$0xff] %v2580
      %2837 = vst [vmem:[%s201 + $0x740] sm:$0xff] %v2581
      %2838 = vst [vmem:[%s201 + $0x748] sm:$0xff] %v2582
      %2839 = vst [vmem:[%s201 + $0x750] sm:$0xff] %v2583
      %2840 = vst [vmem:[%s201 + $0x758] sm:$0xff] %v2584
      %2841 = vst [vmem:[%s201 + $0x760] sm:$0xff] %v2585
      %2842 = vst [vmem:[%s201 + $0x768] sm:$0xff] %v2586
      %2843 = vst [vmem:[%s201 + $0x770] sm:$0xff] %v2587
      %2844 = vst [vmem:[%s201 + $0x778] sm:$0xff] %v2588
      %2845 = vst [vmem:[%s201 + $0x780] sm:$0xff] %v2589
      %2846 = vst [vmem:[%s201 + $0x788] sm:$0xff] %v2590
      %2847 = vst [vmem:[%s201 + $0x790] sm:$0xff] %v2591
      %2848 = vst [vmem:[%s201 + $0x798] sm:$0xff] %v2592
      %2849 = vst [vmem:[%s201 + $0x7a0] sm:$0xff] %v2593
      %2850 = vst [vmem:[%s201 + $0x7a8] sm:$0xff] %v2594
      %2851 = vst [vmem:[%s201 + $0x7b0] sm:$0xff] %v2595
      %2852 = vst [vmem:[%s201 + $0x7b8] sm:$0xff] %v2596
      %2853 = vst [vmem:[%s201 + $0x7c0] sm:$0xff] %v2597
      %2854 = vst [vmem:[%s201 + $0x7c8] sm:$0xff] %v2598
      %2855 = vst [vmem:[%s201 + $0x7d0] sm:$0xff] %v2599
      %2856 = vst [vmem:[%s201 + $0x7d8] sm:$0xff] %v2600
      %2857 = vst [vmem:[%s201 + $0x7e0] sm:$0xff] %v2601
      %2858 = vst [vmem:[%s201 + $0x7e8] sm:$0xff] %v2602
      %2859 = vst [vmem:[%s201 + $0x7f0] sm:$0xff] %v2603
      %2860 = vst [vmem:[%s201 + $0x7f8] sm:$0xff] %v2604
      %s2861 = smul.u32 256, %s18
      %p2862 = scmp.lt.s32.totalorder %s17, 3
      %s2863 = scalar_select %p2862, %s17, 3
      %p2864 = scmp.lt.s32.totalorder %s2861, 255
      %s2865 = scalar_select %p2864, %s2861, 255
      %s2866 = smul.addr %s2863, 256
      %s2867 = sadd.s32 %s2865, %s2866
      %s2868 = smul.addr %s2867, 8
      %s2869 = scalar_lea.vmem %s2, %s2868
      // Predicated region
      $region29: #{dcgan_generator.17} parent=27 // pred_check
        %p2870 = pneg %p99
      $region30: #{dcgan_generator.17} parent=27 // pred_check_branch
        %2872 = sbr.rel (%p2870) target = $region32
      $region31: #{dcgan_generator.17} parent=27 // pred_region
        %s2873 = smul.u32 256, %s18
      $region32: #{dcgan_generator.17} parent=27 // pred_fallthru
        _
    $region28: #{dcgan_generator.17} parent=5 // pred_fallthru
      _
    %p2874 = scmp.le.s32.totalorder 2, %s8
    // Predicated region
    $region33: #{dcgan_generator.17} parent=5 // pred_check
      %p2875 = pneg %p2874
    $region34: #{dcgan_generator.17} parent=5 // pred_check_branch
      %2877 = sbr.rel (%p2875) target = $region36
    $region35: #{dcgan_generator.17} parent=5 // pred_region
      %s2878 = ssub.s32 %s8, 2
      // Predicated region
      $region37: #{dcgan_generator.17} parent=35 // pred_check
        %p2879 = pneg %p105
      $region38: #{dcgan_generator.17} parent=35 // pred_check_branch
        %2881 = sbr.rel (%p2879) target = $region40
      $region39: #{dcgan_generator.17} parent=35 // pred_region
        %s2882 = smul.u32 256, %s20
        %p2883 = scmp.lt.s32.totalorder %s19, 3
        %s2884 = scalar_select %p2883, %s19, 3
        %p2885 = scmp.lt.s32.totalorder %s2882, 255
        %s2886 = scalar_select %p2885, %s2882, 255
        %s2887 = smul.addr %s2884, 256
        %s2888 = sadd.s32 %s2886, %s2887
        %s2889 = smul.addr %s2888, 8
        %s2890 = scalar_lea.vmem %s2, %s2889
      $region40: #{dcgan_generator.17} parent=35 // pred_fallthru
        _
    $region36: #{dcgan_generator.17} parent=5 // pred_fallthru
      _
  $region6: #{dcgan_generator.17} parent=0 // loop_footer
    %s12 = sadd.s32 1, %s8
  $region7: #{dcgan_generator.17} parent=0 // loop_footer_branch
    %7 = sbr.rel target = $region3
  $region8: #{dcgan_generator.17} parent=0 // loop_exit
    _

</llo_original>
